<compile_context>
chip_gen: v7x
topology: tpu7x:2x2x1
jax: 0.10.0
libtpu: 0.0.40
codegen_flags: <defaults>
</compile_context>

<pallas_src>
import functools

import jax
import jax.numpy as jnp
from jax.experimental import pallas as pl
from jax.experimental.pallas import tpu as pltpu


_W_ALIGN = 8  # aligned column offset for the in-kernel halo scratch


@functools.lru_cache(maxsize=None)
def _vmem_limit_bytes():
    """Per-generation scoped-VMEM budget: ~75% of physical, capped at 96 MiB."""
    try:
        info = pltpu.get_tpu_info()
        cap = int(getattr(info, "vmem_capacity_bytes", 128 * 1024 * 1024))
    except Exception:  # interpret mode / older runtimes
        cap = 128 * 1024 * 1024
    return min((cap * 3) // 4, 96 * 1024 * 1024)


def _compiler_params(*semantics):
    return pltpu.CompilerParams(dimension_semantics=semantics,
                                vmem_limit_bytes=_vmem_limit_bytes())


def _round_up(x, m):
    return ((x + m - 1) // m) * m


def _tile_or_pad(dim, target, quantum):
    """Pick a quantum-aligned tile <= target.  Returns (tile, padded_dim); padded_dim
    exceeds dim when no aligned divisor exists, so the caller zero-pads instead of
    letting a whole-array block blow the VMEM budget."""
    target = max(target, quantum)
    if dim <= target:
        t = _round_up(dim, quantum)
        return t, t
    t = (target // quantum) * quantum
    cand = t
    while cand >= quantum:
        if dim % cand == 0:
            return cand, dim
        cand -= quantum
    return t, _round_up(dim, t)


def _phase_split(xp):
    """(B, Hp, Wp, C) with even Hp/Wp -> (B*4, Hp//2, Wp//2, C) phase arrays
    (space-to-depth) so a stride-2 3x3 conv becomes unit-stride taps in-kernel."""
    B, Hp, Wp, C = xp.shape
    assert Hp % 2 == 0 and Wp % 2 == 0
    x = xp.reshape(B, Hp // 2, 2, Wp // 2, 2, C)
    x = jnp.transpose(x, (0, 2, 4, 1, 3, 5))          # (B, 2, 2, Hh, Wh, C)
    return x.reshape(B * 4, Hp // 2, Wp // 2, C)


# --------------------------------------------------------------------------
# Tiled 1x1-conv matmul with fused folded-BN + optional swish
# --------------------------------------------------------------------------

def _matmul_bn_act_kernel(a_ref, w_ref, scale_ref, bias_ref, o_ref, *, act):
    acc = jnp.dot(a_ref[...], w_ref[...], preferred_element_type=jnp.float32)
    y = acc * scale_ref[...] + bias_ref[...]
    if act == "swish":
        y = y * jax.nn.sigmoid(y)
    o_ref[...] = y.astype(o_ref.dtype)


def matmul_bn_act(a, w, scale, bias, act="none", out_dtype=jnp.bfloat16):
    a = a.astype(jnp.bfloat16)
    w = w.astype(jnp.bfloat16)
    M, K = a.shape
    N = w.shape[1]
    # bf16 feeds: 16-row sublane quantum for M (tm target 1024), 256-wide N tiles (MXU).
    tm, Mp = _tile_or_pad(M, 1024, 16)
    tn, Np = _tile_or_pad(N, 256, 128)
    if Mp != M:
        a = jnp.pad(a, ((0, Mp - M), (0, 0)))
    if Np != N:
        w = jnp.pad(w, ((0, 0), (0, Np - N)))
        scale = jnp.pad(scale, ((0, 0), (0, Np - N)))
        bias = jnp.pad(bias, ((0, 0), (0, Np - N)))
    out = pl.pallas_call(
        functools.partial(_matmul_bn_act_kernel, act=act),
        out_shape=jax.ShapeDtypeStruct((Mp, Np), out_dtype),
        grid=(Mp // tm, Np // tn),
        in_specs=[
            pl.BlockSpec((tm, K), lambda i, j: (i, 0)),
            pl.BlockSpec((K, tn), lambda i, j: (0, j)),
            pl.BlockSpec((1, tn), lambda i, j: (0, j)),
            pl.BlockSpec((1, tn), lambda i, j: (0, j)),
        ],
        out_specs=pl.BlockSpec((tm, tn), lambda i, j: (i, j)),
        compiler_params=_compiler_params("parallel", "parallel"),
    )(a, w, scale, bias)
    if Mp != M or Np != N:
        out = out[:M, :N]
    return out


# --------------------------------------------------------------------------
# Stem: 3x3 stride-2 conv + BN + swish; one small MXU dot per tap (no HBM im2col)
# --------------------------------------------------------------------------

def _stem_kernel(xph_ref, w_ref, scale_ref, bias_ref, o_ref, *, ho, wo):
    xph = xph_ref[...]                       # (4, Hh, Wh, Cin_pad) bf16 phase-split input
    w = w_ref[...]                           # (3, 3, Cin_pad, Cout) bf16
    cout = w.shape[-1]
    acc = jnp.zeros((ho * wo, cout), jnp.float32)
    for dh in range(3):
        for dw in range(3):
            p = (dh % 2) * 2 + (dw % 2)
            sh, sw = dh // 2, dw // 2
            tap = xph[p, sh:sh + ho, sw:sw + wo, :].reshape(ho * wo, -1)
            acc = acc + jnp.dot(tap, w[dh, dw], preferred_element_type=jnp.float32)
    y = acc * scale_ref[...] + bias_ref[...]
    y = y * jax.nn.sigmoid(y)
    o_ref[0] = y.reshape(ho, wo, cout).astype(o_ref.dtype)


def stem_conv(xph, w, scale, bias, batch, ho, wo):
    _, hh, wh, cin = xph.shape
    cout = w.shape[-1]
    return pl.pallas_call(
        functools.partial(_stem_kernel, ho=ho, wo=wo),
        out_shape=jax.ShapeDtypeStruct((batch, ho, wo, cout), jnp.bfloat16),
        grid=(batch,),
        in_specs=[
            pl.BlockSpec((4, hh, wh, cin), lambda b: (b, 0, 0, 0)),
            pl.BlockSpec(w.shape, lambda b: (0, 0, 0, 0)),
            pl.BlockSpec(scale.shape, lambda b: (0, 0)),
            pl.BlockSpec(bias.shape, lambda b: (0, 0)),
        ],
        out_specs=pl.BlockSpec((1, ho, wo, cout), lambda b: (b, 0, 0, 0)),
        compiler_params=_compiler_params("parallel"),
    )(xph, w, scale, bias)


# --------------------------------------------------------------------------
# Depthwise 3x3 conv (+BN+swish) with the SE squeeze fused into the epilogue
# --------------------------------------------------------------------------

def _se_squeeze(y, sw1_ref, sb1_ref, sw2_ref, sb2_ref):
    """Global pool of the activated depthwise output + the two tiny SE FCs."""
    pooled = jnp.mean(y, axis=(0, 1), keepdims=True)[0]          # (1, C)
    h = jnp.dot(pooled, sw1_ref[...], preferred_element_type=jnp.float32) + sb1_ref[...]
    h = h * jax.nn.sigmoid(h)
    s = jnp.dot(h, sw2_ref[...], preferred_element_type=jnp.float32) + sb2_ref[...]
    return jax.nn.sigmoid(s)                                     # (1, C)


def _dwconv_s1_kernel(x_ref, w_ref, scale_ref, bias_ref,
                      sw1_ref, sb1_ref, sw2_ref, sb2_ref,
                      o_ref, s_ref, pad_ref, *, h, w):
    # Build the halo-padded block in a VMEM scratch (no wrapper-side jnp.pad HBM pass).
    # The interior is stored at column offset 8 so the store stays sublane-aligned; only
    # the two hoisted tap *loads* below touch unaligned offsets.
    pad_ref[...] = jnp.zeros(pad_ref.shape, pad_ref.dtype)
    pad_ref[1:h + 1, _W_ALIGN:_W_ALIGN + w, :] = x_ref[0]
    xp = pad_ref[...]                                   # (h+2, W_pad, C) bf16
    k = w_ref[...]                                      # (3, 3, C) bf16
    c = k.shape[-1]
    # Hoist the sublane-shifting W slices out of the 9-tap loop (<=2 relayouts total).
    xw = [xp[:, _W_ALIGN - 1 + dw:_W_ALIGN - 1 + dw + w, :] for dw in range(3)]
    acc = jnp.zeros((h, w, c), jnp.float32)
    for dh in range(3):
        for dw in range(3):
            acc = acc + xw[dw][dh:dh + h, :, :] * k[dh, dw]   # bf16 mul, f32 accumulate
    y = acc * scale_ref[...] + bias_ref[...]
    y = y * jax.nn.sigmoid(y)
    o_ref[0] = y.astype(o_ref.dtype)
    s_ref[0] = _se_squeeze(y, sw1_ref, sb1_ref, sw2_ref, sb2_ref)


def _dwconv_s2_kernel(xph_ref, w_ref, scale_ref, bias_ref,
                      sw1_ref, sb1_ref, sw2_ref, sb2_ref, o_ref, s_ref, *, ho, wo):
    xph = xph_ref[...]                       # (4, Hh, Wh, C) bf16 phase-split padded input
    k = w_ref[...]                           # (3, 3, C) bf16
    c = k.shape[-1]
    views = {}

    def view(p, sw):                         # hoist sublane-shifting W slices
        if (p, sw) not in views:
            views[(p, sw)] = xph[p, :, sw:sw + wo, :]
        return views[(p, sw)]

    acc = jnp.zeros((ho, wo, c), jnp.float32)
    for dh in range(3):                      # strided output computed directly
        for dw in range(3):
            p = (dh % 2) * 2 + (dw % 2)
            sh, sw = dh // 2, dw // 2
            acc = acc + view(p, sw)[sh:sh + ho, :, :] * k[dh, dw]
    y = acc * scale_ref[...] + bias_ref[...]
    y = y * jax.nn.sigmoid(y)
    o_ref[0] = y.astype(o_ref.dtype)
    s_ref[0] = _se_squeeze(y, sw1_ref, sb1_ref, sw2_ref, sb2_ref)


def dwconv3x3_bn_swish_se(x, w, scale, bias, sw1, sb1, sw2, sb2, stride):
    """Returns (h, s): h = (B, Ho, Wo, C) bf16 activated depthwise output,
    s = (B, 1, C) f32 SE excite scale (pool + 2 FCs fused into this kernel)."""
    B, H, W, C = x.shape
    ho, wo = H // stride, W // stride
    w = w.astype(jnp.bfloat16)
    if stride == 1:
        kern = functools.partial(_dwconv_s1_kernel, h=H, w=W)
        x_in = x                                                  # unpadded; halo in-kernel
        x_spec = pl.BlockSpec((1, H, W, C), lambda b: (b, 0, 0, 0))
        scratch = [pltpu.VMEM((H + 2, _W_ALIGN + W + 1, C), jnp.bfloat16)]
        batch = B
    else:
        # TODO(synk): replace this wrapper pad + phase-split HBM pass with in-kernel
        #             strided reads (pl.ds(..., stride=2)) of the unsplit activation.
        xp = jnp.pad(x, ((0, 0), (1, 1), (1, 1), (0, 0)))
        x_in = _phase_split(xp)                                   # (4B, Hh, Wh, C)
        hh, wh = x_in.shape[1], x_in.shape[2]
        kern = functools.partial(_dwconv_s2_kernel, ho=ho, wo=wo)
        x_spec = pl.BlockSpec((4, hh, wh, C), lambda b: (b, 0, 0, 0))
        scratch = []
        batch = B
    return pl.pallas_call(
        kern,
        out_shape=(jax.ShapeDtypeStruct((B, ho, wo, C), jnp.bfloat16),
                   jax.ShapeDtypeStruct((B, 1, C), jnp.float32)),
        grid=(batch,),
        in_specs=[
            x_spec,
            pl.BlockSpec(w.shape, lambda b: (0, 0, 0)),
            pl.BlockSpec(scale.shape, lambda b: (0, 0)),
            pl.BlockSpec(bias.shape, lambda b: (0, 0)),
            pl.BlockSpec(sw1.shape, lambda b: (0, 0)),
            pl.BlockSpec(sb1.shape, lambda b: (0, 0)),
            pl.BlockSpec(sw2.shape, lambda b: (0, 0)),
            pl.BlockSpec(sb2.shape, lambda b: (0, 0)),
        ],
        out_specs=(pl.BlockSpec((1, ho, wo, C), lambda b: (b, 0, 0, 0)),
                   pl.BlockSpec((1, 1, C), lambda b: (b, 0, 0))),
        scratch_shapes=scratch,
        compiler_params=_compiler_params("parallel"),
    )(x_in, w, scale, bias, sw1, sb1, sw2, sb2)


# --------------------------------------------------------------------------
# Fused SE excite + 1x1 projection + BN + optional residual add
# --------------------------------------------------------------------------

def _project_kernel(h_ref, s_ref, w_ref, scale_ref, bias_ref, *rest, has_res):
    if has_res:
        res_ref, o_ref = rest
    else:
        (o_ref,) = rest
    # SE rescale in bf16: no f32 temporary of the (HW, Ce) block ahead of the MXU feed.
    hv = h_ref[0] * s_ref[0].astype(jnp.bfloat16)
    acc = jnp.dot(hv, w_ref[...], preferred_element_type=jnp.float32)
    y = acc * scale_ref[...] + bias_ref[...]
    if has_res:
        y = y + res_ref[0].astype(jnp.float32)          # fused residual add (f32)
    o_ref[0] = y.astype(o_ref.dtype)


def project_se(h, s, w, scale, bias, res=None):
    B, HW, Ce = h.shape
    w = w.astype(jnp.bfloat16)
    cout = w.shape[1]
    has_res = res is not None
    in_specs = [
        pl.BlockSpec((1, HW, Ce), lambda b: (b, 0, 0)),
        pl.BlockSpec((1, 1, Ce), lambda b: (b, 0, 0)),
        pl.BlockSpec((Ce, cout), lambda b: (0, 0)),
        pl.BlockSpec((1, cout), lambda b: (0, 0)),
        pl.BlockSpec((1, cout), lambda b: (0, 0)),
    ]
    args = [h, s, w, scale, bias]
    if has_res:
        in_specs.append(pl.BlockSpec((1, HW, cout), lambda b: (b, 0, 0)))
        args.append(res.astype(jnp.bfloat16))
    return pl.pallas_call(
        functools.partial(_project_kernel, has_res=has_res),
        out_shape=jax.ShapeDtypeStruct((B, HW, cout), jnp.bfloat16),
        grid=(B,),
        in_specs=in_specs,
        out_specs=pl.BlockSpec((1, HW, cout), lambda b: (b, 0, 0)),
        compiler_params=_compiler_params("parallel"),
    )(*args)


# --------------------------------------------------------------------------
# Head 1x1 conv + BN + swish with global average pooling fused in-kernel
# --------------------------------------------------------------------------

def _head_gap_kernel(x_ref, w_ref, scale_ref, bias_ref, o_ref):
    acc = jnp.dot(x_ref[0], w_ref[...], preferred_element_type=jnp.float32)
    y = acc * scale_ref[...] + bias_ref[...]
    y = y * jax.nn.sigmoid(y)
    o_ref[0] = jnp.mean(y, axis=0, keepdims=True)        # fused global average pool


def head_conv_gap(x, w, scale, bias):
    """1x1 head conv + folded BN + swish + GAP; the 1792-wide head activation never
    round-trips through HBM."""
    # TODO(synk): at real resolutions tile HW too and accumulate the pooled sums across
    #             grid steps in a VMEM scratch, finalizing under pl.when.
    B, HW, K = x.shape
    x = x.astype(jnp.bfloat16)
    w = w.astype(jnp.bfloat16)
    N = w.shape[1]
    tn, Np = _tile_or_pad(N, 256, 128)
    if Np != N:
        w = jnp.pad(w, ((0, 0), (0, Np - N)))
        scale = jnp.pad(scale, ((0, 0), (0, Np - N)))
        bias = jnp.pad(bias, ((0, 0), (0, Np - N)))
    out = pl.pallas_call(
        _head_gap_kernel,
        out_shape=jax.ShapeDtypeStruct((B, 1, Np), jnp.float32),
        grid=(B, Np // tn),
        in_specs=[
            pl.BlockSpec((1, HW, K), lambda b, n: (b, 0, 0)),
            pl.BlockSpec((K, tn), lambda b, n: (0, n)),
            pl.BlockSpec((1, tn), lambda b, n: (0, n)),
            pl.BlockSpec((1, tn), lambda b, n: (0, n)),
        ],
        out_specs=pl.BlockSpec((1, 1, tn), lambda b, n: (b, 0, n)),
        compiler_params=_compiler_params("parallel", "parallel"),
    )(x, w, scale, bias)
    out = out.reshape(B, Np)
    return out[:, :N] if Np != N else out


# --------------------------------------------------------------------------
# Final Linear(1792, 1) as a VPU lane reduction + BCEWithLogitsLoss
# --------------------------------------------------------------------------

def _fc_bce_kernel(x_ref, w_ref, b_ref, t_ref, out_ref, loss_ref, *, batch):
    x = x_ref[...]                                       # (B, 1792) f32
    logits = jnp.sum(x * w_ref[...], axis=-1, keepdims=True) + b_ref[...]
    out_ref[...] = logits
    t = t_ref[...]
    # numerically-stable BCE-with-logits: max(x,0) - x*t + log(1 + exp(-|x|))
    l = jnp.maximum(logits, 0.0) - logits * t + jnp.log1p(jnp.exp(-jnp.abs(logits)))
    loss_ref[...] = jnp.sum(l, axis=0, keepdims=True) / float(batch)


def fc_bce(x, w, b, t):
    B = x.shape[0]
    return pl.pallas_call(
        functools.partial(_fc_bce_kernel, batch=B),
        out_shape=(jax.ShapeDtypeStruct((B, 1), jnp.float32),
                   jax.ShapeDtypeStruct((1, 1), jnp.float32)),
        grid=(1,),
        in_specs=[
            pl.BlockSpec(x.shape, lambda i: (0, 0)),
            pl.BlockSpec(w.shape, lambda i: (0, 0)),
            pl.BlockSpec(b.shape, lambda i: (0, 0)),
            pl.BlockSpec(t.shape, lambda i: (0, 0)),
        ],
        out_specs=(pl.BlockSpec((B, 1), lambda i: (0, 0)),
                   pl.BlockSpec((1, 1), lambda i: (0, 0))),
        compiler_params=_compiler_params("arbitrary"),
    )(x, w, b, t)


# --------------------------------------------------------------------------
# Block composition / forward
# --------------------------------------------------------------------------

def mbconv(x, p, stride, skip):
    B, H, W, C = x.shape
    # expand (1x1 conv) + BN + swish  [bf16 MXU feeds, f32 accumulation]
    h = matmul_bn_act(x.reshape(B * H * W, C), p["exp_w"], p["exp_scale"],
                      p["exp_bias"], act="swish")
    Ce = h.shape[-1]
    h = h.reshape(B, H, W, Ce)
    # depthwise 3x3 + BN + swish, SE squeeze fused into the epilogue
    h, s = dwconv3x3_bn_swish_se(h, p["dw_w"], p["dw_scale"], p["dw_bias"],
                                 p["se_w1"], p["se_b1"], p["se_w2"], p["se_b2"],
                                 stride)
    Bh, Ho, Wo, _ = h.shape
    # SE excite + project (1x1 conv) + BN + residual add, one fused kernel
    res = x.reshape(B, H * W, C) if skip else None
    out = project_se(h.reshape(Bh, Ho * Wo, Ce), s, p["proj_w"],
                     p["proj_scale"], p["proj_bias"], res=res)
    return out.reshape(Bh, Ho, Wo, -1)


def efficientnet_forward(params, image_nchw, targets):
    # NCHW (PyTorch convention) -> NHWC for the TPU kernels
    x = jnp.transpose(image_nchw, (0, 2, 3, 1)).astype(jnp.float32)
    B, H, W, _ = x.shape

    # stem: 3x3 stride-2 conv + BN + swish.  Pad + phase split on the tiny 3-channel
    # raw image is cheap layout plumbing; Cin is zero-padded 3->8 so the per-tap MXU
    # dot inside the kernel sees an aligned K.  No im2col matrix ever hits HBM.
    xp = jnp.pad(x, ((0, 0), (1, 1), (1, 1), (0, 5)))
    xph = _phase_split(xp).astype(jnp.bfloat16)
    stem_w = jnp.pad(params["stem_w"],
                     ((0, 0), (0, 0), (0, 5), (0, 0))).astype(jnp.bfloat16)
    h = stem_conv(xph, stem_w, params["stem_scale"], params["stem_bias"],
                  B, H // 2, W // 2)

    # MBConv blocks (reduced depth)
    h = mbconv(h, params["b1"], stride=1, skip=True)
    h = mbconv(h, params["b2"], stride=2, skip=False)

    # head: 1x1 conv to 1792 + BN + swish with global average pooling fused
    Bh, Hh, Wh, C = h.shape
    pooled = head_conv_gap(h.reshape(Bh, Hh * Wh, C), params["head_w"],
                           params["head_scale"], params["head_bias"])

    # Linear(1792, 1) + BCEWithLogitsLoss   (targets.view(-1, 1).type_as(out))
    t = targets.reshape(-1, 1).astype(pooled.dtype)
    out, loss = fc_bce(pooled, params["fc_w"], params["fc_b"], t)
    return out, loss[0, 0]


def init_params(key):
    keys = list(jax.random.split(key, 40))
    it = iter(keys)

    def w(shape, fan_in):
        return jax.random.normal(next(it), shape, jnp.float32) / jnp.sqrt(float(fan_in))

    def bn(c):
        scale = 1.0 + 0.05 * jax.random.normal(next(it), (1, c), jnp.float32)
        bias = 0.05 * jax.random.normal(next(it), (1, c), jnp.float32)
        return scale, bias

    p = {}
    p["stem_w"] = w((3, 3, 3, 32), 27)                 # 3x3, 3 -> 32
    p["stem_scale"], p["stem_bias"] = bn(32)

    def mb_params(cin, cexp, cout, cse):
        d = {}
        d["exp_w"] = w((cin, cexp), cin)
        d["exp_scale"], d["exp_bias"] = bn(cexp)
        d["dw_w"] = w((3, 3, cexp), 9)
        d["dw_scale"], d["dw_bias"] = bn(cexp)
        d["se_w1"] = w((cexp, cse), cexp)
        d["se_b1"] = jnp.zeros((1, cse), jnp.float32)
        d["se_w2"] = w((cse, cexp), cse)
        d["se_b2"] = jnp.zeros((1, cexp), jnp.float32)
        d["proj_w"] = w((cexp, cout), cexp)
        d["proj_scale"], d["proj_bias"] = bn(cout)
        return d

    p["b1"] = mb_params(32, 128, 32, 8)
    p["b2"] = mb_params(32, 128, 64, 8)

    p["head_w"] = w((64, 1792), 64)
    p["head_scale"], p["head_bias"] = bn(1792)

    p["fc_w"] = w((1, 1792), 1792)                     # replaced _fc: Linear(1792, 1)
    p["fc_b"] = jnp.zeros((1, 1), jnp.float32)
    return p


if __name__ == "__main__":
    key = jax.random.PRNGKey(0)
    kp, ki, kt = jax.random.split(key, 3)
    params = init_params(kp)

    image = jax.random.normal(ki, (2, 3, 16, 16), jnp.float32)             # NCHW, like PyTorch
    targets = jax.random.bernoulli(kt, 0.5, (2,)).astype(jnp.float32)

    out, loss = jax.jit(efficientnet_forward)(params, image, targets)
    jax.block_until_ready((out, loss))
    assert out.shape == (2, 1) and loss.shape == ()
    print("KERNEL_OK")
</pallas_src>

<mosaic_0001>
module attributes {stable_mosaic.version = 11 : i64} {
  func.func @_stem_kernel(%arg0: i32, %arg1: memref<4x9x9x8xbf16, #tpu.memory_space<vmem>>, %arg2: memref<3x3x8x32xbf16, #tpu.memory_space<vmem>>, %arg3: memref<1x32xf32, #tpu.memory_space<vmem>>, %arg4: memref<1x32xf32, #tpu.memory_space<vmem>>, %arg5: memref<1x8x8x32xbf16, #tpu.memory_space<vmem>>) attributes {dimension_semantics = [#tpu.dimension_semantics<parallel>], iteration_bounds = array<i64: 2>, scalar_prefetch = 0 : i64, scratch_operands = 0 : i64, tpu.core_type = #tpu.core_type<tc>, window_params = [{transform_indices = @transform_0, window_bounds = array<i64: 4, 9, 9, 8>}, {pipeline_mode = #tpu.pipeline_mode<synchronous>, transform_indices = @transform_1, window_bounds = array<i64: 3, 3, 8, 32>}, {pipeline_mode = #tpu.pipeline_mode<synchronous>, transform_indices = @transform_2, window_bounds = array<i64: 1, 32>}, {pipeline_mode = #tpu.pipeline_mode<synchronous>, transform_indices = @transform_3, window_bounds = array<i64: 1, 32>}, {transform_indices = @transform_4, window_bounds = array<i64: 1, 8, 8, 32>}]} {
    %c0 = arith.constant 0 : index
    %c0_0 = arith.constant 0 : index
    %c0_1 = arith.constant 0 : index
    %c0_2 = arith.constant 0 : index
    %0 = vector.load %arg1[%c0, %c0_0, %c0_1, %c0_2] : memref<4x9x9x8xbf16, #tpu.memory_space<vmem>>, vector<4x9x9x8xbf16>
    %c0_3 = arith.constant 0 : index
    %c0_4 = arith.constant 0 : index
    %c0_5 = arith.constant 0 : index
    %c0_6 = arith.constant 0 : index
    %1 = vector.load %arg2[%c0_3, %c0_4, %c0_5, %c0_6] : memref<3x3x8x32xbf16, #tpu.memory_space<vmem>>, vector<3x3x8x32xbf16>
    %cst = arith.constant 0.000000e+00 : f32
    %2 = vector.broadcast %cst : f32 to vector<64x32xf32>
    %3 = vector.extract_strided_slice %0 {offsets = [0, 0, 0, 0], sizes = [1, 8, 8, 8], strides = [1, 1, 1, 1]} : vector<4x9x9x8xbf16> to vector<1x8x8x8xbf16>
    %4 = vector.shape_cast %3 : vector<1x8x8x8xbf16> to vector<8x8x8xbf16>
    %5 = vector.shape_cast %4 : vector<8x8x8xbf16> to vector<64x8xbf16>
    %6 = vector.extract_strided_slice %1 {offsets = [0, 0, 0, 0], sizes = [1, 1, 8, 32], strides = [1, 1, 1, 1]} : vector<3x3x8x32xbf16> to vector<1x1x8x32xbf16>
    %7 = vector.shape_cast %6 : vector<1x1x8x32xbf16> to vector<8x32xbf16>
    %cst_7 = arith.constant dense<0.000000e+00> : vector<64x32xf32>
    %8 = tpu.matmul %5, %7, %cst_7 {dimension_numbers = #tpu.dot_dimension_numbers<[1], [0], [0], [1], [0, 0, 1, 1], [], []>} : vector<64x8xbf16>, vector<8x32xbf16>, vector<64x32xf32> -> vector<64x32xf32>
    %9 = arith.addf %2, %8 : vector<64x32xf32>
    %10 = vector.extract_strided_slice %0 {offsets = [1, 0, 0, 0], sizes = [1, 8, 8, 8], strides = [1, 1, 1, 1]} : vector<4x9x9x8xbf16> to vector<1x8x8x8xbf16>
    %11 = vector.shape_cast %10 : vector<1x8x8x8xbf16> to vector<8x8x8xbf16>
    %12 = vector.shape_cast %11 : vector<8x8x8xbf16> to vector<64x8xbf16>
    %13 = vector.extract_strided_slice %1 {offsets = [0, 1, 0, 0], sizes = [1, 1, 8, 32], strides = [1, 1, 1, 1]} : vector<3x3x8x32xbf16> to vector<1x1x8x32xbf16>
    %14 = vector.shape_cast %13 : vector<1x1x8x32xbf16> to vector<8x32xbf16>
    %cst_8 = arith.constant dense<0.000000e+00> : vector<64x32xf32>
    %15 = tpu.matmul %12, %14, %cst_8 {dimension_numbers = #tpu.dot_dimension_numbers<[1], [0], [0], [1], [0, 0, 1, 1], [], []>} : vector<64x8xbf16>, vector<8x32xbf16>, vector<64x32xf32> -> vector<64x32xf32>
    %16 = arith.addf %9, %15 : vector<64x32xf32>
    %17 = vector.extract_strided_slice %0 {offsets = [0, 0, 1, 0], sizes = [1, 8, 8, 8], strides = [1, 1, 1, 1]} : vector<4x9x9x8xbf16> to vector<1x8x8x8xbf16>
    %18 = vector.shape_cast %17 : vector<1x8x8x8xbf16> to vector<8x8x8xbf16>
    %19 = vector.shape_cast %18 : vector<8x8x8xbf16> to vector<64x8xbf16>
    %20 = vector.extract_strided_slice %1 {offsets = [0, 2, 0, 0], sizes = [1, 1, 8, 32], strides = [1, 1, 1, 1]} : vector<3x3x8x32xbf16> to vector<1x1x8x32xbf16>
    %21 = vector.shape_cast %20 : vector<1x1x8x32xbf16> to vector<8x32xbf16>
    %cst_9 = arith.constant dense<0.000000e+00> : vector<64x32xf32>
    %22 = tpu.matmul %19, %21, %cst_9 {dimension_numbers = #tpu.dot_dimension_numbers<[1], [0], [0], [1], [0, 0, 1, 1], [], []>} : vector<64x8xbf16>, vector<8x32xbf16>, vector<64x32xf32> -> vector<64x32xf32>
    %23 = arith.addf %16, %22 : vector<64x32xf32>
    %24 = vector.extract_strided_slice %0 {offsets = [2, 0, 0, 0], sizes = [1, 8, 8, 8], strides = [1, 1, 1, 1]} : vector<4x9x9x8xbf16> to vector<1x8x8x8xbf16>
    %25 = vector.shape_cast %24 : vector<1x8x8x8xbf16> to vector<8x8x8xbf16>
    %26 = vector.shape_cast %25 : vector<8x8x8xbf16> to vector<64x8xbf16>
    %27 = vector.extract_strided_slice %1 {offsets = [1, 0, 0, 0], sizes = [1, 1, 8, 32], strides = [1, 1, 1, 1]} : vector<3x3x8x32xbf16> to vector<1x1x8x32xbf16>
    %28 = vector.shape_cast %27 : vector<1x1x8x32xbf16> to vector<8x32xbf16>
    %cst_10 = arith.constant dense<0.000000e+00> : vector<64x32xf32>
    %29 = tpu.matmul %26, %28, %cst_10 {dimension_numbers = #tpu.dot_dimension_numbers<[1], [0], [0], [1], [0, 0, 1, 1], [], []>} : vector<64x8xbf16>, vector<8x32xbf16>, vector<64x32xf32> -> vector<64x32xf32>
    %30 = arith.addf %23, %29 : vector<64x32xf32>
    %31 = vector.extract_strided_slice %0 {offsets = [3, 0, 0, 0], sizes = [1, 8, 8, 8], strides = [1, 1, 1, 1]} : vector<4x9x9x8xbf16> to vector<1x8x8x8xbf16>
    %32 = vector.shape_cast %31 : vector<1x8x8x8xbf16> to vector<8x8x8xbf16>
    %33 = vector.shape_cast %32 : vector<8x8x8xbf16> to vector<64x8xbf16>
    %34 = vector.extract_strided_slice %1 {offsets = [1, 1, 0, 0], sizes = [1, 1, 8, 32], strides = [1, 1, 1, 1]} : vector<3x3x8x32xbf16> to vector<1x1x8x32xbf16>
    %35 = vector.shape_cast %34 : vector<1x1x8x32xbf16> to vector<8x32xbf16>
    %cst_11 = arith.constant dense<0.000000e+00> : vector<64x32xf32>
    %36 = tpu.matmul %33, %35, %cst_11 {dimension_numbers = #tpu.dot_dimension_numbers<[1], [0], [0], [1], [0, 0, 1, 1], [], []>} : vector<64x8xbf16>, vector<8x32xbf16>, vector<64x32xf32> -> vector<64x32xf32>
    %37 = arith.addf %30, %36 : vector<64x32xf32>
    %38 = vector.extract_strided_slice %0 {offsets = [2, 0, 1, 0], sizes = [1, 8, 8, 8], strides = [1, 1, 1, 1]} : vector<4x9x9x8xbf16> to vector<1x8x8x8xbf16>
    %39 = vector.shape_cast %38 : vector<1x8x8x8xbf16> to vector<8x8x8xbf16>
    %40 = vector.shape_cast %39 : vector<8x8x8xbf16> to vector<64x8xbf16>
    %41 = vector.extract_strided_slice %1 {offsets = [1, 2, 0, 0], sizes = [1, 1, 8, 32], strides = [1, 1, 1, 1]} : vector<3x3x8x32xbf16> to vector<1x1x8x32xbf16>
    %42 = vector.shape_cast %41 : vector<1x1x8x32xbf16> to vector<8x32xbf16>
    %cst_12 = arith.constant dense<0.000000e+00> : vector<64x32xf32>
    %43 = tpu.matmul %40, %42, %cst_12 {dimension_numbers = #tpu.dot_dimension_numbers<[1], [0], [0], [1], [0, 0, 1, 1], [], []>} : vector<64x8xbf16>, vector<8x32xbf16>, vector<64x32xf32> -> vector<64x32xf32>
    %44 = arith.addf %37, %43 : vector<64x32xf32>
    %45 = vector.extract_strided_slice %0 {offsets = [0, 1, 0, 0], sizes = [1, 8, 8, 8], strides = [1, 1, 1, 1]} : vector<4x9x9x8xbf16> to vector<1x8x8x8xbf16>
    %46 = vector.shape_cast %45 : vector<1x8x8x8xbf16> to vector<8x8x8xbf16>
    %47 = vector.shape_cast %46 : vector<8x8x8xbf16> to vector<64x8xbf16>
    %48 = vector.extract_strided_slice %1 {offsets = [2, 0, 0, 0], sizes = [1, 1, 8, 32], strides = [1, 1, 1, 1]} : vector<3x3x8x32xbf16> to vector<1x1x8x32xbf16>
    %49 = vector.shape_cast %48 : vector<1x1x8x32xbf16> to vector<8x32xbf16>
    %cst_13 = arith.constant dense<0.000000e+00> : vector<64x32xf32>
    %50 = tpu.matmul %47, %49, %cst_13 {dimension_numbers = #tpu.dot_dimension_numbers<[1], [0], [0], [1], [0, 0, 1, 1], [], []>} : vector<64x8xbf16>, vector<8x32xbf16>, vector<64x32xf32> -> vector<64x32xf32>
    %51 = arith.addf %44, %50 : vector<64x32xf32>
    %52 = vector.extract_strided_slice %0 {offsets = [1, 1, 0, 0], sizes = [1, 8, 8, 8], strides = [1, 1, 1, 1]} : vector<4x9x9x8xbf16> to vector<1x8x8x8xbf16>
    %53 = vector.shape_cast %52 : vector<1x8x8x8xbf16> to vector<8x8x8xbf16>
    %54 = vector.shape_cast %53 : vector<8x8x8xbf16> to vector<64x8xbf16>
    %55 = vector.extract_strided_slice %1 {offsets = [2, 1, 0, 0], sizes = [1, 1, 8, 32], strides = [1, 1, 1, 1]} : vector<3x3x8x32xbf16> to vector<1x1x8x32xbf16>
    %56 = vector.shape_cast %55 : vector<1x1x8x32xbf16> to vector<8x32xbf16>
    %cst_14 = arith.constant dense<0.000000e+00> : vector<64x32xf32>
    %57 = tpu.matmul %54, %56, %cst_14 {dimension_numbers = #tpu.dot_dimension_numbers<[1], [0], [0], [1], [0, 0, 1, 1], [], []>} : vector<64x8xbf16>, vector<8x32xbf16>, vector<64x32xf32> -> vector<64x32xf32>
    %58 = arith.addf %51, %57 : vector<64x32xf32>
    %59 = vector.extract_strided_slice %0 {offsets = [0, 1, 1, 0], sizes = [1, 8, 8, 8], strides = [1, 1, 1, 1]} : vector<4x9x9x8xbf16> to vector<1x8x8x8xbf16>
    %60 = vector.shape_cast %59 : vector<1x8x8x8xbf16> to vector<8x8x8xbf16>
    %61 = vector.shape_cast %60 : vector<8x8x8xbf16> to vector<64x8xbf16>
    %62 = vector.extract_strided_slice %1 {offsets = [2, 2, 0, 0], sizes = [1, 1, 8, 32], strides = [1, 1, 1, 1]} : vector<3x3x8x32xbf16> to vector<1x1x8x32xbf16>
    %63 = vector.shape_cast %62 : vector<1x1x8x32xbf16> to vector<8x32xbf16>
    %cst_15 = arith.constant dense<0.000000e+00> : vector<64x32xf32>
    %64 = tpu.matmul %61, %63, %cst_15 {dimension_numbers = #tpu.dot_dimension_numbers<[1], [0], [0], [1], [0, 0, 1, 1], [], []>} : vector<64x8xbf16>, vector<8x32xbf16>, vector<64x32xf32> -> vector<64x32xf32>
    %65 = arith.addf %58, %64 : vector<64x32xf32>
    %c0_16 = arith.constant 0 : index
    %c0_17 = arith.constant 0 : index
    %66 = vector.load %arg3[%c0_16, %c0_17] : memref<1x32xf32, #tpu.memory_space<vmem>>, vector<1x32xf32>
    %67 = vector.broadcast %66 : vector<1x32xf32> to vector<64x32xf32>
    %68 = arith.mulf %65, %67 : vector<64x32xf32>
    %c0_18 = arith.constant 0 : index
    %c0_19 = arith.constant 0 : index
    %69 = vector.load %arg4[%c0_18, %c0_19] : memref<1x32xf32, #tpu.memory_space<vmem>>, vector<1x32xf32>
    %70 = vector.broadcast %69 : vector<1x32xf32> to vector<64x32xf32>
    %71 = arith.addf %68, %70 : vector<64x32xf32>
    %72 = arith.negf %71 : vector<64x32xf32>
    %73 = math.exp %72 : vector<64x32xf32>
    %cst_20 = arith.constant 1.000000e+00 : f32
    %74 = vector.broadcast %cst_20 : f32 to vector<64x32xf32>
    %75 = arith.addf %74, %73 : vector<64x32xf32>
    %76 = arith.divf %74, %75 : vector<64x32xf32>
    %77 = arith.mulf %71, %76 : vector<64x32xf32>
    %78 = vector.shape_cast %77 : vector<64x32xf32> to vector<8x8x32xf32>
    %79 = arith.truncf %78 : vector<8x8x32xf32> to vector<8x8x32xbf16>
    %c0_21 = arith.constant 0 : index
    %c0_22 = arith.constant 0 : index
    %c0_23 = arith.constant 0 : index
    %c0_24 = arith.constant 0 : index
    %80 = vector.load %arg5[%c0_21, %c0_22, %c0_23, %c0_24] : memref<1x8x8x32xbf16, #tpu.memory_space<vmem>>, vector<1x8x8x32xbf16>
    %81 = vector.shape_cast %80 : vector<1x8x8x32xbf16> to vector<8x8x32xbf16>
    %82 = vector.shape_cast %79 : vector<8x8x32xbf16> to vector<1x8x8x32xbf16>
    tpu.vector_store %arg5[%c0_21, %c0_22, %c0_23, %c0_24], %82 {strides = array<i32>} : memref<1x8x8x32xbf16, #tpu.memory_space<vmem>>, vector<1x8x8x32xbf16>,
    return
  }
  func.func @transform_0(%arg0: i32) -> (i32, i32, i32, i32) {
    %c0_i32 = arith.constant 0 : i32
    %c0_i32_0 = arith.constant 0 : i32
    %c0_i32_1 = arith.constant 0 : i32
    %c0_i32_2 = arith.constant 0 : i32
    return %arg0, %c0_i32, %c0_i32_0, %c0_i32_1 : i32, i32, i32, i32
  }
  func.func @transform_1(%arg0: i32) -> (i32, i32, i32, i32) {
    %c0_i32 = arith.constant 0 : i32
    %c0_i32_0 = arith.constant 0 : i32
    %c0_i32_1 = arith.constant 0 : i32
    %c0_i32_2 = arith.constant 0 : i32
    %c0_i32_3 = arith.constant 0 : i32
    return %c0_i32, %c0_i32_0, %c0_i32_1, %c0_i32_2 : i32, i32, i32, i32
  }
  func.func @transform_2(%arg0: i32) -> (i32, i32) {
    %c0_i32 = arith.constant 0 : i32
    %c0_i32_0 = arith.constant 0 : i32
    %c0_i32_1 = arith.constant 0 : i32
    return %c0_i32, %c0_i32_0 : i32, i32
  }
  func.func @transform_3(%arg0: i32) -> (i32, i32) {
    %c0_i32 = arith.constant 0 : i32
    %c0_i32_0 = arith.constant 0 : i32
    %c0_i32_1 = arith.constant 0 : i32
    return %c0_i32, %c0_i32_0 : i32, i32
  }
  func.func @transform_4(%arg0: i32) -> (i32, i32, i32, i32) {
    %c0_i32 = arith.constant 0 : i32
    %c0_i32_0 = arith.constant 0 : i32
    %c0_i32_1 = arith.constant 0 : i32
    %c0_i32_2 = arith.constant 0 : i32
    return %arg0, %c0_i32, %c0_i32_0, %c0_i32_1 : i32, i32, i32, i32
  }
}

module attributes {stable_mosaic.version = 11 : i64} {
  func.func @_matmul_bn_act_kernel(%arg0: i32, %arg1: i32, %arg2: memref<128x32xbf16, #tpu.memory_space<vmem>>, %arg3: memref<32x128xbf16, #tpu.memory_space<vmem>>, %arg4: memref<1x128xf32, #tpu.memory_space<vmem>>, %arg5: memref<1x128xf32, #tpu.memory_space<vmem>>, %arg6: memref<128x128xbf16, #tpu.memory_space<vmem>>) attributes {dimension_semantics = [#tpu.dimension_semantics<parallel>, #tpu.dimension_semantics<parallel>], iteration_bounds = array<i64: 1, 1>, scalar_prefetch = 0 : i64, scratch_operands = 0 : i64, tpu.core_type = #tpu.core_type<tc>, window_params = [{transform_indices = @transform_0, window_bounds = array<i64: 128, 32>}, {transform_indices = @transform_1, window_bounds = array<i64: 32, 128>}, {transform_indices = @transform_2, window_bounds = array<i64: 1, 128>}, {transform_indices = @transform_3, window_bounds = array<i64: 1, 128>}, {transform_indices = @transform_4, window_bounds = array<i64: 128, 128>}]} {
    %c0 = arith.constant 0 : index
    %c0_0 = arith.constant 0 : index
    %0 = vector.load %arg2[%c0, %c0_0] : memref<128x32xbf16, #tpu.memory_space<vmem>>, vector<128x32xbf16>
    %c0_1 = arith.constant 0 : index
    %c0_2 = arith.constant 0 : index
    %1 = vector.load %arg3[%c0_1, %c0_2] : memref<32x128xbf16, #tpu.memory_space<vmem>>, vector<32x128xbf16>
    %cst = arith.constant dense<0.000000e+00> : vector<128x128xf32>
    %2 = tpu.matmul %0, %1, %cst {dimension_numbers = #tpu.dot_dimension_numbers<[1], [0], [0], [1], [0, 0, 1, 1], [], []>} : vector<128x32xbf16>, vector<32x128xbf16>, vector<128x128xf32> -> vector<128x128xf32>
    %c0_3 = arith.constant 0 : index
    %c0_4 = arith.constant 0 : index
    %3 = vector.load %arg4[%c0_3, %c0_4] : memref<1x128xf32, #tpu.memory_space<vmem>>, vector<1x128xf32>
    %4 = vector.broadcast %3 : vector<1x128xf32> to vector<128x128xf32>
    %5 = arith.mulf %2, %4 : vector<128x128xf32>
    %c0_5 = arith.constant 0 : index
    %c0_6 = arith.constant 0 : index
    %6 = vector.load %arg5[%c0_5, %c0_6] : memref<1x128xf32, #tpu.memory_space<vmem>>, vector<1x128xf32>
    %7 = vector.broadcast %6 : vector<1x128xf32> to vector<128x128xf32>
    %8 = arith.addf %5, %7 : vector<128x128xf32>
    %9 = arith.negf %8 : vector<128x128xf32>
    %10 = math.exp %9 : vector<128x128xf32>
    %cst_7 = arith.constant 1.000000e+00 : f32
    %11 = vector.broadcast %cst_7 : f32 to vector<128x128xf32>
    %12 = arith.addf %11, %10 : vector<128x128xf32>
    %13 = arith.divf %11, %12 : vector<128x128xf32>
    %14 = arith.mulf %8, %13 : vector<128x128xf32>
    %15 = arith.truncf %14 : vector<128x128xf32> to vector<128x128xbf16>
    %c0_8 = arith.constant 0 : index
    %c0_9 = arith.constant 0 : index
    %16 = vector.load %arg6[%c0_8, %c0_9] : memref<128x128xbf16, #tpu.memory_space<vmem>>, vector<128x128xbf16>
    tpu.vector_store %arg6[%c0_8, %c0_9], %15 {strides = array<i32>} : memref<128x128xbf16, #tpu.memory_space<vmem>>, vector<128x128xbf16>,
    return
  }
  func.func @transform_0(%arg0: i32, %arg1: i32) -> (i32, i32) {
    %c0_i32 = arith.constant 0 : i32
    %c0_i32_0 = arith.constant 0 : i32
    return %arg0, %c0_i32 : i32, i32
  }
  func.func @transform_1(%arg0: i32, %arg1: i32) -> (i32, i32) {
    %c0_i32 = arith.constant 0 : i32
    %c0_i32_0 = arith.constant 0 : i32
    return %c0_i32, %arg1 : i32, i32
  }
  func.func @transform_2(%arg0: i32, %arg1: i32) -> (i32, i32) {
    %c0_i32 = arith.constant 0 : i32
    %c0_i32_0 = arith.constant 0 : i32
    return %c0_i32, %arg1 : i32, i32
  }
  func.func @transform_3(%arg0: i32, %arg1: i32) -> (i32, i32) {
    %c0_i32 = arith.constant 0 : i32
    %c0_i32_0 = arith.constant 0 : i32
    return %c0_i32, %arg1 : i32, i32
  }
  func.func @transform_4(%arg0: i32, %arg1: i32) -> (i32, i32) {
    %c0_i32 = arith.constant 0 : i32
    return %arg0, %arg1 : i32, i32
  }
}

module attributes {stable_mosaic.version = 11 : i64} {
  func.func @_dwconv_s1_kernel(%arg0: i32, %arg1: memref<1x8x8x128xbf16, #tpu.memory_space<vmem>>, %arg2: memref<3x3x128xbf16, #tpu.memory_space<vmem>>, %arg3: memref<1x128xf32, #tpu.memory_space<vmem>>, %arg4: memref<1x128xf32, #tpu.memory_space<vmem>>, %arg5: memref<128x8xf32, #tpu.memory_space<vmem>>, %arg6: memref<1x8xf32, #tpu.memory_space<vmem>>, %arg7: memref<8x128xf32, #tpu.memory_space<vmem>>, %arg8: memref<1x128xf32, #tpu.memory_space<vmem>>, %arg9: memref<1x8x8x128xbf16, #tpu.memory_space<vmem>>, %arg10: memref<1x1x128xf32, #tpu.memory_space<vmem>>, %arg11: memref<10x17x128xbf16, #tpu.memory_space<vmem>>) attributes {dimension_semantics = [#tpu.dimension_semantics<parallel>], iteration_bounds = array<i64: 2>, scalar_prefetch = 0 : i64, scratch_operands = 1 : i64, tpu.core_type = #tpu.core_type<tc>, window_params = [{transform_indices = @transform_0, window_bounds = array<i64: 1, 8, 8, 128>}, {pipeline_mode = #tpu.pipeline_mode<synchronous>, transform_indices = @transform_1, window_bounds = array<i64: 3, 3, 128>}, {pipeline_mode = #tpu.pipeline_mode<synchronous>, transform_indices = @transform_2, window_bounds = array<i64: 1, 128>}, {pipeline_mode = #tpu.pipeline_mode<synchronous>, transform_indices = @transform_3, window_bounds = array<i64: 1, 128>}, {pipeline_mode = #tpu.pipeline_mode<synchronous>, transform_indices = @transform_4, window_bounds = array<i64: 128, 8>}, {pipeline_mode = #tpu.pipeline_mode<synchronous>, transform_indices = @transform_5, window_bounds = array<i64: 1, 8>}, {pipeline_mode = #tpu.pipeline_mode<synchronous>, transform_indices = @transform_6, window_bounds = array<i64: 8, 128>}, {pipeline_mode = #tpu.pipeline_mode<synchronous>, transform_indices = @transform_7, window_bounds = array<i64: 1, 128>}, {transform_indices = @transform_8, window_bounds = array<i64: 1, 8, 8, 128>}, {transform_indices = @transform_9, window_bounds = array<i64: 1, 1, 128>}]} {
    %cst = arith.constant 0.000000e+00 : bf16
    %0 = vector.broadcast %cst : bf16 to vector<10x17x128xbf16>
    %c0 = arith.constant 0 : index
    %c0_0 = arith.constant 0 : index
    %c0_1 = arith.constant 0 : index
    %1 = vector.load %arg11[%c0, %c0_0, %c0_1] : memref<10x17x128xbf16, #tpu.memory_space<vmem>>, vector<10x17x128xbf16>
    tpu.vector_store %arg11[%c0, %c0_0, %c0_1], %0 {strides = array<i32>} : memref<10x17x128xbf16, #tpu.memory_space<vmem>>, vector<10x17x128xbf16>,
    %c0_2 = arith.constant 0 : index
    %c0_3 = arith.constant 0 : index
    %c0_4 = arith.constant 0 : index
    %c0_5 = arith.constant 0 : index
    %2 = vector.load %arg1[%c0_2, %c0_3, %c0_4, %c0_5] : memref<1x8x8x128xbf16, #tpu.memory_space<vmem>>, vector<1x8x8x128xbf16>
    %3 = vector.shape_cast %2 : vector<1x8x8x128xbf16> to vector<8x8x128xbf16>
    %c1 = arith.constant 1 : index
    %c8 = arith.constant 8 : index
    %c0_6 = arith.constant 0 : index
    %4 = vector.load %arg11[%c1, %c8, %c0_6] : memref<10x17x128xbf16, #tpu.memory_space<vmem>>, vector<8x8x128xbf16>
    tpu.vector_store %arg11[%c1, %c8, %c0_6], %3 {strides = array<i32>} : memref<10x17x128xbf16, #tpu.memory_space<vmem>>, vector<8x8x128xbf16>,
    %c0_7 = arith.constant 0 : index
    %c0_8 = arith.constant 0 : index
    %c0_9 = arith.constant 0 : index
    %5 = vector.load %arg11[%c0_7, %c0_8, %c0_9] : memref<10x17x128xbf16, #tpu.memory_space<vmem>>, vector<10x17x128xbf16>
    %c0_10 = arith.constant 0 : index
    %c0_11 = arith.constant 0 : index
    %c0_12 = arith.constant 0 : index
    %6 = vector.load %arg2[%c0_10, %c0_11, %c0_12] : memref<3x3x128xbf16, #tpu.memory_space<vmem>>, vector<3x3x128xbf16>
    %7 = vector.extract_strided_slice %5 {offsets = [0, 7, 0], sizes = [10, 8, 128], strides = [1, 1, 1]} : vector<10x17x128xbf16> to vector<10x8x128xbf16>
    %8 = vector.extract_strided_slice %5 {offsets = [0, 8, 0], sizes = [10, 8, 128], strides = [1, 1, 1]} : vector<10x17x128xbf16> to vector<10x8x128xbf16>
    %9 = vector.extract_strided_slice %5 {offsets = [0, 9, 0], sizes = [10, 8, 128], strides = [1, 1, 1]} : vector<10x17x128xbf16> to vector<10x8x128xbf16>
    %cst_13 = arith.constant 0.000000e+00 : f32
    %10 = vector.broadcast %cst_13 : f32 to vector<8x8x128xf32>
    %11 = vector.extract_strided_slice %7 {offsets = [0, 0, 0], sizes = [8, 8, 128], strides = [1, 1, 1]} : vector<10x8x128xbf16> to vector<8x8x128xbf16>
    %12 = vector.extract_strided_slice %6 {offsets = [0, 0, 0], sizes = [1, 1, 128], strides = [1, 1, 1]} : vector<3x3x128xbf16> to vector<1x1x128xbf16>
    %13 = vector.shape_cast %12 : vector<1x1x128xbf16> to vector<128xbf16>
    %14 = vector.shape_cast %13 : vector<128xbf16> to vector<1x1x128xbf16>
    %15 = vector.broadcast %14 : vector<1x1x128xbf16> to vector<8x8x128xbf16>
    %16 = arith.mulf %11, %15 : vector<8x8x128xbf16>
    %17 = arith.extf %16 : vector<8x8x128xbf16> to vector<8x8x128xf32>
    %18 = arith.addf %10, %17 : vector<8x8x128xf32>
    %19 = vector.extract_strided_slice %8 {offsets = [0, 0, 0], sizes = [8, 8, 128], strides = [1, 1, 1]} : vector<10x8x128xbf16> to vector<8x8x128xbf16>
    %20 = vector.extract_strided_slice %6 {offsets = [0, 1, 0], sizes = [1, 1, 128], strides = [1, 1, 1]} : vector<3x3x128xbf16> to vector<1x1x128xbf16>
    %21 = vector.shape_cast %20 : vector<1x1x128xbf16> to vector<128xbf16>
    %22 = vector.shape_cast %21 : vector<128xbf16> to vector<1x1x128xbf16>
    %23 = vector.broadcast %22 : vector<1x1x128xbf16> to vector<8x8x128xbf16>
    %24 = arith.mulf %19, %23 : vector<8x8x128xbf16>
    %25 = arith.extf %24 : vector<8x8x128xbf16> to vector<8x8x128xf32>
    %26 = arith.addf %18, %25 : vector<8x8x128xf32>
    %27 = vector.extract_strided_slice %9 {offsets = [0, 0, 0], sizes = [8, 8, 128], strides = [1, 1, 1]} : vector<10x8x128xbf16> to vector<8x8x128xbf16>
    %28 = vector.extract_strided_slice %6 {offsets = [0, 2, 0], sizes = [1, 1, 128], strides = [1, 1, 1]} : vector<3x3x128xbf16> to vector<1x1x128xbf16>
    %29 = vector.shape_cast %28 : vector<1x1x128xbf16> to vector<128xbf16>
    %30 = vector.shape_cast %29 : vector<128xbf16> to vector<1x1x128xbf16>
    %31 = vector.broadcast %30 : vector<1x1x128xbf16> to vector<8x8x128xbf16>
    %32 = arith.mulf %27, %31 : vector<8x8x128xbf16>
    %33 = arith.extf %32 : vector<8x8x128xbf16> to vector<8x8x128xf32>
    %34 = arith.addf %26, %33 : vector<8x8x128xf32>
    %35 = vector.extract_strided_slice %7 {offsets = [1, 0, 0], sizes = [8, 8, 128], strides = [1, 1, 1]} : vector<10x8x128xbf16> to vector<8x8x128xbf16>
    %36 = vector.extract_strided_slice %6 {offsets = [1, 0, 0], sizes = [1, 1, 128], strides = [1, 1, 1]} : vector<3x3x128xbf16> to vector<1x1x128xbf16>
    %37 = vector.shape_cast %36 : vector<1x1x128xbf16> to vector<128xbf16>
    %38 = vector.shape_cast %37 : vector<128xbf16> to vector<1x1x128xbf16>
    %39 = vector.broadcast %38 : vector<1x1x128xbf16> to vector<8x8x128xbf16>
    %40 = arith.mulf %35, %39 : vector<8x8x128xbf16>
    %41 = arith.extf %40 : vector<8x8x128xbf16> to vector<8x8x128xf32>
    %42 = arith.addf %34, %41 : vector<8x8x128xf32>
    %43 = vector.extract_strided_slice %8 {offsets = [1, 0, 0], sizes = [8, 8, 128], strides = [1, 1, 1]} : vector<10x8x128xbf16> to vector<8x8x128xbf16>
    %44 = vector.extract_strided_slice %6 {offsets = [1, 1, 0], sizes = [1, 1, 128], strides = [1, 1, 1]} : vector<3x3x128xbf16> to vector<1x1x128xbf16>
    %45 = vector.shape_cast %44 : vector<1x1x128xbf16> to vector<128xbf16>
    %46 = vector.shape_cast %45 : vector<128xbf16> to vector<1x1x128xbf16>
    %47 = vector.broadcast %46 : vector<1x1x128xbf16> to vector<8x8x128xbf16>
    %48 = arith.mulf %43, %47 : vector<8x8x128xbf16>
    %49 = arith.extf %48 : vector<8x8x128xbf16> to vector<8x8x128xf32>
    %50 = arith.addf %42, %49 : vector<8x8x128xf32>
    %51 = vector.extract_strided_slice %9 {offsets = [1, 0, 0], sizes = [8, 8, 128], strides = [1, 1, 1]} : vector<10x8x128xbf16> to vector<8x8x128xbf16>
    %52 = vector.extract_strided_slice %6 {offsets = [1, 2, 0], sizes = [1, 1, 128], strides = [1, 1, 1]} : vector<3x3x128xbf16> to vector<1x1x128xbf16>
    %53 = vector.shape_cast %52 : vector<1x1x128xbf16> to vector<128xbf16>
    %54 = vector.shape_cast %53 : vector<128xbf16> to vector<1x1x128xbf16>
    %55 = vector.broadcast %54 : vector<1x1x128xbf16> to vector<8x8x128xbf16>
    %56 = arith.mulf %51, %55 : vector<8x8x128xbf16>
    %57 = arith.extf %56 : vector<8x8x128xbf16> to vector<8x8x128xf32>
    %58 = arith.addf %50, %57 : vector<8x8x128xf32>
    %59 = vector.extract_strided_slice %7 {offsets = [2, 0, 0], sizes = [8, 8, 128], strides = [1, 1, 1]} : vector<10x8x128xbf16> to vector<8x8x128xbf16>
    %60 = vector.extract_strided_slice %6 {offsets = [2, 0, 0], sizes = [1, 1, 128], strides = [1, 1, 1]} : vector<3x3x128xbf16> to vector<1x1x128xbf16>
    %61 = vector.shape_cast %60 : vector<1x1x128xbf16> to vector<128xbf16>
    %62 = vector.shape_cast %61 : vector<128xbf16> to vector<1x1x128xbf16>
    %63 = vector.broadcast %62 : vector<1x1x128xbf16> to vector<8x8x128xbf16>
    %64 = arith.mulf %59, %63 : vector<8x8x128xbf16>
    %65 = arith.extf %64 : vector<8x8x128xbf16> to vector<8x8x128xf32>
    %66 = arith.addf %58, %65 : vector<8x8x128xf32>
    %67 = vector.extract_strided_slice %8 {offsets = [2, 0, 0], sizes = [8, 8, 128], strides = [1, 1, 1]} : vector<10x8x128xbf16> to vector<8x8x128xbf16>
    %68 = vector.extract_strided_slice %6 {offsets = [2, 1, 0], sizes = [1, 1, 128], strides = [1, 1, 1]} : vector<3x3x128xbf16> to vector<1x1x128xbf16>
    %69 = vector.shape_cast %68 : vector<1x1x128xbf16> to vector<128xbf16>
    %70 = vector.shape_cast %69 : vector<128xbf16> to vector<1x1x128xbf16>
    %71 = vector.broadcast %70 : vector<1x1x128xbf16> to vector<8x8x128xbf16>
    %72 = arith.mulf %67, %71 : vector<8x8x128xbf16>
    %73 = arith.extf %72 : vector<8x8x128xbf16> to vector<8x8x128xf32>
    %74 = arith.addf %66, %73 : vector<8x8x128xf32>
    %75 = vector.extract_strided_slice %9 {offsets = [2, 0, 0], sizes = [8, 8, 128], strides = [1, 1, 1]} : vector<10x8x128xbf16> to vector<8x8x128xbf16>
    %76 = vector.extract_strided_slice %6 {offsets = [2, 2, 0], sizes = [1, 1, 128], strides = [1, 1, 1]} : vector<3x3x128xbf16> to vector<1x1x128xbf16>
    %77 = vector.shape_cast %76 : vector<1x1x128xbf16> to vector<128xbf16>
    %78 = vector.shape_cast %77 : vector<128xbf16> to vector<1x1x128xbf16>
    %79 = vector.broadcast %78 : vector<1x1x128xbf16> to vector<8x8x128xbf16>
    %80 = arith.mulf %75, %79 : vector<8x8x128xbf16>
    %81 = arith.extf %80 : vector<8x8x128xbf16> to vector<8x8x128xf32>
    %82 = arith.addf %74, %81 : vector<8x8x128xf32>
    %c0_14 = arith.constant 0 : index
    %c0_15 = arith.constant 0 : index
    %83 = vector.load %arg3[%c0_14, %c0_15] : memref<1x128xf32, #tpu.memory_space<vmem>>, vector<1x128xf32>
    %84 = vector.shape_cast %83 : vector<1x128xf32> to vector<1x1x128xf32>
    %85 = vector.broadcast %84 : vector<1x1x128xf32> to vector<8x8x128xf32>
    %86 = arith.mulf %82, %85 : vector<8x8x128xf32>
    %c0_16 = arith.constant 0 : index
    %c0_17 = arith.constant 0 : index
    %87 = vector.load %arg4[%c0_16, %c0_17] : memref<1x128xf32, #tpu.memory_space<vmem>>, vector<1x128xf32>
    %88 = vector.shape_cast %87 : vector<1x128xf32> to vector<1x1x128xf32>
    %89 = vector.broadcast %88 : vector<1x1x128xf32> to vector<8x8x128xf32>
    %90 = arith.addf %86, %89 : vector<8x8x128xf32>
    %91 = arith.negf %90 : vector<8x8x128xf32>
    %92 = math.exp %91 : vector<8x8x128xf32>
    %cst_18 = arith.constant 1.000000e+00 : f32
    %93 = vector.broadcast %cst_18 : f32 to vector<8x8x128xf32>
    %94 = arith.addf %93, %92 : vector<8x8x128xf32>
    %95 = arith.divf %93, %94 : vector<8x8x128xf32>
    %96 = arith.mulf %90, %95 : vector<8x8x128xf32>
    %97 = arith.truncf %96 : vector<8x8x128xf32> to vector<8x8x128xbf16>
    %c0_19 = arith.constant 0 : index
    %c0_20 = arith.constant 0 : index
    %c0_21 = arith.constant 0 : index
    %c0_22 = arith.constant 0 : index
    %98 = vector.load %arg9[%c0_19, %c0_20, %c0_21, %c0_22] : memref<1x8x8x128xbf16, #tpu.memory_space<vmem>>, vector<1x8x8x128xbf16>
    %99 = vector.shape_cast %98 : vector<1x8x8x128xbf16> to vector<8x8x128xbf16>
    %100 = vector.shape_cast %97 : vector<8x8x128xbf16> to vector<1x8x8x128xbf16>
    tpu.vector_store %arg9[%c0_19, %c0_20, %c0_21, %c0_22], %100 {strides = array<i32>} : memref<1x8x8x128xbf16, #tpu.memory_space<vmem>>, vector<1x8x8x128xbf16>,
    %cst_23 = arith.constant dense<0.000000e+00> : vector<128xf32>
    %101 = vector.multi_reduction <add>, %96, %cst_23 [0, 1] : vector<8x8x128xf32> to vector<128xf32>
    %102 = vector.shape_cast %101 : vector<128xf32> to vector<1x1x128xf32>
    %cst_24 = arith.constant 6.400000e+01 : f32
    %103 = vector.broadcast %cst_24 : f32 to vector<1x1x128xf32>
    %104 = arith.divf %102, %103 : vector<1x1x128xf32>
    %105 = vector.shape_cast %104 : vector<1x1x128xf32> to vector<1x128xf32>
    %c0_25 = arith.constant 0 : index
    %c0_26 = arith.constant 0 : index
    %106 = vector.load %arg5[%c0_25, %c0_26] : memref<128x8xf32, #tpu.memory_space<vmem>>, vector<128x8xf32>
    %cst_27 = arith.constant dense<0.000000e+00> : vector<1x8xf32>
    %107 = tpu.matmul %105, %106, %cst_27 {dimension_numbers = #tpu.dot_dimension_numbers<[1], [0], [0], [1], [0, 0, 1, 1], [], []>} : vector<1x128xf32>, vector<128x8xf32>, vector<1x8xf32> -> vector<1x8xf32>
    %c0_28 = arith.constant 0 : index
    %c0_29 = arith.constant 0 : index
    %108 = vector.load %arg6[%c0_28, %c0_29] : memref<1x8xf32, #tpu.memory_space<vmem>>, vector<1x8xf32>
    %109 = arith.addf %107, %108 : vector<1x8xf32>
    %110 = arith.negf %109 : vector<1x8xf32>
    %111 = math.exp %110 : vector<1x8xf32>
    %cst_30 = arith.constant 1.000000e+00 : f32
    %112 = vector.broadcast %cst_30 : f32 to vector<1x8xf32>
    %113 = arith.addf %112, %111 : vector<1x8xf32>
    %114 = arith.divf %112, %113 : vector<1x8xf32>
    %115 = arith.mulf %109, %114 : vector<1x8xf32>
    %c0_31 = arith.constant 0 : index
    %c0_32 = arith.constant 0 : index
    %116 = vector.load %arg7[%c0_31, %c0_32] : memref<8x128xf32, #tpu.memory_space<vmem>>, vector<8x128xf32>
    %cst_33 = arith.constant dense<0.000000e+00> : vector<1x128xf32>
    %117 = tpu.matmul %115, %116, %cst_33 {dimension_numbers = #tpu.dot_dimension_numbers<[1], [0], [0], [1], [0, 0, 1, 1], [], []>} : vector<1x8xf32>, vector<8x128xf32>, vector<1x128xf32> -> vector<1x128xf32>
    %c0_34 = arith.constant 0 : index
    %c0_35 = arith.constant 0 : index
    %118 = vector.load %arg8[%c0_34, %c0_35] : memref<1x128xf32, #tpu.memory_space<vmem>>, vector<1x128xf32>
    %119 = arith.addf %117, %118 : vector<1x128xf32>
    %120 = arith.negf %119 : vector<1x128xf32>
    %121 = math.exp %120 : vector<1x128xf32>
    %cst_36 = arith.constant 1.000000e+00 : f32
    %122 = vector.broadcast %cst_36 : f32 to vector<1x128xf32>
    %123 = arith.addf %122, %121 : vector<1x128xf32>
    %124 = arith.divf %122, %123 : vector<1x128xf32>
    %c0_37 = arith.constant 0 : index
    %c0_38 = arith.constant 0 : index
    %c0_39 = arith.constant 0 : index
    %125 = vector.load %arg10[%c0_37, %c0_38, %c0_39] : memref<1x1x128xf32, #tpu.memory_space<vmem>>, vector<1x1x128xf32>
    %126 = vector.shape_cast %125 : vector<1x1x128xf32> to vector<1x128xf32>
    %127 = vector.shape_cast %124 : vector<1x128xf32> to vector<1x1x128xf32>
    tpu.vector_store %arg10[%c0_37, %c0_38, %c0_39], %127 {strides = array<i32>} : memref<1x1x128xf32, #tpu.memory_space<vmem>>, vector<1x1x128xf32>,
    return
  }
  func.func @transform_0(%arg0: i32) -> (i32, i32, i32, i32) {
    %c0_i32 = arith.constant 0 : i32
    %c0_i32_0 = arith.constant 0 : i32
    %c0_i32_1 = arith.constant 0 : i32
    %c0_i32_2 = arith.constant 0 : i32
    return %arg0, %c0_i32, %c0_i32_0, %c0_i32_1 : i32, i32, i32, i32
  }
  func.func @transform_1(%arg0: i32) -> (i32, i32, i32) {
    %c0_i32 = arith.constant 0 : i32
    %c0_i32_0 = arith.constant 0 : i32
    %c0_i32_1 = arith.constant 0 : i32
    %c0_i32_2 = arith.constant 0 : i32
    return %c0_i32, %c0_i32_0, %c0_i32_1 : i32, i32, i32
  }
  func.func @transform_2(%arg0: i32) -> (i32, i32) {
    %c0_i32 = arith.constant 0 : i32
    %c0_i32_0 = arith.constant 0 : i32
    %c0_i32_1 = arith.constant 0 : i32
    return %c0_i32, %c0_i32_0 : i32, i32
  }
  func.func @transform_3(%arg0: i32) -> (i32, i32) {
    %c0_i32 = arith.constant 0 : i32
    %c0_i32_0 = arith.constant 0 : i32
    %c0_i32_1 = arith.constant 0 : i32
    return %c0_i32, %c0_i32_0 : i32, i32
  }
  func.func @transform_4(%arg0: i32) -> (i32, i32) {
    %c0_i32 = arith.constant 0 : i32
    %c0_i32_0 = arith.constant 0 : i32
    %c0_i32_1 = arith.constant 0 : i32
    return %c0_i32, %c0_i32_0 : i32, i32
  }
  func.func @transform_5(%arg0: i32) -> (i32, i32) {
    %c0_i32 = arith.constant 0 : i32
    %c0_i32_0 = arith.constant 0 : i32
    %c0_i32_1 = arith.constant 0 : i32
    return %c0_i32, %c0_i32_0 : i32, i32
  }
  func.func @transform_6(%arg0: i32) -> (i32, i32) {
    %c0_i32 = arith.constant 0 : i32
    %c0_i32_0 = arith.constant 0 : i32
    %c0_i32_1 = arith.constant 0 : i32
    return %c0_i32, %c0_i32_0 : i32, i32
  }
  func.func @transform_7(%arg0: i32) -> (i32, i32) {
    %c0_i32 = arith.constant 0 : i32
    %c0_i32_0 = arith.constant 0 : i32
    %c0_i32_1 = arith.constant 0 : i32
    return %c0_i32, %c0_i32_0 : i32, i32
  }
  func.func @transform_8(%arg0: i32) -> (i32, i32, i32, i32) {
    %c0_i32 = arith.constant 0 : i32
    %c0_i32_0 = arith.constant 0 : i32
    %c0_i32_1 = arith.constant 0 : i32
    %c0_i32_2 = arith.constant 0 : i32
    return %arg0, %c0_i32, %c0_i32_0, %c0_i32_1 : i32, i32, i32, i32
  }
  func.func @transform_9(%arg0: i32) -> (i32, i32, i32) {
    %c0_i32 = arith.constant 0 : i32
    %c0_i32_0 = arith.constant 0 : i32
    %c0_i32_1 = arith.constant 0 : i32
    return %arg0, %c0_i32, %c0_i32_0 : i32, i32, i32
  }
}

module attributes {stable_mosaic.version = 11 : i64} {
  func.func @_project_kernel(%arg0: i32, %arg1: memref<1x64x128xbf16, #tpu.memory_space<vmem>>, %arg2: memref<1x1x128xf32, #tpu.memory_space<vmem>>, %arg3: memref<128x32xbf16, #tpu.memory_space<vmem>>, %arg4: memref<1x32xf32, #tpu.memory_space<vmem>>, %arg5: memref<1x32xf32, #tpu.memory_space<vmem>>, %arg6: memref<1x64x32xbf16, #tpu.memory_space<vmem>>, %arg7: memref<1x64x32xbf16, #tpu.memory_space<vmem>>) attributes {dimension_semantics = [#tpu.dimension_semantics<parallel>], iteration_bounds = array<i64: 2>, scalar_prefetch = 0 : i64, scratch_operands = 0 : i64, tpu.core_type = #tpu.core_type<tc>, window_params = [{transform_indices = @transform_0, window_bounds = array<i64: 1, 64, 128>}, {transform_indices = @transform_1, window_bounds = array<i64: 1, 1, 128>}, {pipeline_mode = #tpu.pipeline_mode<synchronous>, transform_indices = @transform_2, window_bounds = array<i64: 128, 32>}, {pipeline_mode = #tpu.pipeline_mode<synchronous>, transform_indices = @transform_3, window_bounds = array<i64: 1, 32>}, {pipeline_mode = #tpu.pipeline_mode<synchronous>, transform_indices = @transform_4, window_bounds = array<i64: 1, 32>}, {transform_indices = @transform_5, window_bounds = array<i64: 1, 64, 32>}, {transform_indices = @transform_6, window_bounds = array<i64: 1, 64, 32>}]} {
    %c0 = arith.constant 0 : index
    %c0_0 = arith.constant 0 : index
    %c0_1 = arith.constant 0 : index
    %0 = vector.load %arg1[%c0, %c0_0, %c0_1] : memref<1x64x128xbf16, #tpu.memory_space<vmem>>, vector<1x64x128xbf16>
    %1 = vector.shape_cast %0 : vector<1x64x128xbf16> to vector<64x128xbf16>
    %c0_2 = arith.constant 0 : index
    %c0_3 = arith.constant 0 : index
    %c0_4 = arith.constant 0 : index
    %2 = vector.load %arg2[%c0_2, %c0_3, %c0_4] : memref<1x1x128xf32, #tpu.memory_space<vmem>>, vector<1x1x128xf32>
    %3 = vector.shape_cast %2 : vector<1x1x128xf32> to vector<1x128xf32>
    %4 = arith.truncf %3 : vector<1x128xf32> to vector<1x128xbf16>
    %5 = vector.broadcast %4 : vector<1x128xbf16> to vector<64x128xbf16>
    %6 = arith.mulf %1, %5 : vector<64x128xbf16>
    %c0_5 = arith.constant 0 : index
    %c0_6 = arith.constant 0 : index
    %7 = vector.load %arg3[%c0_5, %c0_6] : memref<128x32xbf16, #tpu.memory_space<vmem>>, vector<128x32xbf16>
    %cst = arith.constant dense<0.000000e+00> : vector<64x32xf32>
    %8 = tpu.matmul %6, %7, %cst {dimension_numbers = #tpu.dot_dimension_numbers<[1], [0], [0], [1], [0, 0, 1, 1], [], []>} : vector<64x128xbf16>, vector<128x32xbf16>, vector<64x32xf32> -> vector<64x32xf32>
    %c0_7 = arith.constant 0 : index
    %c0_8 = arith.constant 0 : index
    %9 = vector.load %arg4[%c0_7, %c0_8] : memref<1x32xf32, #tpu.memory_space<vmem>>, vector<1x32xf32>
    %10 = vector.broadcast %9 : vector<1x32xf32> to vector<64x32xf32>
    %11 = arith.mulf %8, %10 : vector<64x32xf32>
    %c0_9 = arith.constant 0 : index
    %c0_10 = arith.constant 0 : index
    %12 = vector.load %arg5[%c0_9, %c0_10] : memref<1x32xf32, #tpu.memory_space<vmem>>, vector<1x32xf32>
    %13 = vector.broadcast %12 : vector<1x32xf32> to vector<64x32xf32>
    %14 = arith.addf %11, %13 : vector<64x32xf32>
    %c0_11 = arith.constant 0 : index
    %c0_12 = arith.constant 0 : index
    %c0_13 = arith.constant 0 : index
    %15 = vector.load %arg6[%c0_11, %c0_12, %c0_13] : memref<1x64x32xbf16, #tpu.memory_space<vmem>>, vector<1x64x32xbf16>
    %16 = vector.shape_cast %15 : vector<1x64x32xbf16> to vector<64x32xbf16>
    %17 = arith.extf %16 : vector<64x32xbf16> to vector<64x32xf32>
    %18 = arith.addf %14, %17 : vector<64x32xf32>
    %19 = arith.truncf %18 : vector<64x32xf32> to vector<64x32xbf16>
    %c0_14 = arith.constant 0 : index
    %c0_15 = arith.constant 0 : index
    %c0_16 = arith.constant 0 : index
    %20 = vector.load %arg7[%c0_14, %c0_15, %c0_16] : memref<1x64x32xbf16, #tpu.memory_space<vmem>>, vector<1x64x32xbf16>
    %21 = vector.shape_cast %20 : vector<1x64x32xbf16> to vector<64x32xbf16>
    %22 = vector.shape_cast %19 : vector<64x32xbf16> to vector<1x64x32xbf16>
    tpu.vector_store %arg7[%c0_14, %c0_15, %c0_16], %22 {strides = array<i32>} : memref<1x64x32xbf16, #tpu.memory_space<vmem>>, vector<1x64x32xbf16>,
    return
  }
  func.func @transform_0(%arg0: i32) -> (i32, i32, i32) {
    %c0_i32 = arith.constant 0 : i32
    %c0_i32_0 = arith.constant 0 : i32
    %c0_i32_1 = arith.constant 0 : i32
    return %arg0, %c0_i32, %c0_i32_0 : i32, i32, i32
  }
  func.func @transform_1(%arg0: i32) -> (i32, i32, i32) {
    %c0_i32 = arith.constant 0 : i32
    %c0_i32_0 = arith.constant 0 : i32
    %c0_i32_1 = arith.constant 0 : i32
    return %arg0, %c0_i32, %c0_i32_0 : i32, i32, i32
  }
  func.func @transform_2(%arg0: i32) -> (i32, i32) {
    %c0_i32 = arith.constant 0 : i32
    %c0_i32_0 = arith.constant 0 : i32
    %c0_i32_1 = arith.constant 0 : i32
    return %c0_i32, %c0_i32_0 : i32, i32
  }
  func.func @transform_3(%arg0: i32) -> (i32, i32) {
    %c0_i32 = arith.constant 0 : i32
    %c0_i32_0 = arith.constant 0 : i32
    %c0_i32_1 = arith.constant 0 : i32
    return %c0_i32, %c0_i32_0 : i32, i32
  }
  func.func @transform_4(%arg0: i32) -> (i32, i32) {
    %c0_i32 = arith.constant 0 : i32
    %c0_i32_0 = arith.constant 0 : i32
    %c0_i32_1 = arith.constant 0 : i32
    return %c0_i32, %c0_i32_0 : i32, i32
  }
  func.func @transform_5(%arg0: i32) -> (i32, i32, i32) {
    %c0_i32 = arith.constant 0 : i32
    %c0_i32_0 = arith.constant 0 : i32
    %c0_i32_1 = arith.constant 0 : i32
    return %arg0, %c0_i32, %c0_i32_0 : i32, i32, i32
  }
  func.func @transform_6(%arg0: i32) -> (i32, i32, i32) {
    %c0_i32 = arith.constant 0 : i32
    %c0_i32_0 = arith.constant 0 : i32
    %c0_i32_1 = arith.constant 0 : i32
    return %arg0, %c0_i32, %c0_i32_0 : i32, i32, i32
  }
}

module attributes {stable_mosaic.version = 11 : i64} {
  func.func @_dwconv_s2_kernel(%arg0: i32, %arg1: memref<4x5x5x128xbf16, #tpu.memory_space<vmem>>, %arg2: memref<3x3x128xbf16, #tpu.memory_space<vmem>>, %arg3: memref<1x128xf32, #tpu.memory_space<vmem>>, %arg4: memref<1x128xf32, #tpu.memory_space<vmem>>, %arg5: memref<128x8xf32, #tpu.memory_space<vmem>>, %arg6: memref<1x8xf32, #tpu.memory_space<vmem>>, %arg7: memref<8x128xf32, #tpu.memory_space<vmem>>, %arg8: memref<1x128xf32, #tpu.memory_space<vmem>>, %arg9: memref<1x4x4x128xbf16, #tpu.memory_space<vmem>>, %arg10: memref<1x1x128xf32, #tpu.memory_space<vmem>>) attributes {dimension_semantics = [#tpu.dimension_semantics<parallel>], iteration_bounds = array<i64: 2>, scalar_prefetch = 0 : i64, scratch_operands = 0 : i64, tpu.core_type = #tpu.core_type<tc>, window_params = [{transform_indices = @transform_0, window_bounds = array<i64: 4, 5, 5, 128>}, {pipeline_mode = #tpu.pipeline_mode<synchronous>, transform_indices = @transform_1, window_bounds = array<i64: 3, 3, 128>}, {pipeline_mode = #tpu.pipeline_mode<synchronous>, transform_indices = @transform_2, window_bounds = array<i64: 1, 128>}, {pipeline_mode = #tpu.pipeline_mode<synchronous>, transform_indices = @transform_3, window_bounds = array<i64: 1, 128>}, {pipeline_mode = #tpu.pipeline_mode<synchronous>, transform_indices = @transform_4, window_bounds = array<i64: 128, 8>}, {pipeline_mode = #tpu.pipeline_mode<synchronous>, transform_indices = @transform_5, window_bounds = array<i64: 1, 8>}, {pipeline_mode = #tpu.pipeline_mode<synchronous>, transform_indices = @transform_6, window_bounds = array<i64: 8, 128>}, {pipeline_mode = #tpu.pipeline_mode<synchronous>, transform_indices = @transform_7, window_bounds = array<i64: 1, 128>}, {transform_indices = @transform_8, window_bounds = array<i64: 1, 4, 4, 128>}, {transform_indices = @transform_9, window_bounds = array<i64: 1, 1, 128>}]} {
    %c0 = arith.constant 0 : index
    %c0_0 = arith.constant 0 : index
    %c0_1 = arith.constant 0 : index
    %c0_2 = arith.constant 0 : index
    %0 = vector.load %arg1[%c0, %c0_0, %c0_1, %c0_2] : memref<4x5x5x128xbf16, #tpu.memory_space<vmem>>, vector<4x5x5x128xbf16>
    %c0_3 = arith.constant 0 : index
    %c0_4 = arith.constant 0 : index
    %c0_5 = arith.constant 0 : index
    %1 = vector.load %arg2[%c0_3, %c0_4, %c0_5] : memref<3x3x128xbf16, #tpu.memory_space<vmem>>, vector<3x3x128xbf16>
    %cst = arith.constant 0.000000e+00 : f32
    %2 = vector.broadcast %cst : f32 to vector<4x4x128xf32>
    %3 = vector.extract_strided_slice %0 {offsets = [0, 0, 0, 0], sizes = [1, 5, 4, 128], strides = [1, 1, 1, 1]} : vector<4x5x5x128xbf16> to vector<1x5x4x128xbf16>
    %4 = vector.shape_cast %3 : vector<1x5x4x128xbf16> to vector<5x4x128xbf16>
    %5 = vector.extract_strided_slice %4 {offsets = [0, 0, 0], sizes = [4, 4, 128], strides = [1, 1, 1]} : vector<5x4x128xbf16> to vector<4x4x128xbf16>
    %6 = vector.extract_strided_slice %1 {offsets = [0, 0, 0], sizes = [1, 1, 128], strides = [1, 1, 1]} : vector<3x3x128xbf16> to vector<1x1x128xbf16>
    %7 = vector.shape_cast %6 : vector<1x1x128xbf16> to vector<128xbf16>
    %8 = vector.shape_cast %7 : vector<128xbf16> to vector<1x1x128xbf16>
    %9 = vector.broadcast %8 : vector<1x1x128xbf16> to vector<4x4x128xbf16>
    %10 = arith.mulf %5, %9 : vector<4x4x128xbf16>
    %11 = arith.extf %10 : vector<4x4x128xbf16> to vector<4x4x128xf32>
    %12 = arith.addf %2, %11 : vector<4x4x128xf32>
    %13 = vector.extract_strided_slice %0 {offsets = [1, 0, 0, 0], sizes = [1, 5, 4, 128], strides = [1, 1, 1, 1]} : vector<4x5x5x128xbf16> to vector<1x5x4x128xbf16>
    %14 = vector.shape_cast %13 : vector<1x5x4x128xbf16> to vector<5x4x128xbf16>
    %15 = vector.extract_strided_slice %14 {offsets = [0, 0, 0], sizes = [4, 4, 128], strides = [1, 1, 1]} : vector<5x4x128xbf16> to vector<4x4x128xbf16>
    %16 = vector.extract_strided_slice %1 {offsets = [0, 1, 0], sizes = [1, 1, 128], strides = [1, 1, 1]} : vector<3x3x128xbf16> to vector<1x1x128xbf16>
    %17 = vector.shape_cast %16 : vector<1x1x128xbf16> to vector<128xbf16>
    %18 = vector.shape_cast %17 : vector<128xbf16> to vector<1x1x128xbf16>
    %19 = vector.broadcast %18 : vector<1x1x128xbf16> to vector<4x4x128xbf16>
    %20 = arith.mulf %15, %19 : vector<4x4x128xbf16>
    %21 = arith.extf %20 : vector<4x4x128xbf16> to vector<4x4x128xf32>
    %22 = arith.addf %12, %21 : vector<4x4x128xf32>
    %23 = vector.extract_strided_slice %0 {offsets = [0, 0, 1, 0], sizes = [1, 5, 4, 128], strides = [1, 1, 1, 1]} : vector<4x5x5x128xbf16> to vector<1x5x4x128xbf16>
    %24 = vector.shape_cast %23 : vector<1x5x4x128xbf16> to vector<5x4x128xbf16>
    %25 = vector.extract_strided_slice %24 {offsets = [0, 0, 0], sizes = [4, 4, 128], strides = [1, 1, 1]} : vector<5x4x128xbf16> to vector<4x4x128xbf16>
    %26 = vector.extract_strided_slice %1 {offsets = [0, 2, 0], sizes = [1, 1, 128], strides = [1, 1, 1]} : vector<3x3x128xbf16> to vector<1x1x128xbf16>
    %27 = vector.shape_cast %26 : vector<1x1x128xbf16> to vector<128xbf16>
    %28 = vector.shape_cast %27 : vector<128xbf16> to vector<1x1x128xbf16>
    %29 = vector.broadcast %28 : vector<1x1x128xbf16> to vector<4x4x128xbf16>
    %30 = arith.mulf %25, %29 : vector<4x4x128xbf16>
    %31 = arith.extf %30 : vector<4x4x128xbf16> to vector<4x4x128xf32>
    %32 = arith.addf %22, %31 : vector<4x4x128xf32>
    %33 = vector.extract_strided_slice %0 {offsets = [2, 0, 0, 0], sizes = [1, 5, 4, 128], strides = [1, 1, 1, 1]} : vector<4x5x5x128xbf16> to vector<1x5x4x128xbf16>
    %34 = vector.shape_cast %33 : vector<1x5x4x128xbf16> to vector<5x4x128xbf16>
    %35 = vector.extract_strided_slice %34 {offsets = [0, 0, 0], sizes = [4, 4, 128], strides = [1, 1, 1]} : vector<5x4x128xbf16> to vector<4x4x128xbf16>
    %36 = vector.extract_strided_slice %1 {offsets = [1, 0, 0], sizes = [1, 1, 128], strides = [1, 1, 1]} : vector<3x3x128xbf16> to vector<1x1x128xbf16>
    %37 = vector.shape_cast %36 : vector<1x1x128xbf16> to vector<128xbf16>
    %38 = vector.shape_cast %37 : vector<128xbf16> to vector<1x1x128xbf16>
    %39 = vector.broadcast %38 : vector<1x1x128xbf16> to vector<4x4x128xbf16>
    %40 = arith.mulf %35, %39 : vector<4x4x128xbf16>
    %41 = arith.extf %40 : vector<4x4x128xbf16> to vector<4x4x128xf32>
    %42 = arith.addf %32, %41 : vector<4x4x128xf32>
    %43 = vector.extract_strided_slice %0 {offsets = [3, 0, 0, 0], sizes = [1, 5, 4, 128], strides = [1, 1, 1, 1]} : vector<4x5x5x128xbf16> to vector<1x5x4x128xbf16>
    %44 = vector.shape_cast %43 : vector<1x5x4x128xbf16> to vector<5x4x128xbf16>
    %45 = vector.extract_strided_slice %44 {offsets = [0, 0, 0], sizes = [4, 4, 128], strides = [1, 1, 1]} : vector<5x4x128xbf16> to vector<4x4x128xbf16>
    %46 = vector.extract_strided_slice %1 {offsets = [1, 1, 0], sizes = [1, 1, 128], strides = [1, 1, 1]} : vector<3x3x128xbf16> to vector<1x1x128xbf16>
    %47 = vector.shape_cast %46 : vector<1x1x128xbf16> to vector<128xbf16>
    %48 = vector.shape_cast %47 : vector<128xbf16> to vector<1x1x128xbf16>
    %49 = vector.broadcast %48 : vector<1x1x128xbf16> to vector<4x4x128xbf16>
    %50 = arith.mulf %45, %49 : vector<4x4x128xbf16>
    %51 = arith.extf %50 : vector<4x4x128xbf16> to vector<4x4x128xf32>
    %52 = arith.addf %42, %51 : vector<4x4x128xf32>
    %53 = vector.extract_strided_slice %0 {offsets = [2, 0, 1, 0], sizes = [1, 5, 4, 128], strides = [1, 1, 1, 1]} : vector<4x5x5x128xbf16> to vector<1x5x4x128xbf16>
    %54 = vector.shape_cast %53 : vector<1x5x4x128xbf16> to vector<5x4x128xbf16>
    %55 = vector.extract_strided_slice %54 {offsets = [0, 0, 0], sizes = [4, 4, 128], strides = [1, 1, 1]} : vector<5x4x128xbf16> to vector<4x4x128xbf16>
    %56 = vector.extract_strided_slice %1 {offsets = [1, 2, 0], sizes = [1, 1, 128], strides = [1, 1, 1]} : vector<3x3x128xbf16> to vector<1x1x128xbf16>
    %57 = vector.shape_cast %56 : vector<1x1x128xbf16> to vector<128xbf16>
    %58 = vector.shape_cast %57 : vector<128xbf16> to vector<1x1x128xbf16>
    %59 = vector.broadcast %58 : vector<1x1x128xbf16> to vector<4x4x128xbf16>
    %60 = arith.mulf %55, %59 : vector<4x4x128xbf16>
    %61 = arith.extf %60 : vector<4x4x128xbf16> to vector<4x4x128xf32>
    %62 = arith.addf %52, %61 : vector<4x4x128xf32>
    %63 = vector.extract_strided_slice %4 {offsets = [1, 0, 0], sizes = [4, 4, 128], strides = [1, 1, 1]} : vector<5x4x128xbf16> to vector<4x4x128xbf16>
    %64 = vector.extract_strided_slice %1 {offsets = [2, 0, 0], sizes = [1, 1, 128], strides = [1, 1, 1]} : vector<3x3x128xbf16> to vector<1x1x128xbf16>
    %65 = vector.shape_cast %64 : vector<1x1x128xbf16> to vector<128xbf16>
    %66 = vector.shape_cast %65 : vector<128xbf16> to vector<1x1x128xbf16>
    %67 = vector.broadcast %66 : vector<1x1x128xbf16> to vector<4x4x128xbf16>
    %68 = arith.mulf %63, %67 : vector<4x4x128xbf16>
    %69 = arith.extf %68 : vector<4x4x128xbf16> to vector<4x4x128xf32>
    %70 = arith.addf %62, %69 : vector<4x4x128xf32>
    %71 = vector.extract_strided_slice %14 {offsets = [1, 0, 0], sizes = [4, 4, 128], strides = [1, 1, 1]} : vector<5x4x128xbf16> to vector<4x4x128xbf16>
    %72 = vector.extract_strided_slice %1 {offsets = [2, 1, 0], sizes = [1, 1, 128], strides = [1, 1, 1]} : vector<3x3x128xbf16> to vector<1x1x128xbf16>
    %73 = vector.shape_cast %72 : vector<1x1x128xbf16> to vector<128xbf16>
    %74 = vector.shape_cast %73 : vector<128xbf16> to vector<1x1x128xbf16>
    %75 = vector.broadcast %74 : vector<1x1x128xbf16> to vector<4x4x128xbf16>
    %76 = arith.mulf %71, %75 : vector<4x4x128xbf16>
    %77 = arith.extf %76 : vector<4x4x128xbf16> to vector<4x4x128xf32>
    %78 = arith.addf %70, %77 : vector<4x4x128xf32>
    %79 = vector.extract_strided_slice %24 {offsets = [1, 0, 0], sizes = [4, 4, 128], strides = [1, 1, 1]} : vector<5x4x128xbf16> to vector<4x4x128xbf16>
    %80 = vector.extract_strided_slice %1 {offsets = [2, 2, 0], sizes = [1, 1, 128], strides = [1, 1, 1]} : vector<3x3x128xbf16> to vector<1x1x128xbf16>
    %81 = vector.shape_cast %80 : vector<1x1x128xbf16> to vector<128xbf16>
    %82 = vector.shape_cast %81 : vector<128xbf16> to vector<1x1x128xbf16>
    %83 = vector.broadcast %82 : vector<1x1x128xbf16> to vector<4x4x128xbf16>
    %84 = arith.mulf %79, %83 : vector<4x4x128xbf16>
    %85 = arith.extf %84 : vector<4x4x128xbf16> to vector<4x4x128xf32>
    %86 = arith.addf %78, %85 : vector<4x4x128xf32>
    %c0_6 = arith.constant 0 : index
    %c0_7 = arith.constant 0 : index
    %87 = vector.load %arg3[%c0_6, %c0_7] : memref<1x128xf32, #tpu.memory_space<vmem>>, vector<1x128xf32>
    %88 = vector.shape_cast %87 : vector<1x128xf32> to vector<1x1x128xf32>
    %89 = vector.broadcast %88 : vector<1x1x128xf32> to vector<4x4x128xf32>
    %90 = arith.mulf %86, %89 : vector<4x4x128xf32>
    %c0_8 = arith.constant 0 : index
    %c0_9 = arith.constant 0 : index
    %91 = vector.load %arg4[%c0_8, %c0_9] : memref<1x128xf32, #tpu.memory_space<vmem>>, vector<1x128xf32>
    %92 = vector.shape_cast %91 : vector<1x128xf32> to vector<1x1x128xf32>
    %93 = vector.broadcast %92 : vector<1x1x128xf32> to vector<4x4x128xf32>
    %94 = arith.addf %90, %93 : vector<4x4x128xf32>
    %95 = arith.negf %94 : vector<4x4x128xf32>
    %96 = math.exp %95 : vector<4x4x128xf32>
    %cst_10 = arith.constant 1.000000e+00 : f32
    %97 = vector.broadcast %cst_10 : f32 to vector<4x4x128xf32>
    %98 = arith.addf %97, %96 : vector<4x4x128xf32>
    %99 = arith.divf %97, %98 : vector<4x4x128xf32>
    %100 = arith.mulf %94, %99 : vector<4x4x128xf32>
    %101 = arith.truncf %100 : vector<4x4x128xf32> to vector<4x4x128xbf16>
    %c0_11 = arith.constant 0 : index
    %c0_12 = arith.constant 0 : index
    %c0_13 = arith.constant 0 : index
    %c0_14 = arith.constant 0 : index
    %102 = vector.load %arg9[%c0_11, %c0_12, %c0_13, %c0_14] : memref<1x4x4x128xbf16, #tpu.memory_space<vmem>>, vector<1x4x4x128xbf16>
    %103 = vector.shape_cast %102 : vector<1x4x4x128xbf16> to vector<4x4x128xbf16>
    %104 = vector.shape_cast %101 : vector<4x4x128xbf16> to vector<1x4x4x128xbf16>
    tpu.vector_store %arg9[%c0_11, %c0_12, %c0_13, %c0_14], %104 {strides = array<i32>} : memref<1x4x4x128xbf16, #tpu.memory_space<vmem>>, vector<1x4x4x128xbf16>,
    %cst_15 = arith.constant dense<0.000000e+00> : vector<128xf32>
    %105 = vector.multi_reduction <add>, %100, %cst_15 [0, 1] : vector<4x4x128xf32> to vector<128xf32>
    %106 = vector.shape_cast %105 : vector<128xf32> to vector<1x1x128xf32>
    %cst_16 = arith.constant 1.600000e+01 : f32
    %107 = vector.broadcast %cst_16 : f32 to vector<1x1x128xf32>
    %108 = arith.divf %106, %107 : vector<1x1x128xf32>
    %109 = vector.shape_cast %108 : vector<1x1x128xf32> to vector<1x128xf32>
    %c0_17 = arith.constant 0 : index
    %c0_18 = arith.constant 0 : index
    %110 = vector.load %arg5[%c0_17, %c0_18] : memref<128x8xf32, #tpu.memory_space<vmem>>, vector<128x8xf32>
    %cst_19 = arith.constant dense<0.000000e+00> : vector<1x8xf32>
    %111 = tpu.matmul %109, %110, %cst_19 {dimension_numbers = #tpu.dot_dimension_numbers<[1], [0], [0], [1], [0, 0, 1, 1], [], []>} : vector<1x128xf32>, vector<128x8xf32>, vector<1x8xf32> -> vector<1x8xf32>
    %c0_20 = arith.constant 0 : index
    %c0_21 = arith.constant 0 : index
    %112 = vector.load %arg6[%c0_20, %c0_21] : memref<1x8xf32, #tpu.memory_space<vmem>>, vector<1x8xf32>
    %113 = arith.addf %111, %112 : vector<1x8xf32>
    %114 = arith.negf %113 : vector<1x8xf32>
    %115 = math.exp %114 : vector<1x8xf32>
    %cst_22 = arith.constant 1.000000e+00 : f32
    %116 = vector.broadcast %cst_22 : f32 to vector<1x8xf32>
    %117 = arith.addf %116, %115 : vector<1x8xf32>
    %118 = arith.divf %116, %117 : vector<1x8xf32>
    %119 = arith.mulf %113, %118 : vector<1x8xf32>
    %c0_23 = arith.constant 0 : index
    %c0_24 = arith.constant 0 : index
    %120 = vector.load %arg7[%c0_23, %c0_24] : memref<8x128xf32, #tpu.memory_space<vmem>>, vector<8x128xf32>
    %cst_25 = arith.constant dense<0.000000e+00> : vector<1x128xf32>
    %121 = tpu.matmul %119, %120, %cst_25 {dimension_numbers = #tpu.dot_dimension_numbers<[1], [0], [0], [1], [0, 0, 1, 1], [], []>} : vector<1x8xf32>, vector<8x128xf32>, vector<1x128xf32> -> vector<1x128xf32>
    %c0_26 = arith.constant 0 : index
    %c0_27 = arith.constant 0 : index
    %122 = vector.load %arg8[%c0_26, %c0_27] : memref<1x128xf32, #tpu.memory_space<vmem>>, vector<1x128xf32>
    %123 = arith.addf %121, %122 : vector<1x128xf32>
    %124 = arith.negf %123 : vector<1x128xf32>
    %125 = math.exp %124 : vector<1x128xf32>
    %cst_28 = arith.constant 1.000000e+00 : f32
    %126 = vector.broadcast %cst_28 : f32 to vector<1x128xf32>
    %127 = arith.addf %126, %125 : vector<1x128xf32>
    %128 = arith.divf %126, %127 : vector<1x128xf32>
    %c0_29 = arith.constant 0 : index
    %c0_30 = arith.constant 0 : index
    %c0_31 = arith.constant 0 : index
    %129 = vector.load %arg10[%c0_29, %c0_30, %c0_31] : memref<1x1x128xf32, #tpu.memory_space<vmem>>, vector<1x1x128xf32>
    %130 = vector.shape_cast %129 : vector<1x1x128xf32> to vector<1x128xf32>
    %131 = vector.shape_cast %128 : vector<1x128xf32> to vector<1x1x128xf32>
    tpu.vector_store %arg10[%c0_29, %c0_30, %c0_31], %131 {strides = array<i32>} : memref<1x1x128xf32, #tpu.memory_space<vmem>>, vector<1x1x128xf32>,
    return
  }
  func.func @transform_0(%arg0: i32) -> (i32, i32, i32, i32) {
    %c0_i32 = arith.constant 0 : i32
    %c0_i32_0 = arith.constant 0 : i32
    %c0_i32_1 = arith.constant 0 : i32
    %c0_i32_2 = arith.constant 0 : i32
    return %arg0, %c0_i32, %c0_i32_0, %c0_i32_1 : i32, i32, i32, i32
  }
  func.func @transform_1(%arg0: i32) -> (i32, i32, i32) {
    %c0_i32 = arith.constant 0 : i32
    %c0_i32_0 = arith.constant 0 : i32
    %c0_i32_1 = arith.constant 0 : i32
    %c0_i32_2 = arith.constant 0 : i32
    return %c0_i32, %c0_i32_0, %c0_i32_1 : i32, i32, i32
  }
  func.func @transform_2(%arg0: i32) -> (i32, i32) {
    %c0_i32 = arith.constant 0 : i32
    %c0_i32_0 = arith.constant 0 : i32
    %c0_i32_1 = arith.constant 0 : i32
    return %c0_i32, %c0_i32_0 : i32, i32
  }
  func.func @transform_3(%arg0: i32) -> (i32, i32) {
    %c0_i32 = arith.constant 0 : i32
    %c0_i32_0 = arith.constant 0 : i32
    %c0_i32_1 = arith.constant 0 : i32
    return %c0_i32, %c0_i32_0 : i32, i32
  }
  func.func @transform_4(%arg0: i32) -> (i32, i32) {
    %c0_i32 = arith.constant 0 : i32
    %c0_i32_0 = arith.constant 0 : i32
    %c0_i32_1 = arith.constant 0 : i32
    return %c0_i32, %c0_i32_0 : i32, i32
  }
  func.func @transform_5(%arg0: i32) -> (i32, i32) {
    %c0_i32 = arith.constant 0 : i32
    %c0_i32_0 = arith.constant 0 : i32
    %c0_i32_1 = arith.constant 0 : i32
    return %c0_i32, %c0_i32_0 : i32, i32
  }
  func.func @transform_6(%arg0: i32) -> (i32, i32) {
    %c0_i32 = arith.constant 0 : i32
    %c0_i32_0 = arith.constant 0 : i32
    %c0_i32_1 = arith.constant 0 : i32
    return %c0_i32, %c0_i32_0 : i32, i32
  }
  func.func @transform_7(%arg0: i32) -> (i32, i32) {
    %c0_i32 = arith.constant 0 : i32
    %c0_i32_0 = arith.constant 0 : i32
    %c0_i32_1 = arith.constant 0 : i32
    return %c0_i32, %c0_i32_0 : i32, i32
  }
  func.func @transform_8(%arg0: i32) -> (i32, i32, i32, i32) {
    %c0_i32 = arith.constant 0 : i32
    %c0_i32_0 = arith.constant 0 : i32
    %c0_i32_1 = arith.constant 0 : i32
    %c0_i32_2 = arith.constant 0 : i32
    return %arg0, %c0_i32, %c0_i32_0, %c0_i32_1 : i32, i32, i32, i32
  }
  func.func @transform_9(%arg0: i32) -> (i32, i32, i32) {
    %c0_i32 = arith.constant 0 : i32
    %c0_i32_0 = arith.constant 0 : i32
    %c0_i32_1 = arith.constant 0 : i32
    return %arg0, %c0_i32, %c0_i32_0 : i32, i32, i32
  }
}

module attributes {stable_mosaic.version = 11 : i64} {
  func.func @_project_kernel(%arg0: i32, %arg1: memref<1x16x128xbf16, #tpu.memory_space<vmem>>, %arg2: memref<1x1x128xf32, #tpu.memory_space<vmem>>, %arg3: memref<128x64xbf16, #tpu.memory_space<vmem>>, %arg4: memref<1x64xf32, #tpu.memory_space<vmem>>, %arg5: memref<1x64xf32, #tpu.memory_space<vmem>>, %arg6: memref<1x16x64xbf16, #tpu.memory_space<vmem>>) attributes {dimension_semantics = [#tpu.dimension_semantics<parallel>], iteration_bounds = array<i64: 2>, scalar_prefetch = 0 : i64, scratch_operands = 0 : i64, tpu.core_type = #tpu.core_type<tc>, window_params = [{transform_indices = @transform_0, window_bounds = array<i64: 1, 16, 128>}, {transform_indices = @transform_1, window_bounds = array<i64: 1, 1, 128>}, {pipeline_mode = #tpu.pipeline_mode<synchronous>, transform_indices = @transform_2, window_bounds = array<i64: 128, 64>}, {pipeline_mode = #tpu.pipeline_mode<synchronous>, transform_indices = @transform_3, window_bounds = array<i64: 1, 64>}, {pipeline_mode = #tpu.pipeline_mode<synchronous>, transform_indices = @transform_4, window_bounds = array<i64: 1, 64>}, {transform_indices = @transform_5, window_bounds = array<i64: 1, 16, 64>}]} {
    %c0 = arith.constant 0 : index
    %c0_0 = arith.constant 0 : index
    %c0_1 = arith.constant 0 : index
    %0 = vector.load %arg1[%c0, %c0_0, %c0_1] : memref<1x16x128xbf16, #tpu.memory_space<vmem>>, vector<1x16x128xbf16>
    %1 = vector.shape_cast %0 : vector<1x16x128xbf16> to vector<16x128xbf16>
    %c0_2 = arith.constant 0 : index
    %c0_3 = arith.constant 0 : index
    %c0_4 = arith.constant 0 : index
    %2 = vector.load %arg2[%c0_2, %c0_3, %c0_4] : memref<1x1x128xf32, #tpu.memory_space<vmem>>, vector<1x1x128xf32>
    %3 = vector.shape_cast %2 : vector<1x1x128xf32> to vector<1x128xf32>
    %4 = arith.truncf %3 : vector<1x128xf32> to vector<1x128xbf16>
    %5 = vector.broadcast %4 : vector<1x128xbf16> to vector<16x128xbf16>
    %6 = arith.mulf %1, %5 : vector<16x128xbf16>
    %c0_5 = arith.constant 0 : index
    %c0_6 = arith.constant 0 : index
    %7 = vector.load %arg3[%c0_5, %c0_6] : memref<128x64xbf16, #tpu.memory_space<vmem>>, vector<128x64xbf16>
    %cst = arith.constant dense<0.000000e+00> : vector<16x64xf32>
    %8 = tpu.matmul %6, %7, %cst {dimension_numbers = #tpu.dot_dimension_numbers<[1], [0], [0], [1], [0, 0, 1, 1], [], []>} : vector<16x128xbf16>, vector<128x64xbf16>, vector<16x64xf32> -> vector<16x64xf32>
    %c0_7 = arith.constant 0 : index
    %c0_8 = arith.constant 0 : index
    %9 = vector.load %arg4[%c0_7, %c0_8] : memref<1x64xf32, #tpu.memory_space<vmem>>, vector<1x64xf32>
    %10 = vector.broadcast %9 : vector<1x64xf32> to vector<16x64xf32>
    %11 = arith.mulf %8, %10 : vector<16x64xf32>
    %c0_9 = arith.constant 0 : index
    %c0_10 = arith.constant 0 : index
    %12 = vector.load %arg5[%c0_9, %c0_10] : memref<1x64xf32, #tpu.memory_space<vmem>>, vector<1x64xf32>
    %13 = vector.broadcast %12 : vector<1x64xf32> to vector<16x64xf32>
    %14 = arith.addf %11, %13 : vector<16x64xf32>
    %15 = arith.truncf %14 : vector<16x64xf32> to vector<16x64xbf16>
    %c0_11 = arith.constant 0 : index
    %c0_12 = arith.constant 0 : index
    %c0_13 = arith.constant 0 : index
    %16 = vector.load %arg6[%c0_11, %c0_12, %c0_13] : memref<1x16x64xbf16, #tpu.memory_space<vmem>>, vector<1x16x64xbf16>
    %17 = vector.shape_cast %16 : vector<1x16x64xbf16> to vector<16x64xbf16>
    %18 = vector.shape_cast %15 : vector<16x64xbf16> to vector<1x16x64xbf16>
    tpu.vector_store %arg6[%c0_11, %c0_12, %c0_13], %18 {strides = array<i32>} : memref<1x16x64xbf16, #tpu.memory_space<vmem>>, vector<1x16x64xbf16>,
    return
  }
  func.func @transform_0(%arg0: i32) -> (i32, i32, i32) {
    %c0_i32 = arith.constant 0 : i32
    %c0_i32_0 = arith.constant 0 : i32
    %c0_i32_1 = arith.constant 0 : i32
    return %arg0, %c0_i32, %c0_i32_0 : i32, i32, i32
  }
  func.func @transform_1(%arg0: i32) -> (i32, i32, i32) {
    %c0_i32 = arith.constant 0 : i32
    %c0_i32_0 = arith.constant 0 : i32
    %c0_i32_1 = arith.constant 0 : i32
    return %arg0, %c0_i32, %c0_i32_0 : i32, i32, i32
  }
  func.func @transform_2(%arg0: i32) -> (i32, i32) {
    %c0_i32 = arith.constant 0 : i32
    %c0_i32_0 = arith.constant 0 : i32
    %c0_i32_1 = arith.constant 0 : i32
    return %c0_i32, %c0_i32_0 : i32, i32
  }
  func.func @transform_3(%arg0: i32) -> (i32, i32) {
    %c0_i32 = arith.constant 0 : i32
    %c0_i32_0 = arith.constant 0 : i32
    %c0_i32_1 = arith.constant 0 : i32
    return %c0_i32, %c0_i32_0 : i32, i32
  }
  func.func @transform_4(%arg0: i32) -> (i32, i32) {
    %c0_i32 = arith.constant 0 : i32
    %c0_i32_0 = arith.constant 0 : i32
    %c0_i32_1 = arith.constant 0 : i32
    return %c0_i32, %c0_i32_0 : i32, i32
  }
  func.func @transform_5(%arg0: i32) -> (i32, i32, i32) {
    %c0_i32 = arith.constant 0 : i32
    %c0_i32_0 = arith.constant 0 : i32
    %c0_i32_1 = arith.constant 0 : i32
    return %arg0, %c0_i32, %c0_i32_0 : i32, i32, i32
  }
}

module attributes {stable_mosaic.version = 11 : i64} {
  func.func @_fc_bce_kernel(%arg0: i32, %arg1: memref<2x1792xf32, #tpu.memory_space<vmem>>, %arg2: memref<1x1792xf32, #tpu.memory_space<vmem>>, %arg3: memref<1x1xf32, #tpu.memory_space<vmem>>, %arg4: memref<2x1xf32, #tpu.memory_space<vmem>>, %arg5: memref<2x1xf32, #tpu.memory_space<vmem>>, %arg6: memref<1x1xf32, #tpu.memory_space<vmem>>) attributes {dimension_semantics = [#tpu.dimension_semantics<arbitrary>], iteration_bounds = array<i64: 1>, scalar_prefetch = 0 : i64, scratch_operands = 0 : i64, tpu.core_type = #tpu.core_type<tc>, window_params = [{pipeline_mode = #tpu.pipeline_mode<synchronous>, transform_indices = @transform_0, window_bounds = array<i64: 2, 1792>}, {pipeline_mode = #tpu.pipeline_mode<synchronous>, transform_indices = @transform_1, window_bounds = array<i64: 1, 1792>}, {pipeline_mode = #tpu.pipeline_mode<synchronous>, transform_indices = @transform_2, window_bounds = array<i64: 1, 1>}, {pipeline_mode = #tpu.pipeline_mode<synchronous>, transform_indices = @transform_3, window_bounds = array<i64: 2, 1>}, {pipeline_mode = #tpu.pipeline_mode<synchronous>, transform_indices = @transform_4, window_bounds = array<i64: 2, 1>}, {pipeline_mode = #tpu.pipeline_mode<synchronous>, transform_indices = @transform_5, window_bounds = array<i64: 1, 1>}]} {
    %c0 = arith.constant 0 : index
    %c0_0 = arith.constant 0 : index
    %0 = vector.load %arg1[%c0, %c0_0] : memref<2x1792xf32, #tpu.memory_space<vmem>>, vector<2x1792xf32>
    %c0_1 = arith.constant 0 : index
    %c0_2 = arith.constant 0 : index
    %1 = vector.load %arg2[%c0_1, %c0_2] : memref<1x1792xf32, #tpu.memory_space<vmem>>, vector<1x1792xf32>
    %2 = vector.broadcast %1 : vector<1x1792xf32> to vector<2x1792xf32>
    %3 = arith.mulf %0, %2 : vector<2x1792xf32>
    %cst = arith.constant dense<0.000000e+00> : vector<2xf32>
    %4 = vector.multi_reduction <add>, %3, %cst [1] : vector<2x1792xf32> to vector<2xf32>
    %5 = vector.shape_cast %4 : vector<2xf32> to vector<2x1xf32>
    %c0_3 = arith.constant 0 : index
    %c0_4 = arith.constant 0 : index
    %6 = vector.load %arg3[%c0_3, %c0_4] : memref<1x1xf32, #tpu.memory_space<vmem>>, vector<1x1xf32>
    %7 = vector.broadcast %6 : vector<1x1xf32> to vector<2x1xf32>
    %8 = arith.addf %5, %7 : vector<2x1xf32>
    %c0_5 = arith.constant 0 : index
    %c0_6 = arith.constant 0 : index
    %9 = vector.load %arg5[%c0_5, %c0_6] : memref<2x1xf32, #tpu.memory_space<vmem>>, vector<2x1xf32>
    tpu.vector_store %arg5[%c0_5, %c0_6], %8 {strides = array<i32>} : memref<2x1xf32, #tpu.memory_space<vmem>>, vector<2x1xf32>,
    %c0_7 = arith.constant 0 : index
    %c0_8 = arith.constant 0 : index
    %10 = vector.load %arg4[%c0_7, %c0_8] : memref<2x1xf32, #tpu.memory_space<vmem>>, vector<2x1xf32>
    %cst_9 = arith.constant 0.000000e+00 : f32
    %11 = vector.broadcast %cst_9 : f32 to vector<2x1xf32>
    %12 = arith.maximumf %8, %11 : vector<2x1xf32>
    %13 = arith.mulf %8, %10 : vector<2x1xf32>
    %14 = arith.subf %12, %13 : vector<2x1xf32>
    %15 = math.absf %8 : vector<2x1xf32>
    %cst_10 = arith.constant 0.000000e+00 : f32
    %16 = vector.broadcast %cst_10 : f32 to vector<2x1xf32>
    %17 = arith.subf %16, %15 : vector<2x1xf32>
    %18 = math.exp %17 : vector<2x1xf32>
    %19 = math.log1p %18 : vector<2x1xf32>
    %20 = arith.addf %14, %19 : vector<2x1xf32>
    %cst_11 = arith.constant dense<0.000000e+00> : vector<1xf32>
    %21 = vector.multi_reduction <add>, %20, %cst_11 [0] : vector<2x1xf32> to vector<1xf32>
    %22 = vector.shape_cast %21 : vector<1xf32> to vector<1x1xf32>
    %cst_12 = arith.constant 2.000000e+00 : f32
    %23 = vector.broadcast %cst_12 : f32 to vector<1x1xf32>
    %24 = arith.divf %22, %23 : vector<1x1xf32>
    %c0_13 = arith.constant 0 : index
    %c0_14 = arith.constant 0 : index
    %25 = vector.load %arg6[%c0_13, %c0_14] : memref<1x1xf32, #tpu.memory_space<vmem>>, vector<1x1xf32>
    tpu.vector_store %arg6[%c0_13, %c0_14], %24 {strides = array<i32>} : memref<1x1xf32, #tpu.memory_space<vmem>>, vector<1x1xf32>,
    return
  }
  func.func @transform_0(%arg0: i32) -> (i32, i32) {
    %c0_i32 = arith.constant 0 : i32
    %c0_i32_0 = arith.constant 0 : i32
    %c0_i32_1 = arith.constant 0 : i32
    return %c0_i32, %c0_i32_0 : i32, i32
  }
  func.func @transform_1(%arg0: i32) -> (i32, i32) {
    %c0_i32 = arith.constant 0 : i32
    %c0_i32_0 = arith.constant 0 : i32
    %c0_i32_1 = arith.constant 0 : i32
    return %c0_i32, %c0_i32_0 : i32, i32
  }
  func.func @transform_2(%arg0: i32) -> (i32, i32) {
    %c0_i32 = arith.constant 0 : i32
    %c0_i32_0 = arith.constant 0 : i32
    %c0_i32_1 = arith.constant 0 : i32
    return %c0_i32, %c0_i32_0 : i32, i32
  }
  func.func @transform_3(%arg0: i32) -> (i32, i32) {
    %c0_i32 = arith.constant 0 : i32
    %c0_i32_0 = arith.constant 0 : i32
    %c0_i32_1 = arith.constant 0 : i32
    return %c0_i32, %c0_i32_0 : i32, i32
  }
  func.func @transform_4(%arg0: i32) -> (i32, i32) {
    %c0_i32 = arith.constant 0 : i32
    %c0_i32_0 = arith.constant 0 : i32
    %c0_i32_1 = arith.constant 0 : i32
    return %c0_i32, %c0_i32_0 : i32, i32
  }
  func.func @transform_5(%arg0: i32) -> (i32, i32) {
    %c0_i32 = arith.constant 0 : i32
    %c0_i32_0 = arith.constant 0 : i32
    %c0_i32_1 = arith.constant 0 : i32
    return %c0_i32, %c0_i32_0 : i32, i32
  }
}

module attributes {stable_mosaic.version = 11 : i64} {
  func.func @_head_gap_kernel(%arg0: i32, %arg1: i32, %arg2: memref<1x16x64xbf16, #tpu.memory_space<vmem>>, %arg3: memref<64x256xbf16, #tpu.memory_space<vmem>>, %arg4: memref<1x256xf32, #tpu.memory_space<vmem>>, %arg5: memref<1x256xf32, #tpu.memory_space<vmem>>, %arg6: memref<1x1x256xf32, #tpu.memory_space<vmem>>) attributes {dimension_semantics = [#tpu.dimension_semantics<parallel>, #tpu.dimension_semantics<parallel>], iteration_bounds = array<i64: 2, 7>, scalar_prefetch = 0 : i64, scratch_operands = 0 : i64, tpu.core_type = #tpu.core_type<tc>, window_params = [{transform_indices = @transform_0, window_bounds = array<i64: 1, 16, 64>}, {transform_indices = @transform_1, window_bounds = array<i64: 64, 256>}, {transform_indices = @transform_2, window_bounds = array<i64: 1, 256>}, {transform_indices = @transform_3, window_bounds = array<i64: 1, 256>}, {transform_indices = @transform_4, window_bounds = array<i64: 1, 1, 256>}]} {
    %c0 = arith.constant 0 : index
    %c0_0 = arith.constant 0 : index
    %c0_1 = arith.constant 0 : index
    %0 = vector.load %arg2[%c0, %c0_0, %c0_1] : memref<1x16x64xbf16, #tpu.memory_space<vmem>>, vector<1x16x64xbf16>
    %1 = vector.shape_cast %0 : vector<1x16x64xbf16> to vector<16x64xbf16>
    %c0_2 = arith.constant 0 : index
    %c0_3 = arith.constant 0 : index
    %2 = vector.load %arg3[%c0_2, %c0_3] : memref<64x256xbf16, #tpu.memory_space<vmem>>, vector<64x256xbf16>
    %cst = arith.constant dense<0.000000e+00> : vector<16x256xf32>
    %3 = tpu.matmul %1, %2, %cst {dimension_numbers = #tpu.dot_dimension_numbers<[1], [0], [0], [1], [0, 0, 1, 1], [], []>} : vector<16x64xbf16>, vector<64x256xbf16>, vector<16x256xf32> -> vector<16x256xf32>
    %c0_4 = arith.constant 0 : index
    %c0_5 = arith.constant 0 : index
    %4 = vector.load %arg4[%c0_4, %c0_5] : memref<1x256xf32, #tpu.memory_space<vmem>>, vector<1x256xf32>
    %5 = vector.broadcast %4 : vector<1x256xf32> to vector<16x256xf32>
    %6 = arith.mulf %3, %5 : vector<16x256xf32>
    %c0_6 = arith.constant 0 : index
    %c0_7 = arith.constant 0 : index
    %7 = vector.load %arg5[%c0_6, %c0_7] : memref<1x256xf32, #tpu.memory_space<vmem>>, vector<1x256xf32>
    %8 = vector.broadcast %7 : vector<1x256xf32> to vector<16x256xf32>
    %9 = arith.addf %6, %8 : vector<16x256xf32>
    %10 = arith.negf %9 : vector<16x256xf32>
    %11 = math.exp %10 : vector<16x256xf32>
    %cst_8 = arith.constant 1.000000e+00 : f32
    %12 = vector.broadcast %cst_8 : f32 to vector<16x256xf32>
    %13 = arith.addf %12, %11 : vector<16x256xf32>
    %14 = arith.divf %12, %13 : vector<16x256xf32>
    %15 = arith.mulf %9, %14 : vector<16x256xf32>
    %cst_9 = arith.constant dense<0.000000e+00> : vector<256xf32>
    %16 = vector.multi_reduction <add>, %15, %cst_9 [0] : vector<16x256xf32> to vector<256xf32>
    %17 = vector.shape_cast %16 : vector<256xf32> to vector<1x256xf32>
    %cst_10 = arith.constant 1.600000e+01 : f32
    %18 = vector.broadcast %cst_10 : f32 to vector<1x256xf32>
    %19 = arith.divf %17, %18 : vector<1x256xf32>
    %c0_11 = arith.constant 0 : index
    %c0_12 = arith.constant 0 : index
    %c0_13 = arith.constant 0 : index
    %20 = vector.load %arg6[%c0_11, %c0_12, %c0_13] : memref<1x1x256xf32, #tpu.memory_space<vmem>>, vector<1x1x256xf32>
    %21 = vector.shape_cast %20 : vector<1x1x256xf32> to vector<1x256xf32>
    %22 = vector.shape_cast %19 : vector<1x256xf32> to vector<1x1x256xf32>
    tpu.vector_store %arg6[%c0_11, %c0_12, %c0_13], %22 {strides = array<i32>} : memref<1x1x256xf32, #tpu.memory_space<vmem>>, vector<1x1x256xf32>,
    return
  }
  func.func @transform_0(%arg0: i32, %arg1: i32) -> (i32, i32, i32) {
    %c0_i32 = arith.constant 0 : i32
    %c0_i32_0 = arith.constant 0 : i32
    %c0_i32_1 = arith.constant 0 : i32
    return %arg0, %c0_i32, %c0_i32_0 : i32, i32, i32
  }
  func.func @transform_1(%arg0: i32, %arg1: i32) -> (i32, i32) {
    %c0_i32 = arith.constant 0 : i32
    %c0_i32_0 = arith.constant 0 : i32
    return %c0_i32, %arg1 : i32, i32
  }
  func.func @transform_2(%arg0: i32, %arg1: i32) -> (i32, i32) {
    %c0_i32 = arith.constant 0 : i32
    %c0_i32_0 = arith.constant 0 : i32
    return %c0_i32, %arg1 : i32, i32
  }
  func.func @transform_3(%arg0: i32, %arg1: i32) -> (i32, i32) {
    %c0_i32 = arith.constant 0 : i32
    %c0_i32_0 = arith.constant 0 : i32
    return %c0_i32, %arg1 : i32, i32
  }
  func.func @transform_4(%arg0: i32, %arg1: i32) -> (i32, i32, i32) {
    %c0_i32 = arith.constant 0 : i32
    %c0_i32_0 = arith.constant 0 : i32
    return %arg0, %c0_i32, %arg1 : i32, i32, i32
  }
}

</mosaic_0001>

<llo_original>
// kernel: efficientnet_forward.10
$region0: #{efficientnet_forward.10}
  #allocation0 [shape = 'u32[]', space=smem, size = 0x4, offset = 0x4, fixed_abs, tag = 'smem constant byte address 0x4 - core index']
  #allocation1 [shape = 'u32[144,128]{1,0:T(1,128)}', space=vmem, size = 0x12000, scoped, tag = 'internal scratch']
  %s0 = inlined_call_operand.hbm [shape: bf16[128,32], index: 0, kind: input, shape index: {}]
  %s1 = inlined_call_operand.hbm [shape: bf16[32,128], index: 1, kind: input, shape index: {}]
  %s2 = inlined_call_operand.hbm [shape: f32[1,128], index: 2, kind: input, shape index: {}]
  %s3 = inlined_call_operand.hbm [shape: f32[1,128], index: 3, kind: input, shape index: {}]
  %s4 = inlined_call_operand.hbm [shape: bf16[128,128], index: 4, kind: output, shape index: {}]
  %s5 = sld [smem:[#allocation0]]
  $region42: #{efficientnet_forward.10} parent=0
    _
  %s7 = ssub.s32 1, %s5
  %s8 = scalar_select 0, %s7, %s5
  $region1: #{efficientnet_forward.10} parent=0
    #allocation2 [shape = 'u8[32768]{0}', space=vmem, size = 0x8000, scoped, tag = 'input window, operand 0, single buffered']
    #allocation3 [shape = 's32[1]{0}', space=sflag, size = 0x4, scoped, tag = 'scoped memory for efficientnet_forward.10']
    #allocation4 [shape = 's32[1]{0}', space=sflag, size = 0x4, scoped, tag = 'scoped memory for efficientnet_forward.10']
    #allocation5 [shape = 'u8[8192]{0}', space=vmem, size = 0x2000, scoped, tag = 'input window, operand 1, single buffered']
    #allocation6 [shape = 's32[1]{0}', space=sflag, size = 0x4, scoped, tag = 'scoped memory for efficientnet_forward.10']
    #allocation7 [shape = 'u8[512]{0}', space=vmem, size = 0x400, scoped, tag = 'input window, operand 2, single buffered']
    #allocation8 [shape = 'u8[512]{0}', space=vmem, size = 0x400, scoped, tag = 'input window, operand 3, single buffered']
    #allocation9 [shape = 's32[1]{0}', space=sflag, size = 0x4, scoped, tag = 'scoped memory for efficientnet_forward.10']
    #allocation10 [shape = 'u8[32768]{0}', space=vmem, size = 0x8000, scoped, tag = 'output window, operand 0, single buffered']
    %9 = vsyncpa [#allocation3], 0
    %10 = vsyncpa [#allocation6], 0
    %11 = vsyncpa [#allocation9], 0
    %12 = vsyncpa [#allocation4], 0
    // Predicated region
    $region2: #{efficientnet_forward.10} parent=1 // pred_check
      _
    $region3: #{efficientnet_forward.10} parent=1 // pred_check_branch
      %14 = sbr.rel (0) target = $region5
    $region4: #{efficientnet_forward.10} parent=1 // pred_region
      %s16 = ssub.s32 1024, 1024
      %17 = vsyncadd [#allocation3], %s16
      %s18 = sshll.u32 [#allocation2], 4
      %s19 = int_to_ptr.vmem [resolvable:$true] %s18
      %24 = dma.hbm_to_vmem [thread:$0]  %s0, 1024, %s19, [#allocation3], 64, 64, 4
    $region5: #{efficientnet_forward.10} parent=1 // pred_fallthru
      _
    // Predicated region
    $region6: #{efficientnet_forward.10} parent=1 // pred_check
      _
    $region7: #{efficientnet_forward.10} parent=1 // pred_check_branch
      %26 = sbr.rel (0) target = $region9
    $region8: #{efficientnet_forward.10} parent=1 // pred_region
      %s28 = ssub.s32 256, 256
      %29 = vsyncadd [#allocation6], %s28
      %s30 = sshll.u32 [#allocation5], 4
      %s31 = int_to_ptr.vmem [resolvable:$true] %s30
      %36 = dma.hbm_to_vmem [thread:$0]  %s1, 256, %s31, [#allocation6], 64, 64, 4
    $region9: #{efficientnet_forward.10} parent=1 // pred_fallthru
      _
    // Predicated region
    $region10: #{efficientnet_forward.10} parent=1 // pred_check
      _
    $region11: #{efficientnet_forward.10} parent=1 // pred_check_branch
      %38 = sbr.rel (0) target = $region13
    $region12: #{efficientnet_forward.10} parent=1 // pred_region
      %s40 = ssub.s32 16, 16
      %41 = vsyncadd [#allocation6], %s40
      %s43 = sshll.u32 [#allocation7], 4
      %s44 = int_to_ptr.vmem [resolvable:$true] %s43
      %46 = dma.hbm_to_vmem [thread:$0]  %s2, 16, %s44, [#allocation6]
    $region13: #{efficientnet_forward.10} parent=1 // pred_fallthru
      _
    // Predicated region
    $region14: #{efficientnet_forward.10} parent=1 // pred_check
      _
    $region15: #{efficientnet_forward.10} parent=1 // pred_check_branch
      %48 = sbr.rel (0) target = $region17
    $region16: #{efficientnet_forward.10} parent=1 // pred_region
      %s50 = ssub.s32 16, 16
      %51 = vsyncadd [#allocation9], %s50
      %s53 = sshll.u32 [#allocation8], 4
      %s54 = int_to_ptr.vmem [resolvable:$true] %s53
      %56 = dma.hbm_to_vmem [thread:$0]  %s3, 16, %s54, [#allocation9]
    $region17: #{efficientnet_forward.10} parent=1 // pred_fallthru
      _
    // Predicated region
    $region18: #{efficientnet_forward.10} parent=1 // pred_check
      _
    $region19: #{efficientnet_forward.10} parent=1 // pred_check_branch
      %58 = sbr.rel (0) target = $region21
    $region20: #{efficientnet_forward.10} parent=1 // pred_region
      %59 = dma.done [#allocation3], 1024
    $region21: #{efficientnet_forward.10} parent=1 // pred_fallthru
      _
    // Predicated region
    $region22: #{efficientnet_forward.10} parent=1 // pred_check
      _
    $region23: #{efficientnet_forward.10} parent=1 // pred_check_branch
      %61 = sbr.rel (0) target = $region25
    $region24: #{efficientnet_forward.10} parent=1 // pred_region
      %62 = dma.done [#allocation6], 256
    $region25: #{efficientnet_forward.10} parent=1 // pred_fallthru
      _
    // Predicated region
    $region26: #{efficientnet_forward.10} parent=1 // pred_check
      _
    $region27: #{efficientnet_forward.10} parent=1 // pred_check_branch
      %64 = sbr.rel (0) target = $region29
    $region28: #{efficientnet_forward.10} parent=1 // pred_region
      %65 = dma.done [#allocation6], 16
    $region29: #{efficientnet_forward.10} parent=1 // pred_fallthru
      _
    // Predicated region
    $region30: #{efficientnet_forward.10} parent=1 // pred_check
      _
    $region31: #{efficientnet_forward.10} parent=1 // pred_check_branch
      %67 = sbr.rel (0) target = $region33
    $region32: #{efficientnet_forward.10} parent=1 // pred_region
      %68 = dma.done [#allocation9], 16
    $region33: #{efficientnet_forward.10} parent=1 // pred_fallthru
      _
    %v70 = vld [vmem:[#allocation2] sm:$0xf]
    %v71 = vld [vmem:[#allocation2 + $0x4] sm:$0xf]
    %v72 = vld [vmem:[#allocation2 + $0x8] sm:$0xf]
    %v73 = vld [vmem:[#allocation2 + $0xc] sm:$0xf]
    %v74 = vld [vmem:[#allocation2 + $0x10] sm:$0xf]
    %v75 = vld [vmem:[#allocation2 + $0x14] sm:$0xf]
    %v76 = vld [vmem:[#allocation2 + $0x18] sm:$0xf]
    %v77 = vld [vmem:[#allocation2 + $0x1c] sm:$0xf]
    %v78 = vld [vmem:[#allocation2 + $0x20] sm:$0xf]
    %v79 = vld [vmem:[#allocation2 + $0x24] sm:$0xf]
    %v80 = vld [vmem:[#allocation2 + $0x28] sm:$0xf]
    %v81 = vld [vmem:[#allocation2 + $0x2c] sm:$0xf]
    %v82 = vld [vmem:[#allocation2 + $0x30] sm:$0xf]
    %v83 = vld [vmem:[#allocation2 + $0x34] sm:$0xf]
    %v84 = vld [vmem:[#allocation2 + $0x38] sm:$0xf]
    %v85 = vld [vmem:[#allocation2 + $0x3c] sm:$0xf]
    %v86 = vld [vmem:[#allocation5] sm:$0xf]
    %v87 = vld [vmem:[#allocation5 + $0x4] sm:$0xf]
    %v88 = vld [vmem:[#allocation5 + $0x8] sm:$0xf]
    %v89 = vld [vmem:[#allocation5 + $0xc] sm:$0xf]
    %v106 = vunpack.c.l.b16 %v70
    %v107 = vunpack.c.l.b16 %v71
    %v108 = vunpack.c.l.b16 %v72
    %v109 = vunpack.c.l.b16 %v73
    %v110 = vunpack.c.l.b16 %v74
    %v111 = vunpack.c.l.b16 %v75
    %v112 = vunpack.c.l.b16 %v76
    %v113 = vunpack.c.l.b16 %v77
    %v114 = vunpack.c.l.b16 %v78
    %v115 = vunpack.c.l.b16 %v79
    %v116 = vunpack.c.l.b16 %v80
    %v117 = vunpack.c.l.b16 %v81
    %v118 = vunpack.c.l.b16 %v82
    %v119 = vunpack.c.l.b16 %v83
    %v120 = vunpack.c.l.b16 %v84
    %v121 = vunpack.c.l.b16 %v85
    %v122 = vpack.c.b16 %v107, %v106
    %v123 = vpack.c.b16 %v109, %v108
    %v124 = vpack.c.b16 %v111, %v110
    %v125 = vpack.c.b16 %v113, %v112
    %v126 = vpack.c.b16 %v115, %v114
    %v127 = vpack.c.b16 %v117, %v116
    %v128 = vpack.c.b16 %v119, %v118
    %v129 = vpack.c.b16 %v121, %v120
    %v134 = vunpack.c.l.b16 %v86
    %v135 = vunpack.c.l.b16 %v87
    %v136 = vunpack.c.l.b16 %v88
    %v137 = vunpack.c.l.b16 %v89
    %v138 = vpack.c.b16 %v135, %v134
    %v139 = vpack.c.b16 %v137, %v136
    %vm142 = vcmask 261120
    %v144 = vsel %vm142, %v122, 0
    %v147 = vsel %vm142, %v123, 0
    %v150 = vsel %vm142, %v124, 0
    %v153 = vsel %vm142, %v125, 0
    %v156 = vsel %vm142, %v126, 0
    %v159 = vsel %vm142, %v127, 0
    %v162 = vsel %vm142, %v128, 0
    %v165 = vsel %vm142, %v129, 0
    %167 = vmatprep.subr.bf16.mxu0 0
    %168 = vmatpush1.bf16.msra.mxu0 %v138
    %169 = vmatprep.subr.bf16.mxu0 0
    %170 = vmatpush1.bf16.msra.mxu0 %v139
    %171 = vmatprep.subr.bf16.mxu0 0
    %172 = vmatpush1.bf16.msra.mxu0 0
    %173 = vmatprep.subr.bf16.mxu0 0
    %174 = vmatpush1.bf16.msra.mxu0 0
    %175 = vmatprep.subr.bf16.mxu0 0
    %176 = vmatpush1.bf16.msra.mxu0 0
    %177 = vmatprep.subr.bf16.mxu0 0
    %178 = vmatpush1.bf16.msra.mxu0 0
    %179 = vmatprep.subr.bf16.mxu0 0
    %180 = vmatpush1.bf16.msra.mxu0 0
    %181 = vmatprep.subr.bf16.mxu0 0
    %182 = vmatpush1.bf16.msra.mxu0 0
    %183 = vmatprep.subr.bf16.mxu0 0
    %184 = vmatpush1.bf16.msra.mxu0 0
    %185 = vmatprep.subr.bf16.mxu0 0
    %186 = vmatpush1.bf16.msra.mxu0 0
    %187 = vmatprep.subr.bf16.mxu0 0
    %188 = vmatpush1.bf16.msra.mxu0 0
    %189 = vmatprep.subr.bf16.mxu0 0
    %190 = vmatpush1.bf16.msra.mxu0 0
    %191 = vmatprep.subr.bf16.mxu0 0
    %192 = vmatpush1.bf16.msra.mxu0 0
    %193 = vmatprep.subr.bf16.mxu0 0
    %194 = vmatpush1.bf16.msra.mxu0 0
    %195 = vmatprep.subr.bf16.mxu0 0
    %196 = vmatpush1.bf16.msra.mxu0 0
    %197 = vmatprep.subr.bf16.mxu0 0
    %198 = vmatpush1.bf16.msra.mxu0 0
    %199 = vmatprep.mubr.bf16.mxu0 0
    %200 = vmatmul.mubr.bf16.gmra.mrb[0].mxu0 %v144
    %v201 = vpop.f32.mrb[0].mxu0
    %v202 = vadd.f32 0.0, %v201
    %v203 = vpop.f32.mrb[0].mxu0
    %v204 = vpop.f32.mrb[0].mxu0
    %v205 = vadd.f32 0.0, %v204
    %v206 = vpop.f32.mrb[0].mxu0
    %207 = vmatprep.mubr.bf16.mxu0 0
    %208 = vmatmul.mubr.bf16.gmra.mrb[0].mxu0 %v147
    %v209 = vpop.f32.mrb[0].mxu0
    %v210 = vadd.f32 0.0, %v209
    %v211 = vpop.f32.mrb[0].mxu0
    %v212 = vpop.f32.mrb[0].mxu0
    %v213 = vadd.f32 0.0, %v212
    %v214 = vpop.f32.mrb[0].mxu0
    %215 = vmatprep.mubr.bf16.mxu0 0
    %216 = vmatmul.mubr.bf16.gmra.mrb[0].mxu0 %v150
    %v217 = vpop.f32.mrb[0].mxu0
    %v218 = vadd.f32 0.0, %v217
    %v219 = vpop.f32.mrb[0].mxu0
    %v220 = vpop.f32.mrb[0].mxu0
    %v221 = vadd.f32 0.0, %v220
    %v222 = vpop.f32.mrb[0].mxu0
    %223 = vmatprep.mubr.bf16.mxu0 0
    %224 = vmatmul.mubr.bf16.gmra.mrb[0].mxu0 %v153
    %v225 = vpop.f32.mrb[0].mxu0
    %v226 = vadd.f32 0.0, %v225
    %v227 = vpop.f32.mrb[0].mxu0
    %v228 = vpop.f32.mrb[0].mxu0
    %v229 = vadd.f32 0.0, %v228
    %v230 = vpop.f32.mrb[0].mxu0
    %231 = vmatprep.mubr.bf16.mxu0 0
    %232 = vmatmul.mubr.bf16.gmra.mrb[0].mxu0 %v156
    %v233 = vpop.f32.mrb[0].mxu0
    %v234 = vadd.f32 0.0, %v233
    %v235 = vpop.f32.mrb[0].mxu0
    %v236 = vpop.f32.mrb[0].mxu0
    %v237 = vadd.f32 0.0, %v236
    %v238 = vpop.f32.mrb[0].mxu0
    %239 = vmatprep.mubr.bf16.mxu0 0
    %240 = vmatmul.mubr.bf16.gmra.mrb[0].mxu0 %v159
    %v241 = vpop.f32.mrb[0].mxu0
    %v242 = vadd.f32 0.0, %v241
    %v243 = vpop.f32.mrb[0].mxu0
    %v244 = vpop.f32.mrb[0].mxu0
    %v245 = vadd.f32 0.0, %v244
    %v246 = vpop.f32.mrb[0].mxu0
    %247 = vmatprep.mubr.bf16.mxu0 0
    %248 = vmatmul.mubr.bf16.gmra.mrb[0].mxu0 %v162
    %v249 = vpop.f32.mrb[0].mxu0
    %v250 = vadd.f32 0.0, %v249
    %v251 = vpop.f32.mrb[0].mxu0
    %v252 = vpop.f32.mrb[0].mxu0
    %v253 = vadd.f32 0.0, %v252
    %v254 = vpop.f32.mrb[0].mxu0
    %255 = vmatprep.mubr.bf16.mxu0 0
    %256 = vmatmul.mubr.bf16.gmra.mrb[0].mxu0 %v165
    %v257 = vpop.f32.mrb[0].mxu0
    %v258 = vadd.f32 0.0, %v257
    %v259 = vpop.f32.mrb[0].mxu0
    %v260 = vpop.f32.mrb[0].mxu0
    %v261 = vadd.f32 0.0, %v260
    %v262 = vpop.f32.mrb[0].mxu0
    %263 = vdwg.mxu0
    %v264 = vld [vmem:[#allocation7] sm:$0x1]
    %v266 = vlaneseq
    %v267 = vshrl.u32 %v266, 7
    %v268 = vsub.s32 0, %v267
    %v269 = vrot.slane %v264, %v268
    %v271 = vmul.f32 %v202, %v269
    %v272 = vmul.f32 %v205, %v269
    %v273 = vmul.f32 %v210, %v269
    %v274 = vmul.f32 %v213, %v269
    %v275 = vmul.f32 %v218, %v269
    %v276 = vmul.f32 %v221, %v269
    %v277 = vmul.f32 %v226, %v269
    %v278 = vmul.f32 %v229, %v269
    %v279 = vmul.f32 %v234, %v269
    %v280 = vmul.f32 %v237, %v269
    %v281 = vmul.f32 %v242, %v269
    %v282 = vmul.f32 %v245, %v269
    %v283 = vmul.f32 %v250, %v269
    %v284 = vmul.f32 %v253, %v269
    %v285 = vmul.f32 %v258, %v269
    %v286 = vmul.f32 %v261, %v269
    %v287 = vld [vmem:[#allocation8] sm:$0x1]
    %v289 = vlaneseq
    %v290 = vshrl.u32 %v289, 7
    %v291 = vsub.s32 0, %v290
    %v292 = vrot.slane %v287, %v291
    %v294 = vadd.f32 %v271, %v292
    %v295 = vadd.f32 %v272, %v292
    %v296 = vadd.f32 %v273, %v292
    %v297 = vadd.f32 %v274, %v292
    %v298 = vadd.f32 %v275, %v292
    %v299 = vadd.f32 %v276, %v292
    %v300 = vadd.f32 %v277, %v292
    %v301 = vadd.f32 %v278, %v292
    %v302 = vadd.f32 %v279, %v292
    %v303 = vadd.f32 %v280, %v292
    %v304 = vadd.f32 %v281, %v292
    %v305 = vadd.f32 %v282, %v292
    %v306 = vadd.f32 %v283, %v292
    %v307 = vadd.f32 %v284, %v292
    %v308 = vadd.f32 %v285, %v292
    %v309 = vadd.f32 %v286, %v292
    %v310 = vxor.u32 %v294, 2147483648
    %v311 = vxor.u32 %v295, 2147483648
    %v312 = vxor.u32 %v296, 2147483648
    %v313 = vxor.u32 %v297, 2147483648
    %v314 = vxor.u32 %v298, 2147483648
    %v315 = vxor.u32 %v299, 2147483648
    %v316 = vxor.u32 %v300, 2147483648
    %v317 = vxor.u32 %v301, 2147483648
    %v318 = vxor.u32 %v302, 2147483648
    %v319 = vxor.u32 %v303, 2147483648
    %v320 = vxor.u32 %v304, 2147483648
    %v321 = vxor.u32 %v305, 2147483648
    %v322 = vxor.u32 %v306, 2147483648
    %v323 = vxor.u32 %v307, 2147483648
    %v324 = vxor.u32 %v308, 2147483648
    %v325 = vxor.u32 %v309, 2147483648
    %v326 = vmul.f32 %v310, 1.442695
    %v327 = vpow.pop %v326
    %v328 = vmul.f32 %v311, 1.442695
    %v329 = vpow.pop %v328
    %v330 = vmul.f32 %v312, 1.442695
    %v331 = vpow.pop %v330
    %v332 = vmul.f32 %v313, 1.442695
    %v333 = vpow.pop %v332
    %v334 = vmul.f32 %v314, 1.442695
    %v335 = vpow.pop %v334
    %v336 = vmul.f32 %v315, 1.442695
    %v337 = vpow.pop %v336
    %v338 = vmul.f32 %v316, 1.442695
    %v339 = vpow.pop %v338
    %v340 = vmul.f32 %v317, 1.442695
    %v341 = vpow.pop %v340
    %v342 = vmul.f32 %v318, 1.442695
    %v343 = vpow.pop %v342
    %v344 = vmul.f32 %v319, 1.442695
    %v345 = vpow.pop %v344
    %v346 = vmul.f32 %v320, 1.442695
    %v347 = vpow.pop %v346
    %v348 = vmul.f32 %v321, 1.442695
    %v349 = vpow.pop %v348
    %v350 = vmul.f32 %v322, 1.442695
    %v351 = vpow.pop %v350
    %v352 = vmul.f32 %v323, 1.442695
    %v353 = vpow.pop %v352
    %v354 = vmul.f32 %v324, 1.442695
    %v355 = vpow.pop %v354
    %v356 = vmul.f32 %v325, 1.442695
    %v357 = vpow.pop %v356
    %v358 = vadd.f32 %v327, 1.0
    %v359 = vadd.f32 %v329, 1.0
    %v360 = vadd.f32 %v331, 1.0
    %v361 = vadd.f32 %v333, 1.0
    %v362 = vadd.f32 %v335, 1.0
    %v363 = vadd.f32 %v337, 1.0
    %v364 = vadd.f32 %v339, 1.0
    %v365 = vadd.f32 %v341, 1.0
    %v366 = vadd.f32 %v343, 1.0
    %v367 = vadd.f32 %v345, 1.0
    %v368 = vadd.f32 %v347, 1.0
    %v369 = vadd.f32 %v349, 1.0
    %v370 = vadd.f32 %v351, 1.0
    %v371 = vadd.f32 %v353, 1.0
    %v372 = vadd.f32 %v355, 1.0
    %v373 = vadd.f32 %v357, 1.0
    %v374 = vrcp.pop %v358
    %v375 = vmul.f32 1.0, %v374
    %v376 = vrcp.pop %v359
    %v377 = vmul.f32 1.0, %v376
    %v378 = vrcp.pop %v360
    %v379 = vmul.f32 1.0, %v378
    %v380 = vrcp.pop %v361
    %v381 = vmul.f32 1.0, %v380
    %v382 = vrcp.pop %v362
    %v383 = vmul.f32 1.0, %v382
    %v384 = vrcp.pop %v363
    %v385 = vmul.f32 1.0, %v384
    %v386 = vrcp.pop %v364
    %v387 = vmul.f32 1.0, %v386
    %v388 = vrcp.pop %v365
    %v389 = vmul.f32 1.0, %v388
    %v390 = vrcp.pop %v366
    %v391 = vmul.f32 1.0, %v390
    %v392 = vrcp.pop %v367
    %v393 = vmul.f32 1.0, %v392
    %v394 = vrcp.pop %v368
    %v395 = vmul.f32 1.0, %v394
    %v396 = vrcp.pop %v369
    %v397 = vmul.f32 1.0, %v396
    %v398 = vrcp.pop %v370
    %v399 = vmul.f32 1.0, %v398
    %v400 = vrcp.pop %v371
    %v401 = vmul.f32 1.0, %v400
    %v402 = vrcp.pop %v372
    %v403 = vmul.f32 1.0, %v402
    %v404 = vrcp.pop %v373
    %v405 = vmul.f32 1.0, %v404
    %v406 = vmul.f32 %v294, %v375
    %v407 = vmul.f32 %v295, %v377
    %v408 = vmul.f32 %v296, %v379
    %v409 = vmul.f32 %v297, %v381
    %v410 = vmul.f32 %v298, %v383
    %v411 = vmul.f32 %v299, %v385
    %v412 = vmul.f32 %v300, %v387
    %v413 = vmul.f32 %v301, %v389
    %v414 = vmul.f32 %v302, %v391
    %v415 = vmul.f32 %v303, %v393
    %v416 = vmul.f32 %v304, %v395
    %v417 = vmul.f32 %v305, %v397
    %v418 = vmul.f32 %v306, %v399
    %v419 = vmul.f32 %v307, %v401
    %v420 = vmul.f32 %v308, %v403
    %v421 = vmul.f32 %v309, %v405
    %v422 = vpack.c.bf16 %v407, %v406
    %v423 = vpack.c.bf16 %v409, %v408
    %v424 = vpack.c.bf16 %v411, %v410
    %v425 = vpack.c.bf16 %v413, %v412
    %v426 = vpack.c.bf16 %v415, %v414
    %v427 = vpack.c.bf16 %v417, %v416
    %v428 = vpack.c.bf16 %v419, %v418
    %v429 = vpack.c.bf16 %v421, %v420
    %v438 = vunpack.c.l.b16 %v422
    %v439 = vunpack.c.h.b16 %v422
    %v440 = vunpack.c.l.b16 %v423
    %v441 = vunpack.c.h.b16 %v423
    %v442 = vunpack.c.l.b16 %v424
    %v443 = vunpack.c.h.b16 %v424
    %v444 = vunpack.c.l.b16 %v425
    %v445 = vunpack.c.h.b16 %v425
    %v446 = vunpack.c.l.b16 %v426
    %v447 = vunpack.c.h.b16 %v426
    %v448 = vunpack.c.l.b16 %v427
    %v449 = vunpack.c.h.b16 %v427
    %v450 = vunpack.c.l.b16 %v428
    %v451 = vunpack.c.h.b16 %v428
    %v452 = vunpack.c.l.b16 %v429
    %v453 = vunpack.c.h.b16 %v429
    %v454 = vpack.c.b16 %v438, %v438
    %v455 = vpack.c.b16 %v439, %v439
    %v456 = vpack.c.b16 %v440, %v440
    %v457 = vpack.c.b16 %v441, %v441
    %v458 = vpack.c.b16 %v442, %v442
    %v459 = vpack.c.b16 %v443, %v443
    %v460 = vpack.c.b16 %v444, %v444
    %v461 = vpack.c.b16 %v445, %v445
    %v462 = vpack.c.b16 %v446, %v446
    %v463 = vpack.c.b16 %v447, %v447
    %v464 = vpack.c.b16 %v448, %v448
    %v465 = vpack.c.b16 %v449, %v449
    %v466 = vpack.c.b16 %v450, %v450
    %v467 = vpack.c.b16 %v451, %v451
    %v468 = vpack.c.b16 %v452, %v452
    %v469 = vpack.c.b16 %v453, %v453
    %486 = vst [vmem:[#allocation10] sm:$0xf] %v454
    %487 = vst [vmem:[#allocation10 + $0x4] sm:$0xf] %v455
    %488 = vst [vmem:[#allocation10 + $0x8] sm:$0xf] %v456
    %489 = vst [vmem:[#allocation10 + $0xc] sm:$0xf] %v457
    %490 = vst [vmem:[#allocation10 + $0x10] sm:$0xf] %v458
    %491 = vst [vmem:[#allocation10 + $0x14] sm:$0xf] %v459
    %492 = vst [vmem:[#allocation10 + $0x18] sm:$0xf] %v460
    %493 = vst [vmem:[#allocation10 + $0x1c] sm:$0xf] %v461
    %494 = vst [vmem:[#allocation10 + $0x20] sm:$0xf] %v462
    %495 = vst [vmem:[#allocation10 + $0x24] sm:$0xf] %v463
    %496 = vst [vmem:[#allocation10 + $0x28] sm:$0xf] %v464
    %497 = vst [vmem:[#allocation10 + $0x2c] sm:$0xf] %v465
    %498 = vst [vmem:[#allocation10 + $0x30] sm:$0xf] %v466
    %499 = vst [vmem:[#allocation10 + $0x34] sm:$0xf] %v467
    %500 = vst [vmem:[#allocation10 + $0x38] sm:$0xf] %v468
    %501 = vst [vmem:[#allocation10 + $0x3c] sm:$0xf] %v469
    // Predicated region
    $region34: #{efficientnet_forward.10} parent=1 // pred_check
      _
    $region35: #{efficientnet_forward.10} parent=1 // pred_check_branch
      %503 = sbr.rel (0) target = $region37
    $region36: #{efficientnet_forward.10} parent=1 // pred_region
      %s505 = ssub.s32 1024, 1024
      %506 = vsyncadd [#allocation4], %s505
      %s507 = sshll.u32 [#allocation10], 4
      %s508 = int_to_ptr.vmem [resolvable:$true] %s507
      %513 = dma.vmem_to_hbm [thread:$0]  %s508, 1024, %s4, [#allocation4], 64, 64, 4
    $region37: #{efficientnet_forward.10} parent=1 // pred_fallthru
      _
    // Predicated region
    $region38: #{efficientnet_forward.10} parent=1 // pred_check
      _
    $region39: #{efficientnet_forward.10} parent=1 // pred_check_branch
      %515 = sbr.rel (0) target = $region41
    $region40: #{efficientnet_forward.10} parent=1 // pred_region
      %516 = dma.done [#allocation4], 1024
    $region41: #{efficientnet_forward.10} parent=1 // pred_fallthru
      _
    %517 = vsyncpa [#allocation3], 1
    %518 = vsyncpa [#allocation6], 1
    %519 = vsyncpa [#allocation9], 1
    %520 = vsyncpa [#allocation4], 1

// kernel: efficientnet_forward.9
$region0: #{efficientnet_forward.9}
  #allocation0 [shape = 'u32[]', space=smem, size = 0x4, offset = 0x4, fixed_abs, tag = 'smem constant byte address 0x4 - core index']
  #allocation1 [shape = 'u32[144,128]{1,0:T(1,128)}', space=vmem, size = 0x12000, scoped, tag = 'internal scratch']
  %s0 = inlined_call_operand.hbm [shape: bf16[8,9,9,8], index: 0, kind: input, shape index: {}]
  %s1 = inlined_call_operand.hbm [shape: bf16[3,3,8,32], index: 1, kind: input, shape index: {}]
  %s2 = inlined_call_operand.hbm [shape: f32[1,32], index: 2, kind: input, shape index: {}]
  %s3 = inlined_call_operand.hbm [shape: f32[1,32], index: 3, kind: input, shape index: {}]
  %s4 = inlined_call_operand.hbm [shape: bf16[2,8,8,32], index: 4, kind: output, shape index: {}]
  %s5 = sld [smem:[#allocation0]]
  $region65: #{efficientnet_forward.9} parent=0
    _
  %s7 = ssub.s32 1, %s5
  %s8 = scalar_select 0, %s7, %s5
  $region1: #{efficientnet_forward.9} parent=0
    #allocation2 [shape = 'u8[294912]{0}', space=vmem, size = 0x48000, scoped, tag = 'input window, operand 0']
    #allocation3 [shape = 's32[2]{0}', space=sflag, size = 0x8, scoped, tag = 'scoped memory for efficientnet_forward.9']
    #allocation4 [shape = 's32[2]{0}', space=sflag, size = 0x8, scoped, tag = 'scoped memory for efficientnet_forward.9']
    #allocation5 [shape = 'u8[18432]{0}', space=vmem, size = 0x4800, scoped, tag = 'input window, operand 1, single buffered']
    #allocation6 [shape = 's32[1]{0}', space=sflag, size = 0x4, scoped, tag = 'scoped memory for efficientnet_forward.9']
    #allocation7 [shape = 'u8[512]{0}', space=vmem, size = 0x400, scoped, tag = 'input window, operand 2, single buffered']
    #allocation8 [shape = 'u8[512]{0}', space=vmem, size = 0x400, scoped, tag = 'input window, operand 3, single buffered']
    #allocation9 [shape = 's32[1]{0}', space=sflag, size = 0x4, scoped, tag = 'scoped memory for efficientnet_forward.9']
    #allocation10 [shape = 'u8[32768]{0}', space=vmem, size = 0x8000, scoped, tag = 'output window, operand 0']
    %9 = vsyncpa [#allocation3], 0
    %s10 = scalar_lea.sflag [#allocation3], 1
    %11 = vsyncpa %s10, 0
    %12 = vsyncpa [#allocation6], 0
    %13 = vsyncpa [#allocation9], 0
    %14 = vsyncpa [#allocation4], 0
    %s15 = scalar_lea.sflag [#allocation4], 1
    %16 = vsyncpa %s15, 0
    loop: start=0, step=1, limit=4
    $region2: #{efficientnet_forward.9} parent=1 // loop_pre_header
      _
    $region3: #{efficientnet_forward.9} parent=1 // loop_header
      %s18 = sphi 0, %s22
      %p19 = scmp.ge.s32.totalorder %s18, 4
      %s28 = sphi 0, %s30
      %s31 = sphi 0, %s28
      %s32 = sphi 0, %s31
      %s48 = sphi 0, %s32
      %s52 = sphi 0, %s52
      %s54 = sphi 0, %s52
      %s55 = sphi 0, %s54
      %s69 = sphi 0, %s55
      %s73 = sphi 0, %s73
      %s75 = sphi 0, %s73
      %s76 = sphi 0, %s75
      %s90 = sphi 0, %s76
      %s94 = sphi 0, %s94
      %s96 = sphi 0, %s94
      %s97 = sphi 0, %s96
      %s111 = sphi 0, %s97
      %s117 = sphi 0, %s119
      %s120 = sphi 0, %s117
      %s121 = sphi 0, %s120
      %s137 = sphi 0, %s121
    $region4: #{efficientnet_forward.9} parent=1 // loop_header_branch
      %21 = sbr.rel (%p19) target = $region8
    $region5: #{efficientnet_forward.9} parent=1 // loop_body
      %s23 = ssub.s32 %s18, 1
      %s24 = ssub.s32 %s18, 2
      %s25 = sadd.s32 %s18, 1
      %s26 = ssub.s32 %s18, %s25
      %p27 = scmp.eq.s32.totalorder %s26, 0
      %s29 = sadd.s32 %s28, 1
      %s30 = scalar_select %p27, %s28, %s29
      %p33 = pneg %p27
      %p34 = scmp.eq.s32.totalorder %s18, 1
      %p35 = por %p33, %p34
      %p36 = scmp.ne.s32.totalorder %s28, %s31
      %p37 = scmp.eq.s32.totalorder %s18, 0
      %p38 = por %p36, %p37
      %p39 = scmp.ne.s32.totalorder %s28, %s31
      %p40 = scmp.eq.s32.totalorder %s23, 1
      %p41 = por %p39, %p40
      %p42 = scmp.ne.s32.totalorder %s31, %s32
      %p43 = scmp.eq.s32.totalorder %s23, 0
      %p44 = por %p42, %p43
      %p45 = scmp.ne.s32.totalorder %s31, %s32
      %p46 = scmp.eq.s32.totalorder %s24, 1
      %p47 = por %p45, %p46
      %p49 = scmp.ne.s32.totalorder %s32, %s48
      %p50 = scmp.eq.s32.totalorder %s24, 0
      %p51 = por %p49, %p50
      %s53 = sadd.s32 %s52, 1
      %p56 = scmp.eq.s32.totalorder %s18, 1
      %p57 = scmp.ne.s32.totalorder %s52, %s54
      %p58 = scmp.eq.s32.totalorder %s18, 0
      %p59 = por %p57, %p58
      %p60 = scmp.ne.s32.totalorder %s52, %s54
      %p61 = scmp.eq.s32.totalorder %s23, 1
      %p62 = por %p60, %p61
      %p63 = scmp.ne.s32.totalorder %s54, %s55
      %p64 = scmp.eq.s32.totalorder %s23, 0
      %p65 = por %p63, %p64
      %p66 = scmp.ne.s32.totalorder %s54, %s55
      %p67 = scmp.eq.s32.totalorder %s24, 1
      %p68 = por %p66, %p67
      %p70 = scmp.ne.s32.totalorder %s55, %s69
      %p71 = scmp.eq.s32.totalorder %s24, 0
      %p72 = por %p70, %p71
      %s74 = sadd.s32 %s73, 1
      %p77 = scmp.eq.s32.totalorder %s18, 1
      %p78 = scmp.ne.s32.totalorder %s73, %s75
      %p79 = scmp.eq.s32.totalorder %s18, 0
      %p80 = por %p78, %p79
      %p81 = scmp.ne.s32.totalorder %s73, %s75
      %p82 = scmp.eq.s32.totalorder %s23, 1
      %p83 = por %p81, %p82
      %p84 = scmp.ne.s32.totalorder %s75, %s76
      %p85 = scmp.eq.s32.totalorder %s23, 0
      %p86 = por %p84, %p85
      %p87 = scmp.ne.s32.totalorder %s75, %s76
      %p88 = scmp.eq.s32.totalorder %s24, 1
      %p89 = por %p87, %p88
      %p91 = scmp.ne.s32.totalorder %s76, %s90
      %p92 = scmp.eq.s32.totalorder %s24, 0
      %p93 = por %p91, %p92
      %s95 = sadd.s32 %s94, 1
      %p98 = scmp.eq.s32.totalorder %s18, 1
      %p99 = scmp.ne.s32.totalorder %s94, %s96
      %p100 = scmp.eq.s32.totalorder %s18, 0
      %p101 = por %p99, %p100
      %p102 = scmp.ne.s32.totalorder %s94, %s96
      %p103 = scmp.eq.s32.totalorder %s23, 1
      %p104 = por %p102, %p103
      %p105 = scmp.ne.s32.totalorder %s96, %s97
      %p106 = scmp.eq.s32.totalorder %s23, 0
      %p107 = por %p105, %p106
      %p108 = scmp.ne.s32.totalorder %s96, %s97
      %p109 = scmp.eq.s32.totalorder %s24, 1
      %p110 = por %p108, %p109
      %p112 = scmp.ne.s32.totalorder %s97, %s111
      %p113 = scmp.eq.s32.totalorder %s24, 0
      %p114 = por %p112, %p113
      %s115 = ssub.s32 %s18, %s25
      %p116 = scmp.eq.s32.totalorder %s115, 0
      %s118 = sadd.s32 %s117, 1
      %s119 = scalar_select %p116, %s117, %s118
      %p122 = pneg %p116
      %p123 = scmp.eq.s32.totalorder %s18, 1
      %p124 = por %p122, %p123
      %p125 = scmp.ne.s32.totalorder %s117, %s120
      %p126 = scmp.eq.s32.totalorder %s18, 0
      %p127 = por %p125, %p126
      %p128 = scmp.ne.s32.totalorder %s117, %s120
      %p129 = scmp.eq.s32.totalorder %s23, 1
      %p130 = por %p128, %p129
      %p131 = scmp.ne.s32.totalorder %s120, %s121
      %p132 = scmp.eq.s32.totalorder %s23, 0
      %p133 = por %p131, %p132
      %p134 = scmp.ne.s32.totalorder %s120, %s121
      %p135 = scmp.eq.s32.totalorder %s24, 1
      %p136 = por %p134, %p135
      %p138 = scmp.ne.s32.totalorder %s121, %s137
      %p139 = scmp.eq.s32.totalorder %s24, 0
      %p140 = por %p138, %p139
      %p141 = scmp.le.s32.totalorder 1, %s18
      %p142 = scmp.lt.s32.totalorder %s18, 3
      %p143 = pnand %p141, %p142
      %p144 = pneg %p143
      // Predicated region
      $region9: #{efficientnet_forward.9} parent=5 // pred_check
        _
      $region10: #{efficientnet_forward.9} parent=5 // pred_check_branch
        %146 = sbr.rel (%p143) target = $region12
      $region11: #{efficientnet_forward.9} parent=5 // pred_region
        %s147 = ssub.s32 %s18, 1
        // Predicated region
        $region13: #{efficientnet_forward.9} parent=11 // pred_check
          %p148 = pneg %p65
        $region14: #{efficientnet_forward.9} parent=11 // pred_check_branch
          %150 = sbr.rel (%p148) target = $region16
        $region15: #{efficientnet_forward.9} parent=11 // pred_region
          %s152 = ssub.s32 576, 576
          %153 = vsyncadd [#allocation6], %s152
          %s154 = sshll.u32 [#allocation5], 4
          %s155 = int_to_ptr.vmem [resolvable:$true] %s154
          %160 = dma.hbm_to_vmem [thread:$0]  %s1, 576, %s155, [#allocation6], 64, 64, 4
        $region16: #{efficientnet_forward.9} parent=11 // pred_fallthru
          _
        // Predicated region
        $region17: #{efficientnet_forward.9} parent=11 // pred_check
          %p161 = pneg %p86
        $region18: #{efficientnet_forward.9} parent=11 // pred_check_branch
          %163 = sbr.rel (%p161) target = $region20
        $region19: #{efficientnet_forward.9} parent=11 // pred_region
          %s165 = ssub.s32 16, 16
          %166 = vsyncadd [#allocation6], %s165
          %s168 = sshll.u32 [#allocation7], 4
          %s169 = int_to_ptr.vmem [resolvable:$true] %s168
          %171 = dma.hbm_to_vmem [thread:$0]  %s2, 16, %s169, [#allocation6]
        $region20: #{efficientnet_forward.9} parent=11 // pred_fallthru
          _
        // Predicated region
        $region21: #{efficientnet_forward.9} parent=11 // pred_check
          %p172 = pneg %p107
        $region22: #{efficientnet_forward.9} parent=11 // pred_check_branch
          %174 = sbr.rel (%p172) target = $region24
        $region23: #{efficientnet_forward.9} parent=11 // pred_region
          %s176 = ssub.s32 16, 16
          %177 = vsyncadd [#allocation9], %s176
          %s179 = sshll.u32 [#allocation8], 4
          %s180 = int_to_ptr.vmem [resolvable:$true] %s179
          %182 = dma.hbm_to_vmem [thread:$0]  %s3, 16, %s180, [#allocation9]
        $region24: #{efficientnet_forward.9} parent=11 // pred_fallthru
          _
      $region12: #{efficientnet_forward.9} parent=5 // pred_fallthru
        _
      %p183 = scmp.lt.s32.totalorder %s18, 2
      // Predicated region
      $region25: #{efficientnet_forward.9} parent=5 // pred_check
        %p184 = pneg %p183
      $region26: #{efficientnet_forward.9} parent=5 // pred_check_branch
        %186 = sbr.rel (%p184) target = $region28
      $region27: #{efficientnet_forward.9} parent=5 // pred_region
        // Predicated region
        $region29: #{efficientnet_forward.9} parent=27 // pred_check
          %p187 = pneg %p38
        $region30: #{efficientnet_forward.9} parent=27 // pred_check_branch
          %189 = sbr.rel (%p187) target = $region32
        $region31: #{efficientnet_forward.9} parent=27 // pred_region
          %s190 = sand.u32 %s28, 1
          %s191 = scalar_lea.sflag [#allocation3], %s190
          %s192 = sand.u32 %s28, 1
          %s193 = smul.addr %s192, 288
          %s194 = scalar_lea.vmem [#allocation2], %s193
          %s195 = smul.u32 4, %s18
          %s197 = ssub.s32 4608, 4608
          %198 = vsyncadd %s191, %s197
          %s199 = smul.addr %s195, 18
          %s200 = smul.addr %s199, 64
          %s201 = scalar_lea.hbm %s0, %s200
          %s202 = sshll.u32 %s194, 4
          %s203 = int_to_ptr.vmem [resolvable:$true] %s202
          %208 = dma.hbm_to_vmem [thread:$0]  %s201, 4608, %s203, %s191, 64, 64, 4
        $region32: #{efficientnet_forward.9} parent=27 // pred_fallthru
          _
      $region28: #{efficientnet_forward.9} parent=5 // pred_fallthru
        _
      %p209 = scmp.le.s32.totalorder 1, %s18
      %p210 = scmp.lt.s32.totalorder %s18, 3
      %p211 = pnand %p209, %p210
      %p212 = pneg %p211
      // Predicated region
      $region33: #{efficientnet_forward.9} parent=5 // pred_check
        _
      $region34: #{efficientnet_forward.9} parent=5 // pred_check_branch
        %214 = sbr.rel (%p211) target = $region36
      $region35: #{efficientnet_forward.9} parent=5 // pred_region
        %s215 = ssub.s32 %s18, 1
        %s216 = sand.u32 %s31, 1
        %s217 = scalar_lea.sflag [#allocation3], %s216
        %s218 = sand.u32 %s31, 1
        %s219 = smul.addr %s218, 288
        %s220 = scalar_lea.vmem [#allocation2], %s219
        // Predicated region
        $region37: #{efficientnet_forward.9} parent=35 // pred_check
          %p221 = pneg %p44
        $region38: #{efficientnet_forward.9} parent=35 // pred_check_branch
          %223 = sbr.rel (%p221) target = $region40
        $region39: #{efficientnet_forward.9} parent=35 // pred_region
          %224 = dma.done %s217, 4608
        $region40: #{efficientnet_forward.9} parent=35 // pred_fallthru
          _
        // Predicated region
        $region41: #{efficientnet_forward.9} parent=35 // pred_check
          %p225 = pneg %p65
        $region42: #{efficientnet_forward.9} parent=35 // pred_check_branch
          %227 = sbr.rel (%p225) target = $region44
        $region43: #{efficientnet_forward.9} parent=35 // pred_region
          %228 = dma.done [#allocation6], 576
        $region44: #{efficientnet_forward.9} parent=35 // pred_fallthru
          _
        // Predicated region
        $region45: #{efficientnet_forward.9} parent=35 // pred_check
          %p229 = pneg %p86
        $region46: #{efficientnet_forward.9} parent=35 // pred_check_branch
          %231 = sbr.rel (%p229) target = $region48
        $region47: #{efficientnet_forward.9} parent=35 // pred_region
          %232 = dma.done [#allocation6], 16
        $region48: #{efficientnet_forward.9} parent=35 // pred_fallthru
          _
        // Predicated region
        $region49: #{efficientnet_forward.9} parent=35 // pred_check
          %p233 = pneg %p107
        $region50: #{efficientnet_forward.9} parent=35 // pred_check_branch
          %235 = sbr.rel (%p233) target = $region52
        $region51: #{efficientnet_forward.9} parent=35 // pred_region
          %236 = dma.done [#allocation9], 16
        $region52: #{efficientnet_forward.9} parent=35 // pred_fallthru
          _
        %s237 = sand.u32 %s31, 1
        %s238 = scalar_lea.sflag [#allocation3], %s237
        %s239 = sand.u32 %s31, 1
        %s240 = smul.addr %s239, 288
        %s241 = scalar_lea.vmem [#allocation2], %s240
        %p242 = pneg %p44
        %p243 = pneg %p41
        %p244 = pneg %p65
        %p245 = pneg %p62
        %p246 = pneg %p86
        %p247 = pneg %p83
        %p248 = pneg %p107
        %p249 = pneg %p104
        %p250 = pneg %p133
        %p251 = pneg %p130
        %s252 = sand.u32 %s120, 1
        %s253 = scalar_lea.sflag [#allocation4], %s252
        %s254 = sand.u32 %s120, 1
        %s255 = smul.addr %s254, 32
        %s256 = scalar_lea.vmem [#allocation10], %s255
        %s257 = smul.u32 4, %s23
        %v259 = vld [vmem:[%s220] sm:$0xf]
        %v260 = vld [vmem:[%s220 + $0x4] sm:$0x1]
        %v261 = vld [vmem:[%s220 + $0x8] sm:$0xf]
        %v262 = vld [vmem:[%s220 + $0xc] sm:$0x1]
        %v263 = vld [vmem:[%s220 + $0x10] sm:$0xf]
        %v264 = vld [vmem:[%s220 + $0x14] sm:$0x1]
        %v265 = vld [vmem:[%s220 + $0x18] sm:$0xf]
        %v266 = vld [vmem:[%s220 + $0x1c] sm:$0x1]
        %v267 = vld [vmem:[%s220 + $0x20] sm:$0xf]
        %v268 = vld [vmem:[%s220 + $0x24] sm:$0x1]
        %v269 = vld [vmem:[%s220 + $0x28] sm:$0xf]
        %v270 = vld [vmem:[%s220 + $0x2c] sm:$0x1]
        %v271 = vld [vmem:[%s220 + $0x30] sm:$0xf]
        %v272 = vld [vmem:[%s220 + $0x34] sm:$0x1]
        %v273 = vld [vmem:[%s220 + $0x38] sm:$0xf]
        %v274 = vld [vmem:[%s220 + $0x3c] sm:$0x1]
        %v275 = vld [vmem:[%s220 + $0x40] sm:$0xf]
        %v276 = vld [vmem:[%s220 + $0x44] sm:$0x1]
        %v277 = vld [vmem:[%s220 + $0x48] sm:$0xf]
        %v278 = vld [vmem:[%s220 + $0x50] sm:$0xf]
        %v279 = vld [vmem:[%s220 + $0x58] sm:$0xf]
        %v280 = vld [vmem:[%s220 + $0x60] sm:$0xf]
        %v281 = vld [vmem:[%s220 + $0x68] sm:$0xf]
        %v282 = vld [vmem:[%s220 + $0x70] sm:$0xf]
        %v283 = vld [vmem:[%s220 + $0x78] sm:$0xf]
        %v284 = vld [vmem:[%s220 + $0x80] sm:$0xf]
        %v285 = vld [vmem:[%s220 + $0x88] sm:$0xf]
        %v286 = vld [vmem:[%s220 + $0x90] sm:$0xf]
        %v287 = vld [vmem:[%s220 + $0x94] sm:$0x1]
        %v288 = vld [vmem:[%s220 + $0x98] sm:$0xf]
        %v289 = vld [vmem:[%s220 + $0x9c] sm:$0x1]
        %v290 = vld [vmem:[%s220 + $0xa0] sm:$0xf]
        %v291 = vld [vmem:[%s220 + $0xa4] sm:$0x1]
        %v292 = vld [vmem:[%s220 + $0xa8] sm:$0xf]
        %v293 = vld [vmem:[%s220 + $0xac] sm:$0x1]
        %v294 = vld [vmem:[%s220 + $0xb0] sm:$0xf]
        %v295 = vld [vmem:[%s220 + $0xb4] sm:$0x1]
        %v296 = vld [vmem:[%s220 + $0xb8] sm:$0xf]
        %v297 = vld [vmem:[%s220 + $0xbc] sm:$0x1]
        %v298 = vld [vmem:[%s220 + $0xc0] sm:$0xf]
        %v299 = vld [vmem:[%s220 + $0xc4] sm:$0x1]
        %v300 = vld [vmem:[%s220 + $0xc8] sm:$0xf]
        %v301 = vld [vmem:[%s220 + $0xcc] sm:$0x1]
        %v302 = vld [vmem:[%s220 + $0xd8] sm:$0xf]
        %v303 = vld [vmem:[%s220 + $0xe0] sm:$0xf]
        %v304 = vld [vmem:[%s220 + $0xe8] sm:$0xf]
        %v305 = vld [vmem:[%s220 + $0xf0] sm:$0xf]
        %v306 = vld [vmem:[%s220 + $0xf8] sm:$0xf]
        %v307 = vld [vmem:[%s220 + $0x100] sm:$0xf]
        %v308 = vld [vmem:[%s220 + $0x108] sm:$0xf]
        %v309 = vld [vmem:[%s220 + $0x110] sm:$0xf]
        %v310 = vld [vmem:[#allocation5] sm:$0xf]
        %v311 = vld [vmem:[#allocation5 + $0x4] sm:$0xf]
        %v312 = vld [vmem:[#allocation5 + $0x8] sm:$0xf]
        %v313 = vld [vmem:[#allocation5 + $0xc] sm:$0xf]
        %v314 = vld [vmem:[#allocation5 + $0x10] sm:$0xf]
        %v315 = vld [vmem:[#allocation5 + $0x14] sm:$0xf]
        %v316 = vld [vmem:[#allocation5 + $0x18] sm:$0xf]
        %v317 = vld [vmem:[#allocation5 + $0x1c] sm:$0xf]
        %v318 = vld [vmem:[#allocation5 + $0x20] sm:$0xf]
        %v327 = vunpack.c.l.b16 %v277
        %v328 = vunpack.c.l.b16 %v278
        %v329 = vunpack.c.l.b16 %v279
        %v330 = vunpack.c.l.b16 %v280
        %v331 = vunpack.c.l.b16 %v281
        %v332 = vunpack.c.l.b16 %v282
        %v333 = vunpack.c.l.b16 %v283
        %v334 = vunpack.c.l.b16 %v284
        %v335 = vpack.c.b16 %v328, %v327
        %v336 = vpack.c.b16 %v330, %v329
        %v337 = vpack.c.b16 %v332, %v331
        %v338 = vpack.c.b16 %v334, %v333
        %vm339 = vcmask 64512
        %v341 = vsel %vm339, %v335, 0
        %v344 = vsel %vm339, %v336, 0
        %v347 = vsel %vm339, %v337, 0
        %v350 = vsel %vm339, %v338, 0
        %vm352 = vcmask 1043456
        %v354 = vsel %vm352, %v311, 0
        %356 = vmatprep.subr.bf16.mxu0 0
        %357 = vmatpush1.bf16.msra.mxu0 %v354
        %358 = vmatprep.subr.bf16.mxu0 0
        %359 = vmatpush1.bf16.msra.mxu0 0
        %360 = vmatprep.subr.bf16.mxu0 0
        %361 = vmatpush1.bf16.msra.mxu0 0
        %362 = vmatprep.subr.bf16.mxu0 0
        %363 = vmatpush1.bf16.msra.mxu0 0
        %364 = vmatprep.subr.bf16.mxu0 0
        %365 = vmatpush1.bf16.msra.mxu0 0
        %366 = vmatprep.subr.bf16.mxu0 0
        %367 = vmatpush1.bf16.msra.mxu0 0
        %368 = vmatprep.subr.bf16.mxu0 0
        %369 = vmatpush1.bf16.msra.mxu0 0
        %370 = vmatprep.subr.bf16.mxu0 0
        %371 = vmatpush1.bf16.msra.mxu0 0
        %372 = vmatprep.subr.bf16.mxu0 0
        %373 = vmatpush1.bf16.msra.mxu0 0
        %374 = vmatprep.subr.bf16.mxu0 0
        %375 = vmatpush1.bf16.msra.mxu0 0
        %376 = vmatprep.subr.bf16.mxu0 0
        %377 = vmatpush1.bf16.msra.mxu0 0
        %378 = vmatprep.subr.bf16.mxu0 0
        %379 = vmatpush1.bf16.msra.mxu0 0
        %380 = vmatprep.subr.bf16.mxu0 0
        %381 = vmatpush1.bf16.msra.mxu0 0
        %382 = vmatprep.subr.bf16.mxu0 0
        %383 = vmatpush1.bf16.msra.mxu0 0
        %384 = vmatprep.subr.bf16.mxu0 0
        %385 = vmatpush1.bf16.msra.mxu0 0
        %386 = vmatprep.subr.bf16.mxu0 0
        %387 = vmatpush1.bf16.msra.mxu0 0
        %388 = vmatprep.mubr.bf16.mxu0 0
        %389 = vmatmul.mubr.bf16.gmra.mrb[0].mxu0 %v341
        %v390 = vpop.f32.mrb[0].mxu0
        %v391 = vadd.f32 0.0, %v390
        %v392 = vpop.f32.mrb[0].mxu0
        %v393 = vpop.f32.mrb[0].mxu0
        %v394 = vadd.f32 0.0, %v393
        %v395 = vpop.f32.mrb[0].mxu0
        %396 = vmatprep.mubr.bf16.mxu0 0
        %397 = vmatmul.mubr.bf16.gmra.mrb[0].mxu0 %v344
        %v398 = vpop.f32.mrb[0].mxu0
        %v399 = vadd.f32 0.0, %v398
        %v400 = vpop.f32.mrb[0].mxu0
        %v401 = vpop.f32.mrb[0].mxu0
        %v402 = vadd.f32 0.0, %v401
        %v403 = vpop.f32.mrb[0].mxu0
        %404 = vmatprep.mubr.bf16.mxu0 0
        %405 = vmatmul.mubr.bf16.gmra.mrb[0].mxu0 %v347
        %v406 = vpop.f32.mrb[0].mxu0
        %v407 = vadd.f32 0.0, %v406
        %v408 = vpop.f32.mrb[0].mxu0
        %v409 = vpop.f32.mrb[0].mxu0
        %v410 = vadd.f32 0.0, %v409
        %v411 = vpop.f32.mrb[0].mxu0
        %412 = vmatprep.mubr.bf16.mxu0 0
        %413 = vmatmul.mubr.bf16.gmra.mrb[0].mxu0 %v350
        %v414 = vpop.f32.mrb[0].mxu0
        %v415 = vadd.f32 0.0, %v414
        %v416 = vpop.f32.mrb[0].mxu0
        %v417 = vpop.f32.mrb[0].mxu0
        %v418 = vadd.f32 0.0, %v417
        %v419 = vpop.f32.mrb[0].mxu0
        %420 = vdwg.mxu0
        %v429 = vunpack.c.l.b16 %v259
        %v430 = vunpack.c.l.b16 %v261
        %v431 = vunpack.c.l.b16 %v263
        %v432 = vunpack.c.l.b16 %v265
        %v433 = vunpack.c.l.b16 %v267
        %v434 = vunpack.c.l.b16 %v269
        %v435 = vunpack.c.l.b16 %v271
        %v436 = vunpack.c.l.b16 %v273
        %v437 = vpack.c.b16 %v430, %v429
        %v438 = vpack.c.b16 %v432, %v431
        %v439 = vpack.c.b16 %v434, %v433
        %v440 = vpack.c.b16 %v436, %v435
        %v442 = vsel %vm339, %v437, 0
        %v445 = vsel %vm339, %v438, 0
        %v448 = vsel %vm339, %v439, 0
        %v451 = vsel %vm339, %v440, 0
        %v454 = vsel %vm352, %v310, 0
        %456 = vmatprep.subr.bf16.mxu0 0
        %457 = vmatpush1.bf16.msra.mxu0 %v454
        %458 = vmatprep.subr.bf16.mxu0 0
        %459 = vmatpush1.bf16.msra.mxu0 0
        %460 = vmatprep.subr.bf16.mxu0 0
        %461 = vmatpush1.bf16.msra.mxu0 0
        %462 = vmatprep.subr.bf16.mxu0 0
        %463 = vmatpush1.bf16.msra.mxu0 0
        %464 = vmatprep.subr.bf16.mxu0 0
        %465 = vmatpush1.bf16.msra.mxu0 0
        %466 = vmatprep.subr.bf16.mxu0 0
        %467 = vmatpush1.bf16.msra.mxu0 0
        %468 = vmatprep.subr.bf16.mxu0 0
        %469 = vmatpush1.bf16.msra.mxu0 0
        %470 = vmatprep.subr.bf16.mxu0 0
        %471 = vmatpush1.bf16.msra.mxu0 0
        %472 = vmatprep.subr.bf16.mxu0 0
        %473 = vmatpush1.bf16.msra.mxu0 0
        %474 = vmatprep.subr.bf16.mxu0 0
        %475 = vmatpush1.bf16.msra.mxu0 0
        %476 = vmatprep.subr.bf16.mxu0 0
        %477 = vmatpush1.bf16.msra.mxu0 0
        %478 = vmatprep.subr.bf16.mxu0 0
        %479 = vmatpush1.bf16.msra.mxu0 0
        %480 = vmatprep.subr.bf16.mxu0 0
        %481 = vmatpush1.bf16.msra.mxu0 0
        %482 = vmatprep.subr.bf16.mxu0 0
        %483 = vmatpush1.bf16.msra.mxu0 0
        %484 = vmatprep.subr.bf16.mxu0 0
        %485 = vmatpush1.bf16.msra.mxu0 0
        %486 = vmatprep.subr.bf16.mxu0 0
        %487 = vmatpush1.bf16.msra.mxu0 0
        %488 = vmatprep.mubr.bf16.mxu0 0
        %489 = vmatmul.mubr.bf16.gmra.mrb[0].mxu0 %v442
        %v490 = vpop.f32.mrb[0].mxu0
        %v491 = vadd.f32 %v391, %v490
        %v492 = vpop.f32.mrb[0].mxu0
        %v493 = vpop.f32.mrb[0].mxu0
        %v494 = vadd.f32 %v394, %v493
        %v495 = vpop.f32.mrb[0].mxu0
        %496 = vmatprep.mubr.bf16.mxu0 0
        %497 = vmatmul.mubr.bf16.gmra.mrb[0].mxu0 %v445
        %v498 = vpop.f32.mrb[0].mxu0
        %v499 = vadd.f32 %v399, %v498
        %v500 = vpop.f32.mrb[0].mxu0
        %v501 = vpop.f32.mrb[0].mxu0
        %v502 = vadd.f32 %v402, %v501
        %v503 = vpop.f32.mrb[0].mxu0
        %504 = vmatprep.mubr.bf16.mxu0 0
        %505 = vmatmul.mubr.bf16.gmra.mrb[0].mxu0 %v448
        %v506 = vpop.f32.mrb[0].mxu0
        %v507 = vadd.f32 %v407, %v506
        %v508 = vpop.f32.mrb[0].mxu0
        %v509 = vpop.f32.mrb[0].mxu0
        %v510 = vadd.f32 %v410, %v509
        %v511 = vpop.f32.mrb[0].mxu0
        %512 = vmatprep.mubr.bf16.mxu0 0
        %513 = vmatmul.mubr.bf16.gmra.mrb[0].mxu0 %v451
        %v514 = vpop.f32.mrb[0].mxu0
        %v515 = vadd.f32 %v415, %v514
        %v516 = vpop.f32.mrb[0].mxu0
        %v517 = vpop.f32.mrb[0].mxu0
        %v518 = vadd.f32 %v418, %v517
        %v519 = vpop.f32.mrb[0].mxu0
        %520 = vdwg.mxu0
        %vm521 = vsmask.f32 3328
        %vm522 = vsmask.f32 7440
        %vm523 = vmor %vm521, %vm522
        %v525 = vshrl.u32 %v259, 16
        %v527 = vrot.slane %v525, 4
        %v528 = vshll.u32 %v259, 16
        %v530 = vrot.slane %v528, 5
        %v531 = vor.u32 %v527, %v530
        %v532 = vrot.slane %v531, 4
        %v534 = vshll.u32 %v260, 16
        %v536 = vrot.slane %v534, 5
        %v537 = vsel %vm523, %v532, %v536
        %v539 = vshrl.u32 %v261, 16
        %v541 = vrot.slane %v539, 4
        %v542 = vshll.u32 %v261, 16
        %v544 = vrot.slane %v542, 5
        %v545 = vor.u32 %v541, %v544
        %v546 = vrot.slane %v545, 4
        %v548 = vshll.u32 %v262, 16
        %v550 = vrot.slane %v548, 5
        %v551 = vsel %vm523, %v546, %v550
        %v553 = vshrl.u32 %v263, 16
        %v555 = vrot.slane %v553, 4
        %v556 = vshll.u32 %v263, 16
        %v558 = vrot.slane %v556, 5
        %v559 = vor.u32 %v555, %v558
        %v560 = vrot.slane %v559, 4
        %v562 = vshll.u32 %v264, 16
        %v564 = vrot.slane %v562, 5
        %v565 = vsel %vm523, %v560, %v564
        %v567 = vshrl.u32 %v265, 16
        %v569 = vrot.slane %v567, 4
        %v570 = vshll.u32 %v265, 16
        %v572 = vrot.slane %v570, 5
        %v573 = vor.u32 %v569, %v572
        %v574 = vrot.slane %v573, 4
        %v576 = vshll.u32 %v266, 16
        %v578 = vrot.slane %v576, 5
        %v579 = vsel %vm523, %v574, %v578
        %v581 = vshrl.u32 %v267, 16
        %v583 = vrot.slane %v581, 4
        %v584 = vshll.u32 %v267, 16
        %v586 = vrot.slane %v584, 5
        %v587 = vor.u32 %v583, %v586
        %v588 = vrot.slane %v587, 4
        %v590 = vshll.u32 %v268, 16
        %v592 = vrot.slane %v590, 5
        %v593 = vsel %vm523, %v588, %v592
        %v595 = vshrl.u32 %v269, 16
        %v597 = vrot.slane %v595, 4
        %v598 = vshll.u32 %v269, 16
        %v600 = vrot.slane %v598, 5
        %v601 = vor.u32 %v597, %v600
        %v602 = vrot.slane %v601, 4
        %v604 = vshll.u32 %v270, 16
        %v606 = vrot.slane %v604, 5
        %v607 = vsel %vm523, %v602, %v606
        %v609 = vshrl.u32 %v271, 16
        %v611 = vrot.slane %v609, 4
        %v612 = vshll.u32 %v271, 16
        %v614 = vrot.slane %v612, 5
        %v615 = vor.u32 %v611, %v614
        %v616 = vrot.slane %v615, 4
        %v618 = vshll.u32 %v272, 16
        %v620 = vrot.slane %v618, 5
        %v621 = vsel %vm523, %v616, %v620
        %v623 = vshrl.u32 %v273, 16
        %v625 = vrot.slane %v623, 4
        %v626 = vshll.u32 %v273, 16
        %v628 = vrot.slane %v626, 5
        %v629 = vor.u32 %v625, %v628
        %v630 = vrot.slane %v629, 4
        %v632 = vshll.u32 %v274, 16
        %v634 = vrot.slane %v632, 5
        %v635 = vsel %vm523, %v630, %v634
        %v636 = vunpack.c.l.b16 %v537
        %v637 = vunpack.c.l.b16 %v551
        %v638 = vunpack.c.l.b16 %v565
        %v639 = vunpack.c.l.b16 %v579
        %v640 = vunpack.c.l.b16 %v593
        %v641 = vunpack.c.l.b16 %v607
        %v642 = vunpack.c.l.b16 %v621
        %v643 = vunpack.c.l.b16 %v635
        %v644 = vpack.c.b16 %v637, %v636
        %v645 = vpack.c.b16 %v639, %v638
        %v646 = vpack.c.b16 %v641, %v640
        %v647 = vpack.c.b16 %v643, %v642
        %v649 = vsel %vm339, %v644, 0
        %v652 = vsel %vm339, %v645, 0
        %v655 = vsel %vm339, %v646, 0
        %v658 = vsel %vm339, %v647, 0
        %v661 = vsel %vm352, %v312, 0
        %663 = vmatprep.subr.bf16.mxu0 0
        %664 = vmatpush1.bf16.msra.mxu0 %v661
        %665 = vmatprep.subr.bf16.mxu0 0
        %666 = vmatpush1.bf16.msra.mxu0 0
        %667 = vmatprep.subr.bf16.mxu0 0
        %668 = vmatpush1.bf16.msra.mxu0 0
        %669 = vmatprep.subr.bf16.mxu0 0
        %670 = vmatpush1.bf16.msra.mxu0 0
        %671 = vmatprep.subr.bf16.mxu0 0
        %672 = vmatpush1.bf16.msra.mxu0 0
        %673 = vmatprep.subr.bf16.mxu0 0
        %674 = vmatpush1.bf16.msra.mxu0 0
        %675 = vmatprep.subr.bf16.mxu0 0
        %676 = vmatpush1.bf16.msra.mxu0 0
        %677 = vmatprep.subr.bf16.mxu0 0
        %678 = vmatpush1.bf16.msra.mxu0 0
        %679 = vmatprep.subr.bf16.mxu0 0
        %680 = vmatpush1.bf16.msra.mxu0 0
        %681 = vmatprep.subr.bf16.mxu0 0
        %682 = vmatpush1.bf16.msra.mxu0 0
        %683 = vmatprep.subr.bf16.mxu0 0
        %684 = vmatpush1.bf16.msra.mxu0 0
        %685 = vmatprep.subr.bf16.mxu0 0
        %686 = vmatpush1.bf16.msra.mxu0 0
        %687 = vmatprep.subr.bf16.mxu0 0
        %688 = vmatpush1.bf16.msra.mxu0 0
        %689 = vmatprep.subr.bf16.mxu0 0
        %690 = vmatpush1.bf16.msra.mxu0 0
        %691 = vmatprep.subr.bf16.mxu0 0
        %692 = vmatpush1.bf16.msra.mxu0 0
        %693 = vmatprep.subr.bf16.mxu0 0
        %694 = vmatpush1.bf16.msra.mxu0 0
        %695 = vmatprep.mubr.bf16.mxu0 0
        %696 = vmatmul.mubr.bf16.gmra.mrb[0].mxu0 %v649
        %v697 = vpop.f32.mrb[0].mxu0
        %v698 = vadd.f32 0.0, %v697
        %v699 = vpop.f32.mrb[0].mxu0
        %v700 = vpop.f32.mrb[0].mxu0
        %v701 = vadd.f32 0.0, %v700
        %v702 = vpop.f32.mrb[0].mxu0
        %703 = vmatprep.mubr.bf16.mxu0 0
        %704 = vmatmul.mubr.bf16.gmra.mrb[0].mxu0 %v652
        %v705 = vpop.f32.mrb[0].mxu0
        %v706 = vadd.f32 0.0, %v705
        %v707 = vpop.f32.mrb[0].mxu0
        %v708 = vpop.f32.mrb[0].mxu0
        %v709 = vadd.f32 0.0, %v708
        %v710 = vpop.f32.mrb[0].mxu0
        %711 = vmatprep.mubr.bf16.mxu0 0
        %712 = vmatmul.mubr.bf16.gmra.mrb[0].mxu0 %v655
        %v713 = vpop.f32.mrb[0].mxu0
        %v714 = vadd.f32 0.0, %v713
        %v715 = vpop.f32.mrb[0].mxu0
        %v716 = vpop.f32.mrb[0].mxu0
        %v717 = vadd.f32 0.0, %v716
        %v718 = vpop.f32.mrb[0].mxu0
        %719 = vmatprep.mubr.bf16.mxu0 0
        %720 = vmatmul.mubr.bf16.gmra.mrb[0].mxu0 %v658
        %v721 = vpop.f32.mrb[0].mxu0
        %v722 = vadd.f32 0.0, %v721
        %v723 = vpop.f32.mrb[0].mxu0
        %v724 = vpop.f32.mrb[0].mxu0
        %v725 = vadd.f32 0.0, %v724
        %v726 = vpop.f32.mrb[0].mxu0
        %727 = vdwg.mxu0
        %v728 = vadd.f32 %v491, %v698
        %v729 = vadd.f32 %v494, %v701
        %v730 = vadd.f32 %v499, %v706
        %v731 = vadd.f32 %v502, %v709
        %v732 = vadd.f32 %v507, %v714
        %v733 = vadd.f32 %v510, %v717
        %v734 = vadd.f32 %v515, %v722
        %v735 = vadd.f32 %v518, %v725
        %v744 = vunpack.c.l.b16 %v286
        %v745 = vunpack.c.l.b16 %v288
        %v746 = vunpack.c.l.b16 %v290
        %v747 = vunpack.c.l.b16 %v292
        %v748 = vunpack.c.l.b16 %v294
        %v749 = vunpack.c.l.b16 %v296
        %v750 = vunpack.c.l.b16 %v298
        %v751 = vunpack.c.l.b16 %v300
        %v752 = vpack.c.b16 %v745, %v744
        %v753 = vpack.c.b16 %v747, %v746
        %v754 = vpack.c.b16 %v749, %v748
        %v755 = vpack.c.b16 %v751, %v750
        %v757 = vsel %vm339, %v752, 0
        %v760 = vsel %vm339, %v753, 0
        %v763 = vsel %vm339, %v754, 0
        %v766 = vsel %vm339, %v755, 0
        %v769 = vsel %vm352, %v313, 0
        %771 = vmatprep.subr.bf16.mxu0 0
        %772 = vmatpush1.bf16.msra.mxu0 %v769
        %773 = vmatprep.subr.bf16.mxu0 0
        %774 = vmatpush1.bf16.msra.mxu0 0
        %775 = vmatprep.subr.bf16.mxu0 0
        %776 = vmatpush1.bf16.msra.mxu0 0
        %777 = vmatprep.subr.bf16.mxu0 0
        %778 = vmatpush1.bf16.msra.mxu0 0
        %779 = vmatprep.subr.bf16.mxu0 0
        %780 = vmatpush1.bf16.msra.mxu0 0
        %781 = vmatprep.subr.bf16.mxu0 0
        %782 = vmatpush1.bf16.msra.mxu0 0
        %783 = vmatprep.subr.bf16.mxu0 0
        %784 = vmatpush1.bf16.msra.mxu0 0
        %785 = vmatprep.subr.bf16.mxu0 0
        %786 = vmatpush1.bf16.msra.mxu0 0
        %787 = vmatprep.subr.bf16.mxu0 0
        %788 = vmatpush1.bf16.msra.mxu0 0
        %789 = vmatprep.subr.bf16.mxu0 0
        %790 = vmatpush1.bf16.msra.mxu0 0
        %791 = vmatprep.subr.bf16.mxu0 0
        %792 = vmatpush1.bf16.msra.mxu0 0
        %793 = vmatprep.subr.bf16.mxu0 0
        %794 = vmatpush1.bf16.msra.mxu0 0
        %795 = vmatprep.subr.bf16.mxu0 0
        %796 = vmatpush1.bf16.msra.mxu0 0
        %797 = vmatprep.subr.bf16.mxu0 0
        %798 = vmatpush1.bf16.msra.mxu0 0
        %799 = vmatprep.subr.bf16.mxu0 0
        %800 = vmatpush1.bf16.msra.mxu0 0
        %801 = vmatprep.subr.bf16.mxu0 0
        %802 = vmatpush1.bf16.msra.mxu0 0
        %803 = vmatprep.mubr.bf16.mxu0 0
        %804 = vmatmul.mubr.bf16.gmra.mrb[0].mxu0 %v757
        %v805 = vpop.f32.mrb[0].mxu0
        %v806 = vadd.f32 0.0, %v805
        %v807 = vpop.f32.mrb[0].mxu0
        %v808 = vpop.f32.mrb[0].mxu0
        %v809 = vadd.f32 0.0, %v808
        %v810 = vpop.f32.mrb[0].mxu0
        %811 = vmatprep.mubr.bf16.mxu0 0
        %812 = vmatmul.mubr.bf16.gmra.mrb[0].mxu0 %v760
        %v813 = vpop.f32.mrb[0].mxu0
        %v814 = vadd.f32 0.0, %v813
        %v815 = vpop.f32.mrb[0].mxu0
        %v816 = vpop.f32.mrb[0].mxu0
        %v817 = vadd.f32 0.0, %v816
        %v818 = vpop.f32.mrb[0].mxu0
        %819 = vmatprep.mubr.bf16.mxu0 0
        %820 = vmatmul.mubr.bf16.gmra.mrb[0].mxu0 %v763
        %v821 = vpop.f32.mrb[0].mxu0
        %v822 = vadd.f32 0.0, %v821
        %v823 = vpop.f32.mrb[0].mxu0
        %v824 = vpop.f32.mrb[0].mxu0
        %v825 = vadd.f32 0.0, %v824
        %v826 = vpop.f32.mrb[0].mxu0
        %827 = vmatprep.mubr.bf16.mxu0 0
        %828 = vmatmul.mubr.bf16.gmra.mrb[0].mxu0 %v766
        %v829 = vpop.f32.mrb[0].mxu0
        %v830 = vadd.f32 0.0, %v829
        %v831 = vpop.f32.mrb[0].mxu0
        %v832 = vpop.f32.mrb[0].mxu0
        %v833 = vadd.f32 0.0, %v832
        %v834 = vpop.f32.mrb[0].mxu0
        %835 = vdwg.mxu0
        %v836 = vadd.f32 %v728, %v806
        %v837 = vadd.f32 %v729, %v809
        %v838 = vadd.f32 %v730, %v814
        %v839 = vadd.f32 %v731, %v817
        %v840 = vadd.f32 %v732, %v822
        %v841 = vadd.f32 %v733, %v825
        %v842 = vadd.f32 %v734, %v830
        %v843 = vadd.f32 %v735, %v833
        %v852 = vunpack.c.l.b16 %v302
        %v853 = vunpack.c.l.b16 %v303
        %v854 = vunpack.c.l.b16 %v304
        %v855 = vunpack.c.l.b16 %v305
        %v856 = vunpack.c.l.b16 %v306
        %v857 = vunpack.c.l.b16 %v307
        %v858 = vunpack.c.l.b16 %v308
        %v859 = vunpack.c.l.b16 %v309
        %v860 = vpack.c.b16 %v853, %v852
        %v861 = vpack.c.b16 %v855, %v854
        %v862 = vpack.c.b16 %v857, %v856
        %v863 = vpack.c.b16 %v859, %v858
        %v865 = vsel %vm339, %v860, 0
        %v868 = vsel %vm339, %v861, 0
        %v871 = vsel %vm339, %v862, 0
        %v874 = vsel %vm339, %v863, 0
        %v877 = vsel %vm352, %v314, 0
        %879 = vmatprep.subr.bf16.mxu0 0
        %880 = vmatpush1.bf16.msra.mxu0 %v877
        %881 = vmatprep.subr.bf16.mxu0 0
        %882 = vmatpush1.bf16.msra.mxu0 0
        %883 = vmatprep.subr.bf16.mxu0 0
        %884 = vmatpush1.bf16.msra.mxu0 0
        %885 = vmatprep.subr.bf16.mxu0 0
        %886 = vmatpush1.bf16.msra.mxu0 0
        %887 = vmatprep.subr.bf16.mxu0 0
        %888 = vmatpush1.bf16.msra.mxu0 0
        %889 = vmatprep.subr.bf16.mxu0 0
        %890 = vmatpush1.bf16.msra.mxu0 0
        %891 = vmatprep.subr.bf16.mxu0 0
        %892 = vmatpush1.bf16.msra.mxu0 0
        %893 = vmatprep.subr.bf16.mxu0 0
        %894 = vmatpush1.bf16.msra.mxu0 0
        %895 = vmatprep.subr.bf16.mxu0 0
        %896 = vmatpush1.bf16.msra.mxu0 0
        %897 = vmatprep.subr.bf16.mxu0 0
        %898 = vmatpush1.bf16.msra.mxu0 0
        %899 = vmatprep.subr.bf16.mxu0 0
        %900 = vmatpush1.bf16.msra.mxu0 0
        %901 = vmatprep.subr.bf16.mxu0 0
        %902 = vmatpush1.bf16.msra.mxu0 0
        %903 = vmatprep.subr.bf16.mxu0 0
        %904 = vmatpush1.bf16.msra.mxu0 0
        %905 = vmatprep.subr.bf16.mxu0 0
        %906 = vmatpush1.bf16.msra.mxu0 0
        %907 = vmatprep.subr.bf16.mxu0 0
        %908 = vmatpush1.bf16.msra.mxu0 0
        %909 = vmatprep.subr.bf16.mxu0 0
        %910 = vmatpush1.bf16.msra.mxu0 0
        %911 = vmatprep.mubr.bf16.mxu0 0
        %912 = vmatmul.mubr.bf16.gmra.mrb[0].mxu0 %v865
        %v913 = vpop.f32.mrb[0].mxu0
        %v914 = vadd.f32 0.0, %v913
        %v915 = vpop.f32.mrb[0].mxu0
        %v916 = vpop.f32.mrb[0].mxu0
        %v917 = vadd.f32 0.0, %v916
        %v918 = vpop.f32.mrb[0].mxu0
        %919 = vmatprep.mubr.bf16.mxu0 0
        %920 = vmatmul.mubr.bf16.gmra.mrb[0].mxu0 %v868
        %v921 = vpop.f32.mrb[0].mxu0
        %v922 = vadd.f32 0.0, %v921
        %v923 = vpop.f32.mrb[0].mxu0
        %v924 = vpop.f32.mrb[0].mxu0
        %v925 = vadd.f32 0.0, %v924
        %v926 = vpop.f32.mrb[0].mxu0
        %927 = vmatprep.mubr.bf16.mxu0 0
        %928 = vmatmul.mubr.bf16.gmra.mrb[0].mxu0 %v871
        %v929 = vpop.f32.mrb[0].mxu0
        %v930 = vadd.f32 0.0, %v929
        %v931 = vpop.f32.mrb[0].mxu0
        %v932 = vpop.f32.mrb[0].mxu0
        %v933 = vadd.f32 0.0, %v932
        %v934 = vpop.f32.mrb[0].mxu0
        %935 = vmatprep.mubr.bf16.mxu0 0
        %936 = vmatmul.mubr.bf16.gmra.mrb[0].mxu0 %v874
        %v937 = vpop.f32.mrb[0].mxu0
        %v938 = vadd.f32 0.0, %v937
        %v939 = vpop.f32.mrb[0].mxu0
        %v940 = vpop.f32.mrb[0].mxu0
        %v941 = vadd.f32 0.0, %v940
        %v942 = vpop.f32.mrb[0].mxu0
        %943 = vdwg.mxu0
        %v944 = vadd.f32 %v836, %v914
        %v945 = vadd.f32 %v837, %v917
        %v946 = vadd.f32 %v838, %v922
        %v947 = vadd.f32 %v839, %v925
        %v948 = vadd.f32 %v840, %v930
        %v949 = vadd.f32 %v841, %v933
        %v950 = vadd.f32 %v842, %v938
        %v951 = vadd.f32 %v843, %v941
        %v953 = vshrl.u32 %v286, 16
        %v955 = vrot.slane %v953, 4
        %v956 = vshll.u32 %v286, 16
        %v958 = vrot.slane %v956, 5
        %v959 = vor.u32 %v955, %v958
        %v960 = vrot.slane %v959, 4
        %v962 = vshll.u32 %v287, 16
        %v964 = vrot.slane %v962, 5
        %v965 = vsel %vm523, %v960, %v964
        %v967 = vshrl.u32 %v288, 16
        %v969 = vrot.slane %v967, 4
        %v970 = vshll.u32 %v288, 16
        %v972 = vrot.slane %v970, 5
        %v973 = vor.u32 %v969, %v972
        %v974 = vrot.slane %v973, 4
        %v976 = vshll.u32 %v289, 16
        %v978 = vrot.slane %v976, 5
        %v979 = vsel %vm523, %v974, %v978
        %v981 = vshrl.u32 %v290, 16
        %v983 = vrot.slane %v981, 4
        %v984 = vshll.u32 %v290, 16
        %v986 = vrot.slane %v984, 5
        %v987 = vor.u32 %v983, %v986
        %v988 = vrot.slane %v987, 4
        %v990 = vshll.u32 %v291, 16
        %v992 = vrot.slane %v990, 5
        %v993 = vsel %vm523, %v988, %v992
        %v995 = vshrl.u32 %v292, 16
        %v997 = vrot.slane %v995, 4
        %v998 = vshll.u32 %v292, 16
        %v1000 = vrot.slane %v998, 5
        %v1001 = vor.u32 %v997, %v1000
        %v1002 = vrot.slane %v1001, 4
        %v1004 = vshll.u32 %v293, 16
        %v1006 = vrot.slane %v1004, 5
        %v1007 = vsel %vm523, %v1002, %v1006
        %v1009 = vshrl.u32 %v294, 16
        %v1011 = vrot.slane %v1009, 4
        %v1012 = vshll.u32 %v294, 16
        %v1014 = vrot.slane %v1012, 5
        %v1015 = vor.u32 %v1011, %v1014
        %v1016 = vrot.slane %v1015, 4
        %v1018 = vshll.u32 %v295, 16
        %v1020 = vrot.slane %v1018, 5
        %v1021 = vsel %vm523, %v1016, %v1020
        %v1023 = vshrl.u32 %v296, 16
        %v1025 = vrot.slane %v1023, 4
        %v1026 = vshll.u32 %v296, 16
        %v1028 = vrot.slane %v1026, 5
        %v1029 = vor.u32 %v1025, %v1028
        %v1030 = vrot.slane %v1029, 4
        %v1032 = vshll.u32 %v297, 16
        %v1034 = vrot.slane %v1032, 5
        %v1035 = vsel %vm523, %v1030, %v1034
        %v1037 = vshrl.u32 %v298, 16
        %v1039 = vrot.slane %v1037, 4
        %v1040 = vshll.u32 %v298, 16
        %v1042 = vrot.slane %v1040, 5
        %v1043 = vor.u32 %v1039, %v1042
        %v1044 = vrot.slane %v1043, 4
        %v1046 = vshll.u32 %v299, 16
        %v1048 = vrot.slane %v1046, 5
        %v1049 = vsel %vm523, %v1044, %v1048
        %v1051 = vshrl.u32 %v300, 16
        %v1053 = vrot.slane %v1051, 4
        %v1054 = vshll.u32 %v300, 16
        %v1056 = vrot.slane %v1054, 5
        %v1057 = vor.u32 %v1053, %v1056
        %v1058 = vrot.slane %v1057, 4
        %v1060 = vshll.u32 %v301, 16
        %v1062 = vrot.slane %v1060, 5
        %v1063 = vsel %vm523, %v1058, %v1062
        %v1064 = vunpack.c.l.b16 %v965
        %v1065 = vunpack.c.l.b16 %v979
        %v1066 = vunpack.c.l.b16 %v993
        %v1067 = vunpack.c.l.b16 %v1007
        %v1068 = vunpack.c.l.b16 %v1021
        %v1069 = vunpack.c.l.b16 %v1035
        %v1070 = vunpack.c.l.b16 %v1049
        %v1071 = vunpack.c.l.b16 %v1063
        %v1072 = vpack.c.b16 %v1065, %v1064
        %v1073 = vpack.c.b16 %v1067, %v1066
        %v1074 = vpack.c.b16 %v1069, %v1068
        %v1075 = vpack.c.b16 %v1071, %v1070
        %v1077 = vsel %vm339, %v1072, 0
        %v1080 = vsel %vm339, %v1073, 0
        %v1083 = vsel %vm339, %v1074, 0
        %v1086 = vsel %vm339, %v1075, 0
        %v1089 = vsel %vm352, %v315, 0
        %1091 = vmatprep.subr.bf16.mxu0 0
        %1092 = vmatpush1.bf16.msra.mxu0 %v1089
        %1093 = vmatprep.subr.bf16.mxu0 0
        %1094 = vmatpush1.bf16.msra.mxu0 0
        %1095 = vmatprep.subr.bf16.mxu0 0
        %1096 = vmatpush1.bf16.msra.mxu0 0
        %1097 = vmatprep.subr.bf16.mxu0 0
        %1098 = vmatpush1.bf16.msra.mxu0 0
        %1099 = vmatprep.subr.bf16.mxu0 0
        %1100 = vmatpush1.bf16.msra.mxu0 0
        %1101 = vmatprep.subr.bf16.mxu0 0
        %1102 = vmatpush1.bf16.msra.mxu0 0
        %1103 = vmatprep.subr.bf16.mxu0 0
        %1104 = vmatpush1.bf16.msra.mxu0 0
        %1105 = vmatprep.subr.bf16.mxu0 0
        %1106 = vmatpush1.bf16.msra.mxu0 0
        %1107 = vmatprep.subr.bf16.mxu0 0
        %1108 = vmatpush1.bf16.msra.mxu0 0
        %1109 = vmatprep.subr.bf16.mxu0 0
        %1110 = vmatpush1.bf16.msra.mxu0 0
        %1111 = vmatprep.subr.bf16.mxu0 0
        %1112 = vmatpush1.bf16.msra.mxu0 0
        %1113 = vmatprep.subr.bf16.mxu0 0
        %1114 = vmatpush1.bf16.msra.mxu0 0
        %1115 = vmatprep.subr.bf16.mxu0 0
        %1116 = vmatpush1.bf16.msra.mxu0 0
        %1117 = vmatprep.subr.bf16.mxu0 0
        %1118 = vmatpush1.bf16.msra.mxu0 0
        %1119 = vmatprep.subr.bf16.mxu0 0
        %1120 = vmatpush1.bf16.msra.mxu0 0
        %1121 = vmatprep.subr.bf16.mxu0 0
        %1122 = vmatpush1.bf16.msra.mxu0 0
        %1123 = vmatprep.mubr.bf16.mxu0 0
        %1124 = vmatmul.mubr.bf16.gmra.mrb[0].mxu0 %v1077
        %v1125 = vpop.f32.mrb[0].mxu0
        %v1126 = vadd.f32 0.0, %v1125
        %v1127 = vpop.f32.mrb[0].mxu0
        %v1128 = vpop.f32.mrb[0].mxu0
        %v1129 = vadd.f32 0.0, %v1128
        %v1130 = vpop.f32.mrb[0].mxu0
        %1131 = vmatprep.mubr.bf16.mxu0 0
        %1132 = vmatmul.mubr.bf16.gmra.mrb[0].mxu0 %v1080
        %v1133 = vpop.f32.mrb[0].mxu0
        %v1134 = vadd.f32 0.0, %v1133
        %v1135 = vpop.f32.mrb[0].mxu0
        %v1136 = vpop.f32.mrb[0].mxu0
        %v1137 = vadd.f32 0.0, %v1136
        %v1138 = vpop.f32.mrb[0].mxu0
        %1139 = vmatprep.mubr.bf16.mxu0 0
        %1140 = vmatmul.mubr.bf16.gmra.mrb[0].mxu0 %v1083
        %v1141 = vpop.f32.mrb[0].mxu0
        %v1142 = vadd.f32 0.0, %v1141
        %v1143 = vpop.f32.mrb[0].mxu0
        %v1144 = vpop.f32.mrb[0].mxu0
        %v1145 = vadd.f32 0.0, %v1144
        %v1146 = vpop.f32.mrb[0].mxu0
        %1147 = vmatprep.mubr.bf16.mxu0 0
        %1148 = vmatmul.mubr.bf16.gmra.mrb[0].mxu0 %v1086
        %v1149 = vpop.f32.mrb[0].mxu0
        %v1150 = vadd.f32 0.0, %v1149
        %v1151 = vpop.f32.mrb[0].mxu0
        %v1152 = vpop.f32.mrb[0].mxu0
        %v1153 = vadd.f32 0.0, %v1152
        %v1154 = vpop.f32.mrb[0].mxu0
        %1155 = vdwg.mxu0
        %v1156 = vadd.f32 %v944, %v1126
        %v1157 = vadd.f32 %v945, %v1129
        %v1158 = vadd.f32 %v946, %v1134
        %v1159 = vadd.f32 %v947, %v1137
        %v1160 = vadd.f32 %v948, %v1142
        %v1161 = vadd.f32 %v949, %v1145
        %v1162 = vadd.f32 %v950, %v1150
        %v1163 = vadd.f32 %v951, %v1153
        %v1165 = vunpack.c.l.b16 %v275
        %v1166 = vpack.c.b16 %v431, %v430
        %v1167 = vpack.c.b16 %v433, %v432
        %v1168 = vpack.c.b16 %v435, %v434
        %v1169 = vpack.c.b16 %v1165, %v436
        %v1171 = vsel %vm339, %v1166, 0
        %v1174 = vsel %vm339, %v1167, 0
        %v1177 = vsel %vm339, %v1168, 0
        %v1180 = vsel %vm339, %v1169, 0
        %v1183 = vsel %vm352, %v316, 0
        %1185 = vmatprep.subr.bf16.mxu0 0
        %1186 = vmatpush1.bf16.msra.mxu0 %v1183
        %1187 = vmatprep.subr.bf16.mxu0 0
        %1188 = vmatpush1.bf16.msra.mxu0 0
        %1189 = vmatprep.subr.bf16.mxu0 0
        %1190 = vmatpush1.bf16.msra.mxu0 0
        %1191 = vmatprep.subr.bf16.mxu0 0
        %1192 = vmatpush1.bf16.msra.mxu0 0
        %1193 = vmatprep.subr.bf16.mxu0 0
        %1194 = vmatpush1.bf16.msra.mxu0 0
        %1195 = vmatprep.subr.bf16.mxu0 0
        %1196 = vmatpush1.bf16.msra.mxu0 0
        %1197 = vmatprep.subr.bf16.mxu0 0
        %1198 = vmatpush1.bf16.msra.mxu0 0
        %1199 = vmatprep.subr.bf16.mxu0 0
        %1200 = vmatpush1.bf16.msra.mxu0 0
        %1201 = vmatprep.subr.bf16.mxu0 0
        %1202 = vmatpush1.bf16.msra.mxu0 0
        %1203 = vmatprep.subr.bf16.mxu0 0
        %1204 = vmatpush1.bf16.msra.mxu0 0
        %1205 = vmatprep.subr.bf16.mxu0 0
        %1206 = vmatpush1.bf16.msra.mxu0 0
        %1207 = vmatprep.subr.bf16.mxu0 0
        %1208 = vmatpush1.bf16.msra.mxu0 0
        %1209 = vmatprep.subr.bf16.mxu0 0
        %1210 = vmatpush1.bf16.msra.mxu0 0
        %1211 = vmatprep.subr.bf16.mxu0 0
        %1212 = vmatpush1.bf16.msra.mxu0 0
        %1213 = vmatprep.subr.bf16.mxu0 0
        %1214 = vmatpush1.bf16.msra.mxu0 0
        %1215 = vmatprep.subr.bf16.mxu0 0
        %1216 = vmatpush1.bf16.msra.mxu0 0
        %1217 = vmatprep.mubr.bf16.mxu0 0
        %1218 = vmatmul.mubr.bf16.gmra.mrb[0].mxu0 %v1171
        %v1219 = vpop.f32.mrb[0].mxu0
        %v1220 = vadd.f32 0.0, %v1219
        %v1221 = vpop.f32.mrb[0].mxu0
        %v1222 = vpop.f32.mrb[0].mxu0
        %v1223 = vadd.f32 0.0, %v1222
        %v1224 = vpop.f32.mrb[0].mxu0
        %1225 = vmatprep.mubr.bf16.mxu0 0
        %1226 = vmatmul.mubr.bf16.gmra.mrb[0].mxu0 %v1174
        %v1227 = vpop.f32.mrb[0].mxu0
        %v1228 = vadd.f32 0.0, %v1227
        %v1229 = vpop.f32.mrb[0].mxu0
        %v1230 = vpop.f32.mrb[0].mxu0
        %v1231 = vadd.f32 0.0, %v1230
        %v1232 = vpop.f32.mrb[0].mxu0
        %1233 = vmatprep.mubr.bf16.mxu0 0
        %1234 = vmatmul.mubr.bf16.gmra.mrb[0].mxu0 %v1177
        %v1235 = vpop.f32.mrb[0].mxu0
        %v1236 = vadd.f32 0.0, %v1235
        %v1237 = vpop.f32.mrb[0].mxu0
        %v1238 = vpop.f32.mrb[0].mxu0
        %v1239 = vadd.f32 0.0, %v1238
        %v1240 = vpop.f32.mrb[0].mxu0
        %1241 = vmatprep.mubr.bf16.mxu0 0
        %1242 = vmatmul.mubr.bf16.gmra.mrb[0].mxu0 %v1180
        %v1243 = vpop.f32.mrb[0].mxu0
        %v1244 = vadd.f32 0.0, %v1243
        %v1245 = vpop.f32.mrb[0].mxu0
        %v1246 = vpop.f32.mrb[0].mxu0
        %v1247 = vadd.f32 0.0, %v1246
        %v1248 = vpop.f32.mrb[0].mxu0
        %1249 = vdwg.mxu0
        %v1250 = vadd.f32 %v1156, %v1220
        %v1251 = vadd.f32 %v1157, %v1223
        %v1252 = vadd.f32 %v1158, %v1228
        %v1253 = vadd.f32 %v1159, %v1231
        %v1254 = vadd.f32 %v1160, %v1236
        %v1255 = vadd.f32 %v1161, %v1239
        %v1256 = vadd.f32 %v1162, %v1244
        %v1257 = vadd.f32 %v1163, %v1247
        %v1259 = vunpack.c.l.b16 %v285
        %v1260 = vpack.c.b16 %v329, %v328
        %v1261 = vpack.c.b16 %v331, %v330
        %v1262 = vpack.c.b16 %v333, %v332
        %v1263 = vpack.c.b16 %v1259, %v334
        %v1265 = vsel %vm339, %v1260, 0
        %v1268 = vsel %vm339, %v1261, 0
        %v1271 = vsel %vm339, %v1262, 0
        %v1274 = vsel %vm339, %v1263, 0
        %v1277 = vsel %vm352, %v317, 0
        %1279 = vmatprep.subr.bf16.mxu0 0
        %1280 = vmatpush1.bf16.msra.mxu0 %v1277
        %1281 = vmatprep.subr.bf16.mxu0 0
        %1282 = vmatpush1.bf16.msra.mxu0 0
        %1283 = vmatprep.subr.bf16.mxu0 0
        %1284 = vmatpush1.bf16.msra.mxu0 0
        %1285 = vmatprep.subr.bf16.mxu0 0
        %1286 = vmatpush1.bf16.msra.mxu0 0
        %1287 = vmatprep.subr.bf16.mxu0 0
        %1288 = vmatpush1.bf16.msra.mxu0 0
        %1289 = vmatprep.subr.bf16.mxu0 0
        %1290 = vmatpush1.bf16.msra.mxu0 0
        %1291 = vmatprep.subr.bf16.mxu0 0
        %1292 = vmatpush1.bf16.msra.mxu0 0
        %1293 = vmatprep.subr.bf16.mxu0 0
        %1294 = vmatpush1.bf16.msra.mxu0 0
        %1295 = vmatprep.subr.bf16.mxu0 0
        %1296 = vmatpush1.bf16.msra.mxu0 0
        %1297 = vmatprep.subr.bf16.mxu0 0
        %1298 = vmatpush1.bf16.msra.mxu0 0
        %1299 = vmatprep.subr.bf16.mxu0 0
        %1300 = vmatpush1.bf16.msra.mxu0 0
        %1301 = vmatprep.subr.bf16.mxu0 0
        %1302 = vmatpush1.bf16.msra.mxu0 0
        %1303 = vmatprep.subr.bf16.mxu0 0
        %1304 = vmatpush1.bf16.msra.mxu0 0
        %1305 = vmatprep.subr.bf16.mxu0 0
        %1306 = vmatpush1.bf16.msra.mxu0 0
        %1307 = vmatprep.subr.bf16.mxu0 0
        %1308 = vmatpush1.bf16.msra.mxu0 0
        %1309 = vmatprep.subr.bf16.mxu0 0
        %1310 = vmatpush1.bf16.msra.mxu0 0
        %1311 = vmatprep.mubr.bf16.mxu0 0
        %1312 = vmatmul.mubr.bf16.gmra.mrb[0].mxu0 %v1265
        %v1313 = vpop.f32.mrb[0].mxu0
        %v1314 = vadd.f32 0.0, %v1313
        %v1315 = vpop.f32.mrb[0].mxu0
        %v1316 = vpop.f32.mrb[0].mxu0
        %v1317 = vadd.f32 0.0, %v1316
        %v1318 = vpop.f32.mrb[0].mxu0
        %1319 = vmatprep.mubr.bf16.mxu0 0
        %1320 = vmatmul.mubr.bf16.gmra.mrb[0].mxu0 %v1268
        %v1321 = vpop.f32.mrb[0].mxu0
        %v1322 = vadd.f32 0.0, %v1321
        %v1323 = vpop.f32.mrb[0].mxu0
        %v1324 = vpop.f32.mrb[0].mxu0
        %v1325 = vadd.f32 0.0, %v1324
        %v1326 = vpop.f32.mrb[0].mxu0
        %1327 = vmatprep.mubr.bf16.mxu0 0
        %1328 = vmatmul.mubr.bf16.gmra.mrb[0].mxu0 %v1271
        %v1329 = vpop.f32.mrb[0].mxu0
        %v1330 = vadd.f32 0.0, %v1329
        %v1331 = vpop.f32.mrb[0].mxu0
        %v1332 = vpop.f32.mrb[0].mxu0
        %v1333 = vadd.f32 0.0, %v1332
        %v1334 = vpop.f32.mrb[0].mxu0
        %1335 = vmatprep.mubr.bf16.mxu0 0
        %1336 = vmatmul.mubr.bf16.gmra.mrb[0].mxu0 %v1274
        %v1337 = vpop.f32.mrb[0].mxu0
        %v1338 = vadd.f32 0.0, %v1337
        %v1339 = vpop.f32.mrb[0].mxu0
        %v1340 = vpop.f32.mrb[0].mxu0
        %v1341 = vadd.f32 0.0, %v1340
        %v1342 = vpop.f32.mrb[0].mxu0
        %1343 = vdwg.mxu0
        %v1344 = vadd.f32 %v1250, %v1314
        %v1345 = vadd.f32 %v1251, %v1317
        %v1346 = vadd.f32 %v1252, %v1322
        %v1347 = vadd.f32 %v1253, %v1325
        %v1348 = vadd.f32 %v1254, %v1330
        %v1349 = vadd.f32 %v1255, %v1333
        %v1350 = vadd.f32 %v1256, %v1338
        %v1351 = vadd.f32 %v1257, %v1341
        %v1353 = vshrl.u32 %v275, 16
        %v1355 = vrot.slane %v1353, 4
        %v1356 = vshll.u32 %v275, 16
        %v1358 = vrot.slane %v1356, 5
        %v1359 = vor.u32 %v1355, %v1358
        %v1360 = vrot.slane %v1359, 4
        %v1362 = vshll.u32 %v276, 16
        %v1364 = vrot.slane %v1362, 5
        %v1365 = vsel %vm523, %v1360, %v1364
        %v1366 = vunpack.c.l.b16 %v1365
        %v1367 = vpack.c.b16 %v638, %v637
        %v1368 = vpack.c.b16 %v640, %v639
        %v1369 = vpack.c.b16 %v642, %v641
        %v1370 = vpack.c.b16 %v1366, %v643
        %v1372 = vsel %vm339, %v1367, 0
        %v1375 = vsel %vm339, %v1368, 0
        %v1378 = vsel %vm339, %v1369, 0
        %v1381 = vsel %vm339, %v1370, 0
        %v1384 = vsel %vm352, %v318, 0
        %1386 = vmatprep.subr.bf16.mxu0 0
        %1387 = vmatpush1.bf16.msra.mxu0 %v1384
        %1388 = vmatprep.subr.bf16.mxu0 0
        %1389 = vmatpush1.bf16.msra.mxu0 0
        %1390 = vmatprep.subr.bf16.mxu0 0
        %1391 = vmatpush1.bf16.msra.mxu0 0
        %1392 = vmatprep.subr.bf16.mxu0 0
        %1393 = vmatpush1.bf16.msra.mxu0 0
        %1394 = vmatprep.subr.bf16.mxu0 0
        %1395 = vmatpush1.bf16.msra.mxu0 0
        %1396 = vmatprep.subr.bf16.mxu0 0
        %1397 = vmatpush1.bf16.msra.mxu0 0
        %1398 = vmatprep.subr.bf16.mxu0 0
        %1399 = vmatpush1.bf16.msra.mxu0 0
        %1400 = vmatprep.subr.bf16.mxu0 0
        %1401 = vmatpush1.bf16.msra.mxu0 0
        %1402 = vmatprep.subr.bf16.mxu0 0
        %1403 = vmatpush1.bf16.msra.mxu0 0
        %1404 = vmatprep.subr.bf16.mxu0 0
        %1405 = vmatpush1.bf16.msra.mxu0 0
        %1406 = vmatprep.subr.bf16.mxu0 0
        %1407 = vmatpush1.bf16.msra.mxu0 0
        %1408 = vmatprep.subr.bf16.mxu0 0
        %1409 = vmatpush1.bf16.msra.mxu0 0
        %1410 = vmatprep.subr.bf16.mxu0 0
        %1411 = vmatpush1.bf16.msra.mxu0 0
        %1412 = vmatprep.subr.bf16.mxu0 0
        %1413 = vmatpush1.bf16.msra.mxu0 0
        %1414 = vmatprep.subr.bf16.mxu0 0
        %1415 = vmatpush1.bf16.msra.mxu0 0
        %1416 = vmatprep.subr.bf16.mxu0 0
        %1417 = vmatpush1.bf16.msra.mxu0 0
        %1418 = vmatprep.mubr.bf16.mxu0 0
        %1419 = vmatmul.mubr.bf16.gmra.mrb[0].mxu0 %v1372
        %v1420 = vpop.f32.mrb[0].mxu0
        %v1421 = vadd.f32 0.0, %v1420
        %v1422 = vpop.f32.mrb[0].mxu0
        %v1423 = vpop.f32.mrb[0].mxu0
        %v1424 = vadd.f32 0.0, %v1423
        %v1425 = vpop.f32.mrb[0].mxu0
        %1426 = vmatprep.mubr.bf16.mxu0 0
        %1427 = vmatmul.mubr.bf16.gmra.mrb[0].mxu0 %v1375
        %v1428 = vpop.f32.mrb[0].mxu0
        %v1429 = vadd.f32 0.0, %v1428
        %v1430 = vpop.f32.mrb[0].mxu0
        %v1431 = vpop.f32.mrb[0].mxu0
        %v1432 = vadd.f32 0.0, %v1431
        %v1433 = vpop.f32.mrb[0].mxu0
        %1434 = vmatprep.mubr.bf16.mxu0 0
        %1435 = vmatmul.mubr.bf16.gmra.mrb[0].mxu0 %v1378
        %v1436 = vpop.f32.mrb[0].mxu0
        %v1437 = vadd.f32 0.0, %v1436
        %v1438 = vpop.f32.mrb[0].mxu0
        %v1439 = vpop.f32.mrb[0].mxu0
        %v1440 = vadd.f32 0.0, %v1439
        %v1441 = vpop.f32.mrb[0].mxu0
        %1442 = vmatprep.mubr.bf16.mxu0 0
        %1443 = vmatmul.mubr.bf16.gmra.mrb[0].mxu0 %v1381
        %v1444 = vpop.f32.mrb[0].mxu0
        %v1445 = vadd.f32 0.0, %v1444
        %v1446 = vpop.f32.mrb[0].mxu0
        %v1447 = vpop.f32.mrb[0].mxu0
        %v1448 = vadd.f32 0.0, %v1447
        %v1449 = vpop.f32.mrb[0].mxu0
        %1450 = vdwg.mxu0
        %v1451 = vadd.f32 %v1344, %v1421
        %v1452 = vadd.f32 %v1345, %v1424
        %v1453 = vadd.f32 %v1346, %v1429
        %v1454 = vadd.f32 %v1347, %v1432
        %v1455 = vadd.f32 %v1348, %v1437
        %v1456 = vadd.f32 %v1349, %v1440
        %v1457 = vadd.f32 %v1350, %v1445
        %v1458 = vadd.f32 %v1351, %v1448
        %v1459 = vld [vmem:[#allocation7] sm:$0x1]
        %v1461 = vlaneseq
        %v1462 = vshrl.u32 %v1461, 7
        %v1463 = vsub.s32 0, %v1462
        %v1464 = vrot.slane %v1459, %v1463
        %v1466 = vmul.f32 %v1451, %v1464
        %v1467 = vmul.f32 %v1452, %v1464
        %v1468 = vmul.f32 %v1453, %v1464
        %v1469 = vmul.f32 %v1454, %v1464
        %v1470 = vmul.f32 %v1455, %v1464
        %v1471 = vmul.f32 %v1456, %v1464
        %v1472 = vmul.f32 %v1457, %v1464
        %v1473 = vmul.f32 %v1458, %v1464
        %v1474 = vld [vmem:[#allocation8] sm:$0x1]
        %v1476 = vlaneseq
        %v1477 = vshrl.u32 %v1476, 7
        %v1478 = vsub.s32 0, %v1477
        %v1479 = vrot.slane %v1474, %v1478
        %v1481 = vadd.f32 %v1466, %v1479
        %v1482 = vadd.f32 %v1467, %v1479
        %v1483 = vadd.f32 %v1468, %v1479
        %v1484 = vadd.f32 %v1469, %v1479
        %v1485 = vadd.f32 %v1470, %v1479
        %v1486 = vadd.f32 %v1471, %v1479
        %v1487 = vadd.f32 %v1472, %v1479
        %v1488 = vadd.f32 %v1473, %v1479
        %v1489 = vxor.u32 %v1481, 2147483648
        %v1490 = vxor.u32 %v1482, 2147483648
        %v1491 = vxor.u32 %v1483, 2147483648
        %v1492 = vxor.u32 %v1484, 2147483648
        %v1493 = vxor.u32 %v1485, 2147483648
        %v1494 = vxor.u32 %v1486, 2147483648
        %v1495 = vxor.u32 %v1487, 2147483648
        %v1496 = vxor.u32 %v1488, 2147483648
        %v1497 = vmul.f32 %v1489, 1.442695
        %v1498 = vpow.pop %v1497
        %v1499 = vmul.f32 %v1490, 1.442695
        %v1500 = vpow.pop %v1499
        %v1501 = vmul.f32 %v1491, 1.442695
        %v1502 = vpow.pop %v1501
        %v1503 = vmul.f32 %v1492, 1.442695
        %v1504 = vpow.pop %v1503
        %v1505 = vmul.f32 %v1493, 1.442695
        %v1506 = vpow.pop %v1505
        %v1507 = vmul.f32 %v1494, 1.442695
        %v1508 = vpow.pop %v1507
        %v1509 = vmul.f32 %v1495, 1.442695
        %v1510 = vpow.pop %v1509
        %v1511 = vmul.f32 %v1496, 1.442695
        %v1512 = vpow.pop %v1511
        %v1513 = vadd.f32 %v1498, 1.0
        %v1514 = vadd.f32 %v1500, 1.0
        %v1515 = vadd.f32 %v1502, 1.0
        %v1516 = vadd.f32 %v1504, 1.0
        %v1517 = vadd.f32 %v1506, 1.0
        %v1518 = vadd.f32 %v1508, 1.0
        %v1519 = vadd.f32 %v1510, 1.0
        %v1520 = vadd.f32 %v1512, 1.0
        %v1521 = vrcp.pop %v1513
        %v1522 = vmul.f32 1.0, %v1521
        %v1523 = vrcp.pop %v1514
        %v1524 = vmul.f32 1.0, %v1523
        %v1525 = vrcp.pop %v1515
        %v1526 = vmul.f32 1.0, %v1525
        %v1527 = vrcp.pop %v1516
        %v1528 = vmul.f32 1.0, %v1527
        %v1529 = vrcp.pop %v1517
        %v1530 = vmul.f32 1.0, %v1529
        %v1531 = vrcp.pop %v1518
        %v1532 = vmul.f32 1.0, %v1531
        %v1533 = vrcp.pop %v1519
        %v1534 = vmul.f32 1.0, %v1533
        %v1535 = vrcp.pop %v1520
        %v1536 = vmul.f32 1.0, %v1535
        %v1537 = vmul.f32 %v1481, %v1522
        %v1538 = vmul.f32 %v1482, %v1524
        %v1539 = vmul.f32 %v1483, %v1526
        %v1540 = vmul.f32 %v1484, %v1528
        %v1541 = vmul.f32 %v1485, %v1530
        %v1542 = vmul.f32 %v1486, %v1532
        %v1543 = vmul.f32 %v1487, %v1534
        %v1544 = vmul.f32 %v1488, %v1536
        %v1545 = vpack.c.bf16 %v1537, %v1537
        %v1546 = vpack.c.bf16 %v1538, %v1538
        %v1547 = vpack.c.bf16 %v1539, %v1539
        %v1548 = vpack.c.bf16 %v1540, %v1540
        %v1549 = vpack.c.bf16 %v1541, %v1541
        %v1550 = vpack.c.bf16 %v1542, %v1542
        %v1551 = vpack.c.bf16 %v1543, %v1543
        %v1552 = vpack.c.bf16 %v1544, %v1544
        %vm1553 = vcmask 257024
        %1554 = vst.msk [vmem:[%s256] sm:$0xf] %vm1553, %v1545
        %1555 = vst.msk [vmem:[%s256 + $0x4] sm:$0xf] %vm1553, %v1546
        %1556 = vst.msk [vmem:[%s256 + $0x8] sm:$0xf] %vm1553, %v1547
        %1557 = vst.msk [vmem:[%s256 + $0xc] sm:$0xf] %vm1553, %v1548
        %1558 = vst.msk [vmem:[%s256 + $0x10] sm:$0xf] %vm1553, %v1549
        %1559 = vst.msk [vmem:[%s256 + $0x14] sm:$0xf] %vm1553, %v1550
        %1560 = vst.msk [vmem:[%s256 + $0x18] sm:$0xf] %vm1553, %v1551
        %1561 = vst.msk [vmem:[%s256 + $0x1c] sm:$0xf] %vm1553, %v1552
        %s1562 = sand.u32 %s120, 1
        %s1563 = scalar_lea.sflag [#allocation4], %s1562
        %s1564 = sand.u32 %s120, 1
        %s1565 = smul.addr %s1564, 32
        %s1566 = scalar_lea.vmem [#allocation10], %s1565
        // Predicated region
        $region53: #{efficientnet_forward.9} parent=35 // pred_check
          %p1567 = pneg %p130
        $region54: #{efficientnet_forward.9} parent=35 // pred_check_branch
          %1569 = sbr.rel (%p1567) target = $region56
        $region55: #{efficientnet_forward.9} parent=35 // pred_region
          %s1571 = ssub.s32 512, 512
          %1572 = vsyncadd %s1563, %s1571
          %s1573 = smul.addr %s23, 8
          %s1574 = smul.addr %s1573, 64
          %s1575 = scalar_lea.hbm %s4, %s1574
          %s1576 = sshll.u32 %s1566, 4
          %s1577 = int_to_ptr.vmem [resolvable:$true] %s1576
          %1582 = dma.vmem_to_hbm [thread:$0]  %s1577, 512, %s1575, %s1563, 64, 64, 4
        $region56: #{efficientnet_forward.9} parent=35 // pred_fallthru
          _
      $region36: #{efficientnet_forward.9} parent=5 // pred_fallthru
        _
      %p1583 = scmp.le.s32.totalorder 2, %s18
      // Predicated region
      $region57: #{efficientnet_forward.9} parent=5 // pred_check
        %p1584 = pneg %p1583
      $region58: #{efficientnet_forward.9} parent=5 // pred_check_branch
        %1586 = sbr.rel (%p1584) target = $region60
      $region59: #{efficientnet_forward.9} parent=5 // pred_region
        %s1587 = ssub.s32 %s18, 2
        // Predicated region
        $region61: #{efficientnet_forward.9} parent=59 // pred_check
          %p1588 = pneg %p136
        $region62: #{efficientnet_forward.9} parent=59 // pred_check_branch
          %1590 = sbr.rel (%p1588) target = $region64
        $region63: #{efficientnet_forward.9} parent=59 // pred_region
          %s1591 = sand.u32 %s121, 1
          %s1592 = scalar_lea.sflag [#allocation4], %s1591
          %s1593 = sand.u32 %s121, 1
          %s1594 = smul.addr %s1593, 32
          %s1595 = scalar_lea.vmem [#allocation10], %s1594
          %1596 = dma.done %s1592, 512
        $region64: #{efficientnet_forward.9} parent=59 // pred_fallthru
          _
      $region60: #{efficientnet_forward.9} parent=5 // pred_fallthru
        _
    $region6: #{efficientnet_forward.9} parent=1 // loop_footer
      %s22 = sadd.s32 1, %s18
    $region7: #{efficientnet_forward.9} parent=1 // loop_footer_branch
      %17 = sbr.rel target = $region3
    $region8: #{efficientnet_forward.9} parent=1 // loop_exit
      _
    %1597 = vsyncpa [#allocation3], 1
    %s1598 = scalar_lea.sflag [#allocation3], 1
    %1599 = vsyncpa %s1598, 1
    %1600 = vsyncpa [#allocation6], 1
    %1601 = vsyncpa [#allocation9], 1
    %1602 = vsyncpa [#allocation4], 1
    %s1603 = scalar_lea.sflag [#allocation4], 1
    %1604 = vsyncpa %s1603, 1

// kernel: efficientnet_forward.11
$region0: #{efficientnet_forward.11}
  #allocation0 [shape = 'u32[]', space=smem, size = 0x4, offset = 0x4, fixed_abs, tag = 'smem constant byte address 0x4 - core index']
  #allocation1 [shape = 'u32[144,128]{1,0:T(1,128)}', space=vmem, size = 0x12000, scoped, tag = 'internal scratch']
  #allocation2 [shape = 'bf16[10,17,128]{2,1,0:T(8,128)(2,1)}', space=vmem, size = 0xf000, scoped, tag = 'scratch operand']
  %s0 = inlined_call_operand.hbm [shape: bf16[2,8,8,128], index: 0, kind: input, shape index: {}]
  %s1 = inlined_call_operand.hbm [shape: bf16[3,3,128], index: 1, kind: input, shape index: {}]
  %s2 = inlined_call_operand.hbm [shape: f32[1,128], index: 2, kind: input, shape index: {}]
  %s3 = inlined_call_operand.hbm [shape: f32[1,128], index: 3, kind: input, shape index: {}]
  %s4 = inlined_call_operand.hbm [shape: f32[128,8], index: 4, kind: input, shape index: {}]
  %s5 = inlined_call_operand.hbm [shape: f32[1,8], index: 5, kind: input, shape index: {}]
  %s6 = inlined_call_operand.hbm [shape: f32[8,128], index: 6, kind: input, shape index: {}]
  %s7 = inlined_call_operand.hbm [shape: f32[1,128], index: 7, kind: input, shape index: {}]
  %s8 = inlined_call_operand.hbm [shape: bf16[2,8,8,128], index: 8, kind: output, shape index: {0}]
  %s9 = inlined_call_operand.hbm [shape: f32[2,1,128], index: 9, kind: output, shape index: {1}]
  %10 = xla_tuple %s8, %s9
  %s11 = sld [smem:[#allocation0]]
  $region105: #{efficientnet_forward.11} parent=0
    _
  %s13 = ssub.s32 1, %s11
  %s14 = scalar_select 0, %s13, %s11
  $region1: #{efficientnet_forward.11} parent=0
    #allocation3 [shape = 'u8[32768]{0}', space=vmem, size = 0x8000, scoped, tag = 'input window, operand 0']
    #allocation4 [shape = 's32[2]{0}', space=sflag, size = 0x8, scoped, tag = 'scoped memory for efficientnet_forward.11']
    #allocation5 [shape = 's32[2]{0}', space=sflag, size = 0x8, scoped, tag = 'scoped memory for efficientnet_forward.11']
    #allocation6 [shape = 'u8[3072]{0}', space=vmem, size = 0xc00, scoped, tag = 'input window, operand 1, single buffered']
    #allocation7 [shape = 's32[1]{0}', space=sflag, size = 0x4, scoped, tag = 'scoped memory for efficientnet_forward.11']
    #allocation8 [shape = 'u8[512]{0}', space=vmem, size = 0x400, scoped, tag = 'input window, operand 2, single buffered']
    #allocation9 [shape = 'u8[512]{0}', space=vmem, size = 0x400, scoped, tag = 'input window, operand 3, single buffered']
    #allocation10 [shape = 's32[1]{0}', space=sflag, size = 0x4, scoped, tag = 'scoped memory for efficientnet_forward.11']
    #allocation11 [shape = 'u8[65536]{0}', space=vmem, size = 0x10000, scoped, tag = 'input window, operand 4, single buffered']
    #allocation12 [shape = 'u8[512]{0}', space=vmem, size = 0x400, scoped, tag = 'input window, operand 5, single buffered']
    #allocation13 [shape = 's32[1]{0}', space=sflag, size = 0x4, scoped, tag = 'scoped memory for efficientnet_forward.11']
    #allocation14 [shape = 'u8[4096]{0}', space=vmem, size = 0x1000, scoped, tag = 'input window, operand 6, single buffered']
    #allocation15 [shape = 'u8[512]{0}', space=vmem, size = 0x400, scoped, tag = 'input window, operand 7, single buffered']
    #allocation16 [shape = 's32[1]{0}', space=sflag, size = 0x4, scoped, tag = 'scoped memory for efficientnet_forward.11']
    #allocation17 [shape = 'u8[32768]{0}', space=vmem, size = 0x8000, scoped, tag = 'output window, operand 0']
    #allocation18 [shape = 'u8[1024]{0}', space=vmem, size = 0x400, scoped, tag = 'output window, operand 1']
    #allocation19 [shape = 's32[2]{0}', space=sflag, size = 0x8, scoped, tag = 'scoped memory for efficientnet_forward.11']
    %15 = vsyncpa [#allocation4], 0
    %s16 = scalar_lea.sflag [#allocation4], 1
    %17 = vsyncpa %s16, 0
    %18 = vsyncpa [#allocation7], 0
    %19 = vsyncpa [#allocation10], 0
    %20 = vsyncpa [#allocation13], 0
    %21 = vsyncpa [#allocation16], 0
    %22 = vsyncpa [#allocation5], 0
    %s23 = scalar_lea.sflag [#allocation5], 1
    %24 = vsyncpa %s23, 0
    %25 = vsyncpa [#allocation19], 0
    %s26 = scalar_lea.sflag [#allocation19], 1
    %27 = vsyncpa %s26, 0
    loop: start=0, step=1, limit=4
    $region2: #{efficientnet_forward.11} parent=1 // loop_pre_header
      _
    $region3: #{efficientnet_forward.11} parent=1 // loop_header
      %s29 = sphi 0, %s33
      %p30 = scmp.ge.s32.totalorder %s29, 4
      %s39 = sphi 0, %s41
      %s42 = sphi 0, %s39
      %s43 = sphi 0, %s42
      %s59 = sphi 0, %s43
      %s63 = sphi 0, %s63
      %s65 = sphi 0, %s63
      %s66 = sphi 0, %s65
      %s80 = sphi 0, %s66
      %s84 = sphi 0, %s84
      %s86 = sphi 0, %s84
      %s87 = sphi 0, %s86
      %s101 = sphi 0, %s87
      %s105 = sphi 0, %s105
      %s107 = sphi 0, %s105
      %s108 = sphi 0, %s107
      %s122 = sphi 0, %s108
      %s126 = sphi 0, %s126
      %s128 = sphi 0, %s126
      %s129 = sphi 0, %s128
      %s143 = sphi 0, %s129
      %s147 = sphi 0, %s147
      %s149 = sphi 0, %s147
      %s150 = sphi 0, %s149
      %s164 = sphi 0, %s150
      %s168 = sphi 0, %s168
      %s170 = sphi 0, %s168
      %s171 = sphi 0, %s170
      %s185 = sphi 0, %s171
      %s189 = sphi 0, %s189
      %s191 = sphi 0, %s189
      %s192 = sphi 0, %s191
      %s206 = sphi 0, %s192
      %s212 = sphi 0, %s214
      %s215 = sphi 0, %s212
      %s216 = sphi 0, %s215
      %s232 = sphi 0, %s216
      %s238 = sphi 0, %s240
      %s241 = sphi 0, %s238
      %s242 = sphi 0, %s241
      %s258 = sphi 0, %s242
    $region4: #{efficientnet_forward.11} parent=1 // loop_header_branch
      %32 = sbr.rel (%p30) target = $region8
    $region5: #{efficientnet_forward.11} parent=1 // loop_body
      %s34 = ssub.s32 %s29, 1
      %s35 = ssub.s32 %s29, 2
      %s36 = sadd.s32 %s29, 1
      %s37 = ssub.s32 %s29, %s36
      %p38 = scmp.eq.s32.totalorder %s37, 0
      %s40 = sadd.s32 %s39, 1
      %s41 = scalar_select %p38, %s39, %s40
      %p44 = pneg %p38
      %p45 = scmp.eq.s32.totalorder %s29, 1
      %p46 = por %p44, %p45
      %p47 = scmp.ne.s32.totalorder %s39, %s42
      %p48 = scmp.eq.s32.totalorder %s29, 0
      %p49 = por %p47, %p48
      %p50 = scmp.ne.s32.totalorder %s39, %s42
      %p51 = scmp.eq.s32.totalorder %s34, 1
      %p52 = por %p50, %p51
      %p53 = scmp.ne.s32.totalorder %s42, %s43
      %p54 = scmp.eq.s32.totalorder %s34, 0
      %p55 = por %p53, %p54
      %p56 = scmp.ne.s32.totalorder %s42, %s43
      %p57 = scmp.eq.s32.totalorder %s35, 1
      %p58 = por %p56, %p57
      %p60 = scmp.ne.s32.totalorder %s43, %s59
      %p61 = scmp.eq.s32.totalorder %s35, 0
      %p62 = por %p60, %p61
      %s64 = sadd.s32 %s63, 1
      %p67 = scmp.eq.s32.totalorder %s29, 1
      %p68 = scmp.ne.s32.totalorder %s63, %s65
      %p69 = scmp.eq.s32.totalorder %s29, 0
      %p70 = por %p68, %p69
      %p71 = scmp.ne.s32.totalorder %s63, %s65
      %p72 = scmp.eq.s32.totalorder %s34, 1
      %p73 = por %p71, %p72
      %p74 = scmp.ne.s32.totalorder %s65, %s66
      %p75 = scmp.eq.s32.totalorder %s34, 0
      %p76 = por %p74, %p75
      %p77 = scmp.ne.s32.totalorder %s65, %s66
      %p78 = scmp.eq.s32.totalorder %s35, 1
      %p79 = por %p77, %p78
      %p81 = scmp.ne.s32.totalorder %s66, %s80
      %p82 = scmp.eq.s32.totalorder %s35, 0
      %p83 = por %p81, %p82
      %s85 = sadd.s32 %s84, 1
      %p88 = scmp.eq.s32.totalorder %s29, 1
      %p89 = scmp.ne.s32.totalorder %s84, %s86
      %p90 = scmp.eq.s32.totalorder %s29, 0
      %p91 = por %p89, %p90
      %p92 = scmp.ne.s32.totalorder %s84, %s86
      %p93 = scmp.eq.s32.totalorder %s34, 1
      %p94 = por %p92, %p93
      %p95 = scmp.ne.s32.totalorder %s86, %s87
      %p96 = scmp.eq.s32.totalorder %s34, 0
      %p97 = por %p95, %p96
      %p98 = scmp.ne.s32.totalorder %s86, %s87
      %p99 = scmp.eq.s32.totalorder %s35, 1
      %p100 = por %p98, %p99
      %p102 = scmp.ne.s32.totalorder %s87, %s101
      %p103 = scmp.eq.s32.totalorder %s35, 0
      %p104 = por %p102, %p103
      %s106 = sadd.s32 %s105, 1
      %p109 = scmp.eq.s32.totalorder %s29, 1
      %p110 = scmp.ne.s32.totalorder %s105, %s107
      %p111 = scmp.eq.s32.totalorder %s29, 0
      %p112 = por %p110, %p111
      %p113 = scmp.ne.s32.totalorder %s105, %s107
      %p114 = scmp.eq.s32.totalorder %s34, 1
      %p115 = por %p113, %p114
      %p116 = scmp.ne.s32.totalorder %s107, %s108
      %p117 = scmp.eq.s32.totalorder %s34, 0
      %p118 = por %p116, %p117
      %p119 = scmp.ne.s32.totalorder %s107, %s108
      %p120 = scmp.eq.s32.totalorder %s35, 1
      %p121 = por %p119, %p120
      %p123 = scmp.ne.s32.totalorder %s108, %s122
      %p124 = scmp.eq.s32.totalorder %s35, 0
      %p125 = por %p123, %p124
      %s127 = sadd.s32 %s126, 1
      %p130 = scmp.eq.s32.totalorder %s29, 1
      %p131 = scmp.ne.s32.totalorder %s126, %s128
      %p132 = scmp.eq.s32.totalorder %s29, 0
      %p133 = por %p131, %p132
      %p134 = scmp.ne.s32.totalorder %s126, %s128
      %p135 = scmp.eq.s32.totalorder %s34, 1
      %p136 = por %p134, %p135
      %p137 = scmp.ne.s32.totalorder %s128, %s129
      %p138 = scmp.eq.s32.totalorder %s34, 0
      %p139 = por %p137, %p138
      %p140 = scmp.ne.s32.totalorder %s128, %s129
      %p141 = scmp.eq.s32.totalorder %s35, 1
      %p142 = por %p140, %p141
      %p144 = scmp.ne.s32.totalorder %s129, %s143
      %p145 = scmp.eq.s32.totalorder %s35, 0
      %p146 = por %p144, %p145
      %s148 = sadd.s32 %s147, 1
      %p151 = scmp.eq.s32.totalorder %s29, 1
      %p152 = scmp.ne.s32.totalorder %s147, %s149
      %p153 = scmp.eq.s32.totalorder %s29, 0
      %p154 = por %p152, %p153
      %p155 = scmp.ne.s32.totalorder %s147, %s149
      %p156 = scmp.eq.s32.totalorder %s34, 1
      %p157 = por %p155, %p156
      %p158 = scmp.ne.s32.totalorder %s149, %s150
      %p159 = scmp.eq.s32.totalorder %s34, 0
      %p160 = por %p158, %p159
      %p161 = scmp.ne.s32.totalorder %s149, %s150
      %p162 = scmp.eq.s32.totalorder %s35, 1
      %p163 = por %p161, %p162
      %p165 = scmp.ne.s32.totalorder %s150, %s164
      %p166 = scmp.eq.s32.totalorder %s35, 0
      %p167 = por %p165, %p166
      %s169 = sadd.s32 %s168, 1
      %p172 = scmp.eq.s32.totalorder %s29, 1
      %p173 = scmp.ne.s32.totalorder %s168, %s170
      %p174 = scmp.eq.s32.totalorder %s29, 0
      %p175 = por %p173, %p174
      %p176 = scmp.ne.s32.totalorder %s168, %s170
      %p177 = scmp.eq.s32.totalorder %s34, 1
      %p178 = por %p176, %p177
      %p179 = scmp.ne.s32.totalorder %s170, %s171
      %p180 = scmp.eq.s32.totalorder %s34, 0
      %p181 = por %p179, %p180
      %p182 = scmp.ne.s32.totalorder %s170, %s171
      %p183 = scmp.eq.s32.totalorder %s35, 1
      %p184 = por %p182, %p183
      %p186 = scmp.ne.s32.totalorder %s171, %s185
      %p187 = scmp.eq.s32.totalorder %s35, 0
      %p188 = por %p186, %p187
      %s190 = sadd.s32 %s189, 1
      %p193 = scmp.eq.s32.totalorder %s29, 1
      %p194 = scmp.ne.s32.totalorder %s189, %s191
      %p195 = scmp.eq.s32.totalorder %s29, 0
      %p196 = por %p194, %p195
      %p197 = scmp.ne.s32.totalorder %s189, %s191
      %p198 = scmp.eq.s32.totalorder %s34, 1
      %p199 = por %p197, %p198
      %p200 = scmp.ne.s32.totalorder %s191, %s192
      %p201 = scmp.eq.s32.totalorder %s34, 0
      %p202 = por %p200, %p201
      %p203 = scmp.ne.s32.totalorder %s191, %s192
      %p204 = scmp.eq.s32.totalorder %s35, 1
      %p205 = por %p203, %p204
      %p207 = scmp.ne.s32.totalorder %s192, %s206
      %p208 = scmp.eq.s32.totalorder %s35, 0
      %p209 = por %p207, %p208
      %s210 = ssub.s32 %s29, %s36
      %p211 = scmp.eq.s32.totalorder %s210, 0
      %s213 = sadd.s32 %s212, 1
      %s214 = scalar_select %p211, %s212, %s213
      %p217 = pneg %p211
      %p218 = scmp.eq.s32.totalorder %s29, 1
      %p219 = por %p217, %p218
      %p220 = scmp.ne.s32.totalorder %s212, %s215
      %p221 = scmp.eq.s32.totalorder %s29, 0
      %p222 = por %p220, %p221
      %p223 = scmp.ne.s32.totalorder %s212, %s215
      %p224 = scmp.eq.s32.totalorder %s34, 1
      %p225 = por %p223, %p224
      %p226 = scmp.ne.s32.totalorder %s215, %s216
      %p227 = scmp.eq.s32.totalorder %s34, 0
      %p228 = por %p226, %p227
      %p229 = scmp.ne.s32.totalorder %s215, %s216
      %p230 = scmp.eq.s32.totalorder %s35, 1
      %p231 = por %p229, %p230
      %p233 = scmp.ne.s32.totalorder %s216, %s232
      %p234 = scmp.eq.s32.totalorder %s35, 0
      %p235 = por %p233, %p234
      %s236 = ssub.s32 %s29, %s36
      %p237 = scmp.eq.s32.totalorder %s236, 0
      %s239 = sadd.s32 %s238, 1
      %s240 = scalar_select %p237, %s238, %s239
      %p243 = pneg %p237
      %p244 = scmp.eq.s32.totalorder %s29, 1
      %p245 = por %p243, %p244
      %p246 = scmp.ne.s32.totalorder %s238, %s241
      %p247 = scmp.eq.s32.totalorder %s29, 0
      %p248 = por %p246, %p247
      %p249 = scmp.ne.s32.totalorder %s238, %s241
      %p250 = scmp.eq.s32.totalorder %s34, 1
      %p251 = por %p249, %p250
      %p252 = scmp.ne.s32.totalorder %s241, %s242
      %p253 = scmp.eq.s32.totalorder %s34, 0
      %p254 = por %p252, %p253
      %p255 = scmp.ne.s32.totalorder %s241, %s242
      %p256 = scmp.eq.s32.totalorder %s35, 1
      %p257 = por %p255, %p256
      %p259 = scmp.ne.s32.totalorder %s242, %s258
      %p260 = scmp.eq.s32.totalorder %s35, 0
      %p261 = por %p259, %p260
      %p262 = scmp.le.s32.totalorder 1, %s29
      %p263 = scmp.lt.s32.totalorder %s29, 3
      %p264 = pnand %p262, %p263
      %p265 = pneg %p264
      // Predicated region
      $region9: #{efficientnet_forward.11} parent=5 // pred_check
        _
      $region10: #{efficientnet_forward.11} parent=5 // pred_check_branch
        %267 = sbr.rel (%p264) target = $region12
      $region11: #{efficientnet_forward.11} parent=5 // pred_region
        %s268 = ssub.s32 %s29, 1
        // Predicated region
        $region13: #{efficientnet_forward.11} parent=11 // pred_check
          %p269 = pneg %p76
        $region14: #{efficientnet_forward.11} parent=11 // pred_check_branch
          %271 = sbr.rel (%p269) target = $region16
        $region15: #{efficientnet_forward.11} parent=11 // pred_region
          %s273 = ssub.s32 96, 96
          %274 = vsyncadd [#allocation7], %s273
          %s275 = sshll.u32 [#allocation6], 4
          %s276 = int_to_ptr.vmem [resolvable:$true] %s275
          %281 = dma.hbm_to_vmem [thread:$0]  %s1, 96, %s276, [#allocation7], 32, 32, 2
        $region16: #{efficientnet_forward.11} parent=11 // pred_fallthru
          _
        // Predicated region
        $region17: #{efficientnet_forward.11} parent=11 // pred_check
          %p282 = pneg %p97
        $region18: #{efficientnet_forward.11} parent=11 // pred_check_branch
          %284 = sbr.rel (%p282) target = $region20
        $region19: #{efficientnet_forward.11} parent=11 // pred_region
          %s286 = ssub.s32 16, 16
          %287 = vsyncadd [#allocation7], %s286
          %s289 = sshll.u32 [#allocation8], 4
          %s290 = int_to_ptr.vmem [resolvable:$true] %s289
          %292 = dma.hbm_to_vmem [thread:$0]  %s2, 16, %s290, [#allocation7]
        $region20: #{efficientnet_forward.11} parent=11 // pred_fallthru
          _
        // Predicated region
        $region21: #{efficientnet_forward.11} parent=11 // pred_check
          %p293 = pneg %p118
        $region22: #{efficientnet_forward.11} parent=11 // pred_check_branch
          %295 = sbr.rel (%p293) target = $region24
        $region23: #{efficientnet_forward.11} parent=11 // pred_region
          %s297 = ssub.s32 16, 16
          %298 = vsyncadd [#allocation10], %s297
          %s300 = sshll.u32 [#allocation9], 4
          %s301 = int_to_ptr.vmem [resolvable:$true] %s300
          %303 = dma.hbm_to_vmem [thread:$0]  %s3, 16, %s301, [#allocation10]
        $region24: #{efficientnet_forward.11} parent=11 // pred_fallthru
          _
        // Predicated region
        $region25: #{efficientnet_forward.11} parent=11 // pred_check
          %p304 = pneg %p139
        $region26: #{efficientnet_forward.11} parent=11 // pred_check_branch
          %306 = sbr.rel (%p304) target = $region28
        $region27: #{efficientnet_forward.11} parent=11 // pred_region
          %s308 = ssub.s32 2048, 2048
          %309 = vsyncadd [#allocation10], %s308
          %s310 = sshll.u32 [#allocation11], 4
          %s311 = int_to_ptr.vmem [resolvable:$true] %s310
          %316 = dma.hbm_to_vmem [thread:$0]  %s4, 2048, %s311, [#allocation10], 128, 128, 8
        $region28: #{efficientnet_forward.11} parent=11 // pred_fallthru
          _
        // Predicated region
        $region29: #{efficientnet_forward.11} parent=11 // pred_check
          %p317 = pneg %p160
        $region30: #{efficientnet_forward.11} parent=11 // pred_check_branch
          %319 = sbr.rel (%p317) target = $region32
        $region31: #{efficientnet_forward.11} parent=11 // pred_region
          %s321 = ssub.s32 16, 16
          %322 = vsyncadd [#allocation13], %s321
          %s324 = sshll.u32 [#allocation12], 4
          %s325 = int_to_ptr.vmem [resolvable:$true] %s324
          %327 = dma.hbm_to_vmem [thread:$0]  %s5, 16, %s325, [#allocation13]
        $region32: #{efficientnet_forward.11} parent=11 // pred_fallthru
          _
        // Predicated region
        $region33: #{efficientnet_forward.11} parent=11 // pred_check
          %p328 = pneg %p181
        $region34: #{efficientnet_forward.11} parent=11 // pred_check_branch
          %330 = sbr.rel (%p328) target = $region36
        $region35: #{efficientnet_forward.11} parent=11 // pred_region
          %s332 = ssub.s32 128, 128
          %333 = vsyncadd [#allocation13], %s332
          %s335 = sshll.u32 [#allocation14], 4
          %s336 = int_to_ptr.vmem [resolvable:$true] %s335
          %338 = dma.hbm_to_vmem [thread:$0]  %s6, 128, %s336, [#allocation13]
        $region36: #{efficientnet_forward.11} parent=11 // pred_fallthru
          _
        // Predicated region
        $region37: #{efficientnet_forward.11} parent=11 // pred_check
          %p339 = pneg %p202
        $region38: #{efficientnet_forward.11} parent=11 // pred_check_branch
          %341 = sbr.rel (%p339) target = $region40
        $region39: #{efficientnet_forward.11} parent=11 // pred_region
          %s343 = ssub.s32 16, 16
          %344 = vsyncadd [#allocation16], %s343
          %s346 = sshll.u32 [#allocation15], 4
          %s347 = int_to_ptr.vmem [resolvable:$true] %s346
          %349 = dma.hbm_to_vmem [thread:$0]  %s7, 16, %s347, [#allocation16]
        $region40: #{efficientnet_forward.11} parent=11 // pred_fallthru
          _
      $region12: #{efficientnet_forward.11} parent=5 // pred_fallthru
        _
      %p350 = scmp.lt.s32.totalorder %s29, 2
      // Predicated region
      $region41: #{efficientnet_forward.11} parent=5 // pred_check
        %p351 = pneg %p350
      $region42: #{efficientnet_forward.11} parent=5 // pred_check_branch
        %353 = sbr.rel (%p351) target = $region44
      $region43: #{efficientnet_forward.11} parent=5 // pred_region
        // Predicated region
        $region45: #{efficientnet_forward.11} parent=43 // pred_check
          %p354 = pneg %p49
        $region46: #{efficientnet_forward.11} parent=43 // pred_check_branch
          %356 = sbr.rel (%p354) target = $region48
        $region47: #{efficientnet_forward.11} parent=43 // pred_region
          %s357 = sand.u32 %s39, 1
          %s358 = scalar_lea.sflag [#allocation4], %s357
          %s359 = sand.u32 %s39, 1
          %s360 = smul.addr %s359, 32
          %s361 = scalar_lea.vmem [#allocation3], %s360
          %s363 = ssub.s32 512, 512
          %364 = vsyncadd %s358, %s363
          %s365 = smul.addr %s29, 8
          %s366 = smul.addr %s365, 64
          %s367 = scalar_lea.hbm %s0, %s366
          %s368 = sshll.u32 %s361, 4
          %s369 = int_to_ptr.vmem [resolvable:$true] %s368
          %374 = dma.hbm_to_vmem [thread:$0]  %s367, 512, %s369, %s358, 64, 64, 4
        $region48: #{efficientnet_forward.11} parent=43 // pred_fallthru
          _
      $region44: #{efficientnet_forward.11} parent=5 // pred_fallthru
        _
      %p375 = scmp.le.s32.totalorder 1, %s29
      %p376 = scmp.lt.s32.totalorder %s29, 3
      %p377 = pnand %p375, %p376
      %p378 = pneg %p377
      // Predicated region
      $region49: #{efficientnet_forward.11} parent=5 // pred_check
        _
      $region50: #{efficientnet_forward.11} parent=5 // pred_check_branch
        %380 = sbr.rel (%p377) target = $region52
      $region51: #{efficientnet_forward.11} parent=5 // pred_region
        %s381 = ssub.s32 %s29, 1
        %s382 = sand.u32 %s42, 1
        %s383 = scalar_lea.sflag [#allocation4], %s382
        %s384 = sand.u32 %s42, 1
        %s385 = smul.addr %s384, 32
        %s386 = scalar_lea.vmem [#allocation3], %s385
        // Predicated region
        $region53: #{efficientnet_forward.11} parent=51 // pred_check
          %p387 = pneg %p55
        $region54: #{efficientnet_forward.11} parent=51 // pred_check_branch
          %389 = sbr.rel (%p387) target = $region56
        $region55: #{efficientnet_forward.11} parent=51 // pred_region
          %390 = dma.done %s383, 512
        $region56: #{efficientnet_forward.11} parent=51 // pred_fallthru
          _
        // Predicated region
        $region57: #{efficientnet_forward.11} parent=51 // pred_check
          %p391 = pneg %p76
        $region58: #{efficientnet_forward.11} parent=51 // pred_check_branch
          %393 = sbr.rel (%p391) target = $region60
        $region59: #{efficientnet_forward.11} parent=51 // pred_region
          %394 = dma.done [#allocation7], 96
        $region60: #{efficientnet_forward.11} parent=51 // pred_fallthru
          _
        // Predicated region
        $region61: #{efficientnet_forward.11} parent=51 // pred_check
          %p395 = pneg %p97
        $region62: #{efficientnet_forward.11} parent=51 // pred_check_branch
          %397 = sbr.rel (%p395) target = $region64
        $region63: #{efficientnet_forward.11} parent=51 // pred_region
          %398 = dma.done [#allocation7], 16
        $region64: #{efficientnet_forward.11} parent=51 // pred_fallthru
          _
        // Predicated region
        $region65: #{efficientnet_forward.11} parent=51 // pred_check
          %p399 = pneg %p118
        $region66: #{efficientnet_forward.11} parent=51 // pred_check_branch
          %401 = sbr.rel (%p399) target = $region68
        $region67: #{efficientnet_forward.11} parent=51 // pred_region
          %402 = dma.done [#allocation10], 16
        $region68: #{efficientnet_forward.11} parent=51 // pred_fallthru
          _
        // Predicated region
        $region69: #{efficientnet_forward.11} parent=51 // pred_check
          %p403 = pneg %p139
        $region70: #{efficientnet_forward.11} parent=51 // pred_check_branch
          %405 = sbr.rel (%p403) target = $region72
        $region71: #{efficientnet_forward.11} parent=51 // pred_region
          %406 = dma.done [#allocation10], 2048
        $region72: #{efficientnet_forward.11} parent=51 // pred_fallthru
          _
        // Predicated region
        $region73: #{efficientnet_forward.11} parent=51 // pred_check
          %p407 = pneg %p160
        $region74: #{efficientnet_forward.11} parent=51 // pred_check_branch
          %409 = sbr.rel (%p407) target = $region76
        $region75: #{efficientnet_forward.11} parent=51 // pred_region
          %410 = dma.done [#allocation13], 16
        $region76: #{efficientnet_forward.11} parent=51 // pred_fallthru
          _
        // Predicated region
        $region77: #{efficientnet_forward.11} parent=51 // pred_check
          %p411 = pneg %p181
        $region78: #{efficientnet_forward.11} parent=51 // pred_check_branch
          %413 = sbr.rel (%p411) target = $region80
        $region79: #{efficientnet_forward.11} parent=51 // pred_region
          %414 = dma.done [#allocation13], 128
        $region80: #{efficientnet_forward.11} parent=51 // pred_fallthru
          _
        // Predicated region
        $region81: #{efficientnet_forward.11} parent=51 // pred_check
          %p415 = pneg %p202
        $region82: #{efficientnet_forward.11} parent=51 // pred_check_branch
          %417 = sbr.rel (%p415) target = $region84
        $region83: #{efficientnet_forward.11} parent=51 // pred_region
          %418 = dma.done [#allocation16], 16
        $region84: #{efficientnet_forward.11} parent=51 // pred_fallthru
          _
        %s419 = sand.u32 %s42, 1
        %s420 = scalar_lea.sflag [#allocation4], %s419
        %s421 = sand.u32 %s42, 1
        %s422 = smul.addr %s421, 32
        %s423 = scalar_lea.vmem [#allocation3], %s422
        %p424 = pneg %p55
        %p425 = pneg %p52
        %p426 = pneg %p76
        %p427 = pneg %p73
        %p428 = pneg %p97
        %p429 = pneg %p94
        %p430 = pneg %p118
        %p431 = pneg %p115
        %p432 = pneg %p139
        %p433 = pneg %p136
        %p434 = pneg %p160
        %p435 = pneg %p157
        %p436 = pneg %p181
        %p437 = pneg %p178
        %p438 = pneg %p202
        %p439 = pneg %p199
        %p440 = pneg %p228
        %p441 = pneg %p225
        %s442 = sand.u32 %s215, 1
        %s443 = scalar_lea.sflag [#allocation5], %s442
        %s444 = sand.u32 %s215, 1
        %s445 = smul.addr %s444, 32
        %s446 = scalar_lea.vmem [#allocation17], %s445
        %p447 = pneg %p254
        %p448 = pneg %p251
        %s449 = sand.u32 %s241, 1
        %s450 = scalar_lea.sflag [#allocation19], %s449
        %s451 = sand.u32 %s241, 1
        %s452 = scalar_lea.vmem [#allocation18], %s451
        %454 = vst [vmem:[#allocation2] sm:$0xf] 0
        %455 = vst [vmem:[#allocation2 + $0x4] sm:$0xf] 0
        %vm456 = vcmask 1040384
        %vm457 = vsmask.f32 256
        %vm458 = vmand %vm456, %vm457
        %v459 = vld [vmem:[#allocation2 + $0x8] sm:$0x1]
        %v460 = vsel %vm458, 0, %v459
        %461 = vst [vmem:[#allocation2 + $0x8] sm:$0x1] %v460
        %462 = vst [vmem:[#allocation2 + $0xc] sm:$0xf] 0
        %463 = vst [vmem:[#allocation2 + $0x10] sm:$0xf] 0
        %v464 = vld [vmem:[#allocation2 + $0x14] sm:$0x1]
        %v465 = vsel %vm458, 0, %v464
        %466 = vst [vmem:[#allocation2 + $0x14] sm:$0x1] %v465
        %467 = vst [vmem:[#allocation2 + $0x18] sm:$0xf] 0
        %468 = vst [vmem:[#allocation2 + $0x1c] sm:$0xf] 0
        %v469 = vld [vmem:[#allocation2 + $0x20] sm:$0x1]
        %v470 = vsel %vm458, 0, %v469
        %471 = vst [vmem:[#allocation2 + $0x20] sm:$0x1] %v470
        %472 = vst [vmem:[#allocation2 + $0x24] sm:$0xf] 0
        %473 = vst [vmem:[#allocation2 + $0x28] sm:$0xf] 0
        %v474 = vld [vmem:[#allocation2 + $0x2c] sm:$0x1]
        %v475 = vsel %vm458, 0, %v474
        %476 = vst [vmem:[#allocation2 + $0x2c] sm:$0x1] %v475
        %477 = vst [vmem:[#allocation2 + $0x30] sm:$0xf] 0
        %478 = vst [vmem:[#allocation2 + $0x34] sm:$0xf] 0
        %v479 = vld [vmem:[#allocation2 + $0x38] sm:$0x1]
        %v480 = vsel %vm458, 0, %v479
        %481 = vst [vmem:[#allocation2 + $0x38] sm:$0x1] %v480
        %482 = vst [vmem:[#allocation2 + $0x3c] sm:$0xf] 0
        %483 = vst [vmem:[#allocation2 + $0x40] sm:$0xf] 0
        %v484 = vld [vmem:[#allocation2 + $0x44] sm:$0x1]
        %v485 = vsel %vm458, 0, %v484
        %486 = vst [vmem:[#allocation2 + $0x44] sm:$0x1] %v485
        %487 = vst [vmem:[#allocation2 + $0x48] sm:$0xf] 0
        %488 = vst [vmem:[#allocation2 + $0x4c] sm:$0xf] 0
        %v489 = vld [vmem:[#allocation2 + $0x50] sm:$0x1]
        %v490 = vsel %vm458, 0, %v489
        %491 = vst [vmem:[#allocation2 + $0x50] sm:$0x1] %v490
        %492 = vst [vmem:[#allocation2 + $0x54] sm:$0xf] 0
        %493 = vst [vmem:[#allocation2 + $0x58] sm:$0xf] 0
        %v494 = vld [vmem:[#allocation2 + $0x5c] sm:$0x1]
        %v495 = vsel %vm458, 0, %v494
        %496 = vst [vmem:[#allocation2 + $0x5c] sm:$0x1] %v495
        %497 = vst [vmem:[#allocation2 + $0x60] sm:$0xf] 0
        %498 = vst [vmem:[#allocation2 + $0x64] sm:$0xf] 0
        %v499 = vld [vmem:[#allocation2 + $0x68] sm:$0x1]
        %v500 = vsel %vm458, 0, %v499
        %501 = vst [vmem:[#allocation2 + $0x68] sm:$0x1] %v500
        %502 = vst [vmem:[#allocation2 + $0x6c] sm:$0xf] 0
        %503 = vst [vmem:[#allocation2 + $0x70] sm:$0xf] 0
        %v504 = vld [vmem:[#allocation2 + $0x74] sm:$0x1]
        %v505 = vsel %vm458, 0, %v504
        %506 = vst [vmem:[#allocation2 + $0x74] sm:$0x1] %v505
        %v507 = vld [vmem:[%s386] sm:$0xf]
        %v508 = vld [vmem:[%s386 + $0x4] sm:$0xf]
        %v509 = vld [vmem:[%s386 + $0x8] sm:$0xf]
        %v510 = vld [vmem:[%s386 + $0xc] sm:$0xf]
        %v511 = vld [vmem:[%s386 + $0x10] sm:$0xf]
        %v512 = vld [vmem:[%s386 + $0x14] sm:$0xf]
        %v513 = vld [vmem:[%s386 + $0x18] sm:$0xf]
        %v514 = vld [vmem:[%s386 + $0x1c] sm:$0xf]
        %s515 = scalar_lea.vmem [#allocation2], 12
        %516 = vst [vmem:[%s515 + $0x4] sm:$0xf] %v507
        %517 = vst [vmem:[%s515 + $0x10] sm:$0xf] %v508
        %518 = vst [vmem:[%s515 + $0x1c] sm:$0xf] %v509
        %519 = vst [vmem:[%s515 + $0x28] sm:$0xf] %v510
        %520 = vst [vmem:[%s515 + $0x34] sm:$0xf] %v511
        %521 = vst [vmem:[%s515 + $0x40] sm:$0xf] %v512
        %522 = vst [vmem:[%s515 + $0x4c] sm:$0xf] %v513
        %523 = vst [vmem:[%s515 + $0x58] sm:$0xf] %v514
        %v524 = vld [vmem:[#allocation2] sm:$0xf]
        %v525 = vld [vmem:[#allocation2 + $0x4] sm:$0xf]
        %v526 = vld [vmem:[#allocation2 + $0x8] sm:$0x1]
        %v527 = vld [vmem:[#allocation2 + $0xc] sm:$0xf]
        %v528 = vld [vmem:[#allocation2 + $0x10] sm:$0xf]
        %v529 = vld [vmem:[#allocation2 + $0x14] sm:$0x1]
        %v530 = vld [vmem:[#allocation2 + $0x18] sm:$0xf]
        %v531 = vld [vmem:[#allocation2 + $0x1c] sm:$0xf]
        %v532 = vld [vmem:[#allocation2 + $0x20] sm:$0x1]
        %v533 = vld [vmem:[#allocation2 + $0x24] sm:$0xf]
        %v534 = vld [vmem:[#allocation2 + $0x28] sm:$0xf]
        %v535 = vld [vmem:[#allocation2 + $0x2c] sm:$0x1]
        %v536 = vld [vmem:[#allocation2 + $0x30] sm:$0xf]
        %v537 = vld [vmem:[#allocation2 + $0x34] sm:$0xf]
        %v538 = vld [vmem:[#allocation2 + $0x38] sm:$0x1]
        %v539 = vld [vmem:[#allocation2 + $0x3c] sm:$0xf]
        %v540 = vld [vmem:[#allocation2 + $0x40] sm:$0xf]
        %v541 = vld [vmem:[#allocation2 + $0x44] sm:$0x1]
        %v542 = vld [vmem:[#allocation2 + $0x48] sm:$0xf]
        %v543 = vld [vmem:[#allocation2 + $0x4c] sm:$0xf]
        %v544 = vld [vmem:[#allocation2 + $0x50] sm:$0x1]
        %v545 = vld [vmem:[#allocation2 + $0x54] sm:$0xf]
        %v546 = vld [vmem:[#allocation2 + $0x58] sm:$0xf]
        %v547 = vld [vmem:[#allocation2 + $0x5c] sm:$0x1]
        %v548 = vld [vmem:[#allocation2 + $0x60] sm:$0xf]
        %v549 = vld [vmem:[#allocation2 + $0x64] sm:$0xf]
        %v550 = vld [vmem:[#allocation2 + $0x68] sm:$0x1]
        %v551 = vld [vmem:[#allocation2 + $0x6c] sm:$0xf]
        %v552 = vld [vmem:[#allocation2 + $0x70] sm:$0xf]
        %v553 = vld [vmem:[#allocation2 + $0x74] sm:$0x1]
        %v554 = vld [vmem:[#allocation6] sm:$0x3]
        %v555 = vld [vmem:[#allocation6 + $0x2] sm:$0x3]
        %v556 = vld [vmem:[#allocation6 + $0x4] sm:$0x3]
        %v558 = vpack.i.b16 %v554, %v554
        %v560 = vlaneseq
        %v561 = vshrl.u32 %v560, 7
        %v562 = vsub.s32 0, %v561
        %v563 = vrot.slane %v558, %v562
        %v565 = vunpack.c.l.b16 %v563
        %v566 = vpack.c.b16 %v565, %v565
        %v568 = vmul.bf16 %v524, %v566
        %v569 = vmul.bf16 %v525, %v566
        %v570 = vmul.bf16 %v527, %v566
        %v571 = vmul.bf16 %v528, %v566
        %v572 = vmul.bf16 %v530, %v566
        %v573 = vmul.bf16 %v531, %v566
        %v574 = vmul.bf16 %v533, %v566
        %v575 = vmul.bf16 %v534, %v566
        %v576 = vmul.bf16 %v536, %v566
        %v577 = vmul.bf16 %v537, %v566
        %v578 = vmul.bf16 %v539, %v566
        %v579 = vmul.bf16 %v540, %v566
        %v580 = vmul.bf16 %v542, %v566
        %v581 = vmul.bf16 %v543, %v566
        %v582 = vmul.bf16 %v545, %v566
        %v583 = vmul.bf16 %v546, %v566
        %v584 = vunpack.c.l.bf16 %v568
        %v585 = vunpack.c.l.bf16 %v569
        %v586 = vunpack.c.l.bf16 %v570
        %v587 = vunpack.c.l.bf16 %v571
        %v588 = vunpack.c.l.bf16 %v572
        %v589 = vunpack.c.l.bf16 %v573
        %v590 = vunpack.c.l.bf16 %v574
        %v591 = vunpack.c.l.bf16 %v575
        %v592 = vunpack.c.l.bf16 %v576
        %v593 = vunpack.c.l.bf16 %v577
        %v594 = vunpack.c.l.bf16 %v578
        %v595 = vunpack.c.l.bf16 %v579
        %v596 = vunpack.c.l.bf16 %v580
        %v597 = vunpack.c.l.bf16 %v581
        %v598 = vunpack.c.l.bf16 %v582
        %v599 = vunpack.c.l.bf16 %v583
        %v600 = vadd.f32 %v584, 0.0
        %v601 = vadd.f32 %v585, 0.0
        %v602 = vadd.f32 %v586, 0.0
        %v603 = vadd.f32 %v587, 0.0
        %v604 = vadd.f32 %v588, 0.0
        %v605 = vadd.f32 %v589, 0.0
        %v606 = vadd.f32 %v590, 0.0
        %v607 = vadd.f32 %v591, 0.0
        %v608 = vadd.f32 %v592, 0.0
        %v609 = vadd.f32 %v593, 0.0
        %v610 = vadd.f32 %v594, 0.0
        %v611 = vadd.f32 %v595, 0.0
        %v612 = vadd.f32 %v596, 0.0
        %v613 = vadd.f32 %v597, 0.0
        %v614 = vadd.f32 %v598, 0.0
        %v615 = vadd.f32 %v599, 0.0
        %v616 = vshrl.u32 %v554, 16
        %v617 = vpack.i.b16 %v616, %v616
        %v619 = vlaneseq
        %v620 = vshrl.u32 %v619, 7
        %v621 = vsub.s32 0, %v620
        %v622 = vrot.slane %v617, %v621
        %v623 = vmul.bf16 %v525, %v622
        %v624 = vmul.bf16 %v528, %v622
        %v625 = vmul.bf16 %v531, %v622
        %v626 = vmul.bf16 %v534, %v622
        %v627 = vmul.bf16 %v537, %v622
        %v628 = vmul.bf16 %v540, %v622
        %v629 = vmul.bf16 %v543, %v622
        %v630 = vmul.bf16 %v546, %v622
        %v631 = vunpack.c.l.bf16 %v623
        %v632 = vunpack.c.l.bf16 %v624
        %v633 = vunpack.c.l.bf16 %v625
        %v634 = vunpack.c.l.bf16 %v626
        %v635 = vunpack.c.l.bf16 %v627
        %v636 = vunpack.c.l.bf16 %v628
        %v637 = vunpack.c.l.bf16 %v629
        %v638 = vunpack.c.l.bf16 %v630
        %v647 = vrot.slane %v631, 1
        %v648 = vrot.slane %v632, 1
        %v649 = vrot.slane %v633, 1
        %v650 = vrot.slane %v634, 1
        %v651 = vrot.slane %v635, 1
        %v652 = vrot.slane %v636, 1
        %v653 = vrot.slane %v637, 1
        %v654 = vrot.slane %v638, 1
        %v663 = vadd.f32 %v600, %v647
        %v664 = vadd.f32 %v601, %v647
        %v665 = vadd.f32 %v602, %v648
        %v666 = vadd.f32 %v603, %v648
        %v667 = vadd.f32 %v604, %v649
        %v668 = vadd.f32 %v605, %v649
        %v669 = vadd.f32 %v606, %v650
        %v670 = vadd.f32 %v607, %v650
        %v671 = vadd.f32 %v608, %v651
        %v672 = vadd.f32 %v609, %v651
        %v673 = vadd.f32 %v610, %v652
        %v674 = vadd.f32 %v611, %v652
        %v675 = vadd.f32 %v612, %v653
        %v676 = vadd.f32 %v613, %v653
        %v677 = vadd.f32 %v614, %v654
        %v678 = vadd.f32 %v615, %v654
        %v679 = vlaneseq
        %v680 = vshrl.u32 %v679, 7
        %v681 = vsub.s32 1, %v680
        %v682 = vrot.slane %v558, %v681
        %v684 = vunpack.c.l.b16 %v682
        %v685 = vpack.c.b16 %v684, %v684
        %v687 = vmul.bf16 %v525, %v685
        %v688 = vmul.bf16 %v526, %v685
        %v689 = vmul.bf16 %v528, %v685
        %v690 = vmul.bf16 %v529, %v685
        %v691 = vmul.bf16 %v531, %v685
        %v692 = vmul.bf16 %v532, %v685
        %v693 = vmul.bf16 %v534, %v685
        %v694 = vmul.bf16 %v535, %v685
        %v695 = vmul.bf16 %v537, %v685
        %v696 = vmul.bf16 %v538, %v685
        %v697 = vmul.bf16 %v540, %v685
        %v698 = vmul.bf16 %v541, %v685
        %v699 = vmul.bf16 %v543, %v685
        %v700 = vmul.bf16 %v544, %v685
        %v701 = vmul.bf16 %v546, %v685
        %v702 = vmul.bf16 %v547, %v685
        %v703 = vunpack.c.l.bf16 %v687
        %v704 = vunpack.c.l.bf16 %v688
        %v705 = vunpack.c.l.bf16 %v689
        %v706 = vunpack.c.l.bf16 %v690
        %v707 = vunpack.c.l.bf16 %v691
        %v708 = vunpack.c.l.bf16 %v692
        %v709 = vunpack.c.l.bf16 %v693
        %v710 = vunpack.c.l.bf16 %v694
        %v711 = vunpack.c.l.bf16 %v695
        %v712 = vunpack.c.l.bf16 %v696
        %v713 = vunpack.c.l.bf16 %v697
        %v714 = vunpack.c.l.bf16 %v698
        %v715 = vunpack.c.l.bf16 %v699
        %v716 = vunpack.c.l.bf16 %v700
        %v717 = vunpack.c.l.bf16 %v701
        %v718 = vunpack.c.l.bf16 %v702
        %vm735 = vcmask 1045504
        %v736 = vrot.slane %v703, 2
        %v737 = vrot.slane %v704, 2
        %v738 = vsel %vm735, %v736, %v737
        %v739 = vrot.slane %v705, 2
        %v740 = vrot.slane %v706, 2
        %v741 = vsel %vm735, %v739, %v740
        %v742 = vrot.slane %v707, 2
        %v743 = vrot.slane %v708, 2
        %v744 = vsel %vm735, %v742, %v743
        %v745 = vrot.slane %v709, 2
        %v746 = vrot.slane %v710, 2
        %v747 = vsel %vm735, %v745, %v746
        %v748 = vrot.slane %v711, 2
        %v749 = vrot.slane %v712, 2
        %v750 = vsel %vm735, %v748, %v749
        %v751 = vrot.slane %v713, 2
        %v752 = vrot.slane %v714, 2
        %v753 = vsel %vm735, %v751, %v752
        %v754 = vrot.slane %v715, 2
        %v755 = vrot.slane %v716, 2
        %v756 = vsel %vm735, %v754, %v755
        %v757 = vrot.slane %v717, 2
        %v758 = vrot.slane %v718, 2
        %v759 = vsel %vm735, %v757, %v758
        %v776 = vadd.f32 %v663, %v736
        %v777 = vadd.f32 %v664, %v738
        %v778 = vadd.f32 %v665, %v739
        %v779 = vadd.f32 %v666, %v741
        %v780 = vadd.f32 %v667, %v742
        %v781 = vadd.f32 %v668, %v744
        %v782 = vadd.f32 %v669, %v745
        %v783 = vadd.f32 %v670, %v747
        %v784 = vadd.f32 %v671, %v748
        %v785 = vadd.f32 %v672, %v750
        %v786 = vadd.f32 %v673, %v751
        %v787 = vadd.f32 %v674, %v753
        %v788 = vadd.f32 %v675, %v754
        %v789 = vadd.f32 %v676, %v756
        %v790 = vadd.f32 %v677, %v757
        %v791 = vadd.f32 %v678, %v759
        %v793 = vpack.i.b16 %v555, %v555
        %v795 = vlaneseq
        %v796 = vshrl.u32 %v795, 7
        %v797 = vsub.s32 0, %v796
        %v798 = vrot.slane %v793, %v797
        %v800 = vunpack.c.l.b16 %v798
        %v801 = vpack.c.b16 %v800, %v800
        %v803 = vmul.bf16 %v527, %v801
        %v804 = vmul.bf16 %v528, %v801
        %v805 = vmul.bf16 %v530, %v801
        %v806 = vmul.bf16 %v531, %v801
        %v807 = vmul.bf16 %v533, %v801
        %v808 = vmul.bf16 %v534, %v801
        %v809 = vmul.bf16 %v536, %v801
        %v810 = vmul.bf16 %v537, %v801
        %v811 = vmul.bf16 %v539, %v801
        %v812 = vmul.bf16 %v540, %v801
        %v813 = vmul.bf16 %v542, %v801
        %v814 = vmul.bf16 %v543, %v801
        %v815 = vmul.bf16 %v545, %v801
        %v816 = vmul.bf16 %v546, %v801
        %v817 = vmul.bf16 %v548, %v801
        %v818 = vmul.bf16 %v549, %v801
        %v819 = vunpack.c.l.bf16 %v803
        %v820 = vunpack.c.l.bf16 %v804
        %v821 = vunpack.c.l.bf16 %v805
        %v822 = vunpack.c.l.bf16 %v806
        %v823 = vunpack.c.l.bf16 %v807
        %v824 = vunpack.c.l.bf16 %v808
        %v825 = vunpack.c.l.bf16 %v809
        %v826 = vunpack.c.l.bf16 %v810
        %v827 = vunpack.c.l.bf16 %v811
        %v828 = vunpack.c.l.bf16 %v812
        %v829 = vunpack.c.l.bf16 %v813
        %v830 = vunpack.c.l.bf16 %v814
        %v831 = vunpack.c.l.bf16 %v815
        %v832 = vunpack.c.l.bf16 %v816
        %v833 = vunpack.c.l.bf16 %v817
        %v834 = vunpack.c.l.bf16 %v818
        %v835 = vadd.f32 %v776, %v819
        %v836 = vadd.f32 %v777, %v820
        %v837 = vadd.f32 %v778, %v821
        %v838 = vadd.f32 %v779, %v822
        %v839 = vadd.f32 %v780, %v823
        %v840 = vadd.f32 %v781, %v824
        %v841 = vadd.f32 %v782, %v825
        %v842 = vadd.f32 %v783, %v826
        %v843 = vadd.f32 %v784, %v827
        %v844 = vadd.f32 %v785, %v828
        %v845 = vadd.f32 %v786, %v829
        %v846 = vadd.f32 %v787, %v830
        %v847 = vadd.f32 %v788, %v831
        %v848 = vadd.f32 %v789, %v832
        %v849 = vadd.f32 %v790, %v833
        %v850 = vadd.f32 %v791, %v834
        %v851 = vshrl.u32 %v555, 16
        %v852 = vpack.i.b16 %v851, %v851
        %v854 = vlaneseq
        %v855 = vshrl.u32 %v854, 7
        %v856 = vsub.s32 0, %v855
        %v857 = vrot.slane %v852, %v856
        %v858 = vmul.bf16 %v528, %v857
        %v859 = vmul.bf16 %v531, %v857
        %v860 = vmul.bf16 %v534, %v857
        %v861 = vmul.bf16 %v537, %v857
        %v862 = vmul.bf16 %v540, %v857
        %v863 = vmul.bf16 %v543, %v857
        %v864 = vmul.bf16 %v546, %v857
        %v865 = vmul.bf16 %v549, %v857
        %v866 = vunpack.c.l.bf16 %v858
        %v867 = vunpack.c.l.bf16 %v859
        %v868 = vunpack.c.l.bf16 %v860
        %v869 = vunpack.c.l.bf16 %v861
        %v870 = vunpack.c.l.bf16 %v862
        %v871 = vunpack.c.l.bf16 %v863
        %v872 = vunpack.c.l.bf16 %v864
        %v873 = vunpack.c.l.bf16 %v865
        %v882 = vrot.slane %v866, 1
        %v883 = vrot.slane %v867, 1
        %v884 = vrot.slane %v868, 1
        %v885 = vrot.slane %v869, 1
        %v886 = vrot.slane %v870, 1
        %v887 = vrot.slane %v871, 1
        %v888 = vrot.slane %v872, 1
        %v889 = vrot.slane %v873, 1
        %v898 = vadd.f32 %v835, %v882
        %v899 = vadd.f32 %v836, %v882
        %v900 = vadd.f32 %v837, %v883
        %v901 = vadd.f32 %v838, %v883
        %v902 = vadd.f32 %v839, %v884
        %v903 = vadd.f32 %v840, %v884
        %v904 = vadd.f32 %v841, %v885
        %v905 = vadd.f32 %v842, %v885
        %v906 = vadd.f32 %v843, %v886
        %v907 = vadd.f32 %v844, %v886
        %v908 = vadd.f32 %v845, %v887
        %v909 = vadd.f32 %v846, %v887
        %v910 = vadd.f32 %v847, %v888
        %v911 = vadd.f32 %v848, %v888
        %v912 = vadd.f32 %v849, %v889
        %v913 = vadd.f32 %v850, %v889
        %v914 = vlaneseq
        %v915 = vshrl.u32 %v914, 7
        %v916 = vsub.s32 1, %v915
        %v917 = vrot.slane %v793, %v916
        %v919 = vunpack.c.l.b16 %v917
        %v920 = vpack.c.b16 %v919, %v919
        %v922 = vmul.bf16 %v528, %v920
        %v923 = vmul.bf16 %v529, %v920
        %v924 = vmul.bf16 %v531, %v920
        %v925 = vmul.bf16 %v532, %v920
        %v926 = vmul.bf16 %v534, %v920
        %v927 = vmul.bf16 %v535, %v920
        %v928 = vmul.bf16 %v537, %v920
        %v929 = vmul.bf16 %v538, %v920
        %v930 = vmul.bf16 %v540, %v920
        %v931 = vmul.bf16 %v541, %v920
        %v932 = vmul.bf16 %v543, %v920
        %v933 = vmul.bf16 %v544, %v920
        %v934 = vmul.bf16 %v546, %v920
        %v935 = vmul.bf16 %v547, %v920
        %v936 = vmul.bf16 %v549, %v920
        %v937 = vmul.bf16 %v550, %v920
        %v938 = vunpack.c.l.bf16 %v922
        %v939 = vunpack.c.l.bf16 %v923
        %v940 = vunpack.c.l.bf16 %v924
        %v941 = vunpack.c.l.bf16 %v925
        %v942 = vunpack.c.l.bf16 %v926
        %v943 = vunpack.c.l.bf16 %v927
        %v944 = vunpack.c.l.bf16 %v928
        %v945 = vunpack.c.l.bf16 %v929
        %v946 = vunpack.c.l.bf16 %v930
        %v947 = vunpack.c.l.bf16 %v931
        %v948 = vunpack.c.l.bf16 %v932
        %v949 = vunpack.c.l.bf16 %v933
        %v950 = vunpack.c.l.bf16 %v934
        %v951 = vunpack.c.l.bf16 %v935
        %v952 = vunpack.c.l.bf16 %v936
        %v953 = vunpack.c.l.bf16 %v937
        %v970 = vrot.slane %v938, 2
        %v971 = vrot.slane %v939, 2
        %v972 = vsel %vm735, %v970, %v971
        %v973 = vrot.slane %v940, 2
        %v974 = vrot.slane %v941, 2
        %v975 = vsel %vm735, %v973, %v974
        %v976 = vrot.slane %v942, 2
        %v977 = vrot.slane %v943, 2
        %v978 = vsel %vm735, %v976, %v977
        %v979 = vrot.slane %v944, 2
        %v980 = vrot.slane %v945, 2
        %v981 = vsel %vm735, %v979, %v980
        %v982 = vrot.slane %v946, 2
        %v983 = vrot.slane %v947, 2
        %v984 = vsel %vm735, %v982, %v983
        %v985 = vrot.slane %v948, 2
        %v986 = vrot.slane %v949, 2
        %v987 = vsel %vm735, %v985, %v986
        %v988 = vrot.slane %v950, 2
        %v989 = vrot.slane %v951, 2
        %v990 = vsel %vm735, %v988, %v989
        %v991 = vrot.slane %v952, 2
        %v992 = vrot.slane %v953, 2
        %v993 = vsel %vm735, %v991, %v992
        %v1010 = vadd.f32 %v898, %v970
        %v1011 = vadd.f32 %v899, %v972
        %v1012 = vadd.f32 %v900, %v973
        %v1013 = vadd.f32 %v901, %v975
        %v1014 = vadd.f32 %v902, %v976
        %v1015 = vadd.f32 %v903, %v978
        %v1016 = vadd.f32 %v904, %v979
        %v1017 = vadd.f32 %v905, %v981
        %v1018 = vadd.f32 %v906, %v982
        %v1019 = vadd.f32 %v907, %v984
        %v1020 = vadd.f32 %v908, %v985
        %v1021 = vadd.f32 %v909, %v987
        %v1022 = vadd.f32 %v910, %v988
        %v1023 = vadd.f32 %v911, %v990
        %v1024 = vadd.f32 %v912, %v991
        %v1025 = vadd.f32 %v913, %v993
        %v1027 = vpack.i.b16 %v556, %v556
        %v1029 = vlaneseq
        %v1030 = vshrl.u32 %v1029, 7
        %v1031 = vsub.s32 0, %v1030
        %v1032 = vrot.slane %v1027, %v1031
        %v1034 = vunpack.c.l.b16 %v1032
        %v1035 = vpack.c.b16 %v1034, %v1034
        %v1037 = vmul.bf16 %v530, %v1035
        %v1038 = vmul.bf16 %v531, %v1035
        %v1039 = vmul.bf16 %v533, %v1035
        %v1040 = vmul.bf16 %v534, %v1035
        %v1041 = vmul.bf16 %v536, %v1035
        %v1042 = vmul.bf16 %v537, %v1035
        %v1043 = vmul.bf16 %v539, %v1035
        %v1044 = vmul.bf16 %v540, %v1035
        %v1045 = vmul.bf16 %v542, %v1035
        %v1046 = vmul.bf16 %v543, %v1035
        %v1047 = vmul.bf16 %v545, %v1035
        %v1048 = vmul.bf16 %v546, %v1035
        %v1049 = vmul.bf16 %v548, %v1035
        %v1050 = vmul.bf16 %v549, %v1035
        %v1051 = vmul.bf16 %v551, %v1035
        %v1052 = vmul.bf16 %v552, %v1035
        %v1053 = vunpack.c.l.bf16 %v1037
        %v1054 = vunpack.c.l.bf16 %v1038
        %v1055 = vunpack.c.l.bf16 %v1039
        %v1056 = vunpack.c.l.bf16 %v1040
        %v1057 = vunpack.c.l.bf16 %v1041
        %v1058 = vunpack.c.l.bf16 %v1042
        %v1059 = vunpack.c.l.bf16 %v1043
        %v1060 = vunpack.c.l.bf16 %v1044
        %v1061 = vunpack.c.l.bf16 %v1045
        %v1062 = vunpack.c.l.bf16 %v1046
        %v1063 = vunpack.c.l.bf16 %v1047
        %v1064 = vunpack.c.l.bf16 %v1048
        %v1065 = vunpack.c.l.bf16 %v1049
        %v1066 = vunpack.c.l.bf16 %v1050
        %v1067 = vunpack.c.l.bf16 %v1051
        %v1068 = vunpack.c.l.bf16 %v1052
        %v1069 = vadd.f32 %v1010, %v1053
        %v1070 = vadd.f32 %v1011, %v1054
        %v1071 = vadd.f32 %v1012, %v1055
        %v1072 = vadd.f32 %v1013, %v1056
        %v1073 = vadd.f32 %v1014, %v1057
        %v1074 = vadd.f32 %v1015, %v1058
        %v1075 = vadd.f32 %v1016, %v1059
        %v1076 = vadd.f32 %v1017, %v1060
        %v1077 = vadd.f32 %v1018, %v1061
        %v1078 = vadd.f32 %v1019, %v1062
        %v1079 = vadd.f32 %v1020, %v1063
        %v1080 = vadd.f32 %v1021, %v1064
        %v1081 = vadd.f32 %v1022, %v1065
        %v1082 = vadd.f32 %v1023, %v1066
        %v1083 = vadd.f32 %v1024, %v1067
        %v1084 = vadd.f32 %v1025, %v1068
        %v1085 = vshrl.u32 %v556, 16
        %v1086 = vpack.i.b16 %v1085, %v1085
        %v1088 = vlaneseq
        %v1089 = vshrl.u32 %v1088, 7
        %v1090 = vsub.s32 0, %v1089
        %v1091 = vrot.slane %v1086, %v1090
        %v1092 = vmul.bf16 %v531, %v1091
        %v1093 = vmul.bf16 %v534, %v1091
        %v1094 = vmul.bf16 %v537, %v1091
        %v1095 = vmul.bf16 %v540, %v1091
        %v1096 = vmul.bf16 %v543, %v1091
        %v1097 = vmul.bf16 %v546, %v1091
        %v1098 = vmul.bf16 %v549, %v1091
        %v1099 = vmul.bf16 %v552, %v1091
        %v1100 = vunpack.c.l.bf16 %v1092
        %v1101 = vunpack.c.l.bf16 %v1093
        %v1102 = vunpack.c.l.bf16 %v1094
        %v1103 = vunpack.c.l.bf16 %v1095
        %v1104 = vunpack.c.l.bf16 %v1096
        %v1105 = vunpack.c.l.bf16 %v1097
        %v1106 = vunpack.c.l.bf16 %v1098
        %v1107 = vunpack.c.l.bf16 %v1099
        %v1116 = vrot.slane %v1100, 1
        %v1117 = vrot.slane %v1101, 1
        %v1118 = vrot.slane %v1102, 1
        %v1119 = vrot.slane %v1103, 1
        %v1120 = vrot.slane %v1104, 1
        %v1121 = vrot.slane %v1105, 1
        %v1122 = vrot.slane %v1106, 1
        %v1123 = vrot.slane %v1107, 1
        %v1132 = vadd.f32 %v1069, %v1116
        %v1133 = vadd.f32 %v1070, %v1116
        %v1134 = vadd.f32 %v1071, %v1117
        %v1135 = vadd.f32 %v1072, %v1117
        %v1136 = vadd.f32 %v1073, %v1118
        %v1137 = vadd.f32 %v1074, %v1118
        %v1138 = vadd.f32 %v1075, %v1119
        %v1139 = vadd.f32 %v1076, %v1119
        %v1140 = vadd.f32 %v1077, %v1120
        %v1141 = vadd.f32 %v1078, %v1120
        %v1142 = vadd.f32 %v1079, %v1121
        %v1143 = vadd.f32 %v1080, %v1121
        %v1144 = vadd.f32 %v1081, %v1122
        %v1145 = vadd.f32 %v1082, %v1122
        %v1146 = vadd.f32 %v1083, %v1123
        %v1147 = vadd.f32 %v1084, %v1123
        %v1148 = vlaneseq
        %v1149 = vshrl.u32 %v1148, 7
        %v1150 = vsub.s32 1, %v1149
        %v1151 = vrot.slane %v1027, %v1150
        %v1153 = vunpack.c.l.b16 %v1151
        %v1154 = vpack.c.b16 %v1153, %v1153
        %v1156 = vmul.bf16 %v531, %v1154
        %v1157 = vmul.bf16 %v532, %v1154
        %v1158 = vmul.bf16 %v534, %v1154
        %v1159 = vmul.bf16 %v535, %v1154
        %v1160 = vmul.bf16 %v537, %v1154
        %v1161 = vmul.bf16 %v538, %v1154
        %v1162 = vmul.bf16 %v540, %v1154
        %v1163 = vmul.bf16 %v541, %v1154
        %v1164 = vmul.bf16 %v543, %v1154
        %v1165 = vmul.bf16 %v544, %v1154
        %v1166 = vmul.bf16 %v546, %v1154
        %v1167 = vmul.bf16 %v547, %v1154
        %v1168 = vmul.bf16 %v549, %v1154
        %v1169 = vmul.bf16 %v550, %v1154
        %v1170 = vmul.bf16 %v552, %v1154
        %v1171 = vmul.bf16 %v553, %v1154
        %v1172 = vunpack.c.l.bf16 %v1156
        %v1173 = vunpack.c.l.bf16 %v1157
        %v1174 = vunpack.c.l.bf16 %v1158
        %v1175 = vunpack.c.l.bf16 %v1159
        %v1176 = vunpack.c.l.bf16 %v1160
        %v1177 = vunpack.c.l.bf16 %v1161
        %v1178 = vunpack.c.l.bf16 %v1162
        %v1179 = vunpack.c.l.bf16 %v1163
        %v1180 = vunpack.c.l.bf16 %v1164
        %v1181 = vunpack.c.l.bf16 %v1165
        %v1182 = vunpack.c.l.bf16 %v1166
        %v1183 = vunpack.c.l.bf16 %v1167
        %v1184 = vunpack.c.l.bf16 %v1168
        %v1185 = vunpack.c.l.bf16 %v1169
        %v1186 = vunpack.c.l.bf16 %v1170
        %v1187 = vunpack.c.l.bf16 %v1171
        %v1204 = vrot.slane %v1172, 2
        %v1205 = vrot.slane %v1173, 2
        %v1206 = vsel %vm735, %v1204, %v1205
        %v1207 = vrot.slane %v1174, 2
        %v1208 = vrot.slane %v1175, 2
        %v1209 = vsel %vm735, %v1207, %v1208
        %v1210 = vrot.slane %v1176, 2
        %v1211 = vrot.slane %v1177, 2
        %v1212 = vsel %vm735, %v1210, %v1211
        %v1213 = vrot.slane %v1178, 2
        %v1214 = vrot.slane %v1179, 2
        %v1215 = vsel %vm735, %v1213, %v1214
        %v1216 = vrot.slane %v1180, 2
        %v1217 = vrot.slane %v1181, 2
        %v1218 = vsel %vm735, %v1216, %v1217
        %v1219 = vrot.slane %v1182, 2
        %v1220 = vrot.slane %v1183, 2
        %v1221 = vsel %vm735, %v1219, %v1220
        %v1222 = vrot.slane %v1184, 2
        %v1223 = vrot.slane %v1185, 2
        %v1224 = vsel %vm735, %v1222, %v1223
        %v1225 = vrot.slane %v1186, 2
        %v1226 = vrot.slane %v1187, 2
        %v1227 = vsel %vm735, %v1225, %v1226
        %v1244 = vadd.f32 %v1132, %v1204
        %v1245 = vadd.f32 %v1133, %v1206
        %v1246 = vadd.f32 %v1134, %v1207
        %v1247 = vadd.f32 %v1135, %v1209
        %v1248 = vadd.f32 %v1136, %v1210
        %v1249 = vadd.f32 %v1137, %v1212
        %v1250 = vadd.f32 %v1138, %v1213
        %v1251 = vadd.f32 %v1139, %v1215
        %v1252 = vadd.f32 %v1140, %v1216
        %v1253 = vadd.f32 %v1141, %v1218
        %v1254 = vadd.f32 %v1142, %v1219
        %v1255 = vadd.f32 %v1143, %v1221
        %v1256 = vadd.f32 %v1144, %v1222
        %v1257 = vadd.f32 %v1145, %v1224
        %v1258 = vadd.f32 %v1146, %v1225
        %v1259 = vadd.f32 %v1147, %v1227
        %v1260 = vld [vmem:[#allocation8] sm:$0x1]
        %v1262 = vlaneseq
        %v1263 = vshrl.u32 %v1262, 7
        %v1264 = vsub.s32 0, %v1263
        %v1265 = vrot.slane %v1260, %v1264
        %v1267 = vmul.f32 %v1244, %v1265
        %v1268 = vmul.f32 %v1245, %v1265
        %v1269 = vmul.f32 %v1246, %v1265
        %v1270 = vmul.f32 %v1247, %v1265
        %v1271 = vmul.f32 %v1248, %v1265
        %v1272 = vmul.f32 %v1249, %v1265
        %v1273 = vmul.f32 %v1250, %v1265
        %v1274 = vmul.f32 %v1251, %v1265
        %v1275 = vmul.f32 %v1252, %v1265
        %v1276 = vmul.f32 %v1253, %v1265
        %v1277 = vmul.f32 %v1254, %v1265
        %v1278 = vmul.f32 %v1255, %v1265
        %v1279 = vmul.f32 %v1256, %v1265
        %v1280 = vmul.f32 %v1257, %v1265
        %v1281 = vmul.f32 %v1258, %v1265
        %v1282 = vmul.f32 %v1259, %v1265
        %v1283 = vld [vmem:[#allocation9] sm:$0x1]
        %v1285 = vlaneseq
        %v1286 = vshrl.u32 %v1285, 7
        %v1287 = vsub.s32 0, %v1286
        %v1288 = vrot.slane %v1283, %v1287
        %v1290 = vadd.f32 %v1267, %v1288
        %v1291 = vadd.f32 %v1268, %v1288
        %v1292 = vadd.f32 %v1269, %v1288
        %v1293 = vadd.f32 %v1270, %v1288
        %v1294 = vadd.f32 %v1271, %v1288
        %v1295 = vadd.f32 %v1272, %v1288
        %v1296 = vadd.f32 %v1273, %v1288
        %v1297 = vadd.f32 %v1274, %v1288
        %v1298 = vadd.f32 %v1275, %v1288
        %v1299 = vadd.f32 %v1276, %v1288
        %v1300 = vadd.f32 %v1277, %v1288
        %v1301 = vadd.f32 %v1278, %v1288
        %v1302 = vadd.f32 %v1279, %v1288
        %v1303 = vadd.f32 %v1280, %v1288
        %v1304 = vadd.f32 %v1281, %v1288
        %v1305 = vadd.f32 %v1282, %v1288
        %v1306 = vxor.u32 %v1290, 2147483648
        %v1307 = vxor.u32 %v1291, 2147483648
        %v1308 = vxor.u32 %v1292, 2147483648
        %v1309 = vxor.u32 %v1293, 2147483648
        %v1310 = vxor.u32 %v1294, 2147483648
        %v1311 = vxor.u32 %v1295, 2147483648
        %v1312 = vxor.u32 %v1296, 2147483648
        %v1313 = vxor.u32 %v1297, 2147483648
        %v1314 = vxor.u32 %v1298, 2147483648
        %v1315 = vxor.u32 %v1299, 2147483648
        %v1316 = vxor.u32 %v1300, 2147483648
        %v1317 = vxor.u32 %v1301, 2147483648
        %v1318 = vxor.u32 %v1302, 2147483648
        %v1319 = vxor.u32 %v1303, 2147483648
        %v1320 = vxor.u32 %v1304, 2147483648
        %v1321 = vxor.u32 %v1305, 2147483648
        %v1322 = vmul.f32 %v1306, 1.442695
        %v1323 = vpow.pop %v1322
        %v1324 = vmul.f32 %v1307, 1.442695
        %v1325 = vpow.pop %v1324
        %v1326 = vmul.f32 %v1308, 1.442695
        %v1327 = vpow.pop %v1326
        %v1328 = vmul.f32 %v1309, 1.442695
        %v1329 = vpow.pop %v1328
        %v1330 = vmul.f32 %v1310, 1.442695
        %v1331 = vpow.pop %v1330
        %v1332 = vmul.f32 %v1311, 1.442695
        %v1333 = vpow.pop %v1332
        %v1334 = vmul.f32 %v1312, 1.442695
        %v1335 = vpow.pop %v1334
        %v1336 = vmul.f32 %v1313, 1.442695
        %v1337 = vpow.pop %v1336
        %v1338 = vmul.f32 %v1314, 1.442695
        %v1339 = vpow.pop %v1338
        %v1340 = vmul.f32 %v1315, 1.442695
        %v1341 = vpow.pop %v1340
        %v1342 = vmul.f32 %v1316, 1.442695
        %v1343 = vpow.pop %v1342
        %v1344 = vmul.f32 %v1317, 1.442695
        %v1345 = vpow.pop %v1344
        %v1346 = vmul.f32 %v1318, 1.442695
        %v1347 = vpow.pop %v1346
        %v1348 = vmul.f32 %v1319, 1.442695
        %v1349 = vpow.pop %v1348
        %v1350 = vmul.f32 %v1320, 1.442695
        %v1351 = vpow.pop %v1350
        %v1352 = vmul.f32 %v1321, 1.442695
        %v1353 = vpow.pop %v1352
        %v1354 = vadd.f32 %v1323, 1.0
        %v1355 = vadd.f32 %v1325, 1.0
        %v1356 = vadd.f32 %v1327, 1.0
        %v1357 = vadd.f32 %v1329, 1.0
        %v1358 = vadd.f32 %v1331, 1.0
        %v1359 = vadd.f32 %v1333, 1.0
        %v1360 = vadd.f32 %v1335, 1.0
        %v1361 = vadd.f32 %v1337, 1.0
        %v1362 = vadd.f32 %v1339, 1.0
        %v1363 = vadd.f32 %v1341, 1.0
        %v1364 = vadd.f32 %v1343, 1.0
        %v1365 = vadd.f32 %v1345, 1.0
        %v1366 = vadd.f32 %v1347, 1.0
        %v1367 = vadd.f32 %v1349, 1.0
        %v1368 = vadd.f32 %v1351, 1.0
        %v1369 = vadd.f32 %v1353, 1.0
        %v1370 = vrcp.pop %v1354
        %v1371 = vmul.f32 1.0, %v1370
        %v1372 = vrcp.pop %v1355
        %v1373 = vmul.f32 1.0, %v1372
        %v1374 = vrcp.pop %v1356
        %v1375 = vmul.f32 1.0, %v1374
        %v1376 = vrcp.pop %v1357
        %v1377 = vmul.f32 1.0, %v1376
        %v1378 = vrcp.pop %v1358
        %v1379 = vmul.f32 1.0, %v1378
        %v1380 = vrcp.pop %v1359
        %v1381 = vmul.f32 1.0, %v1380
        %v1382 = vrcp.pop %v1360
        %v1383 = vmul.f32 1.0, %v1382
        %v1384 = vrcp.pop %v1361
        %v1385 = vmul.f32 1.0, %v1384
        %v1386 = vrcp.pop %v1362
        %v1387 = vmul.f32 1.0, %v1386
        %v1388 = vrcp.pop %v1363
        %v1389 = vmul.f32 1.0, %v1388
        %v1390 = vrcp.pop %v1364
        %v1391 = vmul.f32 1.0, %v1390
        %v1392 = vrcp.pop %v1365
        %v1393 = vmul.f32 1.0, %v1392
        %v1394 = vrcp.pop %v1366
        %v1395 = vmul.f32 1.0, %v1394
        %v1396 = vrcp.pop %v1367
        %v1397 = vmul.f32 1.0, %v1396
        %v1398 = vrcp.pop %v1368
        %v1399 = vmul.f32 1.0, %v1398
        %v1400 = vrcp.pop %v1369
        %v1401 = vmul.f32 1.0, %v1400
        %v1402 = vmul.f32 %v1290, %v1371
        %v1403 = vmul.f32 %v1291, %v1373
        %v1404 = vmul.f32 %v1292, %v1375
        %v1405 = vmul.f32 %v1293, %v1377
        %v1406 = vmul.f32 %v1294, %v1379
        %v1407 = vmul.f32 %v1295, %v1381
        %v1408 = vmul.f32 %v1296, %v1383
        %v1409 = vmul.f32 %v1297, %v1385
        %v1410 = vmul.f32 %v1298, %v1387
        %v1411 = vmul.f32 %v1299, %v1389
        %v1412 = vmul.f32 %v1300, %v1391
        %v1413 = vmul.f32 %v1301, %v1393
        %v1414 = vmul.f32 %v1302, %v1395
        %v1415 = vmul.f32 %v1303, %v1397
        %v1416 = vmul.f32 %v1304, %v1399
        %v1417 = vmul.f32 %v1305, %v1401
        %v1418 = vpack.c.bf16 %v1403, %v1402
        %v1419 = vpack.c.bf16 %v1405, %v1404
        %v1420 = vpack.c.bf16 %v1407, %v1406
        %v1421 = vpack.c.bf16 %v1409, %v1408
        %v1422 = vpack.c.bf16 %v1411, %v1410
        %v1423 = vpack.c.bf16 %v1413, %v1412
        %v1424 = vpack.c.bf16 %v1415, %v1414
        %v1425 = vpack.c.bf16 %v1417, %v1416
        %v1434 = vunpack.c.l.b16 %v1418
        %v1435 = vunpack.c.h.b16 %v1418
        %v1436 = vunpack.c.l.b16 %v1419
        %v1437 = vunpack.c.h.b16 %v1419
        %v1438 = vunpack.c.l.b16 %v1420
        %v1439 = vunpack.c.h.b16 %v1420
        %v1440 = vunpack.c.l.b16 %v1421
        %v1441 = vunpack.c.h.b16 %v1421
        %v1442 = vunpack.c.l.b16 %v1422
        %v1443 = vunpack.c.h.b16 %v1422
        %v1444 = vunpack.c.l.b16 %v1423
        %v1445 = vunpack.c.h.b16 %v1423
        %v1446 = vunpack.c.l.b16 %v1424
        %v1447 = vunpack.c.h.b16 %v1424
        %v1448 = vunpack.c.l.b16 %v1425
        %v1449 = vunpack.c.h.b16 %v1425
        %v1450 = vpack.c.b16 %v1434, %v1434
        %v1451 = vpack.c.b16 %v1435, %v1435
        %v1452 = vpack.c.b16 %v1436, %v1436
        %v1453 = vpack.c.b16 %v1437, %v1437
        %v1454 = vpack.c.b16 %v1438, %v1438
        %v1455 = vpack.c.b16 %v1439, %v1439
        %v1456 = vpack.c.b16 %v1440, %v1440
        %v1457 = vpack.c.b16 %v1441, %v1441
        %v1458 = vpack.c.b16 %v1442, %v1442
        %v1459 = vpack.c.b16 %v1443, %v1443
        %v1460 = vpack.c.b16 %v1444, %v1444
        %v1461 = vpack.c.b16 %v1445, %v1445
        %v1462 = vpack.c.b16 %v1446, %v1446
        %v1463 = vpack.c.b16 %v1447, %v1447
        %v1464 = vpack.c.b16 %v1448, %v1448
        %v1465 = vpack.c.b16 %v1449, %v1449
        %vm1466 = vsmask.f32 4368
        %vm1467 = vmor %vm457, %vm1466
        %v1469 = vshrl.u32 %v1450, 16
        %v1471 = vrot.slane %v1469, 7
        %v1472 = vrot.slane %v1471, 4
        %v1474 = vshrl.u32 %v1451, 16
        %v1476 = vrot.slane %v1474, 7
        %v1477 = vshll.u32 %v1451, 16
        %v1479 = vor.u32 %v1476, %v1477
        %v1480 = vsel %vm1467, %v1472, %v1479
        %v1482 = vshrl.u32 %v1452, 16
        %v1484 = vrot.slane %v1482, 7
        %v1485 = vrot.slane %v1484, 4
        %v1487 = vshrl.u32 %v1453, 16
        %v1489 = vrot.slane %v1487, 7
        %v1490 = vshll.u32 %v1453, 16
        %v1492 = vor.u32 %v1489, %v1490
        %v1493 = vsel %vm1467, %v1485, %v1492
        %v1495 = vshrl.u32 %v1454, 16
        %v1497 = vrot.slane %v1495, 7
        %v1498 = vrot.slane %v1497, 4
        %v1500 = vshrl.u32 %v1455, 16
        %v1502 = vrot.slane %v1500, 7
        %v1503 = vshll.u32 %v1455, 16
        %v1505 = vor.u32 %v1502, %v1503
        %v1506 = vsel %vm1467, %v1498, %v1505
        %v1508 = vshrl.u32 %v1456, 16
        %v1510 = vrot.slane %v1508, 7
        %v1511 = vrot.slane %v1510, 4
        %v1513 = vshrl.u32 %v1457, 16
        %v1515 = vrot.slane %v1513, 7
        %v1516 = vshll.u32 %v1457, 16
        %v1518 = vor.u32 %v1515, %v1516
        %v1519 = vsel %vm1467, %v1511, %v1518
        %v1521 = vshrl.u32 %v1458, 16
        %v1523 = vrot.slane %v1521, 7
        %v1524 = vrot.slane %v1523, 4
        %v1526 = vshrl.u32 %v1459, 16
        %v1528 = vrot.slane %v1526, 7
        %v1529 = vshll.u32 %v1459, 16
        %v1531 = vor.u32 %v1528, %v1529
        %v1532 = vsel %vm1467, %v1524, %v1531
        %v1534 = vshrl.u32 %v1460, 16
        %v1536 = vrot.slane %v1534, 7
        %v1537 = vrot.slane %v1536, 4
        %v1539 = vshrl.u32 %v1461, 16
        %v1541 = vrot.slane %v1539, 7
        %v1542 = vshll.u32 %v1461, 16
        %v1544 = vor.u32 %v1541, %v1542
        %v1545 = vsel %vm1467, %v1537, %v1544
        %v1547 = vshrl.u32 %v1462, 16
        %v1549 = vrot.slane %v1547, 7
        %v1550 = vrot.slane %v1549, 4
        %v1552 = vshrl.u32 %v1463, 16
        %v1554 = vrot.slane %v1552, 7
        %v1555 = vshll.u32 %v1463, 16
        %v1557 = vor.u32 %v1554, %v1555
        %v1558 = vsel %vm1467, %v1550, %v1557
        %v1560 = vshrl.u32 %v1464, 16
        %v1562 = vrot.slane %v1560, 7
        %v1563 = vrot.slane %v1562, 4
        %v1565 = vshrl.u32 %v1465, 16
        %v1567 = vrot.slane %v1565, 7
        %v1568 = vshll.u32 %v1465, 16
        %v1570 = vor.u32 %v1567, %v1568
        %v1571 = vsel %vm1467, %v1563, %v1570
        %1580 = vst [vmem:[%s446] sm:$0xf] %v1480
        %1581 = vst [vmem:[%s446 + $0x4] sm:$0xf] %v1493
        %1582 = vst [vmem:[%s446 + $0x8] sm:$0xf] %v1506
        %1583 = vst [vmem:[%s446 + $0xc] sm:$0xf] %v1519
        %1584 = vst [vmem:[%s446 + $0x10] sm:$0xf] %v1532
        %1585 = vst [vmem:[%s446 + $0x14] sm:$0xf] %v1545
        %1586 = vst [vmem:[%s446 + $0x18] sm:$0xf] %v1558
        %1587 = vst [vmem:[%s446 + $0x1c] sm:$0xf] %v1571
        %vm1604 = vcmask 1040384
        %v1605 = vrot.slane %v1402, 7
        %v1606 = vrot.slane %v1403, 7
        %v1607 = vsel %vm1604, %v1605, %v1606
        %v1608 = vrot.slane %v1404, 7
        %v1609 = vrot.slane %v1405, 7
        %v1610 = vsel %vm1604, %v1608, %v1609
        %v1611 = vrot.slane %v1406, 7
        %v1612 = vrot.slane %v1407, 7
        %v1613 = vsel %vm1604, %v1611, %v1612
        %v1614 = vrot.slane %v1408, 7
        %v1615 = vrot.slane %v1409, 7
        %v1616 = vsel %vm1604, %v1614, %v1615
        %v1617 = vrot.slane %v1410, 7
        %v1618 = vrot.slane %v1411, 7
        %v1619 = vsel %vm1604, %v1617, %v1618
        %v1620 = vrot.slane %v1412, 7
        %v1621 = vrot.slane %v1413, 7
        %v1622 = vsel %vm1604, %v1620, %v1621
        %v1623 = vrot.slane %v1414, 7
        %v1624 = vrot.slane %v1415, 7
        %v1625 = vsel %vm1604, %v1623, %v1624
        %v1626 = vrot.slane %v1416, 7
        %v1627 = vrot.slane %v1417, 7
        %v1628 = vsel %vm1604, %v1626, %v1627
        %v1637 = vadd.f32 %v1607, %v1610
        %v1638 = vadd.f32 %v1637, %v1613
        %v1639 = vadd.f32 %v1638, %v1616
        %v1640 = vadd.f32 %v1639, %v1619
        %v1641 = vadd.f32 %v1640, %v1622
        %v1642 = vadd.f32 %v1641, %v1625
        %v1643 = vadd.f32 %v1642, %v1628
        %v1644 = vrot.slane %v1643, 4
        %v1645 = vadd.f32 %v1643, %v1644
        %v1646 = vrot.slane %v1645, 2
        %v1647 = vadd.f32 %v1645, %v1646
        %v1648 = vrot.slane %v1647, 1
        %v1649 = vadd.f32 %v1647, %v1648
        %v1650 = vrcp.pop 64.0
        %v1651 = vmul.f32 %v1649, %v1650
        %v1652 = vld [vmem:[#allocation11] sm:$0xff]
        %v1653 = vld [vmem:[#allocation11 + $0x8] sm:$0xff]
        %v1654 = vld [vmem:[#allocation11 + $0x10] sm:$0xff]
        %v1655 = vld [vmem:[#allocation11 + $0x18] sm:$0xff]
        %v1656 = vld [vmem:[#allocation11 + $0x20] sm:$0xff]
        %v1657 = vld [vmem:[#allocation11 + $0x28] sm:$0xff]
        %v1658 = vld [vmem:[#allocation11 + $0x30] sm:$0xff]
        %v1659 = vld [vmem:[#allocation11 + $0x38] sm:$0xff]
        %v1660 = vld [vmem:[#allocation11 + $0x40] sm:$0xff]
        %v1661 = vld [vmem:[#allocation11 + $0x48] sm:$0xff]
        %v1662 = vld [vmem:[#allocation11 + $0x50] sm:$0xff]
        %v1663 = vld [vmem:[#allocation11 + $0x58] sm:$0xff]
        %v1664 = vld [vmem:[#allocation11 + $0x60] sm:$0xff]
        %v1665 = vld [vmem:[#allocation11 + $0x68] sm:$0xff]
        %v1666 = vld [vmem:[#allocation11 + $0x70] sm:$0xff]
        %v1667 = vld [vmem:[#allocation11 + $0x78] sm:$0xff]
        %v1668 = vld [vmem:[#allocation12] sm:$0x1]
        %1669 = vmatprep.subr.mxu0 0.0
        %1670 = vmatpush1.msra.mxu0 %v1652
        %1671 = vmatprep.subr.mxu0 0.0
        %1672 = vmatpush1.msra.mxu0 %v1653
        %1673 = vmatprep.subr.mxu0 0.0
        %1674 = vmatpush1.msra.mxu0 %v1654
        %1675 = vmatprep.subr.mxu0 0.0
        %1676 = vmatpush1.msra.mxu0 %v1655
        %1677 = vmatprep.subr.mxu0 0.0
        %1678 = vmatpush1.msra.mxu0 %v1656
        %1679 = vmatprep.subr.mxu0 0.0
        %1680 = vmatpush1.msra.mxu0 %v1657
        %1681 = vmatprep.subr.mxu0 0.0
        %1682 = vmatpush1.msra.mxu0 %v1658
        %1683 = vmatprep.subr.mxu0 0.0
        %1684 = vmatpush1.msra.mxu0 %v1659
        %1685 = vmatprep.subr.mxu0 0.0
        %1686 = vmatpush1.msra.mxu0 %v1660
        %1687 = vmatprep.subr.mxu0 0.0
        %1688 = vmatpush1.msra.mxu0 %v1661
        %1689 = vmatprep.subr.mxu0 0.0
        %1690 = vmatpush1.msra.mxu0 %v1662
        %1691 = vmatprep.subr.mxu0 0.0
        %1692 = vmatpush1.msra.mxu0 %v1663
        %1693 = vmatprep.subr.mxu0 0.0
        %1694 = vmatpush1.msra.mxu0 %v1664
        %1695 = vmatprep.subr.mxu0 0.0
        %1696 = vmatpush1.msra.mxu0 %v1665
        %1697 = vmatprep.subr.mxu0 0.0
        %1698 = vmatpush1.msra.mxu0 %v1666
        %1699 = vmatprep.subr.mxu0 0.0
        %1700 = vmatpush1.msra.mxu0 %v1667
        %1701 = vmatprep.subr.mxu0 0.0
        %1702 = vmatpush1.msra.mxu0 0.0
        %1703 = vmatprep.subr.mxu0 0.0
        %1704 = vmatpush1.msra.mxu0 0.0
        %1705 = vmatprep.subr.mxu0 0.0
        %1706 = vmatpush1.msra.mxu0 0.0
        %1707 = vmatprep.subr.mxu0 0.0
        %1708 = vmatpush1.msra.mxu0 0.0
        %1709 = vmatprep.subr.mxu0 0.0
        %1710 = vmatpush1.msra.mxu0 0.0
        %1711 = vmatprep.subr.mxu0 0.0
        %1712 = vmatpush1.msra.mxu0 0.0
        %1713 = vmatprep.subr.mxu0 0.0
        %1714 = vmatpush1.msra.mxu0 0.0
        %1715 = vmatprep.subr.mxu0 0.0
        %1716 = vmatpush1.msra.mxu0 0.0
        %1717 = vmatprep.subr.mxu0 0.0
        %1718 = vmatpush1.msra.mxu0 0.0
        %1719 = vmatprep.subr.mxu0 0.0
        %1720 = vmatpush1.msra.mxu0 0.0
        %1721 = vmatprep.subr.mxu0 0.0
        %1722 = vmatpush1.msra.mxu0 0.0
        %1723 = vmatprep.subr.mxu0 0.0
        %1724 = vmatpush1.msra.mxu0 0.0
        %1725 = vmatprep.subr.mxu0 0.0
        %1726 = vmatpush1.msra.mxu0 0.0
        %1727 = vmatprep.subr.mxu0 0.0
        %1728 = vmatpush1.msra.mxu0 0.0
        %1729 = vmatprep.subr.mxu0 0.0
        %1730 = vmatpush1.msra.mxu0 0.0
        %1731 = vmatprep.subr.mxu0 0.0
        %1732 = vmatpush1.msra.mxu0 0.0
        %1733 = vmatprep.mubr.f32.mxu0 0.0
        %1734 = vmatmul.mubr.f32.gmra.mrb[0].mxu0 %v1651
        %v1735 = vpop.f32.mrb[0].mxu0
        %v1736 = vadd.f32 %v1668, %v1735
        %v1737 = vpop.f32.mrb[0].mxu0
        %1738 = vdwg.mxu0
        %v1739 = vxor.u32 %v1736, 2147483648
        %v1740 = vmul.f32 %v1739, 1.442695
        %v1741 = vpow.pop %v1740
        %v1742 = vadd.f32 %v1741, 1.0
        %v1743 = vrcp.pop %v1742
        %v1744 = vmul.f32 1.0, %v1743
        %v1745 = vmul.f32 %v1736, %v1744
        %v1746 = vld [vmem:[#allocation14] sm:$0xff]
        %v1747 = vld [vmem:[#allocation15] sm:$0x1]
        %vm1748 = vcmask 64512
        %v1750 = vsel %vm1748, %v1745, 0
        %1752 = vmatprep.subr.mxu0 0.0
        %1753 = vmatpush1.msra.mxu0 %v1746
        %1754 = vmatprep.subr.mxu0 0.0
        %1755 = vmatpush1.msra.mxu0 0.0
        %1756 = vmatprep.subr.mxu0 0.0
        %1757 = vmatpush1.msra.mxu0 0.0
        %1758 = vmatprep.subr.mxu0 0.0
        %1759 = vmatpush1.msra.mxu0 0.0
        %1760 = vmatprep.subr.mxu0 0.0
        %1761 = vmatpush1.msra.mxu0 0.0
        %1762 = vmatprep.subr.mxu0 0.0
        %1763 = vmatpush1.msra.mxu0 0.0
        %1764 = vmatprep.subr.mxu0 0.0
        %1765 = vmatpush1.msra.mxu0 0.0
        %1766 = vmatprep.subr.mxu0 0.0
        %1767 = vmatpush1.msra.mxu0 0.0
        %1768 = vmatprep.subr.mxu0 0.0
        %1769 = vmatpush1.msra.mxu0 0.0
        %1770 = vmatprep.subr.mxu0 0.0
        %1771 = vmatpush1.msra.mxu0 0.0
        %1772 = vmatprep.subr.mxu0 0.0
        %1773 = vmatpush1.msra.mxu0 0.0
        %1774 = vmatprep.subr.mxu0 0.0
        %1775 = vmatpush1.msra.mxu0 0.0
        %1776 = vmatprep.subr.mxu0 0.0
        %1777 = vmatpush1.msra.mxu0 0.0
        %1778 = vmatprep.subr.mxu0 0.0
        %1779 = vmatpush1.msra.mxu0 0.0
        %1780 = vmatprep.subr.mxu0 0.0
        %1781 = vmatpush1.msra.mxu0 0.0
        %1782 = vmatprep.subr.mxu0 0.0
        %1783 = vmatpush1.msra.mxu0 0.0
        %1784 = vmatprep.subr.mxu0 0.0
        %1785 = vmatpush1.msra.mxu0 0.0
        %1786 = vmatprep.subr.mxu0 0.0
        %1787 = vmatpush1.msra.mxu0 0.0
        %1788 = vmatprep.subr.mxu0 0.0
        %1789 = vmatpush1.msra.mxu0 0.0
        %1790 = vmatprep.subr.mxu0 0.0
        %1791 = vmatpush1.msra.mxu0 0.0
        %1792 = vmatprep.subr.mxu0 0.0
        %1793 = vmatpush1.msra.mxu0 0.0
        %1794 = vmatprep.subr.mxu0 0.0
        %1795 = vmatpush1.msra.mxu0 0.0
        %1796 = vmatprep.subr.mxu0 0.0
        %1797 = vmatpush1.msra.mxu0 0.0
        %1798 = vmatprep.subr.mxu0 0.0
        %1799 = vmatpush1.msra.mxu0 0.0
        %1800 = vmatprep.subr.mxu0 0.0
        %1801 = vmatpush1.msra.mxu0 0.0
        %1802 = vmatprep.subr.mxu0 0.0
        %1803 = vmatpush1.msra.mxu0 0.0
        %1804 = vmatprep.subr.mxu0 0.0
        %1805 = vmatpush1.msra.mxu0 0.0
        %1806 = vmatprep.subr.mxu0 0.0
        %1807 = vmatpush1.msra.mxu0 0.0
        %1808 = vmatprep.subr.mxu0 0.0
        %1809 = vmatpush1.msra.mxu0 0.0
        %1810 = vmatprep.subr.mxu0 0.0
        %1811 = vmatpush1.msra.mxu0 0.0
        %1812 = vmatprep.subr.mxu0 0.0
        %1813 = vmatpush1.msra.mxu0 0.0
        %1814 = vmatprep.subr.mxu0 0.0
        %1815 = vmatpush1.msra.mxu0 0.0
        %1816 = vmatprep.mubr.f32.mxu0 0.0
        %1817 = vmatmul.mubr.f32.gmra.mrb[0].mxu0 %v1750
        %v1818 = vpop.f32.mrb[0].mxu0
        %v1819 = vadd.f32 %v1747, %v1818
        %v1820 = vpop.f32.mrb[0].mxu0
        %1821 = vdwg.mxu0
        %v1822 = vxor.u32 %v1819, 2147483648
        %v1823 = vmul.f32 %v1822, 1.442695
        %v1824 = vpow.pop %v1823
        %v1825 = vadd.f32 %v1824, 1.0
        %v1826 = vrcp.pop %v1825
        %v1827 = vmul.f32 1.0, %v1826
        %1828 = vst [vmem:[%s452] sm:$0x1] %v1827
        %s1829 = sand.u32 %s215, 1
        %s1830 = scalar_lea.sflag [#allocation5], %s1829
        %s1831 = sand.u32 %s215, 1
        %s1832 = smul.addr %s1831, 32
        %s1833 = scalar_lea.vmem [#allocation17], %s1832
        %s1834 = sand.u32 %s241, 1
        %s1835 = scalar_lea.sflag [#allocation19], %s1834
        %s1836 = sand.u32 %s241, 1
        %s1837 = scalar_lea.vmem [#allocation18], %s1836
        // Predicated region
        $region85: #{efficientnet_forward.11} parent=51 // pred_check
          %p1838 = pneg %p225
        $region86: #{efficientnet_forward.11} parent=51 // pred_check_branch
          %1840 = sbr.rel (%p1838) target = $region88
        $region87: #{efficientnet_forward.11} parent=51 // pred_region
          %s1842 = ssub.s32 512, 512
          %1843 = vsyncadd %s1830, %s1842
          %s1844 = smul.addr %s34, 8
          %s1845 = smul.addr %s1844, 64
          %s1846 = scalar_lea.hbm %s8, %s1845
          %s1847 = sshll.u32 %s1833, 4
          %s1848 = int_to_ptr.vmem [resolvable:$true] %s1847
          %1853 = dma.vmem_to_hbm [thread:$0]  %s1848, 512, %s1846, %s1830, 64, 64, 4
        $region88: #{efficientnet_forward.11} parent=51 // pred_fallthru
          _
        // Predicated region
        $region89: #{efficientnet_forward.11} parent=51 // pred_check
          %p1854 = pneg %p251
        $region90: #{efficientnet_forward.11} parent=51 // pred_check_branch
          %1856 = sbr.rel (%p1854) target = $region92
        $region91: #{efficientnet_forward.11} parent=51 // pred_region
          %s1858 = ssub.s32 16, 16
          %1859 = vsyncadd %s1835, %s1858
          %s1860 = smul.addr %s34, 16
          %s1861 = scalar_lea.hbm %s9, %s1860
          %s1863 = sshll.u32 %s1837, 4
          %s1864 = int_to_ptr.vmem [resolvable:$true] %s1863
          %1866 = dma.vmem_to_hbm [thread:$0]  %s1864, 16, %s1861, %s1835
        $region92: #{efficientnet_forward.11} parent=51 // pred_fallthru
          _
      $region52: #{efficientnet_forward.11} parent=5 // pred_fallthru
        _
      %p1867 = scmp.le.s32.totalorder 2, %s29
      // Predicated region
      $region93: #{efficientnet_forward.11} parent=5 // pred_check
        %p1868 = pneg %p1867
      $region94: #{efficientnet_forward.11} parent=5 // pred_check_branch
        %1870 = sbr.rel (%p1868) target = $region96
      $region95: #{efficientnet_forward.11} parent=5 // pred_region
        %s1871 = ssub.s32 %s29, 2
        // Predicated region
        $region97: #{efficientnet_forward.11} parent=95 // pred_check
          %p1872 = pneg %p231
        $region98: #{efficientnet_forward.11} parent=95 // pred_check_branch
          %1874 = sbr.rel (%p1872) target = $region100
        $region99: #{efficientnet_forward.11} parent=95 // pred_region
          %s1875 = sand.u32 %s216, 1
          %s1876 = scalar_lea.sflag [#allocation5], %s1875
          %s1877 = sand.u32 %s216, 1
          %s1878 = smul.addr %s1877, 32
          %s1879 = scalar_lea.vmem [#allocation17], %s1878
          %1880 = dma.done %s1876, 512
        $region100: #{efficientnet_forward.11} parent=95 // pred_fallthru
          _
        // Predicated region
        $region101: #{efficientnet_forward.11} parent=95 // pred_check
          %p1881 = pneg %p257
        $region102: #{efficientnet_forward.11} parent=95 // pred_check_branch
          %1883 = sbr.rel (%p1881) target = $region104
        $region103: #{efficientnet_forward.11} parent=95 // pred_region
          %s1884 = sand.u32 %s242, 1
          %s1885 = scalar_lea.sflag [#allocation19], %s1884
          %s1886 = sand.u32 %s242, 1
          %s1887 = scalar_lea.vmem [#allocation18], %s1886
          %1888 = dma.done %s1885, 16
        $region104: #{efficientnet_forward.11} parent=95 // pred_fallthru
          _
      $region96: #{efficientnet_forward.11} parent=5 // pred_fallthru
        _
    $region6: #{efficientnet_forward.11} parent=1 // loop_footer
      %s33 = sadd.s32 1, %s29
    $region7: #{efficientnet_forward.11} parent=1 // loop_footer_branch
      %28 = sbr.rel target = $region3
    $region8: #{efficientnet_forward.11} parent=1 // loop_exit
      _
    %1889 = vsyncpa [#allocation4], 1
    %s1890 = scalar_lea.sflag [#allocation4], 1
    %1891 = vsyncpa %s1890, 1
    %1892 = vsyncpa [#allocation7], 1
    %1893 = vsyncpa [#allocation10], 1
    %1894 = vsyncpa [#allocation13], 1
    %1895 = vsyncpa [#allocation16], 1
    %1896 = vsyncpa [#allocation5], 1
    %s1897 = scalar_lea.sflag [#allocation5], 1
    %1898 = vsyncpa %s1897, 1
    %1899 = vsyncpa [#allocation19], 1
    %s1900 = scalar_lea.sflag [#allocation19], 1
    %1901 = vsyncpa %s1900, 1

// kernel: efficientnet_forward.12
$region0: #{efficientnet_forward.12}
  #allocation0 [shape = 'u32[]', space=smem, size = 0x4, offset = 0x4, fixed_abs, tag = 'smem constant byte address 0x4 - core index']
  #allocation1 [shape = 'u32[144,128]{1,0:T(1,128)}', space=vmem, size = 0x12000, scoped, tag = 'internal scratch']
  %s0 = inlined_call_operand.hbm [shape: bf16[2,64,128], index: 0, kind: input, shape index: {}]
  %s1 = inlined_call_operand.hbm [shape: f32[2,1,128], index: 1, kind: input, shape index: {}]
  %s2 = inlined_call_operand.hbm [shape: bf16[128,32], index: 2, kind: input, shape index: {}]
  %s3 = inlined_call_operand.hbm [shape: f32[1,32], index: 3, kind: input, shape index: {}]
  %s4 = inlined_call_operand.hbm [shape: f32[1,32], index: 4, kind: input, shape index: {}]
  %s5 = inlined_call_operand.hbm [shape: bf16[2,64,32], index: 5, kind: input, shape index: {}]
  %s6 = inlined_call_operand.hbm [shape: bf16[2,64,32], index: 6, kind: output, shape index: {}]
  %s7 = sld [smem:[#allocation0]]
  $region81: #{efficientnet_forward.12} parent=0
    _
  %s9 = ssub.s32 1, %s7
  %s10 = scalar_select 0, %s9, %s7
  $region1: #{efficientnet_forward.12} parent=0
    #allocation2 [shape = 'u8[32768]{0}', space=vmem, size = 0x8000, scoped, tag = 'input window, operand 0']
    #allocation3 [shape = 's32[2]{0}', space=sflag, size = 0x8, scoped, tag = 'scoped memory for efficientnet_forward.12']
    #allocation4 [shape = 's32[2]{0}', space=sflag, size = 0x8, scoped, tag = 'scoped memory for efficientnet_forward.12']
    #allocation5 [shape = 'u8[1024]{0}', space=vmem, size = 0x400, scoped, tag = 'input window, operand 1']
    #allocation6 [shape = 's32[2]{0}', space=sflag, size = 0x8, scoped, tag = 'scoped memory for efficientnet_forward.12']
    #allocation7 [shape = 'u8[32768]{0}', space=vmem, size = 0x8000, scoped, tag = 'input window, operand 2, single buffered']
    #allocation8 [shape = 'u8[512]{0}', space=vmem, size = 0x400, scoped, tag = 'input window, operand 3, single buffered']
    #allocation9 [shape = 's32[1]{0}', space=sflag, size = 0x4, scoped, tag = 'scoped memory for efficientnet_forward.12']
    #allocation10 [shape = 'u8[512]{0}', space=vmem, size = 0x400, scoped, tag = 'input window, operand 4, single buffered']
    #allocation11 [shape = 'u8[32768]{0}', space=vmem, size = 0x8000, scoped, tag = 'input window, operand 5']
    #allocation12 [shape = 's32[2]{0}', space=sflag, size = 0x8, scoped, tag = 'scoped memory for efficientnet_forward.12']
    #allocation13 [shape = 'u8[32768]{0}', space=vmem, size = 0x8000, scoped, tag = 'output window, operand 0']
    %11 = vsyncpa [#allocation3], 0
    %s12 = scalar_lea.sflag [#allocation3], 1
    %13 = vsyncpa %s12, 0
    %14 = vsyncpa [#allocation6], 0
    %s15 = scalar_lea.sflag [#allocation6], 1
    %16 = vsyncpa %s15, 0
    %17 = vsyncpa [#allocation9], 0
    %18 = vsyncpa [#allocation12], 0
    %s19 = scalar_lea.sflag [#allocation12], 1
    %20 = vsyncpa %s19, 0
    %21 = vsyncpa [#allocation4], 0
    %s22 = scalar_lea.sflag [#allocation4], 1
    %23 = vsyncpa %s22, 0
    loop: start=0, step=1, limit=4
    $region2: #{efficientnet_forward.12} parent=1 // loop_pre_header
      _
    $region3: #{efficientnet_forward.12} parent=1 // loop_header
      %s25 = sphi 0, %s29
      %p26 = scmp.ge.s32.totalorder %s25, 4
      %s35 = sphi 0, %s37
      %s38 = sphi 0, %s35
      %s39 = sphi 0, %s38
      %s55 = sphi 0, %s39
      %s61 = sphi 0, %s63
      %s64 = sphi 0, %s61
      %s65 = sphi 0, %s64
      %s81 = sphi 0, %s65
      %s85 = sphi 0, %s85
      %s87 = sphi 0, %s85
      %s88 = sphi 0, %s87
      %s102 = sphi 0, %s88
      %s106 = sphi 0, %s106
      %s108 = sphi 0, %s106
      %s109 = sphi 0, %s108
      %s123 = sphi 0, %s109
      %s127 = sphi 0, %s127
      %s129 = sphi 0, %s127
      %s130 = sphi 0, %s129
      %s144 = sphi 0, %s130
      %s150 = sphi 0, %s152
      %s153 = sphi 0, %s150
      %s154 = sphi 0, %s153
      %s170 = sphi 0, %s154
      %s176 = sphi 0, %s178
      %s179 = sphi 0, %s176
      %s180 = sphi 0, %s179
      %s196 = sphi 0, %s180
    $region4: #{efficientnet_forward.12} parent=1 // loop_header_branch
      %28 = sbr.rel (%p26) target = $region8
    $region5: #{efficientnet_forward.12} parent=1 // loop_body
      %s30 = ssub.s32 %s25, 1
      %s31 = ssub.s32 %s25, 2
      %s32 = sadd.s32 %s25, 1
      %s33 = ssub.s32 %s25, %s32
      %p34 = scmp.eq.s32.totalorder %s33, 0
      %s36 = sadd.s32 %s35, 1
      %s37 = scalar_select %p34, %s35, %s36
      %p40 = pneg %p34
      %p41 = scmp.eq.s32.totalorder %s25, 1
      %p42 = por %p40, %p41
      %p43 = scmp.ne.s32.totalorder %s35, %s38
      %p44 = scmp.eq.s32.totalorder %s25, 0
      %p45 = por %p43, %p44
      %p46 = scmp.ne.s32.totalorder %s35, %s38
      %p47 = scmp.eq.s32.totalorder %s30, 1
      %p48 = por %p46, %p47
      %p49 = scmp.ne.s32.totalorder %s38, %s39
      %p50 = scmp.eq.s32.totalorder %s30, 0
      %p51 = por %p49, %p50
      %p52 = scmp.ne.s32.totalorder %s38, %s39
      %p53 = scmp.eq.s32.totalorder %s31, 1
      %p54 = por %p52, %p53
      %p56 = scmp.ne.s32.totalorder %s39, %s55
      %p57 = scmp.eq.s32.totalorder %s31, 0
      %p58 = por %p56, %p57
      %s59 = ssub.s32 %s25, %s32
      %p60 = scmp.eq.s32.totalorder %s59, 0
      %s62 = sadd.s32 %s61, 1
      %s63 = scalar_select %p60, %s61, %s62
      %p66 = pneg %p60
      %p67 = scmp.eq.s32.totalorder %s25, 1
      %p68 = por %p66, %p67
      %p69 = scmp.ne.s32.totalorder %s61, %s64
      %p70 = scmp.eq.s32.totalorder %s25, 0
      %p71 = por %p69, %p70
      %p72 = scmp.ne.s32.totalorder %s61, %s64
      %p73 = scmp.eq.s32.totalorder %s30, 1
      %p74 = por %p72, %p73
      %p75 = scmp.ne.s32.totalorder %s64, %s65
      %p76 = scmp.eq.s32.totalorder %s30, 0
      %p77 = por %p75, %p76
      %p78 = scmp.ne.s32.totalorder %s64, %s65
      %p79 = scmp.eq.s32.totalorder %s31, 1
      %p80 = por %p78, %p79
      %p82 = scmp.ne.s32.totalorder %s65, %s81
      %p83 = scmp.eq.s32.totalorder %s31, 0
      %p84 = por %p82, %p83
      %s86 = sadd.s32 %s85, 1
      %p89 = scmp.eq.s32.totalorder %s25, 1
      %p90 = scmp.ne.s32.totalorder %s85, %s87
      %p91 = scmp.eq.s32.totalorder %s25, 0
      %p92 = por %p90, %p91
      %p93 = scmp.ne.s32.totalorder %s85, %s87
      %p94 = scmp.eq.s32.totalorder %s30, 1
      %p95 = por %p93, %p94
      %p96 = scmp.ne.s32.totalorder %s87, %s88
      %p97 = scmp.eq.s32.totalorder %s30, 0
      %p98 = por %p96, %p97
      %p99 = scmp.ne.s32.totalorder %s87, %s88
      %p100 = scmp.eq.s32.totalorder %s31, 1
      %p101 = por %p99, %p100
      %p103 = scmp.ne.s32.totalorder %s88, %s102
      %p104 = scmp.eq.s32.totalorder %s31, 0
      %p105 = por %p103, %p104
      %s107 = sadd.s32 %s106, 1
      %p110 = scmp.eq.s32.totalorder %s25, 1
      %p111 = scmp.ne.s32.totalorder %s106, %s108
      %p112 = scmp.eq.s32.totalorder %s25, 0
      %p113 = por %p111, %p112
      %p114 = scmp.ne.s32.totalorder %s106, %s108
      %p115 = scmp.eq.s32.totalorder %s30, 1
      %p116 = por %p114, %p115
      %p117 = scmp.ne.s32.totalorder %s108, %s109
      %p118 = scmp.eq.s32.totalorder %s30, 0
      %p119 = por %p117, %p118
      %p120 = scmp.ne.s32.totalorder %s108, %s109
      %p121 = scmp.eq.s32.totalorder %s31, 1
      %p122 = por %p120, %p121
      %p124 = scmp.ne.s32.totalorder %s109, %s123
      %p125 = scmp.eq.s32.totalorder %s31, 0
      %p126 = por %p124, %p125
      %s128 = sadd.s32 %s127, 1
      %p131 = scmp.eq.s32.totalorder %s25, 1
      %p132 = scmp.ne.s32.totalorder %s127, %s129
      %p133 = scmp.eq.s32.totalorder %s25, 0
      %p134 = por %p132, %p133
      %p135 = scmp.ne.s32.totalorder %s127, %s129
      %p136 = scmp.eq.s32.totalorder %s30, 1
      %p137 = por %p135, %p136
      %p138 = scmp.ne.s32.totalorder %s129, %s130
      %p139 = scmp.eq.s32.totalorder %s30, 0
      %p140 = por %p138, %p139
      %p141 = scmp.ne.s32.totalorder %s129, %s130
      %p142 = scmp.eq.s32.totalorder %s31, 1
      %p143 = por %p141, %p142
      %p145 = scmp.ne.s32.totalorder %s130, %s144
      %p146 = scmp.eq.s32.totalorder %s31, 0
      %p147 = por %p145, %p146
      %s148 = ssub.s32 %s25, %s32
      %p149 = scmp.eq.s32.totalorder %s148, 0
      %s151 = sadd.s32 %s150, 1
      %s152 = scalar_select %p149, %s150, %s151
      %p155 = pneg %p149
      %p156 = scmp.eq.s32.totalorder %s25, 1
      %p157 = por %p155, %p156
      %p158 = scmp.ne.s32.totalorder %s150, %s153
      %p159 = scmp.eq.s32.totalorder %s25, 0
      %p160 = por %p158, %p159
      %p161 = scmp.ne.s32.totalorder %s150, %s153
      %p162 = scmp.eq.s32.totalorder %s30, 1
      %p163 = por %p161, %p162
      %p164 = scmp.ne.s32.totalorder %s153, %s154
      %p165 = scmp.eq.s32.totalorder %s30, 0
      %p166 = por %p164, %p165
      %p167 = scmp.ne.s32.totalorder %s153, %s154
      %p168 = scmp.eq.s32.totalorder %s31, 1
      %p169 = por %p167, %p168
      %p171 = scmp.ne.s32.totalorder %s154, %s170
      %p172 = scmp.eq.s32.totalorder %s31, 0
      %p173 = por %p171, %p172
      %s174 = ssub.s32 %s25, %s32
      %p175 = scmp.eq.s32.totalorder %s174, 0
      %s177 = sadd.s32 %s176, 1
      %s178 = scalar_select %p175, %s176, %s177
      %p181 = pneg %p175
      %p182 = scmp.eq.s32.totalorder %s25, 1
      %p183 = por %p181, %p182
      %p184 = scmp.ne.s32.totalorder %s176, %s179
      %p185 = scmp.eq.s32.totalorder %s25, 0
      %p186 = por %p184, %p185
      %p187 = scmp.ne.s32.totalorder %s176, %s179
      %p188 = scmp.eq.s32.totalorder %s30, 1
      %p189 = por %p187, %p188
      %p190 = scmp.ne.s32.totalorder %s179, %s180
      %p191 = scmp.eq.s32.totalorder %s30, 0
      %p192 = por %p190, %p191
      %p193 = scmp.ne.s32.totalorder %s179, %s180
      %p194 = scmp.eq.s32.totalorder %s31, 1
      %p195 = por %p193, %p194
      %p197 = scmp.ne.s32.totalorder %s180, %s196
      %p198 = scmp.eq.s32.totalorder %s31, 0
      %p199 = por %p197, %p198
      %p200 = scmp.le.s32.totalorder 1, %s25
      %p201 = scmp.lt.s32.totalorder %s25, 3
      %p202 = pnand %p200, %p201
      %p203 = pneg %p202
      // Predicated region
      $region9: #{efficientnet_forward.12} parent=5 // pred_check
        _
      $region10: #{efficientnet_forward.12} parent=5 // pred_check_branch
        %205 = sbr.rel (%p202) target = $region12
      $region11: #{efficientnet_forward.12} parent=5 // pred_region
        %s206 = ssub.s32 %s25, 1
        // Predicated region
        $region13: #{efficientnet_forward.12} parent=11 // pred_check
          %p207 = pneg %p98
        $region14: #{efficientnet_forward.12} parent=11 // pred_check_branch
          %209 = sbr.rel (%p207) target = $region16
        $region15: #{efficientnet_forward.12} parent=11 // pred_region
          %s211 = ssub.s32 1024, 1024
          %212 = vsyncadd [#allocation6], %s211
          %s213 = sshll.u32 [#allocation7], 4
          %s214 = int_to_ptr.vmem [resolvable:$true] %s213
          %219 = dma.hbm_to_vmem [thread:$0]  %s2, 1024, %s214, [#allocation6], 64, 64, 4
        $region16: #{efficientnet_forward.12} parent=11 // pred_fallthru
          _
        // Predicated region
        $region17: #{efficientnet_forward.12} parent=11 // pred_check
          %p220 = pneg %p119
        $region18: #{efficientnet_forward.12} parent=11 // pred_check_branch
          %222 = sbr.rel (%p220) target = $region20
        $region19: #{efficientnet_forward.12} parent=11 // pred_region
          %s224 = ssub.s32 16, 16
          %225 = vsyncadd [#allocation9], %s224
          %s227 = sshll.u32 [#allocation8], 4
          %s228 = int_to_ptr.vmem [resolvable:$true] %s227
          %230 = dma.hbm_to_vmem [thread:$0]  %s3, 16, %s228, [#allocation9]
        $region20: #{efficientnet_forward.12} parent=11 // pred_fallthru
          _
        // Predicated region
        $region21: #{efficientnet_forward.12} parent=11 // pred_check
          %p231 = pneg %p140
        $region22: #{efficientnet_forward.12} parent=11 // pred_check_branch
          %233 = sbr.rel (%p231) target = $region24
        $region23: #{efficientnet_forward.12} parent=11 // pred_region
          %s235 = ssub.s32 16, 16
          %236 = vsyncadd [#allocation9], %s235
          %s238 = sshll.u32 [#allocation10], 4
          %s239 = int_to_ptr.vmem [resolvable:$true] %s238
          %241 = dma.hbm_to_vmem [thread:$0]  %s4, 16, %s239, [#allocation9]
        $region24: #{efficientnet_forward.12} parent=11 // pred_fallthru
          _
      $region12: #{efficientnet_forward.12} parent=5 // pred_fallthru
        _
      %p242 = scmp.lt.s32.totalorder %s25, 2
      // Predicated region
      $region25: #{efficientnet_forward.12} parent=5 // pred_check
        %p243 = pneg %p242
      $region26: #{efficientnet_forward.12} parent=5 // pred_check_branch
        %245 = sbr.rel (%p243) target = $region28
      $region27: #{efficientnet_forward.12} parent=5 // pred_region
        // Predicated region
        $region29: #{efficientnet_forward.12} parent=27 // pred_check
          %p246 = pneg %p45
        $region30: #{efficientnet_forward.12} parent=27 // pred_check_branch
          %248 = sbr.rel (%p246) target = $region32
        $region31: #{efficientnet_forward.12} parent=27 // pred_region
          %s249 = sand.u32 %s35, 1
          %s250 = scalar_lea.sflag [#allocation3], %s249
          %s251 = sand.u32 %s35, 1
          %s252 = smul.addr %s251, 32
          %s253 = scalar_lea.vmem [#allocation2], %s252
          %s255 = ssub.s32 512, 512
          %256 = vsyncadd %s250, %s255
          %s257 = smul.addr %s25, 8
          %s258 = smul.addr %s257, 64
          %s259 = scalar_lea.hbm %s0, %s258
          %s260 = sshll.u32 %s253, 4
          %s261 = int_to_ptr.vmem [resolvable:$true] %s260
          %266 = dma.hbm_to_vmem [thread:$0]  %s259, 512, %s261, %s250, 64, 64, 4
        $region32: #{efficientnet_forward.12} parent=27 // pred_fallthru
          _
        // Predicated region
        $region33: #{efficientnet_forward.12} parent=27 // pred_check
          %p267 = pneg %p71
        $region34: #{efficientnet_forward.12} parent=27 // pred_check_branch
          %269 = sbr.rel (%p267) target = $region36
        $region35: #{efficientnet_forward.12} parent=27 // pred_region
          %s270 = sand.u32 %s25, 1
          %s271 = scalar_lea.sflag [#allocation6], %s270
          %s272 = sand.u32 %s61, 1
          %s273 = scalar_lea.vmem [#allocation5], %s272
          %s275 = ssub.s32 16, 16
          %276 = vsyncadd %s271, %s275
          %s277 = smul.addr %s25, 16
          %s278 = scalar_lea.hbm %s1, %s277
          %s280 = sshll.u32 %s273, 4
          %s281 = int_to_ptr.vmem [resolvable:$true] %s280
          %283 = dma.hbm_to_vmem [thread:$0]  %s278, 16, %s281, %s271
        $region36: #{efficientnet_forward.12} parent=27 // pred_fallthru
          _
        // Predicated region
        $region37: #{efficientnet_forward.12} parent=27 // pred_check
          %p284 = pneg %p160
        $region38: #{efficientnet_forward.12} parent=27 // pred_check_branch
          %286 = sbr.rel (%p284) target = $region40
        $region39: #{efficientnet_forward.12} parent=27 // pred_region
          %s287 = sand.u32 %s150, 1
          %s288 = scalar_lea.sflag [#allocation12], %s287
          %s289 = sand.u32 %s150, 1
          %s290 = smul.addr %s289, 32
          %s291 = scalar_lea.vmem [#allocation11], %s290
          %s293 = ssub.s32 512, 512
          %294 = vsyncadd %s288, %s293
          %s295 = smul.addr %s25, 8
          %s296 = smul.addr %s295, 64
          %s297 = scalar_lea.hbm %s5, %s296
          %s298 = sshll.u32 %s291, 4
          %s299 = int_to_ptr.vmem [resolvable:$true] %s298
          %304 = dma.hbm_to_vmem [thread:$0]  %s297, 512, %s299, %s288, 64, 64, 4
        $region40: #{efficientnet_forward.12} parent=27 // pred_fallthru
          _
      $region28: #{efficientnet_forward.12} parent=5 // pred_fallthru
        _
      %p305 = scmp.le.s32.totalorder 1, %s25
      %p306 = scmp.lt.s32.totalorder %s25, 3
      %p307 = pnand %p305, %p306
      %p308 = pneg %p307
      // Predicated region
      $region41: #{efficientnet_forward.12} parent=5 // pred_check
        _
      $region42: #{efficientnet_forward.12} parent=5 // pred_check_branch
        %310 = sbr.rel (%p307) target = $region44
      $region43: #{efficientnet_forward.12} parent=5 // pred_region
        %s311 = ssub.s32 %s25, 1
        %s312 = sand.u32 %s38, 1
        %s313 = scalar_lea.sflag [#allocation3], %s312
        %s314 = sand.u32 %s38, 1
        %s315 = smul.addr %s314, 32
        %s316 = scalar_lea.vmem [#allocation2], %s315
        // Predicated region
        $region45: #{efficientnet_forward.12} parent=43 // pred_check
          %p317 = pneg %p51
        $region46: #{efficientnet_forward.12} parent=43 // pred_check_branch
          %319 = sbr.rel (%p317) target = $region48
        $region47: #{efficientnet_forward.12} parent=43 // pred_region
          %320 = dma.done %s313, 512
        $region48: #{efficientnet_forward.12} parent=43 // pred_fallthru
          _
        %s321 = sand.u32 %s30, 1
        %s322 = scalar_lea.sflag [#allocation6], %s321
        %s323 = sand.u32 %s64, 1
        %s324 = scalar_lea.vmem [#allocation5], %s323
        // Predicated region
        $region49: #{efficientnet_forward.12} parent=43 // pred_check
          %p325 = pneg %p77
        $region50: #{efficientnet_forward.12} parent=43 // pred_check_branch
          %327 = sbr.rel (%p325) target = $region52
        $region51: #{efficientnet_forward.12} parent=43 // pred_region
          %328 = dma.done %s322, 16
        $region52: #{efficientnet_forward.12} parent=43 // pred_fallthru
          _
        // Predicated region
        $region53: #{efficientnet_forward.12} parent=43 // pred_check
          %p329 = pneg %p98
        $region54: #{efficientnet_forward.12} parent=43 // pred_check_branch
          %331 = sbr.rel (%p329) target = $region56
        $region55: #{efficientnet_forward.12} parent=43 // pred_region
          %332 = dma.done [#allocation6], 1024
        $region56: #{efficientnet_forward.12} parent=43 // pred_fallthru
          _
        // Predicated region
        $region57: #{efficientnet_forward.12} parent=43 // pred_check
          %p333 = pneg %p119
        $region58: #{efficientnet_forward.12} parent=43 // pred_check_branch
          %335 = sbr.rel (%p333) target = $region60
        $region59: #{efficientnet_forward.12} parent=43 // pred_region
          %336 = dma.done [#allocation9], 16
        $region60: #{efficientnet_forward.12} parent=43 // pred_fallthru
          _
        // Predicated region
        $region61: #{efficientnet_forward.12} parent=43 // pred_check
          %p337 = pneg %p140
        $region62: #{efficientnet_forward.12} parent=43 // pred_check_branch
          %339 = sbr.rel (%p337) target = $region64
        $region63: #{efficientnet_forward.12} parent=43 // pred_region
          %340 = dma.done [#allocation9], 16
        $region64: #{efficientnet_forward.12} parent=43 // pred_fallthru
          _
        %s341 = sand.u32 %s153, 1
        %s342 = scalar_lea.sflag [#allocation12], %s341
        %s343 = sand.u32 %s153, 1
        %s344 = smul.addr %s343, 32
        %s345 = scalar_lea.vmem [#allocation11], %s344
        // Predicated region
        $region65: #{efficientnet_forward.12} parent=43 // pred_check
          %p346 = pneg %p166
        $region66: #{efficientnet_forward.12} parent=43 // pred_check_branch
          %348 = sbr.rel (%p346) target = $region68
        $region67: #{efficientnet_forward.12} parent=43 // pred_region
          %349 = dma.done %s342, 512
        $region68: #{efficientnet_forward.12} parent=43 // pred_fallthru
          _
        %s350 = sand.u32 %s38, 1
        %s351 = scalar_lea.sflag [#allocation3], %s350
        %s352 = sand.u32 %s38, 1
        %s353 = smul.addr %s352, 32
        %s354 = scalar_lea.vmem [#allocation2], %s353
        %p355 = pneg %p51
        %p356 = pneg %p48
        %s357 = sand.u32 %s30, 1
        %s358 = scalar_lea.sflag [#allocation6], %s357
        %s359 = sand.u32 %s64, 1
        %s360 = scalar_lea.vmem [#allocation5], %s359
        %p361 = pneg %p77
        %p362 = pneg %p74
        %p363 = pneg %p98
        %p364 = pneg %p95
        %p365 = pneg %p119
        %p366 = pneg %p116
        %p367 = pneg %p140
        %p368 = pneg %p137
        %s369 = sand.u32 %s153, 1
        %s370 = scalar_lea.sflag [#allocation12], %s369
        %s371 = sand.u32 %s153, 1
        %s372 = smul.addr %s371, 32
        %s373 = scalar_lea.vmem [#allocation11], %s372
        %p374 = pneg %p166
        %p375 = pneg %p163
        %p376 = pneg %p192
        %p377 = pneg %p189
        %s378 = sand.u32 %s179, 1
        %s379 = scalar_lea.sflag [#allocation4], %s378
        %s380 = sand.u32 %s179, 1
        %s381 = smul.addr %s380, 32
        %s382 = scalar_lea.vmem [#allocation13], %s381
        %v384 = vld [vmem:[%s316] sm:$0xf]
        %v385 = vld [vmem:[%s316 + $0x4] sm:$0xf]
        %v386 = vld [vmem:[%s316 + $0x8] sm:$0xf]
        %v387 = vld [vmem:[%s316 + $0xc] sm:$0xf]
        %v388 = vld [vmem:[%s316 + $0x10] sm:$0xf]
        %v389 = vld [vmem:[%s316 + $0x14] sm:$0xf]
        %v390 = vld [vmem:[%s316 + $0x18] sm:$0xf]
        %v391 = vld [vmem:[%s316 + $0x1c] sm:$0xf]
        %v392 = vld [vmem:[%s324] sm:$0x1]
        %v393 = vpack.c.bf16 %v392, %v392
        %v395 = vpack.i.b16 %v393, %v393
        %v397 = vlaneseq
        %v398 = vshrl.u32 %v397, 7
        %v399 = vsub.s32 0, %v398
        %v400 = vrot.slane %v395, %v399
        %v402 = vunpack.c.l.b16 %v400
        %v403 = vpack.c.b16 %v402, %v402
        %v405 = vmul.bf16 %v384, %v403
        %v406 = vmul.bf16 %v385, %v403
        %v407 = vmul.bf16 %v386, %v403
        %v408 = vmul.bf16 %v387, %v403
        %v409 = vmul.bf16 %v388, %v403
        %v410 = vmul.bf16 %v389, %v403
        %v411 = vmul.bf16 %v390, %v403
        %v412 = vmul.bf16 %v391, %v403
        %v413 = vld [vmem:[#allocation7] sm:$0xf]
        %v414 = vld [vmem:[#allocation7 + $0x4] sm:$0xf]
        %v415 = vld [vmem:[#allocation7 + $0x8] sm:$0xf]
        %v416 = vld [vmem:[#allocation7 + $0xc] sm:$0xf]
        %v417 = vld [vmem:[#allocation7 + $0x10] sm:$0xf]
        %v418 = vld [vmem:[#allocation7 + $0x14] sm:$0xf]
        %v419 = vld [vmem:[#allocation7 + $0x18] sm:$0xf]
        %v420 = vld [vmem:[#allocation7 + $0x1c] sm:$0xf]
        %v421 = vld [vmem:[#allocation7 + $0x20] sm:$0xf]
        %v422 = vld [vmem:[#allocation7 + $0x24] sm:$0xf]
        %v423 = vld [vmem:[#allocation7 + $0x28] sm:$0xf]
        %v424 = vld [vmem:[#allocation7 + $0x2c] sm:$0xf]
        %v425 = vld [vmem:[#allocation7 + $0x30] sm:$0xf]
        %v426 = vld [vmem:[#allocation7 + $0x34] sm:$0xf]
        %v427 = vld [vmem:[#allocation7 + $0x38] sm:$0xf]
        %v428 = vld [vmem:[#allocation7 + $0x3c] sm:$0xf]
        %v437 = vunpack.c.l.b16 %v405
        %v438 = vunpack.c.l.b16 %v406
        %v439 = vunpack.c.l.b16 %v407
        %v440 = vunpack.c.l.b16 %v408
        %v441 = vunpack.c.l.b16 %v409
        %v442 = vunpack.c.l.b16 %v410
        %v443 = vunpack.c.l.b16 %v411
        %v444 = vunpack.c.l.b16 %v412
        %v445 = vpack.c.b16 %v438, %v437
        %v446 = vpack.c.b16 %v440, %v439
        %v447 = vpack.c.b16 %v442, %v441
        %v448 = vpack.c.b16 %v444, %v443
        %v469 = vunpack.c.l.b16 %v413
        %v470 = vunpack.c.l.b16 %v414
        %v471 = vunpack.c.l.b16 %v415
        %v472 = vunpack.c.l.b16 %v416
        %v473 = vunpack.c.l.b16 %v417
        %v474 = vunpack.c.l.b16 %v418
        %v475 = vunpack.c.l.b16 %v419
        %v476 = vunpack.c.l.b16 %v420
        %v477 = vunpack.c.l.b16 %v421
        %v478 = vunpack.c.l.b16 %v422
        %v479 = vunpack.c.l.b16 %v423
        %v480 = vunpack.c.l.b16 %v424
        %v481 = vunpack.c.l.b16 %v425
        %v482 = vunpack.c.l.b16 %v426
        %v483 = vunpack.c.l.b16 %v427
        %v484 = vunpack.c.l.b16 %v428
        %v485 = vpack.c.b16 %v470, %v469
        %v486 = vpack.c.b16 %v472, %v471
        %v487 = vpack.c.b16 %v474, %v473
        %v488 = vpack.c.b16 %v476, %v475
        %v489 = vpack.c.b16 %v478, %v477
        %v490 = vpack.c.b16 %v480, %v479
        %v491 = vpack.c.b16 %v482, %v481
        %v492 = vpack.c.b16 %v484, %v483
        %501 = vmatprep.subr.bf16.mxu0 0
        %502 = vmatpush1.bf16.msra.mxu0 %v485
        %503 = vmatprep.subr.bf16.mxu0 0
        %504 = vmatpush1.bf16.msra.mxu0 %v486
        %505 = vmatprep.subr.bf16.mxu0 0
        %506 = vmatpush1.bf16.msra.mxu0 %v487
        %507 = vmatprep.subr.bf16.mxu0 0
        %508 = vmatpush1.bf16.msra.mxu0 %v488
        %509 = vmatprep.subr.bf16.mxu0 0
        %510 = vmatpush1.bf16.msra.mxu0 %v489
        %511 = vmatprep.subr.bf16.mxu0 0
        %512 = vmatpush1.bf16.msra.mxu0 %v490
        %513 = vmatprep.subr.bf16.mxu0 0
        %514 = vmatpush1.bf16.msra.mxu0 %v491
        %515 = vmatprep.subr.bf16.mxu0 0
        %516 = vmatpush1.bf16.msra.mxu0 %v492
        %517 = vmatprep.subr.bf16.mxu0 0
        %518 = vmatpush1.bf16.msra.mxu0 0
        %519 = vmatprep.subr.bf16.mxu0 0
        %520 = vmatpush1.bf16.msra.mxu0 0
        %521 = vmatprep.subr.bf16.mxu0 0
        %522 = vmatpush1.bf16.msra.mxu0 0
        %523 = vmatprep.subr.bf16.mxu0 0
        %524 = vmatpush1.bf16.msra.mxu0 0
        %525 = vmatprep.subr.bf16.mxu0 0
        %526 = vmatpush1.bf16.msra.mxu0 0
        %527 = vmatprep.subr.bf16.mxu0 0
        %528 = vmatpush1.bf16.msra.mxu0 0
        %529 = vmatprep.subr.bf16.mxu0 0
        %530 = vmatpush1.bf16.msra.mxu0 0
        %531 = vmatprep.subr.bf16.mxu0 0
        %532 = vmatpush1.bf16.msra.mxu0 0
        %533 = vmatprep.mubr.bf16.mxu0 0
        %534 = vmatmul.mubr.bf16.gmra.mrb[0].mxu0 %v445
        %v535 = vpop.f32.mrb[0].mxu0
        %v536 = vadd.f32 0.0, %v535
        %v537 = vpop.f32.mrb[0].mxu0
        %v538 = vpop.f32.mrb[0].mxu0
        %v539 = vadd.f32 0.0, %v538
        %v540 = vpop.f32.mrb[0].mxu0
        %541 = vmatprep.mubr.bf16.mxu0 0
        %542 = vmatmul.mubr.bf16.gmra.mrb[0].mxu0 %v446
        %v543 = vpop.f32.mrb[0].mxu0
        %v544 = vadd.f32 0.0, %v543
        %v545 = vpop.f32.mrb[0].mxu0
        %v546 = vpop.f32.mrb[0].mxu0
        %v547 = vadd.f32 0.0, %v546
        %v548 = vpop.f32.mrb[0].mxu0
        %549 = vmatprep.mubr.bf16.mxu0 0
        %550 = vmatmul.mubr.bf16.gmra.mrb[0].mxu0 %v447
        %v551 = vpop.f32.mrb[0].mxu0
        %v552 = vadd.f32 0.0, %v551
        %v553 = vpop.f32.mrb[0].mxu0
        %v554 = vpop.f32.mrb[0].mxu0
        %v555 = vadd.f32 0.0, %v554
        %v556 = vpop.f32.mrb[0].mxu0
        %557 = vmatprep.mubr.bf16.mxu0 0
        %558 = vmatmul.mubr.bf16.gmra.mrb[0].mxu0 %v448
        %v559 = vpop.f32.mrb[0].mxu0
        %v560 = vadd.f32 0.0, %v559
        %v561 = vpop.f32.mrb[0].mxu0
        %v562 = vpop.f32.mrb[0].mxu0
        %v563 = vadd.f32 0.0, %v562
        %v564 = vpop.f32.mrb[0].mxu0
        %565 = vdwg.mxu0
        %v566 = vld [vmem:[#allocation8] sm:$0x1]
        %v568 = vlaneseq
        %v569 = vshrl.u32 %v568, 7
        %v570 = vsub.s32 0, %v569
        %v571 = vrot.slane %v566, %v570
        %v573 = vmul.f32 %v536, %v571
        %v574 = vmul.f32 %v539, %v571
        %v575 = vmul.f32 %v544, %v571
        %v576 = vmul.f32 %v547, %v571
        %v577 = vmul.f32 %v552, %v571
        %v578 = vmul.f32 %v555, %v571
        %v579 = vmul.f32 %v560, %v571
        %v580 = vmul.f32 %v563, %v571
        %v581 = vld [vmem:[#allocation10] sm:$0x1]
        %v583 = vlaneseq
        %v584 = vshrl.u32 %v583, 7
        %v585 = vsub.s32 0, %v584
        %v586 = vrot.slane %v581, %v585
        %v588 = vadd.f32 %v573, %v586
        %v589 = vadd.f32 %v574, %v586
        %v590 = vadd.f32 %v575, %v586
        %v591 = vadd.f32 %v576, %v586
        %v592 = vadd.f32 %v577, %v586
        %v593 = vadd.f32 %v578, %v586
        %v594 = vadd.f32 %v579, %v586
        %v595 = vadd.f32 %v580, %v586
        %v596 = vld [vmem:[%s345] sm:$0xf]
        %v597 = vld [vmem:[%s345 + $0x4] sm:$0xf]
        %v598 = vld [vmem:[%s345 + $0x8] sm:$0xf]
        %v599 = vld [vmem:[%s345 + $0xc] sm:$0xf]
        %v600 = vld [vmem:[%s345 + $0x10] sm:$0xf]
        %v601 = vld [vmem:[%s345 + $0x14] sm:$0xf]
        %v602 = vld [vmem:[%s345 + $0x18] sm:$0xf]
        %v603 = vld [vmem:[%s345 + $0x1c] sm:$0xf]
        %v604 = vunpack.c.l.bf16 %v596
        %v605 = vunpack.c.l.bf16 %v597
        %v606 = vunpack.c.l.bf16 %v598
        %v607 = vunpack.c.l.bf16 %v599
        %v608 = vunpack.c.l.bf16 %v600
        %v609 = vunpack.c.l.bf16 %v601
        %v610 = vunpack.c.l.bf16 %v602
        %v611 = vunpack.c.l.bf16 %v603
        %v612 = vadd.f32 %v588, %v604
        %v613 = vadd.f32 %v589, %v605
        %v614 = vadd.f32 %v590, %v606
        %v615 = vadd.f32 %v591, %v607
        %v616 = vadd.f32 %v592, %v608
        %v617 = vadd.f32 %v593, %v609
        %v618 = vadd.f32 %v594, %v610
        %v619 = vadd.f32 %v595, %v611
        %v620 = vpack.c.bf16 %v613, %v612
        %v621 = vpack.c.bf16 %v615, %v614
        %v622 = vpack.c.bf16 %v617, %v616
        %v623 = vpack.c.bf16 %v619, %v618
        %v628 = vunpack.c.l.b16 %v620
        %v629 = vunpack.c.h.b16 %v620
        %v630 = vunpack.c.l.b16 %v621
        %v631 = vunpack.c.h.b16 %v621
        %v632 = vunpack.c.l.b16 %v622
        %v633 = vunpack.c.h.b16 %v622
        %v634 = vunpack.c.l.b16 %v623
        %v635 = vunpack.c.h.b16 %v623
        %v636 = vpack.c.b16 %v628, %v628
        %v637 = vpack.c.b16 %v629, %v629
        %v638 = vpack.c.b16 %v630, %v630
        %v639 = vpack.c.b16 %v631, %v631
        %v640 = vpack.c.b16 %v632, %v632
        %v641 = vpack.c.b16 %v633, %v633
        %v642 = vpack.c.b16 %v634, %v634
        %v643 = vpack.c.b16 %v635, %v635
        %vm652 = vcmask 257024
        %653 = vst.msk [vmem:[%s382] sm:$0xf] %vm652, %v636
        %654 = vst.msk [vmem:[%s382 + $0x4] sm:$0xf] %vm652, %v637
        %655 = vst.msk [vmem:[%s382 + $0x8] sm:$0xf] %vm652, %v638
        %656 = vst.msk [vmem:[%s382 + $0xc] sm:$0xf] %vm652, %v639
        %657 = vst.msk [vmem:[%s382 + $0x10] sm:$0xf] %vm652, %v640
        %658 = vst.msk [vmem:[%s382 + $0x14] sm:$0xf] %vm652, %v641
        %659 = vst.msk [vmem:[%s382 + $0x18] sm:$0xf] %vm652, %v642
        %660 = vst.msk [vmem:[%s382 + $0x1c] sm:$0xf] %vm652, %v643
        %s661 = sand.u32 %s179, 1
        %s662 = scalar_lea.sflag [#allocation4], %s661
        %s663 = sand.u32 %s179, 1
        %s664 = smul.addr %s663, 32
        %s665 = scalar_lea.vmem [#allocation13], %s664
        // Predicated region
        $region69: #{efficientnet_forward.12} parent=43 // pred_check
          %p666 = pneg %p189
        $region70: #{efficientnet_forward.12} parent=43 // pred_check_branch
          %668 = sbr.rel (%p666) target = $region72
        $region71: #{efficientnet_forward.12} parent=43 // pred_region
          %s670 = ssub.s32 512, 512
          %671 = vsyncadd %s662, %s670
          %s672 = smul.addr %s30, 8
          %s673 = smul.addr %s672, 64
          %s674 = scalar_lea.hbm %s6, %s673
          %s675 = sshll.u32 %s665, 4
          %s676 = int_to_ptr.vmem [resolvable:$true] %s675
          %681 = dma.vmem_to_hbm [thread:$0]  %s676, 512, %s674, %s662, 64, 64, 4
        $region72: #{efficientnet_forward.12} parent=43 // pred_fallthru
          _
      $region44: #{efficientnet_forward.12} parent=5 // pred_fallthru
        _
      %p682 = scmp.le.s32.totalorder 2, %s25
      // Predicated region
      $region73: #{efficientnet_forward.12} parent=5 // pred_check
        %p683 = pneg %p682
      $region74: #{efficientnet_forward.12} parent=5 // pred_check_branch
        %685 = sbr.rel (%p683) target = $region76
      $region75: #{efficientnet_forward.12} parent=5 // pred_region
        %s686 = ssub.s32 %s25, 2
        // Predicated region
        $region77: #{efficientnet_forward.12} parent=75 // pred_check
          %p687 = pneg %p195
        $region78: #{efficientnet_forward.12} parent=75 // pred_check_branch
          %689 = sbr.rel (%p687) target = $region80
        $region79: #{efficientnet_forward.12} parent=75 // pred_region
          %s690 = sand.u32 %s180, 1
          %s691 = scalar_lea.sflag [#allocation4], %s690
          %s692 = sand.u32 %s180, 1
          %s693 = smul.addr %s692, 32
          %s694 = scalar_lea.vmem [#allocation13], %s693
          %695 = dma.done %s691, 512
        $region80: #{efficientnet_forward.12} parent=75 // pred_fallthru
          _
      $region76: #{efficientnet_forward.12} parent=5 // pred_fallthru
        _
    $region6: #{efficientnet_forward.12} parent=1 // loop_footer
      %s29 = sadd.s32 1, %s25
    $region7: #{efficientnet_forward.12} parent=1 // loop_footer_branch
      %24 = sbr.rel target = $region3
    $region8: #{efficientnet_forward.12} parent=1 // loop_exit
      _
    %696 = vsyncpa [#allocation3], 1
    %s697 = scalar_lea.sflag [#allocation3], 1
    %698 = vsyncpa %s697, 1
    %699 = vsyncpa [#allocation6], 1
    %s700 = scalar_lea.sflag [#allocation6], 1
    %701 = vsyncpa %s700, 1
    %702 = vsyncpa [#allocation9], 1
    %703 = vsyncpa [#allocation12], 1
    %s704 = scalar_lea.sflag [#allocation12], 1
    %705 = vsyncpa %s704, 1
    %706 = vsyncpa [#allocation4], 1
    %s707 = scalar_lea.sflag [#allocation4], 1
    %708 = vsyncpa %s707, 1

// kernel: efficientnet_forward.15
$region0: #{efficientnet_forward.15}
  #allocation0 [shape = 'u32[]', space=smem, size = 0x4, offset = 0x4, fixed_abs, tag = 'smem constant byte address 0x4 - core index']
  #allocation1 [shape = 'u32[144,128]{1,0:T(1,128)}', space=vmem, size = 0x12000, scoped, tag = 'internal scratch']
  %s0 = inlined_call_operand.hbm [shape: bf16[2,16,128], index: 0, kind: input, shape index: {}]
  %s1 = inlined_call_operand.hbm [shape: f32[2,1,128], index: 1, kind: input, shape index: {}]
  %s2 = inlined_call_operand.hbm [shape: bf16[128,64], index: 2, kind: input, shape index: {}]
  %s3 = inlined_call_operand.hbm [shape: f32[1,64], index: 3, kind: input, shape index: {}]
  %s4 = inlined_call_operand.hbm [shape: f32[1,64], index: 4, kind: input, shape index: {}]
  %s5 = inlined_call_operand.hbm [shape: bf16[2,16,64], index: 5, kind: output, shape index: {}]
  %s6 = sld [smem:[#allocation0]]
  $region73: #{efficientnet_forward.15} parent=0
    _
  %s8 = ssub.s32 1, %s6
  %s9 = scalar_select 0, %s8, %s6
  $region1: #{efficientnet_forward.15} parent=0
    #allocation2 [shape = 'u8[8192]{0}', space=vmem, size = 0x2000, scoped, tag = 'input window, operand 0']
    #allocation3 [shape = 's32[2]{0}', space=sflag, size = 0x8, scoped, tag = 'scoped memory for efficientnet_forward.15']
    #allocation4 [shape = 's32[2]{0}', space=sflag, size = 0x8, scoped, tag = 'scoped memory for efficientnet_forward.15']
    #allocation5 [shape = 'u8[1024]{0}', space=vmem, size = 0x400, scoped, tag = 'input window, operand 1']
    #allocation6 [shape = 's32[2]{0}', space=sflag, size = 0x8, scoped, tag = 'scoped memory for efficientnet_forward.15']
    #allocation7 [shape = 'u8[32768]{0}', space=vmem, size = 0x8000, scoped, tag = 'input window, operand 2, single buffered']
    #allocation8 [shape = 'u8[512]{0}', space=vmem, size = 0x400, scoped, tag = 'input window, operand 3, single buffered']
    #allocation9 [shape = 's32[1]{0}', space=sflag, size = 0x4, scoped, tag = 'scoped memory for efficientnet_forward.15']
    #allocation10 [shape = 'u8[512]{0}', space=vmem, size = 0x400, scoped, tag = 'input window, operand 4, single buffered']
    #allocation11 [shape = 'u8[8192]{0}', space=vmem, size = 0x2000, scoped, tag = 'output window, operand 0']
    %10 = vsyncpa [#allocation3], 0
    %s11 = scalar_lea.sflag [#allocation3], 1
    %12 = vsyncpa %s11, 0
    %13 = vsyncpa [#allocation6], 0
    %s14 = scalar_lea.sflag [#allocation6], 1
    %15 = vsyncpa %s14, 0
    %16 = vsyncpa [#allocation9], 0
    %17 = vsyncpa [#allocation4], 0
    %s18 = scalar_lea.sflag [#allocation4], 1
    %19 = vsyncpa %s18, 0
    loop: start=0, step=1, limit=4
    $region2: #{efficientnet_forward.15} parent=1 // loop_pre_header
      _
    $region3: #{efficientnet_forward.15} parent=1 // loop_header
      %s21 = sphi 0, %s25
      %p22 = scmp.ge.s32.totalorder %s21, 4
      %s31 = sphi 0, %s33
      %s34 = sphi 0, %s31
      %s35 = sphi 0, %s34
      %s51 = sphi 0, %s35
      %s57 = sphi 0, %s59
      %s60 = sphi 0, %s57
      %s61 = sphi 0, %s60
      %s77 = sphi 0, %s61
      %s81 = sphi 0, %s81
      %s83 = sphi 0, %s81
      %s84 = sphi 0, %s83
      %s98 = sphi 0, %s84
      %s102 = sphi 0, %s102
      %s104 = sphi 0, %s102
      %s105 = sphi 0, %s104
      %s119 = sphi 0, %s105
      %s123 = sphi 0, %s123
      %s125 = sphi 0, %s123
      %s126 = sphi 0, %s125
      %s140 = sphi 0, %s126
      %s146 = sphi 0, %s148
      %s149 = sphi 0, %s146
      %s150 = sphi 0, %s149
      %s166 = sphi 0, %s150
    $region4: #{efficientnet_forward.15} parent=1 // loop_header_branch
      %24 = sbr.rel (%p22) target = $region8
    $region5: #{efficientnet_forward.15} parent=1 // loop_body
      %s26 = ssub.s32 %s21, 1
      %s27 = ssub.s32 %s21, 2
      %s28 = sadd.s32 %s21, 1
      %s29 = ssub.s32 %s21, %s28
      %p30 = scmp.eq.s32.totalorder %s29, 0
      %s32 = sadd.s32 %s31, 1
      %s33 = scalar_select %p30, %s31, %s32
      %p36 = pneg %p30
      %p37 = scmp.eq.s32.totalorder %s21, 1
      %p38 = por %p36, %p37
      %p39 = scmp.ne.s32.totalorder %s31, %s34
      %p40 = scmp.eq.s32.totalorder %s21, 0
      %p41 = por %p39, %p40
      %p42 = scmp.ne.s32.totalorder %s31, %s34
      %p43 = scmp.eq.s32.totalorder %s26, 1
      %p44 = por %p42, %p43
      %p45 = scmp.ne.s32.totalorder %s34, %s35
      %p46 = scmp.eq.s32.totalorder %s26, 0
      %p47 = por %p45, %p46
      %p48 = scmp.ne.s32.totalorder %s34, %s35
      %p49 = scmp.eq.s32.totalorder %s27, 1
      %p50 = por %p48, %p49
      %p52 = scmp.ne.s32.totalorder %s35, %s51
      %p53 = scmp.eq.s32.totalorder %s27, 0
      %p54 = por %p52, %p53
      %s55 = ssub.s32 %s21, %s28
      %p56 = scmp.eq.s32.totalorder %s55, 0
      %s58 = sadd.s32 %s57, 1
      %s59 = scalar_select %p56, %s57, %s58
      %p62 = pneg %p56
      %p63 = scmp.eq.s32.totalorder %s21, 1
      %p64 = por %p62, %p63
      %p65 = scmp.ne.s32.totalorder %s57, %s60
      %p66 = scmp.eq.s32.totalorder %s21, 0
      %p67 = por %p65, %p66
      %p68 = scmp.ne.s32.totalorder %s57, %s60
      %p69 = scmp.eq.s32.totalorder %s26, 1
      %p70 = por %p68, %p69
      %p71 = scmp.ne.s32.totalorder %s60, %s61
      %p72 = scmp.eq.s32.totalorder %s26, 0
      %p73 = por %p71, %p72
      %p74 = scmp.ne.s32.totalorder %s60, %s61
      %p75 = scmp.eq.s32.totalorder %s27, 1
      %p76 = por %p74, %p75
      %p78 = scmp.ne.s32.totalorder %s61, %s77
      %p79 = scmp.eq.s32.totalorder %s27, 0
      %p80 = por %p78, %p79
      %s82 = sadd.s32 %s81, 1
      %p85 = scmp.eq.s32.totalorder %s21, 1
      %p86 = scmp.ne.s32.totalorder %s81, %s83
      %p87 = scmp.eq.s32.totalorder %s21, 0
      %p88 = por %p86, %p87
      %p89 = scmp.ne.s32.totalorder %s81, %s83
      %p90 = scmp.eq.s32.totalorder %s26, 1
      %p91 = por %p89, %p90
      %p92 = scmp.ne.s32.totalorder %s83, %s84
      %p93 = scmp.eq.s32.totalorder %s26, 0
      %p94 = por %p92, %p93
      %p95 = scmp.ne.s32.totalorder %s83, %s84
      %p96 = scmp.eq.s32.totalorder %s27, 1
      %p97 = por %p95, %p96
      %p99 = scmp.ne.s32.totalorder %s84, %s98
      %p100 = scmp.eq.s32.totalorder %s27, 0
      %p101 = por %p99, %p100
      %s103 = sadd.s32 %s102, 1
      %p106 = scmp.eq.s32.totalorder %s21, 1
      %p107 = scmp.ne.s32.totalorder %s102, %s104
      %p108 = scmp.eq.s32.totalorder %s21, 0
      %p109 = por %p107, %p108
      %p110 = scmp.ne.s32.totalorder %s102, %s104
      %p111 = scmp.eq.s32.totalorder %s26, 1
      %p112 = por %p110, %p111
      %p113 = scmp.ne.s32.totalorder %s104, %s105
      %p114 = scmp.eq.s32.totalorder %s26, 0
      %p115 = por %p113, %p114
      %p116 = scmp.ne.s32.totalorder %s104, %s105
      %p117 = scmp.eq.s32.totalorder %s27, 1
      %p118 = por %p116, %p117
      %p120 = scmp.ne.s32.totalorder %s105, %s119
      %p121 = scmp.eq.s32.totalorder %s27, 0
      %p122 = por %p120, %p121
      %s124 = sadd.s32 %s123, 1
      %p127 = scmp.eq.s32.totalorder %s21, 1
      %p128 = scmp.ne.s32.totalorder %s123, %s125
      %p129 = scmp.eq.s32.totalorder %s21, 0
      %p130 = por %p128, %p129
      %p131 = scmp.ne.s32.totalorder %s123, %s125
      %p132 = scmp.eq.s32.totalorder %s26, 1
      %p133 = por %p131, %p132
      %p134 = scmp.ne.s32.totalorder %s125, %s126
      %p135 = scmp.eq.s32.totalorder %s26, 0
      %p136 = por %p134, %p135
      %p137 = scmp.ne.s32.totalorder %s125, %s126
      %p138 = scmp.eq.s32.totalorder %s27, 1
      %p139 = por %p137, %p138
      %p141 = scmp.ne.s32.totalorder %s126, %s140
      %p142 = scmp.eq.s32.totalorder %s27, 0
      %p143 = por %p141, %p142
      %s144 = ssub.s32 %s21, %s28
      %p145 = scmp.eq.s32.totalorder %s144, 0
      %s147 = sadd.s32 %s146, 1
      %s148 = scalar_select %p145, %s146, %s147
      %p151 = pneg %p145
      %p152 = scmp.eq.s32.totalorder %s21, 1
      %p153 = por %p151, %p152
      %p154 = scmp.ne.s32.totalorder %s146, %s149
      %p155 = scmp.eq.s32.totalorder %s21, 0
      %p156 = por %p154, %p155
      %p157 = scmp.ne.s32.totalorder %s146, %s149
      %p158 = scmp.eq.s32.totalorder %s26, 1
      %p159 = por %p157, %p158
      %p160 = scmp.ne.s32.totalorder %s149, %s150
      %p161 = scmp.eq.s32.totalorder %s26, 0
      %p162 = por %p160, %p161
      %p163 = scmp.ne.s32.totalorder %s149, %s150
      %p164 = scmp.eq.s32.totalorder %s27, 1
      %p165 = por %p163, %p164
      %p167 = scmp.ne.s32.totalorder %s150, %s166
      %p168 = scmp.eq.s32.totalorder %s27, 0
      %p169 = por %p167, %p168
      %p170 = scmp.le.s32.totalorder 1, %s21
      %p171 = scmp.lt.s32.totalorder %s21, 3
      %p172 = pnand %p170, %p171
      %p173 = pneg %p172
      // Predicated region
      $region9: #{efficientnet_forward.15} parent=5 // pred_check
        _
      $region10: #{efficientnet_forward.15} parent=5 // pred_check_branch
        %175 = sbr.rel (%p172) target = $region12
      $region11: #{efficientnet_forward.15} parent=5 // pred_region
        %s176 = ssub.s32 %s21, 1
        // Predicated region
        $region13: #{efficientnet_forward.15} parent=11 // pred_check
          %p177 = pneg %p94
        $region14: #{efficientnet_forward.15} parent=11 // pred_check_branch
          %179 = sbr.rel (%p177) target = $region16
        $region15: #{efficientnet_forward.15} parent=11 // pred_region
          %s181 = ssub.s32 1024, 1024
          %182 = vsyncadd [#allocation6], %s181
          %s183 = sshll.u32 [#allocation7], 4
          %s184 = int_to_ptr.vmem [resolvable:$true] %s183
          %189 = dma.hbm_to_vmem [thread:$0]  %s2, 1024, %s184, [#allocation6], 64, 64, 4
        $region16: #{efficientnet_forward.15} parent=11 // pred_fallthru
          _
        // Predicated region
        $region17: #{efficientnet_forward.15} parent=11 // pred_check
          %p190 = pneg %p115
        $region18: #{efficientnet_forward.15} parent=11 // pred_check_branch
          %192 = sbr.rel (%p190) target = $region20
        $region19: #{efficientnet_forward.15} parent=11 // pred_region
          %s194 = ssub.s32 16, 16
          %195 = vsyncadd [#allocation9], %s194
          %s197 = sshll.u32 [#allocation8], 4
          %s198 = int_to_ptr.vmem [resolvable:$true] %s197
          %200 = dma.hbm_to_vmem [thread:$0]  %s3, 16, %s198, [#allocation9]
        $region20: #{efficientnet_forward.15} parent=11 // pred_fallthru
          _
        // Predicated region
        $region21: #{efficientnet_forward.15} parent=11 // pred_check
          %p201 = pneg %p136
        $region22: #{efficientnet_forward.15} parent=11 // pred_check_branch
          %203 = sbr.rel (%p201) target = $region24
        $region23: #{efficientnet_forward.15} parent=11 // pred_region
          %s205 = ssub.s32 16, 16
          %206 = vsyncadd [#allocation9], %s205
          %s208 = sshll.u32 [#allocation10], 4
          %s209 = int_to_ptr.vmem [resolvable:$true] %s208
          %211 = dma.hbm_to_vmem [thread:$0]  %s4, 16, %s209, [#allocation9]
        $region24: #{efficientnet_forward.15} parent=11 // pred_fallthru
          _
      $region12: #{efficientnet_forward.15} parent=5 // pred_fallthru
        _
      %p212 = scmp.lt.s32.totalorder %s21, 2
      // Predicated region
      $region25: #{efficientnet_forward.15} parent=5 // pred_check
        %p213 = pneg %p212
      $region26: #{efficientnet_forward.15} parent=5 // pred_check_branch
        %215 = sbr.rel (%p213) target = $region28
      $region27: #{efficientnet_forward.15} parent=5 // pred_region
        // Predicated region
        $region29: #{efficientnet_forward.15} parent=27 // pred_check
          %p216 = pneg %p41
        $region30: #{efficientnet_forward.15} parent=27 // pred_check_branch
          %218 = sbr.rel (%p216) target = $region32
        $region31: #{efficientnet_forward.15} parent=27 // pred_region
          %s219 = sand.u32 %s31, 1
          %s220 = scalar_lea.sflag [#allocation3], %s219
          %s221 = sand.u32 %s31, 1
          %s222 = smul.addr %s221, 8
          %s223 = scalar_lea.vmem [#allocation2], %s222
          %s225 = ssub.s32 128, 128
          %226 = vsyncadd %s220, %s225
          %s227 = smul.addr %s21, 2
          %s228 = smul.addr %s227, 64
          %s229 = scalar_lea.hbm %s0, %s228
          %s230 = sshll.u32 %s223, 4
          %s231 = int_to_ptr.vmem [resolvable:$true] %s230
          %236 = dma.hbm_to_vmem [thread:$0]  %s229, 128, %s231, %s220, 64, 64, 4
        $region32: #{efficientnet_forward.15} parent=27 // pred_fallthru
          _
        // Predicated region
        $region33: #{efficientnet_forward.15} parent=27 // pred_check
          %p237 = pneg %p67
        $region34: #{efficientnet_forward.15} parent=27 // pred_check_branch
          %239 = sbr.rel (%p237) target = $region36
        $region35: #{efficientnet_forward.15} parent=27 // pred_region
          %s240 = sand.u32 %s21, 1
          %s241 = scalar_lea.sflag [#allocation6], %s240
          %s242 = sand.u32 %s57, 1
          %s243 = scalar_lea.vmem [#allocation5], %s242
          %s245 = ssub.s32 16, 16
          %246 = vsyncadd %s241, %s245
          %s247 = smul.addr %s21, 16
          %s248 = scalar_lea.hbm %s1, %s247
          %s250 = sshll.u32 %s243, 4
          %s251 = int_to_ptr.vmem [resolvable:$true] %s250
          %253 = dma.hbm_to_vmem [thread:$0]  %s248, 16, %s251, %s241
        $region36: #{efficientnet_forward.15} parent=27 // pred_fallthru
          _
      $region28: #{efficientnet_forward.15} parent=5 // pred_fallthru
        _
      %p254 = scmp.le.s32.totalorder 1, %s21
      %p255 = scmp.lt.s32.totalorder %s21, 3
      %p256 = pnand %p254, %p255
      %p257 = pneg %p256
      // Predicated region
      $region37: #{efficientnet_forward.15} parent=5 // pred_check
        _
      $region38: #{efficientnet_forward.15} parent=5 // pred_check_branch
        %259 = sbr.rel (%p256) target = $region40
      $region39: #{efficientnet_forward.15} parent=5 // pred_region
        %s260 = ssub.s32 %s21, 1
        %s261 = sand.u32 %s34, 1
        %s262 = scalar_lea.sflag [#allocation3], %s261
        %s263 = sand.u32 %s34, 1
        %s264 = smul.addr %s263, 8
        %s265 = scalar_lea.vmem [#allocation2], %s264
        // Predicated region
        $region41: #{efficientnet_forward.15} parent=39 // pred_check
          %p266 = pneg %p47
        $region42: #{efficientnet_forward.15} parent=39 // pred_check_branch
          %268 = sbr.rel (%p266) target = $region44
        $region43: #{efficientnet_forward.15} parent=39 // pred_region
          %269 = dma.done %s262, 128
        $region44: #{efficientnet_forward.15} parent=39 // pred_fallthru
          _
        %s270 = sand.u32 %s26, 1
        %s271 = scalar_lea.sflag [#allocation6], %s270
        %s272 = sand.u32 %s60, 1
        %s273 = scalar_lea.vmem [#allocation5], %s272
        // Predicated region
        $region45: #{efficientnet_forward.15} parent=39 // pred_check
          %p274 = pneg %p73
        $region46: #{efficientnet_forward.15} parent=39 // pred_check_branch
          %276 = sbr.rel (%p274) target = $region48
        $region47: #{efficientnet_forward.15} parent=39 // pred_region
          %277 = dma.done %s271, 16
        $region48: #{efficientnet_forward.15} parent=39 // pred_fallthru
          _
        // Predicated region
        $region49: #{efficientnet_forward.15} parent=39 // pred_check
          %p278 = pneg %p94
        $region50: #{efficientnet_forward.15} parent=39 // pred_check_branch
          %280 = sbr.rel (%p278) target = $region52
        $region51: #{efficientnet_forward.15} parent=39 // pred_region
          %281 = dma.done [#allocation6], 1024
        $region52: #{efficientnet_forward.15} parent=39 // pred_fallthru
          _
        // Predicated region
        $region53: #{efficientnet_forward.15} parent=39 // pred_check
          %p282 = pneg %p115
        $region54: #{efficientnet_forward.15} parent=39 // pred_check_branch
          %284 = sbr.rel (%p282) target = $region56
        $region55: #{efficientnet_forward.15} parent=39 // pred_region
          %285 = dma.done [#allocation9], 16
        $region56: #{efficientnet_forward.15} parent=39 // pred_fallthru
          _
        // Predicated region
        $region57: #{efficientnet_forward.15} parent=39 // pred_check
          %p286 = pneg %p136
        $region58: #{efficientnet_forward.15} parent=39 // pred_check_branch
          %288 = sbr.rel (%p286) target = $region60
        $region59: #{efficientnet_forward.15} parent=39 // pred_region
          %289 = dma.done [#allocation9], 16
        $region60: #{efficientnet_forward.15} parent=39 // pred_fallthru
          _
        %s290 = sand.u32 %s34, 1
        %s291 = scalar_lea.sflag [#allocation3], %s290
        %s292 = sand.u32 %s34, 1
        %s293 = smul.addr %s292, 8
        %s294 = scalar_lea.vmem [#allocation2], %s293
        %p295 = pneg %p47
        %p296 = pneg %p44
        %s297 = sand.u32 %s26, 1
        %s298 = scalar_lea.sflag [#allocation6], %s297
        %s299 = sand.u32 %s60, 1
        %s300 = scalar_lea.vmem [#allocation5], %s299
        %p301 = pneg %p73
        %p302 = pneg %p70
        %p303 = pneg %p94
        %p304 = pneg %p91
        %p305 = pneg %p115
        %p306 = pneg %p112
        %p307 = pneg %p136
        %p308 = pneg %p133
        %p309 = pneg %p162
        %p310 = pneg %p159
        %s311 = sand.u32 %s149, 1
        %s312 = scalar_lea.sflag [#allocation4], %s311
        %s313 = sand.u32 %s149, 1
        %s314 = smul.addr %s313, 8
        %s315 = scalar_lea.vmem [#allocation11], %s314
        %v317 = vld [vmem:[%s265] sm:$0xf]
        %v318 = vld [vmem:[%s265 + $0x4] sm:$0xf]
        %v319 = vld [vmem:[%s273] sm:$0x1]
        %v320 = vpack.c.bf16 %v319, %v319
        %v322 = vpack.i.b16 %v320, %v320
        %v324 = vlaneseq
        %v325 = vshrl.u32 %v324, 7
        %v326 = vsub.s32 0, %v325
        %v327 = vrot.slane %v322, %v326
        %v329 = vunpack.c.l.b16 %v327
        %v330 = vpack.c.b16 %v329, %v329
        %v332 = vmul.bf16 %v317, %v330
        %v333 = vmul.bf16 %v318, %v330
        %v334 = vld [vmem:[#allocation7] sm:$0xf]
        %v335 = vld [vmem:[#allocation7 + $0x4] sm:$0xf]
        %v336 = vld [vmem:[#allocation7 + $0x8] sm:$0xf]
        %v337 = vld [vmem:[#allocation7 + $0xc] sm:$0xf]
        %v338 = vld [vmem:[#allocation7 + $0x10] sm:$0xf]
        %v339 = vld [vmem:[#allocation7 + $0x14] sm:$0xf]
        %v340 = vld [vmem:[#allocation7 + $0x18] sm:$0xf]
        %v341 = vld [vmem:[#allocation7 + $0x1c] sm:$0xf]
        %v342 = vld [vmem:[#allocation7 + $0x20] sm:$0xf]
        %v343 = vld [vmem:[#allocation7 + $0x24] sm:$0xf]
        %v344 = vld [vmem:[#allocation7 + $0x28] sm:$0xf]
        %v345 = vld [vmem:[#allocation7 + $0x2c] sm:$0xf]
        %v346 = vld [vmem:[#allocation7 + $0x30] sm:$0xf]
        %v347 = vld [vmem:[#allocation7 + $0x34] sm:$0xf]
        %v348 = vld [vmem:[#allocation7 + $0x38] sm:$0xf]
        %v349 = vld [vmem:[#allocation7 + $0x3c] sm:$0xf]
        %v352 = vunpack.c.l.b16 %v332
        %v353 = vunpack.c.l.b16 %v333
        %v354 = vpack.c.b16 %v353, %v352
        %v372 = vunpack.c.l.b16 %v334
        %v373 = vunpack.c.l.b16 %v335
        %v374 = vunpack.c.l.b16 %v336
        %v375 = vunpack.c.l.b16 %v337
        %v376 = vunpack.c.l.b16 %v338
        %v377 = vunpack.c.l.b16 %v339
        %v378 = vunpack.c.l.b16 %v340
        %v379 = vunpack.c.l.b16 %v341
        %v380 = vunpack.c.l.b16 %v342
        %v381 = vunpack.c.l.b16 %v343
        %v382 = vunpack.c.l.b16 %v344
        %v383 = vunpack.c.l.b16 %v345
        %v384 = vunpack.c.l.b16 %v346
        %v385 = vunpack.c.l.b16 %v347
        %v386 = vunpack.c.l.b16 %v348
        %v387 = vunpack.c.l.b16 %v349
        %v388 = vpack.c.b16 %v373, %v372
        %v389 = vpack.c.b16 %v375, %v374
        %v390 = vpack.c.b16 %v377, %v376
        %v391 = vpack.c.b16 %v379, %v378
        %v392 = vpack.c.b16 %v381, %v380
        %v393 = vpack.c.b16 %v383, %v382
        %v394 = vpack.c.b16 %v385, %v384
        %v395 = vpack.c.b16 %v387, %v386
        %404 = vmatprep.subr.bf16.mxu0 0
        %405 = vmatpush1.bf16.msra.mxu0 %v388
        %406 = vmatprep.subr.bf16.mxu0 0
        %407 = vmatpush1.bf16.msra.mxu0 %v389
        %408 = vmatprep.subr.bf16.mxu0 0
        %409 = vmatpush1.bf16.msra.mxu0 %v390
        %410 = vmatprep.subr.bf16.mxu0 0
        %411 = vmatpush1.bf16.msra.mxu0 %v391
        %412 = vmatprep.subr.bf16.mxu0 0
        %413 = vmatpush1.bf16.msra.mxu0 %v392
        %414 = vmatprep.subr.bf16.mxu0 0
        %415 = vmatpush1.bf16.msra.mxu0 %v393
        %416 = vmatprep.subr.bf16.mxu0 0
        %417 = vmatpush1.bf16.msra.mxu0 %v394
        %418 = vmatprep.subr.bf16.mxu0 0
        %419 = vmatpush1.bf16.msra.mxu0 %v395
        %420 = vmatprep.subr.bf16.mxu0 0
        %421 = vmatpush1.bf16.msra.mxu0 0
        %422 = vmatprep.subr.bf16.mxu0 0
        %423 = vmatpush1.bf16.msra.mxu0 0
        %424 = vmatprep.subr.bf16.mxu0 0
        %425 = vmatpush1.bf16.msra.mxu0 0
        %426 = vmatprep.subr.bf16.mxu0 0
        %427 = vmatpush1.bf16.msra.mxu0 0
        %428 = vmatprep.subr.bf16.mxu0 0
        %429 = vmatpush1.bf16.msra.mxu0 0
        %430 = vmatprep.subr.bf16.mxu0 0
        %431 = vmatpush1.bf16.msra.mxu0 0
        %432 = vmatprep.subr.bf16.mxu0 0
        %433 = vmatpush1.bf16.msra.mxu0 0
        %434 = vmatprep.subr.bf16.mxu0 0
        %435 = vmatpush1.bf16.msra.mxu0 0
        %436 = vmatprep.mubr.bf16.mxu0 0
        %437 = vmatmul.mubr.bf16.gmra.mrb[0].mxu0 %v354
        %v438 = vpop.f32.mrb[0].mxu0
        %v439 = vadd.f32 0.0, %v438
        %v440 = vpop.f32.mrb[0].mxu0
        %v441 = vpop.f32.mrb[0].mxu0
        %v442 = vadd.f32 0.0, %v441
        %v443 = vpop.f32.mrb[0].mxu0
        %444 = vdwg.mxu0
        %v445 = vld [vmem:[#allocation8] sm:$0x1]
        %v447 = vlaneseq
        %v448 = vshrl.u32 %v447, 7
        %v449 = vsub.s32 0, %v448
        %v450 = vrot.slane %v445, %v449
        %v452 = vmul.f32 %v439, %v450
        %v453 = vmul.f32 %v442, %v450
        %v454 = vld [vmem:[#allocation10] sm:$0x1]
        %v456 = vlaneseq
        %v457 = vshrl.u32 %v456, 7
        %v458 = vsub.s32 0, %v457
        %v459 = vrot.slane %v454, %v458
        %v461 = vadd.f32 %v452, %v459
        %v462 = vadd.f32 %v453, %v459
        %v463 = vpack.c.bf16 %v462, %v461
        %v465 = vunpack.c.l.b16 %v463
        %v466 = vunpack.c.h.b16 %v463
        %v467 = vpack.c.b16 %v465, %v465
        %v468 = vpack.c.b16 %v466, %v466
        %vm471 = vcmask 519168
        %472 = vst.msk [vmem:[%s315] sm:$0xf] %vm471, %v467
        %473 = vst.msk [vmem:[%s315 + $0x4] sm:$0xf] %vm471, %v468
        %s474 = sand.u32 %s149, 1
        %s475 = scalar_lea.sflag [#allocation4], %s474
        %s476 = sand.u32 %s149, 1
        %s477 = smul.addr %s476, 8
        %s478 = scalar_lea.vmem [#allocation11], %s477
        // Predicated region
        $region61: #{efficientnet_forward.15} parent=39 // pred_check
          %p479 = pneg %p159
        $region62: #{efficientnet_forward.15} parent=39 // pred_check_branch
          %481 = sbr.rel (%p479) target = $region64
        $region63: #{efficientnet_forward.15} parent=39 // pred_region
          %s483 = ssub.s32 128, 128
          %484 = vsyncadd %s475, %s483
          %s485 = smul.addr %s26, 2
          %s486 = smul.addr %s485, 64
          %s487 = scalar_lea.hbm %s5, %s486
          %s488 = sshll.u32 %s478, 4
          %s489 = int_to_ptr.vmem [resolvable:$true] %s488
          %494 = dma.vmem_to_hbm [thread:$0]  %s489, 128, %s487, %s475, 64, 64, 4
        $region64: #{efficientnet_forward.15} parent=39 // pred_fallthru
          _
      $region40: #{efficientnet_forward.15} parent=5 // pred_fallthru
        _
      %p495 = scmp.le.s32.totalorder 2, %s21
      // Predicated region
      $region65: #{efficientnet_forward.15} parent=5 // pred_check
        %p496 = pneg %p495
      $region66: #{efficientnet_forward.15} parent=5 // pred_check_branch
        %498 = sbr.rel (%p496) target = $region68
      $region67: #{efficientnet_forward.15} parent=5 // pred_region
        %s499 = ssub.s32 %s21, 2
        // Predicated region
        $region69: #{efficientnet_forward.15} parent=67 // pred_check
          %p500 = pneg %p165
        $region70: #{efficientnet_forward.15} parent=67 // pred_check_branch
          %502 = sbr.rel (%p500) target = $region72
        $region71: #{efficientnet_forward.15} parent=67 // pred_region
          %s503 = sand.u32 %s150, 1
          %s504 = scalar_lea.sflag [#allocation4], %s503
          %s505 = sand.u32 %s150, 1
          %s506 = smul.addr %s505, 8
          %s507 = scalar_lea.vmem [#allocation11], %s506
          %508 = dma.done %s504, 128
        $region72: #{efficientnet_forward.15} parent=67 // pred_fallthru
          _
      $region68: #{efficientnet_forward.15} parent=5 // pred_fallthru
        _
    $region6: #{efficientnet_forward.15} parent=1 // loop_footer
      %s25 = sadd.s32 1, %s21
    $region7: #{efficientnet_forward.15} parent=1 // loop_footer_branch
      %20 = sbr.rel target = $region3
    $region8: #{efficientnet_forward.15} parent=1 // loop_exit
      _
    %509 = vsyncpa [#allocation3], 1
    %s510 = scalar_lea.sflag [#allocation3], 1
    %511 = vsyncpa %s510, 1
    %512 = vsyncpa [#allocation6], 1
    %s513 = scalar_lea.sflag [#allocation6], 1
    %514 = vsyncpa %s513, 1
    %515 = vsyncpa [#allocation9], 1
    %516 = vsyncpa [#allocation4], 1
    %s517 = scalar_lea.sflag [#allocation4], 1
    %518 = vsyncpa %s517, 1

// kernel: efficientnet_forward.14
$region0: #{efficientnet_forward.14}
  #allocation0 [shape = 'u32[]', space=smem, size = 0x4, offset = 0x4, fixed_abs, tag = 'smem constant byte address 0x4 - core index']
  #allocation1 [shape = 'u32[144,128]{1,0:T(1,128)}', space=vmem, size = 0x12000, scoped, tag = 'internal scratch']
  %s0 = inlined_call_operand.hbm [shape: bf16[8,5,5,128], index: 0, kind: input, shape index: {}]
  %s1 = inlined_call_operand.hbm [shape: bf16[3,3,128], index: 1, kind: input, shape index: {}]
  %s2 = inlined_call_operand.hbm [shape: f32[1,128], index: 2, kind: input, shape index: {}]
  %s3 = inlined_call_operand.hbm [shape: f32[1,128], index: 3, kind: input, shape index: {}]
  %s4 = inlined_call_operand.hbm [shape: f32[128,8], index: 4, kind: input, shape index: {}]
  %s5 = inlined_call_operand.hbm [shape: f32[1,8], index: 5, kind: input, shape index: {}]
  %s6 = inlined_call_operand.hbm [shape: f32[8,128], index: 6, kind: input, shape index: {}]
  %s7 = inlined_call_operand.hbm [shape: f32[1,128], index: 7, kind: input, shape index: {}]
  %s8 = inlined_call_operand.hbm [shape: bf16[2,4,4,128], index: 8, kind: output, shape index: {0}]
  %s9 = inlined_call_operand.hbm [shape: f32[2,1,128], index: 9, kind: output, shape index: {1}]
  %10 = xla_tuple %s8, %s9
  %s11 = sld [smem:[#allocation0]]
  $region105: #{efficientnet_forward.14} parent=0
    _
  %s13 = ssub.s32 1, %s11
  %s14 = scalar_select 0, %s13, %s11
  $region1: #{efficientnet_forward.14} parent=0
    #allocation2 [shape = 'u8[81920]{0}', space=vmem, size = 0x14000, scoped, tag = 'input window, operand 0']
    #allocation3 [shape = 's32[2]{0}', space=sflag, size = 0x8, scoped, tag = 'scoped memory for efficientnet_forward.14']
    #allocation4 [shape = 's32[2]{0}', space=sflag, size = 0x8, scoped, tag = 'scoped memory for efficientnet_forward.14']
    #allocation5 [shape = 'u8[3072]{0}', space=vmem, size = 0xc00, scoped, tag = 'input window, operand 1, single buffered']
    #allocation6 [shape = 's32[1]{0}', space=sflag, size = 0x4, scoped, tag = 'scoped memory for efficientnet_forward.14']
    #allocation7 [shape = 'u8[512]{0}', space=vmem, size = 0x400, scoped, tag = 'input window, operand 2, single buffered']
    #allocation8 [shape = 'u8[512]{0}', space=vmem, size = 0x400, scoped, tag = 'input window, operand 3, single buffered']
    #allocation9 [shape = 's32[1]{0}', space=sflag, size = 0x4, scoped, tag = 'scoped memory for efficientnet_forward.14']
    #allocation10 [shape = 'u8[65536]{0}', space=vmem, size = 0x10000, scoped, tag = 'input window, operand 4, single buffered']
    #allocation11 [shape = 'u8[512]{0}', space=vmem, size = 0x400, scoped, tag = 'input window, operand 5, single buffered']
    #allocation12 [shape = 's32[1]{0}', space=sflag, size = 0x4, scoped, tag = 'scoped memory for efficientnet_forward.14']
    #allocation13 [shape = 'u8[4096]{0}', space=vmem, size = 0x1000, scoped, tag = 'input window, operand 6, single buffered']
    #allocation14 [shape = 'u8[512]{0}', space=vmem, size = 0x400, scoped, tag = 'input window, operand 7, single buffered']
    #allocation15 [shape = 's32[1]{0}', space=sflag, size = 0x4, scoped, tag = 'scoped memory for efficientnet_forward.14']
    #allocation16 [shape = 'u8[8192]{0}', space=vmem, size = 0x2000, scoped, tag = 'output window, operand 0']
    #allocation17 [shape = 'u8[1024]{0}', space=vmem, size = 0x400, scoped, tag = 'output window, operand 1']
    #allocation18 [shape = 's32[2]{0}', space=sflag, size = 0x8, scoped, tag = 'scoped memory for efficientnet_forward.14']
    %15 = vsyncpa [#allocation3], 0
    %s16 = scalar_lea.sflag [#allocation3], 1
    %17 = vsyncpa %s16, 0
    %18 = vsyncpa [#allocation6], 0
    %19 = vsyncpa [#allocation9], 0
    %20 = vsyncpa [#allocation12], 0
    %21 = vsyncpa [#allocation15], 0
    %22 = vsyncpa [#allocation4], 0
    %s23 = scalar_lea.sflag [#allocation4], 1
    %24 = vsyncpa %s23, 0
    %25 = vsyncpa [#allocation18], 0
    %s26 = scalar_lea.sflag [#allocation18], 1
    %27 = vsyncpa %s26, 0
    loop: start=0, step=1, limit=4
    $region2: #{efficientnet_forward.14} parent=1 // loop_pre_header
      _
    $region3: #{efficientnet_forward.14} parent=1 // loop_header
      %s29 = sphi 0, %s33
      %p30 = scmp.ge.s32.totalorder %s29, 4
      %s39 = sphi 0, %s41
      %s42 = sphi 0, %s39
      %s43 = sphi 0, %s42
      %s59 = sphi 0, %s43
      %s63 = sphi 0, %s63
      %s65 = sphi 0, %s63
      %s66 = sphi 0, %s65
      %s80 = sphi 0, %s66
      %s84 = sphi 0, %s84
      %s86 = sphi 0, %s84
      %s87 = sphi 0, %s86
      %s101 = sphi 0, %s87
      %s105 = sphi 0, %s105
      %s107 = sphi 0, %s105
      %s108 = sphi 0, %s107
      %s122 = sphi 0, %s108
      %s126 = sphi 0, %s126
      %s128 = sphi 0, %s126
      %s129 = sphi 0, %s128
      %s143 = sphi 0, %s129
      %s147 = sphi 0, %s147
      %s149 = sphi 0, %s147
      %s150 = sphi 0, %s149
      %s164 = sphi 0, %s150
      %s168 = sphi 0, %s168
      %s170 = sphi 0, %s168
      %s171 = sphi 0, %s170
      %s185 = sphi 0, %s171
      %s189 = sphi 0, %s189
      %s191 = sphi 0, %s189
      %s192 = sphi 0, %s191
      %s206 = sphi 0, %s192
      %s212 = sphi 0, %s214
      %s215 = sphi 0, %s212
      %s216 = sphi 0, %s215
      %s232 = sphi 0, %s216
      %s238 = sphi 0, %s240
      %s241 = sphi 0, %s238
      %s242 = sphi 0, %s241
      %s258 = sphi 0, %s242
    $region4: #{efficientnet_forward.14} parent=1 // loop_header_branch
      %32 = sbr.rel (%p30) target = $region8
    $region5: #{efficientnet_forward.14} parent=1 // loop_body
      %s34 = ssub.s32 %s29, 1
      %s35 = ssub.s32 %s29, 2
      %s36 = sadd.s32 %s29, 1
      %s37 = ssub.s32 %s29, %s36
      %p38 = scmp.eq.s32.totalorder %s37, 0
      %s40 = sadd.s32 %s39, 1
      %s41 = scalar_select %p38, %s39, %s40
      %p44 = pneg %p38
      %p45 = scmp.eq.s32.totalorder %s29, 1
      %p46 = por %p44, %p45
      %p47 = scmp.ne.s32.totalorder %s39, %s42
      %p48 = scmp.eq.s32.totalorder %s29, 0
      %p49 = por %p47, %p48
      %p50 = scmp.ne.s32.totalorder %s39, %s42
      %p51 = scmp.eq.s32.totalorder %s34, 1
      %p52 = por %p50, %p51
      %p53 = scmp.ne.s32.totalorder %s42, %s43
      %p54 = scmp.eq.s32.totalorder %s34, 0
      %p55 = por %p53, %p54
      %p56 = scmp.ne.s32.totalorder %s42, %s43
      %p57 = scmp.eq.s32.totalorder %s35, 1
      %p58 = por %p56, %p57
      %p60 = scmp.ne.s32.totalorder %s43, %s59
      %p61 = scmp.eq.s32.totalorder %s35, 0
      %p62 = por %p60, %p61
      %s64 = sadd.s32 %s63, 1
      %p67 = scmp.eq.s32.totalorder %s29, 1
      %p68 = scmp.ne.s32.totalorder %s63, %s65
      %p69 = scmp.eq.s32.totalorder %s29, 0
      %p70 = por %p68, %p69
      %p71 = scmp.ne.s32.totalorder %s63, %s65
      %p72 = scmp.eq.s32.totalorder %s34, 1
      %p73 = por %p71, %p72
      %p74 = scmp.ne.s32.totalorder %s65, %s66
      %p75 = scmp.eq.s32.totalorder %s34, 0
      %p76 = por %p74, %p75
      %p77 = scmp.ne.s32.totalorder %s65, %s66
      %p78 = scmp.eq.s32.totalorder %s35, 1
      %p79 = por %p77, %p78
      %p81 = scmp.ne.s32.totalorder %s66, %s80
      %p82 = scmp.eq.s32.totalorder %s35, 0
      %p83 = por %p81, %p82
      %s85 = sadd.s32 %s84, 1
      %p88 = scmp.eq.s32.totalorder %s29, 1
      %p89 = scmp.ne.s32.totalorder %s84, %s86
      %p90 = scmp.eq.s32.totalorder %s29, 0
      %p91 = por %p89, %p90
      %p92 = scmp.ne.s32.totalorder %s84, %s86
      %p93 = scmp.eq.s32.totalorder %s34, 1
      %p94 = por %p92, %p93
      %p95 = scmp.ne.s32.totalorder %s86, %s87
      %p96 = scmp.eq.s32.totalorder %s34, 0
      %p97 = por %p95, %p96
      %p98 = scmp.ne.s32.totalorder %s86, %s87
      %p99 = scmp.eq.s32.totalorder %s35, 1
      %p100 = por %p98, %p99
      %p102 = scmp.ne.s32.totalorder %s87, %s101
      %p103 = scmp.eq.s32.totalorder %s35, 0
      %p104 = por %p102, %p103
      %s106 = sadd.s32 %s105, 1
      %p109 = scmp.eq.s32.totalorder %s29, 1
      %p110 = scmp.ne.s32.totalorder %s105, %s107
      %p111 = scmp.eq.s32.totalorder %s29, 0
      %p112 = por %p110, %p111
      %p113 = scmp.ne.s32.totalorder %s105, %s107
      %p114 = scmp.eq.s32.totalorder %s34, 1
      %p115 = por %p113, %p114
      %p116 = scmp.ne.s32.totalorder %s107, %s108
      %p117 = scmp.eq.s32.totalorder %s34, 0
      %p118 = por %p116, %p117
      %p119 = scmp.ne.s32.totalorder %s107, %s108
      %p120 = scmp.eq.s32.totalorder %s35, 1
      %p121 = por %p119, %p120
      %p123 = scmp.ne.s32.totalorder %s108, %s122
      %p124 = scmp.eq.s32.totalorder %s35, 0
      %p125 = por %p123, %p124
      %s127 = sadd.s32 %s126, 1
      %p130 = scmp.eq.s32.totalorder %s29, 1
      %p131 = scmp.ne.s32.totalorder %s126, %s128
      %p132 = scmp.eq.s32.totalorder %s29, 0
      %p133 = por %p131, %p132
      %p134 = scmp.ne.s32.totalorder %s126, %s128
      %p135 = scmp.eq.s32.totalorder %s34, 1
      %p136 = por %p134, %p135
      %p137 = scmp.ne.s32.totalorder %s128, %s129
      %p138 = scmp.eq.s32.totalorder %s34, 0
      %p139 = por %p137, %p138
      %p140 = scmp.ne.s32.totalorder %s128, %s129
      %p141 = scmp.eq.s32.totalorder %s35, 1
      %p142 = por %p140, %p141
      %p144 = scmp.ne.s32.totalorder %s129, %s143
      %p145 = scmp.eq.s32.totalorder %s35, 0
      %p146 = por %p144, %p145
      %s148 = sadd.s32 %s147, 1
      %p151 = scmp.eq.s32.totalorder %s29, 1
      %p152 = scmp.ne.s32.totalorder %s147, %s149
      %p153 = scmp.eq.s32.totalorder %s29, 0
      %p154 = por %p152, %p153
      %p155 = scmp.ne.s32.totalorder %s147, %s149
      %p156 = scmp.eq.s32.totalorder %s34, 1
      %p157 = por %p155, %p156
      %p158 = scmp.ne.s32.totalorder %s149, %s150
      %p159 = scmp.eq.s32.totalorder %s34, 0
      %p160 = por %p158, %p159
      %p161 = scmp.ne.s32.totalorder %s149, %s150
      %p162 = scmp.eq.s32.totalorder %s35, 1
      %p163 = por %p161, %p162
      %p165 = scmp.ne.s32.totalorder %s150, %s164
      %p166 = scmp.eq.s32.totalorder %s35, 0
      %p167 = por %p165, %p166
      %s169 = sadd.s32 %s168, 1
      %p172 = scmp.eq.s32.totalorder %s29, 1
      %p173 = scmp.ne.s32.totalorder %s168, %s170
      %p174 = scmp.eq.s32.totalorder %s29, 0
      %p175 = por %p173, %p174
      %p176 = scmp.ne.s32.totalorder %s168, %s170
      %p177 = scmp.eq.s32.totalorder %s34, 1
      %p178 = por %p176, %p177
      %p179 = scmp.ne.s32.totalorder %s170, %s171
      %p180 = scmp.eq.s32.totalorder %s34, 0
      %p181 = por %p179, %p180
      %p182 = scmp.ne.s32.totalorder %s170, %s171
      %p183 = scmp.eq.s32.totalorder %s35, 1
      %p184 = por %p182, %p183
      %p186 = scmp.ne.s32.totalorder %s171, %s185
      %p187 = scmp.eq.s32.totalorder %s35, 0
      %p188 = por %p186, %p187
      %s190 = sadd.s32 %s189, 1
      %p193 = scmp.eq.s32.totalorder %s29, 1
      %p194 = scmp.ne.s32.totalorder %s189, %s191
      %p195 = scmp.eq.s32.totalorder %s29, 0
      %p196 = por %p194, %p195
      %p197 = scmp.ne.s32.totalorder %s189, %s191
      %p198 = scmp.eq.s32.totalorder %s34, 1
      %p199 = por %p197, %p198
      %p200 = scmp.ne.s32.totalorder %s191, %s192
      %p201 = scmp.eq.s32.totalorder %s34, 0
      %p202 = por %p200, %p201
      %p203 = scmp.ne.s32.totalorder %s191, %s192
      %p204 = scmp.eq.s32.totalorder %s35, 1
      %p205 = por %p203, %p204
      %p207 = scmp.ne.s32.totalorder %s192, %s206
      %p208 = scmp.eq.s32.totalorder %s35, 0
      %p209 = por %p207, %p208
      %s210 = ssub.s32 %s29, %s36
      %p211 = scmp.eq.s32.totalorder %s210, 0
      %s213 = sadd.s32 %s212, 1
      %s214 = scalar_select %p211, %s212, %s213
      %p217 = pneg %p211
      %p218 = scmp.eq.s32.totalorder %s29, 1
      %p219 = por %p217, %p218
      %p220 = scmp.ne.s32.totalorder %s212, %s215
      %p221 = scmp.eq.s32.totalorder %s29, 0
      %p222 = por %p220, %p221
      %p223 = scmp.ne.s32.totalorder %s212, %s215
      %p224 = scmp.eq.s32.totalorder %s34, 1
      %p225 = por %p223, %p224
      %p226 = scmp.ne.s32.totalorder %s215, %s216
      %p227 = scmp.eq.s32.totalorder %s34, 0
      %p228 = por %p226, %p227
      %p229 = scmp.ne.s32.totalorder %s215, %s216
      %p230 = scmp.eq.s32.totalorder %s35, 1
      %p231 = por %p229, %p230
      %p233 = scmp.ne.s32.totalorder %s216, %s232
      %p234 = scmp.eq.s32.totalorder %s35, 0
      %p235 = por %p233, %p234
      %s236 = ssub.s32 %s29, %s36
      %p237 = scmp.eq.s32.totalorder %s236, 0
      %s239 = sadd.s32 %s238, 1
      %s240 = scalar_select %p237, %s238, %s239
      %p243 = pneg %p237
      %p244 = scmp.eq.s32.totalorder %s29, 1
      %p245 = por %p243, %p244
      %p246 = scmp.ne.s32.totalorder %s238, %s241
      %p247 = scmp.eq.s32.totalorder %s29, 0
      %p248 = por %p246, %p247
      %p249 = scmp.ne.s32.totalorder %s238, %s241
      %p250 = scmp.eq.s32.totalorder %s34, 1
      %p251 = por %p249, %p250
      %p252 = scmp.ne.s32.totalorder %s241, %s242
      %p253 = scmp.eq.s32.totalorder %s34, 0
      %p254 = por %p252, %p253
      %p255 = scmp.ne.s32.totalorder %s241, %s242
      %p256 = scmp.eq.s32.totalorder %s35, 1
      %p257 = por %p255, %p256
      %p259 = scmp.ne.s32.totalorder %s242, %s258
      %p260 = scmp.eq.s32.totalorder %s35, 0
      %p261 = por %p259, %p260
      %p262 = scmp.le.s32.totalorder 1, %s29
      %p263 = scmp.lt.s32.totalorder %s29, 3
      %p264 = pnand %p262, %p263
      %p265 = pneg %p264
      // Predicated region
      $region9: #{efficientnet_forward.14} parent=5 // pred_check
        _
      $region10: #{efficientnet_forward.14} parent=5 // pred_check_branch
        %267 = sbr.rel (%p264) target = $region12
      $region11: #{efficientnet_forward.14} parent=5 // pred_region
        %s268 = ssub.s32 %s29, 1
        // Predicated region
        $region13: #{efficientnet_forward.14} parent=11 // pred_check
          %p269 = pneg %p76
        $region14: #{efficientnet_forward.14} parent=11 // pred_check_branch
          %271 = sbr.rel (%p269) target = $region16
        $region15: #{efficientnet_forward.14} parent=11 // pred_region
          %s273 = ssub.s32 96, 96
          %274 = vsyncadd [#allocation6], %s273
          %s275 = sshll.u32 [#allocation5], 4
          %s276 = int_to_ptr.vmem [resolvable:$true] %s275
          %281 = dma.hbm_to_vmem [thread:$0]  %s1, 96, %s276, [#allocation6], 32, 32, 2
        $region16: #{efficientnet_forward.14} parent=11 // pred_fallthru
          _
        // Predicated region
        $region17: #{efficientnet_forward.14} parent=11 // pred_check
          %p282 = pneg %p97
        $region18: #{efficientnet_forward.14} parent=11 // pred_check_branch
          %284 = sbr.rel (%p282) target = $region20
        $region19: #{efficientnet_forward.14} parent=11 // pred_region
          %s286 = ssub.s32 16, 16
          %287 = vsyncadd [#allocation6], %s286
          %s289 = sshll.u32 [#allocation7], 4
          %s290 = int_to_ptr.vmem [resolvable:$true] %s289
          %292 = dma.hbm_to_vmem [thread:$0]  %s2, 16, %s290, [#allocation6]
        $region20: #{efficientnet_forward.14} parent=11 // pred_fallthru
          _
        // Predicated region
        $region21: #{efficientnet_forward.14} parent=11 // pred_check
          %p293 = pneg %p118
        $region22: #{efficientnet_forward.14} parent=11 // pred_check_branch
          %295 = sbr.rel (%p293) target = $region24
        $region23: #{efficientnet_forward.14} parent=11 // pred_region
          %s297 = ssub.s32 16, 16
          %298 = vsyncadd [#allocation9], %s297
          %s300 = sshll.u32 [#allocation8], 4
          %s301 = int_to_ptr.vmem [resolvable:$true] %s300
          %303 = dma.hbm_to_vmem [thread:$0]  %s3, 16, %s301, [#allocation9]
        $region24: #{efficientnet_forward.14} parent=11 // pred_fallthru
          _
        // Predicated region
        $region25: #{efficientnet_forward.14} parent=11 // pred_check
          %p304 = pneg %p139
        $region26: #{efficientnet_forward.14} parent=11 // pred_check_branch
          %306 = sbr.rel (%p304) target = $region28
        $region27: #{efficientnet_forward.14} parent=11 // pred_region
          %s308 = ssub.s32 2048, 2048
          %309 = vsyncadd [#allocation9], %s308
          %s310 = sshll.u32 [#allocation10], 4
          %s311 = int_to_ptr.vmem [resolvable:$true] %s310
          %316 = dma.hbm_to_vmem [thread:$0]  %s4, 2048, %s311, [#allocation9], 128, 128, 8
        $region28: #{efficientnet_forward.14} parent=11 // pred_fallthru
          _
        // Predicated region
        $region29: #{efficientnet_forward.14} parent=11 // pred_check
          %p317 = pneg %p160
        $region30: #{efficientnet_forward.14} parent=11 // pred_check_branch
          %319 = sbr.rel (%p317) target = $region32
        $region31: #{efficientnet_forward.14} parent=11 // pred_region
          %s321 = ssub.s32 16, 16
          %322 = vsyncadd [#allocation12], %s321
          %s324 = sshll.u32 [#allocation11], 4
          %s325 = int_to_ptr.vmem [resolvable:$true] %s324
          %327 = dma.hbm_to_vmem [thread:$0]  %s5, 16, %s325, [#allocation12]
        $region32: #{efficientnet_forward.14} parent=11 // pred_fallthru
          _
        // Predicated region
        $region33: #{efficientnet_forward.14} parent=11 // pred_check
          %p328 = pneg %p181
        $region34: #{efficientnet_forward.14} parent=11 // pred_check_branch
          %330 = sbr.rel (%p328) target = $region36
        $region35: #{efficientnet_forward.14} parent=11 // pred_region
          %s332 = ssub.s32 128, 128
          %333 = vsyncadd [#allocation12], %s332
          %s335 = sshll.u32 [#allocation13], 4
          %s336 = int_to_ptr.vmem [resolvable:$true] %s335
          %338 = dma.hbm_to_vmem [thread:$0]  %s6, 128, %s336, [#allocation12]
        $region36: #{efficientnet_forward.14} parent=11 // pred_fallthru
          _
        // Predicated region
        $region37: #{efficientnet_forward.14} parent=11 // pred_check
          %p339 = pneg %p202
        $region38: #{efficientnet_forward.14} parent=11 // pred_check_branch
          %341 = sbr.rel (%p339) target = $region40
        $region39: #{efficientnet_forward.14} parent=11 // pred_region
          %s343 = ssub.s32 16, 16
          %344 = vsyncadd [#allocation15], %s343
          %s346 = sshll.u32 [#allocation14], 4
          %s347 = int_to_ptr.vmem [resolvable:$true] %s346
          %349 = dma.hbm_to_vmem [thread:$0]  %s7, 16, %s347, [#allocation15]
        $region40: #{efficientnet_forward.14} parent=11 // pred_fallthru
          _
      $region12: #{efficientnet_forward.14} parent=5 // pred_fallthru
        _
      %p350 = scmp.lt.s32.totalorder %s29, 2
      // Predicated region
      $region41: #{efficientnet_forward.14} parent=5 // pred_check
        %p351 = pneg %p350
      $region42: #{efficientnet_forward.14} parent=5 // pred_check_branch
        %353 = sbr.rel (%p351) target = $region44
      $region43: #{efficientnet_forward.14} parent=5 // pred_region
        // Predicated region
        $region45: #{efficientnet_forward.14} parent=43 // pred_check
          %p354 = pneg %p49
        $region46: #{efficientnet_forward.14} parent=43 // pred_check_branch
          %356 = sbr.rel (%p354) target = $region48
        $region47: #{efficientnet_forward.14} parent=43 // pred_region
          %s357 = sand.u32 %s39, 1
          %s358 = scalar_lea.sflag [#allocation3], %s357
          %s359 = sand.u32 %s39, 1
          %s360 = smul.addr %s359, 80
          %s361 = scalar_lea.vmem [#allocation2], %s360
          %s362 = smul.u32 4, %s29
          %s364 = ssub.s32 1280, 1280
          %365 = vsyncadd %s358, %s364
          %s366 = smul.addr %s362, 5
          %s367 = smul.addr %s366, 64
          %s368 = scalar_lea.hbm %s0, %s367
          %s369 = sshll.u32 %s361, 4
          %s370 = int_to_ptr.vmem [resolvable:$true] %s369
          %375 = dma.hbm_to_vmem [thread:$0]  %s368, 1280, %s370, %s358, 64, 64, 4
        $region48: #{efficientnet_forward.14} parent=43 // pred_fallthru
          _
      $region44: #{efficientnet_forward.14} parent=5 // pred_fallthru
        _
      %p376 = scmp.le.s32.totalorder 1, %s29
      %p377 = scmp.lt.s32.totalorder %s29, 3
      %p378 = pnand %p376, %p377
      %p379 = pneg %p378
      // Predicated region
      $region49: #{efficientnet_forward.14} parent=5 // pred_check
        _
      $region50: #{efficientnet_forward.14} parent=5 // pred_check_branch
        %381 = sbr.rel (%p378) target = $region52
      $region51: #{efficientnet_forward.14} parent=5 // pred_region
        %s382 = ssub.s32 %s29, 1
        %s383 = sand.u32 %s42, 1
        %s384 = scalar_lea.sflag [#allocation3], %s383
        %s385 = sand.u32 %s42, 1
        %s386 = smul.addr %s385, 80
        %s387 = scalar_lea.vmem [#allocation2], %s386
        // Predicated region
        $region53: #{efficientnet_forward.14} parent=51 // pred_check
          %p388 = pneg %p55
        $region54: #{efficientnet_forward.14} parent=51 // pred_check_branch
          %390 = sbr.rel (%p388) target = $region56
        $region55: #{efficientnet_forward.14} parent=51 // pred_region
          %391 = dma.done %s384, 1280
        $region56: #{efficientnet_forward.14} parent=51 // pred_fallthru
          _
        // Predicated region
        $region57: #{efficientnet_forward.14} parent=51 // pred_check
          %p392 = pneg %p76
        $region58: #{efficientnet_forward.14} parent=51 // pred_check_branch
          %394 = sbr.rel (%p392) target = $region60
        $region59: #{efficientnet_forward.14} parent=51 // pred_region
          %395 = dma.done [#allocation6], 96
        $region60: #{efficientnet_forward.14} parent=51 // pred_fallthru
          _
        // Predicated region
        $region61: #{efficientnet_forward.14} parent=51 // pred_check
          %p396 = pneg %p97
        $region62: #{efficientnet_forward.14} parent=51 // pred_check_branch
          %398 = sbr.rel (%p396) target = $region64
        $region63: #{efficientnet_forward.14} parent=51 // pred_region
          %399 = dma.done [#allocation6], 16
        $region64: #{efficientnet_forward.14} parent=51 // pred_fallthru
          _
        // Predicated region
        $region65: #{efficientnet_forward.14} parent=51 // pred_check
          %p400 = pneg %p118
        $region66: #{efficientnet_forward.14} parent=51 // pred_check_branch
          %402 = sbr.rel (%p400) target = $region68
        $region67: #{efficientnet_forward.14} parent=51 // pred_region
          %403 = dma.done [#allocation9], 16
        $region68: #{efficientnet_forward.14} parent=51 // pred_fallthru
          _
        // Predicated region
        $region69: #{efficientnet_forward.14} parent=51 // pred_check
          %p404 = pneg %p139
        $region70: #{efficientnet_forward.14} parent=51 // pred_check_branch
          %406 = sbr.rel (%p404) target = $region72
        $region71: #{efficientnet_forward.14} parent=51 // pred_region
          %407 = dma.done [#allocation9], 2048
        $region72: #{efficientnet_forward.14} parent=51 // pred_fallthru
          _
        // Predicated region
        $region73: #{efficientnet_forward.14} parent=51 // pred_check
          %p408 = pneg %p160
        $region74: #{efficientnet_forward.14} parent=51 // pred_check_branch
          %410 = sbr.rel (%p408) target = $region76
        $region75: #{efficientnet_forward.14} parent=51 // pred_region
          %411 = dma.done [#allocation12], 16
        $region76: #{efficientnet_forward.14} parent=51 // pred_fallthru
          _
        // Predicated region
        $region77: #{efficientnet_forward.14} parent=51 // pred_check
          %p412 = pneg %p181
        $region78: #{efficientnet_forward.14} parent=51 // pred_check_branch
          %414 = sbr.rel (%p412) target = $region80
        $region79: #{efficientnet_forward.14} parent=51 // pred_region
          %415 = dma.done [#allocation12], 128
        $region80: #{efficientnet_forward.14} parent=51 // pred_fallthru
          _
        // Predicated region
        $region81: #{efficientnet_forward.14} parent=51 // pred_check
          %p416 = pneg %p202
        $region82: #{efficientnet_forward.14} parent=51 // pred_check_branch
          %418 = sbr.rel (%p416) target = $region84
        $region83: #{efficientnet_forward.14} parent=51 // pred_region
          %419 = dma.done [#allocation15], 16
        $region84: #{efficientnet_forward.14} parent=51 // pred_fallthru
          _
        %s420 = sand.u32 %s42, 1
        %s421 = scalar_lea.sflag [#allocation3], %s420
        %s422 = sand.u32 %s42, 1
        %s423 = smul.addr %s422, 80
        %s424 = scalar_lea.vmem [#allocation2], %s423
        %p425 = pneg %p55
        %p426 = pneg %p52
        %p427 = pneg %p76
        %p428 = pneg %p73
        %p429 = pneg %p97
        %p430 = pneg %p94
        %p431 = pneg %p118
        %p432 = pneg %p115
        %p433 = pneg %p139
        %p434 = pneg %p136
        %p435 = pneg %p160
        %p436 = pneg %p157
        %p437 = pneg %p181
        %p438 = pneg %p178
        %p439 = pneg %p202
        %p440 = pneg %p199
        %p441 = pneg %p228
        %p442 = pneg %p225
        %s443 = sand.u32 %s215, 1
        %s444 = scalar_lea.sflag [#allocation4], %s443
        %s445 = sand.u32 %s215, 1
        %s446 = smul.addr %s445, 8
        %s447 = scalar_lea.vmem [#allocation16], %s446
        %p448 = pneg %p254
        %p449 = pneg %p251
        %s450 = sand.u32 %s241, 1
        %s451 = scalar_lea.sflag [#allocation18], %s450
        %s452 = sand.u32 %s241, 1
        %s453 = scalar_lea.vmem [#allocation17], %s452
        %s454 = smul.u32 4, %s34
        %v455 = vld [vmem:[%s387] sm:$0x7]
        %v456 = vld [vmem:[%s387 + $0x4] sm:$0x7]
        %v457 = vld [vmem:[%s387 + $0x8] sm:$0x7]
        %v458 = vld [vmem:[%s387 + $0xc] sm:$0x7]
        %v459 = vld [vmem:[%s387 + $0x10] sm:$0x7]
        %v460 = vld [vmem:[%s387 + $0x14] sm:$0x7]
        %v461 = vld [vmem:[%s387 + $0x18] sm:$0x7]
        %v462 = vld [vmem:[%s387 + $0x1c] sm:$0x7]
        %v463 = vld [vmem:[%s387 + $0x20] sm:$0x7]
        %v464 = vld [vmem:[%s387 + $0x24] sm:$0x7]
        %v465 = vld [vmem:[%s387 + $0x28] sm:$0x7]
        %v466 = vld [vmem:[%s387 + $0x2c] sm:$0x7]
        %v467 = vld [vmem:[%s387 + $0x30] sm:$0x7]
        %v468 = vld [vmem:[%s387 + $0x34] sm:$0x7]
        %v469 = vld [vmem:[%s387 + $0x3c] sm:$0x7]
        %v470 = vld [vmem:[%s387 + $0x40] sm:$0x7]
        %v471 = vld [vmem:[%s387 + $0x44] sm:$0x7]
        %v472 = vld [vmem:[%s387 + $0x48] sm:$0x7]
        %v473 = vld [vmem:[#allocation5] sm:$0x3]
        %v474 = vld [vmem:[#allocation5 + $0x2] sm:$0x3]
        %v475 = vld [vmem:[#allocation5 + $0x4] sm:$0x3]
        %v477 = vpack.i.b16 %v473, %v473
        %v479 = vlaneseq
        %v480 = vshrl.u32 %v479, 7
        %v481 = vsub.s32 0, %v480
        %v482 = vrot.slane %v477, %v481
        %v483 = vmul.bf16 %v455, %v482
        %v484 = vmul.bf16 %v456, %v482
        %v485 = vmul.bf16 %v457, %v482
        %v486 = vmul.bf16 %v458, %v482
        %v487 = vunpack.c.l.bf16 %v483
        %v488 = vunpack.c.l.bf16 %v484
        %v489 = vunpack.c.l.bf16 %v485
        %v490 = vunpack.c.l.bf16 %v486
        %v491 = vadd.f32 %v487, 0.0
        %v492 = vadd.f32 %v488, 0.0
        %v493 = vadd.f32 %v489, 0.0
        %v494 = vadd.f32 %v490, 0.0
        %v495 = vshrl.u32 %v473, 16
        %v496 = vpack.i.b16 %v495, %v495
        %v498 = vlaneseq
        %v499 = vshrl.u32 %v498, 7
        %v500 = vsub.s32 0, %v499
        %v501 = vrot.slane %v496, %v500
        %v502 = vmul.bf16 %v460, %v501
        %v503 = vmul.bf16 %v461, %v501
        %v504 = vmul.bf16 %v462, %v501
        %v505 = vmul.bf16 %v463, %v501
        %v506 = vunpack.c.l.bf16 %v502
        %v507 = vunpack.c.l.bf16 %v503
        %v508 = vunpack.c.l.bf16 %v504
        %v509 = vunpack.c.l.bf16 %v505
        %v510 = vadd.f32 %v491, %v506
        %v511 = vadd.f32 %v492, %v507
        %v512 = vadd.f32 %v493, %v508
        %v513 = vadd.f32 %v494, %v509
        %v514 = vlaneseq
        %v515 = vshrl.u32 %v514, 7
        %v516 = vsub.s32 1, %v515
        %v517 = vrot.slane %v477, %v516
        %v518 = vmul.bf16 %v455, %v517
        %v519 = vmul.bf16 %v456, %v517
        %v520 = vmul.bf16 %v457, %v517
        %v521 = vmul.bf16 %v458, %v517
        %v522 = vunpack.c.l.bf16 %v518
        %v523 = vunpack.c.l.bf16 %v519
        %v524 = vunpack.c.l.bf16 %v520
        %v525 = vunpack.c.l.bf16 %v521
        %v530 = vrot.slane %v522, 1
        %v531 = vrot.slane %v523, 1
        %v532 = vrot.slane %v524, 1
        %v533 = vrot.slane %v525, 1
        %v538 = vadd.f32 %v510, %v530
        %v539 = vadd.f32 %v511, %v531
        %v540 = vadd.f32 %v512, %v532
        %v541 = vadd.f32 %v513, %v533
        %v543 = vpack.i.b16 %v474, %v474
        %v545 = vlaneseq
        %v546 = vshrl.u32 %v545, 7
        %v547 = vsub.s32 0, %v546
        %v548 = vrot.slane %v543, %v547
        %v549 = vmul.bf16 %v465, %v548
        %v550 = vmul.bf16 %v466, %v548
        %v551 = vmul.bf16 %v467, %v548
        %v552 = vmul.bf16 %v468, %v548
        %v553 = vunpack.c.l.bf16 %v549
        %v554 = vunpack.c.l.bf16 %v550
        %v555 = vunpack.c.l.bf16 %v551
        %v556 = vunpack.c.l.bf16 %v552
        %v557 = vadd.f32 %v538, %v553
        %v558 = vadd.f32 %v539, %v554
        %v559 = vadd.f32 %v540, %v555
        %v560 = vadd.f32 %v541, %v556
        %v561 = vshrl.u32 %v474, 16
        %v562 = vpack.i.b16 %v561, %v561
        %v564 = vlaneseq
        %v565 = vshrl.u32 %v564, 7
        %v566 = vsub.s32 0, %v565
        %v567 = vrot.slane %v562, %v566
        %v568 = vmul.bf16 %v469, %v567
        %v569 = vmul.bf16 %v470, %v567
        %v570 = vmul.bf16 %v471, %v567
        %v571 = vmul.bf16 %v472, %v567
        %v572 = vunpack.c.l.bf16 %v568
        %v573 = vunpack.c.l.bf16 %v569
        %v574 = vunpack.c.l.bf16 %v570
        %v575 = vunpack.c.l.bf16 %v571
        %v576 = vadd.f32 %v557, %v572
        %v577 = vadd.f32 %v558, %v573
        %v578 = vadd.f32 %v559, %v574
        %v579 = vadd.f32 %v560, %v575
        %v580 = vlaneseq
        %v581 = vshrl.u32 %v580, 7
        %v582 = vsub.s32 1, %v581
        %v583 = vrot.slane %v543, %v582
        %v584 = vmul.bf16 %v465, %v583
        %v585 = vmul.bf16 %v466, %v583
        %v586 = vmul.bf16 %v467, %v583
        %v587 = vmul.bf16 %v468, %v583
        %v588 = vunpack.c.l.bf16 %v584
        %v589 = vunpack.c.l.bf16 %v585
        %v590 = vunpack.c.l.bf16 %v586
        %v591 = vunpack.c.l.bf16 %v587
        %v596 = vrot.slane %v588, 1
        %v597 = vrot.slane %v589, 1
        %v598 = vrot.slane %v590, 1
        %v599 = vrot.slane %v591, 1
        %v604 = vadd.f32 %v576, %v596
        %v605 = vadd.f32 %v577, %v597
        %v606 = vadd.f32 %v578, %v598
        %v607 = vadd.f32 %v579, %v599
        %v609 = vpack.i.b16 %v475, %v475
        %v611 = vlaneseq
        %v612 = vshrl.u32 %v611, 7
        %v613 = vsub.s32 0, %v612
        %v614 = vrot.slane %v609, %v613
        %v615 = vmul.bf16 %v456, %v614
        %v616 = vmul.bf16 %v457, %v614
        %v617 = vmul.bf16 %v458, %v614
        %v618 = vmul.bf16 %v459, %v614
        %v619 = vunpack.c.l.bf16 %v615
        %v620 = vunpack.c.l.bf16 %v616
        %v621 = vunpack.c.l.bf16 %v617
        %v622 = vunpack.c.l.bf16 %v618
        %v623 = vadd.f32 %v604, %v619
        %v624 = vadd.f32 %v605, %v620
        %v625 = vadd.f32 %v606, %v621
        %v626 = vadd.f32 %v607, %v622
        %v627 = vshrl.u32 %v475, 16
        %v628 = vpack.i.b16 %v627, %v627
        %v630 = vlaneseq
        %v631 = vshrl.u32 %v630, 7
        %v632 = vsub.s32 0, %v631
        %v633 = vrot.slane %v628, %v632
        %v634 = vmul.bf16 %v461, %v633
        %v635 = vmul.bf16 %v462, %v633
        %v636 = vmul.bf16 %v463, %v633
        %v637 = vmul.bf16 %v464, %v633
        %v638 = vunpack.c.l.bf16 %v634
        %v639 = vunpack.c.l.bf16 %v635
        %v640 = vunpack.c.l.bf16 %v636
        %v641 = vunpack.c.l.bf16 %v637
        %v642 = vadd.f32 %v623, %v638
        %v643 = vadd.f32 %v624, %v639
        %v644 = vadd.f32 %v625, %v640
        %v645 = vadd.f32 %v626, %v641
        %v646 = vlaneseq
        %v647 = vshrl.u32 %v646, 7
        %v648 = vsub.s32 1, %v647
        %v649 = vrot.slane %v609, %v648
        %v650 = vmul.bf16 %v456, %v649
        %v651 = vmul.bf16 %v457, %v649
        %v652 = vmul.bf16 %v458, %v649
        %v653 = vmul.bf16 %v459, %v649
        %v654 = vunpack.c.l.bf16 %v650
        %v655 = vunpack.c.l.bf16 %v651
        %v656 = vunpack.c.l.bf16 %v652
        %v657 = vunpack.c.l.bf16 %v653
        %v662 = vrot.slane %v654, 1
        %v663 = vrot.slane %v655, 1
        %v664 = vrot.slane %v656, 1
        %v665 = vrot.slane %v657, 1
        %v670 = vadd.f32 %v642, %v662
        %v671 = vadd.f32 %v643, %v663
        %v672 = vadd.f32 %v644, %v664
        %v673 = vadd.f32 %v645, %v665
        %v674 = vld [vmem:[#allocation7] sm:$0x1]
        %v676 = vlaneseq
        %v677 = vshrl.u32 %v676, 7
        %v678 = vsub.s32 0, %v677
        %v679 = vrot.slane %v674, %v678
        %v681 = vmul.f32 %v670, %v679
        %v682 = vmul.f32 %v671, %v679
        %v683 = vmul.f32 %v672, %v679
        %v684 = vmul.f32 %v673, %v679
        %v685 = vld [vmem:[#allocation8] sm:$0x1]
        %v687 = vlaneseq
        %v688 = vshrl.u32 %v687, 7
        %v689 = vsub.s32 0, %v688
        %v690 = vrot.slane %v685, %v689
        %v692 = vadd.f32 %v681, %v690
        %v693 = vadd.f32 %v682, %v690
        %v694 = vadd.f32 %v683, %v690
        %v695 = vadd.f32 %v684, %v690
        %v696 = vxor.u32 %v692, 2147483648
        %v697 = vxor.u32 %v693, 2147483648
        %v698 = vxor.u32 %v694, 2147483648
        %v699 = vxor.u32 %v695, 2147483648
        %v700 = vmul.f32 %v696, 1.442695
        %v701 = vpow.pop %v700
        %v702 = vmul.f32 %v697, 1.442695
        %v703 = vpow.pop %v702
        %v704 = vmul.f32 %v698, 1.442695
        %v705 = vpow.pop %v704
        %v706 = vmul.f32 %v699, 1.442695
        %v707 = vpow.pop %v706
        %v708 = vadd.f32 %v701, 1.0
        %v709 = vadd.f32 %v703, 1.0
        %v710 = vadd.f32 %v705, 1.0
        %v711 = vadd.f32 %v707, 1.0
        %v712 = vrcp.pop %v708
        %v713 = vmul.f32 1.0, %v712
        %v714 = vrcp.pop %v709
        %v715 = vmul.f32 1.0, %v714
        %v716 = vrcp.pop %v710
        %v717 = vmul.f32 1.0, %v716
        %v718 = vrcp.pop %v711
        %v719 = vmul.f32 1.0, %v718
        %v720 = vmul.f32 %v692, %v713
        %v721 = vmul.f32 %v693, %v715
        %v722 = vmul.f32 %v694, %v717
        %v723 = vmul.f32 %v695, %v719
        %v724 = vpack.c.bf16 %v720, %v720
        %v725 = vpack.c.bf16 %v721, %v721
        %v726 = vpack.c.bf16 %v722, %v722
        %v727 = vpack.c.bf16 %v723, %v723
        %728 = vst [vmem:[%s447] sm:$0x3] %v724
        %729 = vst [vmem:[%s447 + $0x2] sm:$0x3] %v725
        %730 = vst [vmem:[%s447 + $0x4] sm:$0x3] %v726
        %731 = vst [vmem:[%s447 + $0x6] sm:$0x3] %v727
        %vm732 = vcmask 1043456
        %v733 = vsel %vm732, %v720, 0.0
        %v734 = vsel %vm732, %v721, 0.0
        %v735 = vadd.f32 %v733, %v734
        %v736 = vsel %vm732, %v722, 0.0
        %v737 = vadd.f32 %v735, %v736
        %v738 = vsel %vm732, %v723, 0.0
        %v739 = vadd.f32 %v737, %v738
        %v740 = vrot.slane %v739, 4
        %v741 = vadd.f32 %v739, %v740
        %v742 = vrot.slane %v741, 2
        %v743 = vadd.f32 %v741, %v742
        %v744 = vrot.slane %v743, 1
        %v745 = vadd.f32 %v743, %v744
        %v746 = vrcp.pop 16.0
        %v747 = vmul.f32 %v745, %v746
        %v748 = vld [vmem:[#allocation10] sm:$0xff]
        %v749 = vld [vmem:[#allocation10 + $0x8] sm:$0xff]
        %v750 = vld [vmem:[#allocation10 + $0x10] sm:$0xff]
        %v751 = vld [vmem:[#allocation10 + $0x18] sm:$0xff]
        %v752 = vld [vmem:[#allocation10 + $0x20] sm:$0xff]
        %v753 = vld [vmem:[#allocation10 + $0x28] sm:$0xff]
        %v754 = vld [vmem:[#allocation10 + $0x30] sm:$0xff]
        %v755 = vld [vmem:[#allocation10 + $0x38] sm:$0xff]
        %v756 = vld [vmem:[#allocation10 + $0x40] sm:$0xff]
        %v757 = vld [vmem:[#allocation10 + $0x48] sm:$0xff]
        %v758 = vld [vmem:[#allocation10 + $0x50] sm:$0xff]
        %v759 = vld [vmem:[#allocation10 + $0x58] sm:$0xff]
        %v760 = vld [vmem:[#allocation10 + $0x60] sm:$0xff]
        %v761 = vld [vmem:[#allocation10 + $0x68] sm:$0xff]
        %v762 = vld [vmem:[#allocation10 + $0x70] sm:$0xff]
        %v763 = vld [vmem:[#allocation10 + $0x78] sm:$0xff]
        %v764 = vld [vmem:[#allocation11] sm:$0x1]
        %765 = vmatprep.subr.mxu0 0.0
        %766 = vmatpush1.msra.mxu0 %v748
        %767 = vmatprep.subr.mxu0 0.0
        %768 = vmatpush1.msra.mxu0 %v749
        %769 = vmatprep.subr.mxu0 0.0
        %770 = vmatpush1.msra.mxu0 %v750
        %771 = vmatprep.subr.mxu0 0.0
        %772 = vmatpush1.msra.mxu0 %v751
        %773 = vmatprep.subr.mxu0 0.0
        %774 = vmatpush1.msra.mxu0 %v752
        %775 = vmatprep.subr.mxu0 0.0
        %776 = vmatpush1.msra.mxu0 %v753
        %777 = vmatprep.subr.mxu0 0.0
        %778 = vmatpush1.msra.mxu0 %v754
        %779 = vmatprep.subr.mxu0 0.0
        %780 = vmatpush1.msra.mxu0 %v755
        %781 = vmatprep.subr.mxu0 0.0
        %782 = vmatpush1.msra.mxu0 %v756
        %783 = vmatprep.subr.mxu0 0.0
        %784 = vmatpush1.msra.mxu0 %v757
        %785 = vmatprep.subr.mxu0 0.0
        %786 = vmatpush1.msra.mxu0 %v758
        %787 = vmatprep.subr.mxu0 0.0
        %788 = vmatpush1.msra.mxu0 %v759
        %789 = vmatprep.subr.mxu0 0.0
        %790 = vmatpush1.msra.mxu0 %v760
        %791 = vmatprep.subr.mxu0 0.0
        %792 = vmatpush1.msra.mxu0 %v761
        %793 = vmatprep.subr.mxu0 0.0
        %794 = vmatpush1.msra.mxu0 %v762
        %795 = vmatprep.subr.mxu0 0.0
        %796 = vmatpush1.msra.mxu0 %v763
        %797 = vmatprep.subr.mxu0 0.0
        %798 = vmatpush1.msra.mxu0 0.0
        %799 = vmatprep.subr.mxu0 0.0
        %800 = vmatpush1.msra.mxu0 0.0
        %801 = vmatprep.subr.mxu0 0.0
        %802 = vmatpush1.msra.mxu0 0.0
        %803 = vmatprep.subr.mxu0 0.0
        %804 = vmatpush1.msra.mxu0 0.0
        %805 = vmatprep.subr.mxu0 0.0
        %806 = vmatpush1.msra.mxu0 0.0
        %807 = vmatprep.subr.mxu0 0.0
        %808 = vmatpush1.msra.mxu0 0.0
        %809 = vmatprep.subr.mxu0 0.0
        %810 = vmatpush1.msra.mxu0 0.0
        %811 = vmatprep.subr.mxu0 0.0
        %812 = vmatpush1.msra.mxu0 0.0
        %813 = vmatprep.subr.mxu0 0.0
        %814 = vmatpush1.msra.mxu0 0.0
        %815 = vmatprep.subr.mxu0 0.0
        %816 = vmatpush1.msra.mxu0 0.0
        %817 = vmatprep.subr.mxu0 0.0
        %818 = vmatpush1.msra.mxu0 0.0
        %819 = vmatprep.subr.mxu0 0.0
        %820 = vmatpush1.msra.mxu0 0.0
        %821 = vmatprep.subr.mxu0 0.0
        %822 = vmatpush1.msra.mxu0 0.0
        %823 = vmatprep.subr.mxu0 0.0
        %824 = vmatpush1.msra.mxu0 0.0
        %825 = vmatprep.subr.mxu0 0.0
        %826 = vmatpush1.msra.mxu0 0.0
        %827 = vmatprep.subr.mxu0 0.0
        %828 = vmatpush1.msra.mxu0 0.0
        %829 = vmatprep.mubr.f32.mxu0 0.0
        %830 = vmatmul.mubr.f32.gmra.mrb[0].mxu0 %v747
        %v831 = vpop.f32.mrb[0].mxu0
        %v832 = vadd.f32 %v764, %v831
        %v833 = vpop.f32.mrb[0].mxu0
        %834 = vdwg.mxu0
        %v835 = vxor.u32 %v832, 2147483648
        %v836 = vmul.f32 %v835, 1.442695
        %v837 = vpow.pop %v836
        %v838 = vadd.f32 %v837, 1.0
        %v839 = vrcp.pop %v838
        %v840 = vmul.f32 1.0, %v839
        %v841 = vmul.f32 %v832, %v840
        %v842 = vld [vmem:[#allocation13] sm:$0xff]
        %v843 = vld [vmem:[#allocation14] sm:$0x1]
        %vm844 = vcmask 64512
        %v846 = vsel %vm844, %v841, 0
        %848 = vmatprep.subr.mxu0 0.0
        %849 = vmatpush1.msra.mxu0 %v842
        %850 = vmatprep.subr.mxu0 0.0
        %851 = vmatpush1.msra.mxu0 0.0
        %852 = vmatprep.subr.mxu0 0.0
        %853 = vmatpush1.msra.mxu0 0.0
        %854 = vmatprep.subr.mxu0 0.0
        %855 = vmatpush1.msra.mxu0 0.0
        %856 = vmatprep.subr.mxu0 0.0
        %857 = vmatpush1.msra.mxu0 0.0
        %858 = vmatprep.subr.mxu0 0.0
        %859 = vmatpush1.msra.mxu0 0.0
        %860 = vmatprep.subr.mxu0 0.0
        %861 = vmatpush1.msra.mxu0 0.0
        %862 = vmatprep.subr.mxu0 0.0
        %863 = vmatpush1.msra.mxu0 0.0
        %864 = vmatprep.subr.mxu0 0.0
        %865 = vmatpush1.msra.mxu0 0.0
        %866 = vmatprep.subr.mxu0 0.0
        %867 = vmatpush1.msra.mxu0 0.0
        %868 = vmatprep.subr.mxu0 0.0
        %869 = vmatpush1.msra.mxu0 0.0
        %870 = vmatprep.subr.mxu0 0.0
        %871 = vmatpush1.msra.mxu0 0.0
        %872 = vmatprep.subr.mxu0 0.0
        %873 = vmatpush1.msra.mxu0 0.0
        %874 = vmatprep.subr.mxu0 0.0
        %875 = vmatpush1.msra.mxu0 0.0
        %876 = vmatprep.subr.mxu0 0.0
        %877 = vmatpush1.msra.mxu0 0.0
        %878 = vmatprep.subr.mxu0 0.0
        %879 = vmatpush1.msra.mxu0 0.0
        %880 = vmatprep.subr.mxu0 0.0
        %881 = vmatpush1.msra.mxu0 0.0
        %882 = vmatprep.subr.mxu0 0.0
        %883 = vmatpush1.msra.mxu0 0.0
        %884 = vmatprep.subr.mxu0 0.0
        %885 = vmatpush1.msra.mxu0 0.0
        %886 = vmatprep.subr.mxu0 0.0
        %887 = vmatpush1.msra.mxu0 0.0
        %888 = vmatprep.subr.mxu0 0.0
        %889 = vmatpush1.msra.mxu0 0.0
        %890 = vmatprep.subr.mxu0 0.0
        %891 = vmatpush1.msra.mxu0 0.0
        %892 = vmatprep.subr.mxu0 0.0
        %893 = vmatpush1.msra.mxu0 0.0
        %894 = vmatprep.subr.mxu0 0.0
        %895 = vmatpush1.msra.mxu0 0.0
        %896 = vmatprep.subr.mxu0 0.0
        %897 = vmatpush1.msra.mxu0 0.0
        %898 = vmatprep.subr.mxu0 0.0
        %899 = vmatpush1.msra.mxu0 0.0
        %900 = vmatprep.subr.mxu0 0.0
        %901 = vmatpush1.msra.mxu0 0.0
        %902 = vmatprep.subr.mxu0 0.0
        %903 = vmatpush1.msra.mxu0 0.0
        %904 = vmatprep.subr.mxu0 0.0
        %905 = vmatpush1.msra.mxu0 0.0
        %906 = vmatprep.subr.mxu0 0.0
        %907 = vmatpush1.msra.mxu0 0.0
        %908 = vmatprep.subr.mxu0 0.0
        %909 = vmatpush1.msra.mxu0 0.0
        %910 = vmatprep.subr.mxu0 0.0
        %911 = vmatpush1.msra.mxu0 0.0
        %912 = vmatprep.mubr.f32.mxu0 0.0
        %913 = vmatmul.mubr.f32.gmra.mrb[0].mxu0 %v846
        %v914 = vpop.f32.mrb[0].mxu0
        %v915 = vadd.f32 %v843, %v914
        %v916 = vpop.f32.mrb[0].mxu0
        %917 = vdwg.mxu0
        %v918 = vxor.u32 %v915, 2147483648
        %v919 = vmul.f32 %v918, 1.442695
        %v920 = vpow.pop %v919
        %v921 = vadd.f32 %v920, 1.0
        %v922 = vrcp.pop %v921
        %v923 = vmul.f32 1.0, %v922
        %924 = vst [vmem:[%s453] sm:$0x1] %v923
        %s925 = sand.u32 %s215, 1
        %s926 = scalar_lea.sflag [#allocation4], %s925
        %s927 = sand.u32 %s215, 1
        %s928 = smul.addr %s927, 8
        %s929 = scalar_lea.vmem [#allocation16], %s928
        %s930 = sand.u32 %s241, 1
        %s931 = scalar_lea.sflag [#allocation18], %s930
        %s932 = sand.u32 %s241, 1
        %s933 = scalar_lea.vmem [#allocation17], %s932
        // Predicated region
        $region85: #{efficientnet_forward.14} parent=51 // pred_check
          %p934 = pneg %p225
        $region86: #{efficientnet_forward.14} parent=51 // pred_check_branch
          %936 = sbr.rel (%p934) target = $region88
        $region87: #{efficientnet_forward.14} parent=51 // pred_region
          %s938 = ssub.s32 128, 128
          %939 = vsyncadd %s926, %s938
          %s940 = smul.addr %s34, 4
          %s941 = smul.addr %s940, 32
          %s942 = scalar_lea.hbm %s8, %s941
          %s943 = sshll.u32 %s929, 4
          %s944 = int_to_ptr.vmem [resolvable:$true] %s943
          %949 = dma.vmem_to_hbm [thread:$0]  %s944, 128, %s942, %s926, 32, 32, 2
        $region88: #{efficientnet_forward.14} parent=51 // pred_fallthru
          _
        // Predicated region
        $region89: #{efficientnet_forward.14} parent=51 // pred_check
          %p950 = pneg %p251
        $region90: #{efficientnet_forward.14} parent=51 // pred_check_branch
          %952 = sbr.rel (%p950) target = $region92
        $region91: #{efficientnet_forward.14} parent=51 // pred_region
          %s954 = ssub.s32 16, 16
          %955 = vsyncadd %s931, %s954
          %s956 = smul.addr %s34, 16
          %s957 = scalar_lea.hbm %s9, %s956
          %s959 = sshll.u32 %s933, 4
          %s960 = int_to_ptr.vmem [resolvable:$true] %s959
          %962 = dma.vmem_to_hbm [thread:$0]  %s960, 16, %s957, %s931
        $region92: #{efficientnet_forward.14} parent=51 // pred_fallthru
          _
      $region52: #{efficientnet_forward.14} parent=5 // pred_fallthru
        _
      %p963 = scmp.le.s32.totalorder 2, %s29
      // Predicated region
      $region93: #{efficientnet_forward.14} parent=5 // pred_check
        %p964 = pneg %p963
      $region94: #{efficientnet_forward.14} parent=5 // pred_check_branch
        %966 = sbr.rel (%p964) target = $region96
      $region95: #{efficientnet_forward.14} parent=5 // pred_region
        %s967 = ssub.s32 %s29, 2
        // Predicated region
        $region97: #{efficientnet_forward.14} parent=95 // pred_check
          %p968 = pneg %p231
        $region98: #{efficientnet_forward.14} parent=95 // pred_check_branch
          %970 = sbr.rel (%p968) target = $region100
        $region99: #{efficientnet_forward.14} parent=95 // pred_region
          %s971 = sand.u32 %s216, 1
          %s972 = scalar_lea.sflag [#allocation4], %s971
          %s973 = sand.u32 %s216, 1
          %s974 = smul.addr %s973, 8
          %s975 = scalar_lea.vmem [#allocation16], %s974
          %976 = dma.done %s972, 128
        $region100: #{efficientnet_forward.14} parent=95 // pred_fallthru
          _
        // Predicated region
        $region101: #{efficientnet_forward.14} parent=95 // pred_check
          %p977 = pneg %p257
        $region102: #{efficientnet_forward.14} parent=95 // pred_check_branch
          %979 = sbr.rel (%p977) target = $region104
        $region103: #{efficientnet_forward.14} parent=95 // pred_region
          %s980 = sand.u32 %s242, 1
          %s981 = scalar_lea.sflag [#allocation18], %s980
          %s982 = sand.u32 %s242, 1
          %s983 = scalar_lea.vmem [#allocation17], %s982
          %984 = dma.done %s981, 16
        $region104: #{efficientnet_forward.14} parent=95 // pred_fallthru
          _
      $region96: #{efficientnet_forward.14} parent=5 // pred_fallthru
        _
    $region6: #{efficientnet_forward.14} parent=1 // loop_footer
      %s33 = sadd.s32 1, %s29
    $region7: #{efficientnet_forward.14} parent=1 // loop_footer_branch
      %28 = sbr.rel target = $region3
    $region8: #{efficientnet_forward.14} parent=1 // loop_exit
      _
    %985 = vsyncpa [#allocation3], 1
    %s986 = scalar_lea.sflag [#allocation3], 1
    %987 = vsyncpa %s986, 1
    %988 = vsyncpa [#allocation6], 1
    %989 = vsyncpa [#allocation9], 1
    %990 = vsyncpa [#allocation12], 1
    %991 = vsyncpa [#allocation15], 1
    %992 = vsyncpa [#allocation4], 1
    %s993 = scalar_lea.sflag [#allocation4], 1
    %994 = vsyncpa %s993, 1
    %995 = vsyncpa [#allocation18], 1
    %s996 = scalar_lea.sflag [#allocation18], 1
    %997 = vsyncpa %s996, 1

// kernel: efficientnet_forward.17
$region0: #{efficientnet_forward.17}
  #allocation0 [shape = 'u32[]', space=smem, size = 0x4, offset = 0x4, fixed_abs, tag = 'smem constant byte address 0x4 - core index']
  #allocation1 [shape = 'u32[144,128]{1,0:T(1,128)}', space=vmem, size = 0x12000, scoped, tag = 'internal scratch']
  #allocation2 [shape = 'f32[1,1]{1,0:T(1,128)S(1)}', space=vmem, size = 0x200, scoped, tag = 'scoped memory for efficientnet_forward.17']
  %s0 = inlined_call_operand.hbm [shape: f32[2,1792], index: 0, kind: input, shape index: {}]
  %s1 = inlined_call_operand.hbm [shape: f32[1,1792], index: 1, kind: input, shape index: {}]
  %s2 = inlined_call_operand.<no memory space> [shape: f32[1,1], index: 2, kind: input, shape index: {}]
  %s3 = inlined_call_operand.hbm [shape: f32[2,1], index: 3, kind: input, shape index: {}]
  %s4 = inlined_call_operand.hbm [shape: f32[2,1], index: 4, kind: output, shape index: {0}]
  %s5 = inlined_call_operand.hbm [shape: f32[1,1], index: 5, kind: output, shape index: {1}]
  %6 = xla_tuple %s4, %s5
  %s7 = sld [smem:[#allocation0]]
  $region46: #{efficientnet_forward.17} parent=0
    _
  %s9 = ssub.s32 1, %s7
  %s10 = scalar_select 0, %s9, %s7
  %v11 = vstv %s2
  %12 = vst [vmem:[#allocation2] sm:$0x1] %v11
  $region1: #{efficientnet_forward.17} parent=0
    #allocation3 [shape = 'u8[14336]{0}', space=vmem, size = 0x3800, scoped, tag = 'input window, operand 0, single buffered']
    #allocation4 [shape = 's32[1]{0}', space=sflag, size = 0x4, scoped, tag = 'scoped memory for efficientnet_forward.17']
    #allocation5 [shape = 's32[1]{0}', space=sflag, size = 0x4, scoped, tag = 'scoped memory for efficientnet_forward.17']
    #allocation6 [shape = 'u8[7168]{0}', space=vmem, size = 0x1c00, scoped, tag = 'input window, operand 1, single buffered']
    #allocation7 [shape = 's32[1]{0}', space=sflag, size = 0x4, scoped, tag = 'scoped memory for efficientnet_forward.17']
    #allocation8 [shape = 'u8[1024]{0}', space=vmem, size = 0x400, scoped, tag = 'input window, operand 3, single buffered']
    #allocation9 [shape = 'u8[1024]{0}', space=vmem, size = 0x400, scoped, tag = 'output window, operand 0, single buffered']
    #allocation10 [shape = 'u8[512]{0}', space=vmem, size = 0x400, scoped, tag = 'output window, operand 1, single buffered']
    #allocation11 [shape = 's32[1]{0}', space=sflag, size = 0x4, scoped, tag = 'scoped memory for efficientnet_forward.17']
    %13 = vsyncpa [#allocation4], 0
    %14 = vsyncpa [#allocation7], 0
    %15 = vsyncpa [#allocation5], 0
    %16 = vsyncpa [#allocation11], 0
    // Predicated region
    $region2: #{efficientnet_forward.17} parent=1 // pred_check
      _
    $region3: #{efficientnet_forward.17} parent=1 // pred_check_branch
      %18 = sbr.rel (0) target = $region5
    $region4: #{efficientnet_forward.17} parent=1 // pred_region
      %s20 = ssub.s32 448, 448
      %21 = vsyncadd [#allocation4], %s20
      %s23 = sshll.u32 [#allocation3], 4
      %s24 = int_to_ptr.vmem [resolvable:$true] %s23
      %26 = dma.hbm_to_vmem [thread:$0]  %s0, 448, %s24, [#allocation4]
    $region5: #{efficientnet_forward.17} parent=1 // pred_fallthru
      _
    // Predicated region
    $region6: #{efficientnet_forward.17} parent=1 // pred_check
      _
    $region7: #{efficientnet_forward.17} parent=1 // pred_check_branch
      %28 = sbr.rel (0) target = $region9
    $region8: #{efficientnet_forward.17} parent=1 // pred_region
      %s30 = ssub.s32 224, 224
      %31 = vsyncadd [#allocation7], %s30
      %s33 = sshll.u32 [#allocation6], 4
      %s34 = int_to_ptr.vmem [resolvable:$true] %s33
      %36 = dma.hbm_to_vmem [thread:$0]  %s1, 224, %s34, [#allocation7]
    $region9: #{efficientnet_forward.17} parent=1 // pred_fallthru
      _
    // Predicated region
    $region10: #{efficientnet_forward.17} parent=1 // pred_check
      _
    $region11: #{efficientnet_forward.17} parent=1 // pred_check_branch
      %38 = sbr.rel (0) target = $region13
    $region12: #{efficientnet_forward.17} parent=1 // pred_region
      _
    $region13: #{efficientnet_forward.17} parent=1 // pred_fallthru
      _
    // Predicated region
    $region14: #{efficientnet_forward.17} parent=1 // pred_check
      _
    $region15: #{efficientnet_forward.17} parent=1 // pred_check_branch
      %40 = sbr.rel (0) target = $region17
    $region16: #{efficientnet_forward.17} parent=1 // pred_region
      %s42 = ssub.s32 32, 32
      %43 = vsyncadd [#allocation7], %s42
      %s45 = sshll.u32 [#allocation8], 4
      %s46 = int_to_ptr.vmem [resolvable:$true] %s45
      %48 = dma.hbm_to_vmem [thread:$0]  %s3, 32, %s46, [#allocation7]
    $region17: #{efficientnet_forward.17} parent=1 // pred_fallthru
      _
    // Predicated region
    $region18: #{efficientnet_forward.17} parent=1 // pred_check
      _
    $region19: #{efficientnet_forward.17} parent=1 // pred_check_branch
      %50 = sbr.rel (0) target = $region21
    $region20: #{efficientnet_forward.17} parent=1 // pred_region
      %51 = dma.done [#allocation4], 448
    $region21: #{efficientnet_forward.17} parent=1 // pred_fallthru
      _
    // Predicated region
    $region22: #{efficientnet_forward.17} parent=1 // pred_check
      _
    $region23: #{efficientnet_forward.17} parent=1 // pred_check_branch
      %53 = sbr.rel (0) target = $region25
    $region24: #{efficientnet_forward.17} parent=1 // pred_region
      %54 = dma.done [#allocation7], 224
    $region25: #{efficientnet_forward.17} parent=1 // pred_fallthru
      _
    // Predicated region
    $region26: #{efficientnet_forward.17} parent=1 // pred_check
      _
    $region27: #{efficientnet_forward.17} parent=1 // pred_check_branch
      %56 = sbr.rel (0) target = $region29
    $region28: #{efficientnet_forward.17} parent=1 // pred_region
      %57 = dma.done [#allocation7], 32
    $region29: #{efficientnet_forward.17} parent=1 // pred_fallthru
      _
    %v58 = vld [vmem:[#allocation3] sm:$0xff]
    %v59 = vld [vmem:[#allocation3 + $0x8] sm:$0xff]
    %v60 = vld [vmem:[#allocation3 + $0x10] sm:$0xff]
    %v61 = vld [vmem:[#allocation3 + $0x18] sm:$0xf]
    %v62 = vld [vmem:[#allocation6] sm:$0xff]
    %v63 = vld [vmem:[#allocation6 + $0x8] sm:$0x3f]
    %v66 = vlaneseq
    %v67 = vshrl.u32 %v66, 7
    %v68 = vsub.s32 0, %v67
    %v69 = vrot.slane %v62, %v68
    %v70 = vlaneseq
    %v71 = vshrl.u32 %v70, 7
    %v72 = vsub.s32 1, %v71
    %v73 = vrot.slane %v62, %v72
    %v74 = vlaneseq
    %v75 = vshrl.u32 %v74, 7
    %v76 = vsub.s32 2, %v75
    %v77 = vrot.slane %v62, %v76
    %v78 = vlaneseq
    %v79 = vshrl.u32 %v78, 7
    %v80 = vsub.s32 3, %v79
    %v81 = vrot.slane %v62, %v80
    %v82 = vlaneseq
    %v83 = vshrl.u32 %v82, 7
    %v84 = vsub.s32 4, %v83
    %v85 = vrot.slane %v62, %v84
    %v86 = vlaneseq
    %v87 = vshrl.u32 %v86, 7
    %v88 = vsub.s32 5, %v87
    %v89 = vrot.slane %v62, %v88
    %v90 = vlaneseq
    %v91 = vshrl.u32 %v90, 7
    %v92 = vsub.s32 6, %v91
    %v93 = vrot.slane %v62, %v92
    %v94 = vlaneseq
    %v95 = vshrl.u32 %v94, 7
    %v96 = vsub.s32 7, %v95
    %v97 = vrot.slane %v62, %v96
    %v98 = vlaneseq
    %v99 = vshrl.u32 %v98, 7
    %v100 = vsub.s32 0, %v99
    %v101 = vrot.slane %v63, %v100
    %v102 = vlaneseq
    %v103 = vshrl.u32 %v102, 7
    %v104 = vsub.s32 1, %v103
    %v105 = vrot.slane %v63, %v104
    %v106 = vlaneseq
    %v107 = vshrl.u32 %v106, 7
    %v108 = vsub.s32 2, %v107
    %v109 = vrot.slane %v63, %v108
    %v110 = vlaneseq
    %v111 = vshrl.u32 %v110, 7
    %v112 = vsub.s32 3, %v111
    %v113 = vrot.slane %v63, %v112
    %v114 = vlaneseq
    %v115 = vshrl.u32 %v114, 7
    %v116 = vsub.s32 4, %v115
    %v117 = vrot.slane %v63, %v116
    %v118 = vlaneseq
    %v119 = vshrl.u32 %v118, 7
    %v120 = vsub.s32 5, %v119
    %v121 = vrot.slane %v63, %v120
    %v122 = vcombine.low %v69, %v73
    %v123 = vcombine.low %v77, %v81
    %v125 = vunpack.c.l.s4 1983009808
    %v126 = vunpack.c.0.s8 %v125
    %v127 = vlaneseq
    %v128 = vshrl.u32 %v127, 7
    %v129 = vsub.s32 %v126, %v128
    %v130 = vrot.slane %v122, %v129
    %v132 = vunpack.c.l.s4 1983009808
    %v133 = vunpack.c.0.s8 %v132
    %v134 = vlaneseq
    %v135 = vshrl.u32 %v134, 7
    %v136 = vsub.s32 %v133, %v135
    %v137 = vrot.slane %v123, %v136
    %v138 = vcombine.low %v130, %v137
    %v139 = vcombine.low %v85, %v89
    %v140 = vcombine.low %v93, %v97
    %v142 = vunpack.c.l.s4 1983009808
    %v143 = vunpack.c.0.s8 %v142
    %v144 = vlaneseq
    %v145 = vshrl.u32 %v144, 7
    %v146 = vsub.s32 %v143, %v145
    %v147 = vrot.slane %v139, %v146
    %v149 = vunpack.c.l.s4 1983009808
    %v150 = vunpack.c.0.s8 %v149
    %v151 = vlaneseq
    %v152 = vshrl.u32 %v151, 7
    %v153 = vsub.s32 %v150, %v152
    %v154 = vrot.slane %v140, %v153
    %v155 = vcombine.low %v147, %v154
    %v156 = vcombine.low %v101, %v105
    %v157 = vcombine.low %v109, %v113
    %v159 = vunpack.c.l.s4 1983009808
    %v160 = vunpack.c.0.s8 %v159
    %v161 = vlaneseq
    %v162 = vshrl.u32 %v161, 7
    %v163 = vsub.s32 %v160, %v162
    %v164 = vrot.slane %v156, %v163
    %v166 = vunpack.c.l.s4 1983009808
    %v167 = vunpack.c.0.s8 %v166
    %v168 = vlaneseq
    %v169 = vshrl.u32 %v168, 7
    %v170 = vsub.s32 %v167, %v169
    %v171 = vrot.slane %v157, %v170
    %v172 = vcombine.low %v164, %v171
    %v173 = vcombine.low %v117, %v121
    %v175 = vunpack.c.l.s4 1983009808
    %v176 = vunpack.c.0.s8 %v175
    %v177 = vlaneseq
    %v178 = vshrl.u32 %v177, 7
    %v179 = vsub.s32 %v176, %v178
    %v180 = vrot.slane %v173, %v179
    %v185 = vmul.f32 %v58, %v138
    %v186 = vmul.f32 %v59, %v155
    %v187 = vmul.f32 %v60, %v172
    %v188 = vmul.f32 %v61, %v180
    %v193 = vcombine.high %v185, %v185
    %v195 = vunpack.c.l.s4 1983009808
    %v196 = vunpack.c.0.s8 %v195
    %v197 = vlaneseq
    %v198 = vshrl.u32 %v197, 7
    %v199 = vsub.s32 %v196, %v198
    %v200 = vrot.slane %v185, %v199
    %v202 = vunpack.c.l.s4 1983009808
    %v203 = vunpack.c.0.s8 %v202
    %v204 = vlaneseq
    %v205 = vshrl.u32 %v204, 7
    %v206 = vsub.s32 %v203, %v205
    %v207 = vrot.slane %v193, %v206
    %v208 = vcombine.high %v200, %v200
    %v209 = vcombine.high %v207, %v207
    %v210 = vcombine.high %v186, %v186
    %v212 = vunpack.c.l.s4 1983009808
    %v213 = vunpack.c.0.s8 %v212
    %v214 = vlaneseq
    %v215 = vshrl.u32 %v214, 7
    %v216 = vsub.s32 %v213, %v215
    %v217 = vrot.slane %v186, %v216
    %v219 = vunpack.c.l.s4 1983009808
    %v220 = vunpack.c.0.s8 %v219
    %v221 = vlaneseq
    %v222 = vshrl.u32 %v221, 7
    %v223 = vsub.s32 %v220, %v222
    %v224 = vrot.slane %v210, %v223
    %v225 = vcombine.high %v217, %v217
    %v226 = vcombine.high %v224, %v224
    %v227 = vcombine.high %v187, %v187
    %v229 = vunpack.c.l.s4 1983009808
    %v230 = vunpack.c.0.s8 %v229
    %v231 = vlaneseq
    %v232 = vshrl.u32 %v231, 7
    %v233 = vsub.s32 %v230, %v232
    %v234 = vrot.slane %v187, %v233
    %v236 = vunpack.c.l.s4 1983009808
    %v237 = vunpack.c.0.s8 %v236
    %v238 = vlaneseq
    %v239 = vshrl.u32 %v238, 7
    %v240 = vsub.s32 %v237, %v239
    %v241 = vrot.slane %v227, %v240
    %v242 = vcombine.high %v234, %v234
    %v243 = vcombine.high %v241, %v241
    %v245 = vunpack.c.l.s4 1983009808
    %v246 = vunpack.c.0.s8 %v245
    %v247 = vlaneseq
    %v248 = vshrl.u32 %v247, 7
    %v249 = vsub.s32 %v246, %v248
    %v250 = vrot.slane %v188, %v249
    %v251 = vcombine.high %v250, %v250
    %vm266 = vcmask 1041408
    %v267 = vsel %vm266, %v200, 0.0
    %v268 = vsel %vm266, %v208, 0.0
    %v269 = vadd.f32 %v267, %v268
    %v270 = vsel %vm266, %v207, 0.0
    %v271 = vadd.f32 %v269, %v270
    %v272 = vsel %vm266, %v209, 0.0
    %v273 = vadd.f32 %v271, %v272
    %v274 = vsel %vm266, %v217, 0.0
    %v275 = vadd.f32 %v273, %v274
    %v276 = vsel %vm266, %v225, 0.0
    %v277 = vadd.f32 %v275, %v276
    %v278 = vsel %vm266, %v224, 0.0
    %v279 = vadd.f32 %v277, %v278
    %v280 = vsel %vm266, %v226, 0.0
    %v281 = vadd.f32 %v279, %v280
    %v282 = vsel %vm266, %v234, 0.0
    %v283 = vadd.f32 %v281, %v282
    %v284 = vsel %vm266, %v242, 0.0
    %v285 = vadd.f32 %v283, %v284
    %v286 = vsel %vm266, %v241, 0.0
    %v287 = vadd.f32 %v285, %v286
    %v288 = vsel %vm266, %v243, 0.0
    %v289 = vadd.f32 %v287, %v288
    %v290 = vsel %vm266, %v250, 0.0
    %v291 = vadd.f32 %v289, %v290
    %v292 = vsel %vm266, %v251, 0.0
    %v293 = vadd.f32 %v291, %v292
    %294 = vadd.xlane.f32.xlu0 %v293
    %v295 = vpop.xlane.xlu0 %294
    %v296 = vld [vmem:[#allocation2] sm:$0x1]
    %v298 = vlaneseq
    %v299 = vshrl.u32 %v298, 7
    %v300 = vsub.s32 0, %v299
    %v301 = vrot.slane %v296, %v300
    %v303 = vadd.f32 %v295, %v301
    %vm304 = vcmask 1024
    %305 = vst.msk [vmem:[#allocation9] sm:$0x3] %vm304, %v303
    %v306 = vld [vmem:[#allocation8] sm:$0x3]
    %v307 = vmax.f32 %v303, 0.0
    %v308 = vmul.f32 %v303, %v306
    %v309 = vsub.f32 %v307, %v308
    %v310 = vand.u32 2147483647, %v303
    %v311 = vsub.f32 0.0, %v310
    %v312 = vmul.f32 %v311, 1.442695
    %v313 = vpow.pop %v312
    %v314 = vadd.f32 %v313, 1.0
    %v315 = vlog2.pop %v314
    %v316 = vmul.f32 %v315, 0.6931472
    %v317 = vmul.f32 -0.5, %v313
    %v318 = vadd.f32 %v317, 1.0
    %v319 = vmul.f32 %v318, %v313
    %v320 = vand.u32 2147483647, %v313
    %vm321 = vcmp.lt.f32.partialorder %v320, 0.0004427343
    %v322 = vsel %vm321, %v319, %v316
    %v323 = vadd.f32 %v309, %v322
    %v324 = vsel %vm304, %v323, 0.0
    %v325 = vrot.slane %v324, 4
    %v326 = vadd.f32 %v324, %v325
    %v327 = vrot.slane %v326, 2
    %v328 = vadd.f32 %v326, %v327
    %v329 = vrot.slane %v328, 1
    %v330 = vadd.f32 %v328, %v329
    %v331 = vrcp.pop 2.0
    %v332 = vmul.f32 %v330, %v331
    %vm333 = vcmask 0
    %334 = vst.msk [vmem:[#allocation10] sm:$0x1] %vm333, %v332
    // Predicated region
    $region30: #{efficientnet_forward.17} parent=1 // pred_check
      _
    $region31: #{efficientnet_forward.17} parent=1 // pred_check_branch
      %336 = sbr.rel (0) target = $region33
    $region32: #{efficientnet_forward.17} parent=1 // pred_region
      %s338 = ssub.s32 32, 32
      %339 = vsyncadd [#allocation5], %s338
      %s341 = sshll.u32 [#allocation9], 4
      %s342 = int_to_ptr.vmem [resolvable:$true] %s341
      %344 = dma.vmem_to_hbm [thread:$0]  %s342, 32, %s4, [#allocation5]
    $region33: #{efficientnet_forward.17} parent=1 // pred_fallthru
      _
    // Predicated region
    $region34: #{efficientnet_forward.17} parent=1 // pred_check
      _
    $region35: #{efficientnet_forward.17} parent=1 // pred_check_branch
      %346 = sbr.rel (0) target = $region37
    $region36: #{efficientnet_forward.17} parent=1 // pred_region
      %s348 = ssub.s32 16, 16
      %349 = vsyncadd [#allocation11], %s348
      %s351 = sshll.u32 [#allocation10], 4
      %s352 = int_to_ptr.vmem [resolvable:$true] %s351
      %354 = dma.vmem_to_hbm [thread:$0]  %s352, 16, %s5, [#allocation11]
    $region37: #{efficientnet_forward.17} parent=1 // pred_fallthru
      _
    // Predicated region
    $region38: #{efficientnet_forward.17} parent=1 // pred_check
      _
    $region39: #{efficientnet_forward.17} parent=1 // pred_check_branch
      %356 = sbr.rel (0) target = $region41
    $region40: #{efficientnet_forward.17} parent=1 // pred_region
      %357 = dma.done [#allocation5], 32
    $region41: #{efficientnet_forward.17} parent=1 // pred_fallthru
      _
    // Predicated region
    $region42: #{efficientnet_forward.17} parent=1 // pred_check
      _
    $region43: #{efficientnet_forward.17} parent=1 // pred_check_branch
      %359 = sbr.rel (0) target = $region45
    $region44: #{efficientnet_forward.17} parent=1 // pred_region
      %360 = dma.done [#allocation11], 16
    $region45: #{efficientnet_forward.17} parent=1 // pred_fallthru
      _
    %361 = vsyncpa [#allocation4], 1
    %362 = vsyncpa [#allocation7], 1
    %363 = vsyncpa [#allocation5], 1
    %364 = vsyncpa [#allocation11], 1

// kernel: efficientnet_forward.16
$region0: #{efficientnet_forward.16}
  #allocation0 [shape = 'u32[]', space=smem, size = 0x4, offset = 0x4, fixed_abs, tag = 'smem constant byte address 0x4 - core index']
  #allocation1 [shape = 'u32[144,128]{1,0:T(1,128)}', space=vmem, size = 0x12000, scoped, tag = 'internal scratch']
  %s0 = inlined_call_operand.hbm [shape: bf16[2,16,64], index: 0, kind: input, shape index: {}]
  %s1 = inlined_call_operand.hbm [shape: bf16[64,1792], index: 1, kind: input, shape index: {}]
  %s2 = inlined_call_operand.hbm [shape: f32[1,1792], index: 2, kind: input, shape index: {}]
  %s3 = inlined_call_operand.hbm [shape: f32[1,1792], index: 3, kind: input, shape index: {}]
  %s4 = inlined_call_operand.hbm [shape: f32[2,1,1792], index: 4, kind: output, shape index: {}]
  %s5 = sld [smem:[#allocation0]]
  $region65: #{efficientnet_forward.16} parent=0
    _
  %s7 = ssub.s32 1, %s5
  %s8 = scalar_select 0, %s7, %s5
  $region1: #{efficientnet_forward.16} parent=0
    #allocation2 [shape = 'u8[8192]{0}', space=vmem, size = 0x2000, scoped, tag = 'input window, operand 0']
    #allocation3 [shape = 's32[2]{0}', space=sflag, size = 0x8, scoped, tag = 'scoped memory for efficientnet_forward.16']
    #allocation4 [shape = 's32[2]{0}', space=sflag, size = 0x8, scoped, tag = 'scoped memory for efficientnet_forward.16']
    #allocation5 [shape = 'u8[65536]{0}', space=vmem, size = 0x10000, scoped, tag = 'input window, operand 1']
    #allocation6 [shape = 's32[2]{0}', space=sflag, size = 0x8, scoped, tag = 'scoped memory for efficientnet_forward.16']
    #allocation7 [shape = 'u8[2048]{0}', space=vmem, size = 0x800, scoped, tag = 'input window, operand 2']
    #allocation8 [shape = 'u8[2048]{0}', space=vmem, size = 0x800, scoped, tag = 'input window, operand 3']
    #allocation9 [shape = 's32[2]{0}', space=sflag, size = 0x8, scoped, tag = 'scoped memory for efficientnet_forward.16']
    #allocation10 [shape = 'u8[2048]{0}', space=vmem, size = 0x800, scoped, tag = 'output window, operand 0']
    %9 = vsyncpa [#allocation3], 0
    %s10 = scalar_lea.sflag [#allocation3], 1
    %11 = vsyncpa %s10, 0
    %12 = vsyncpa [#allocation6], 0
    %s13 = scalar_lea.sflag [#allocation6], 1
    %14 = vsyncpa %s13, 0
    %15 = vsyncpa [#allocation9], 0
    %s16 = scalar_lea.sflag [#allocation9], 1
    %17 = vsyncpa %s16, 0
    %18 = vsyncpa [#allocation4], 0
    %s19 = scalar_lea.sflag [#allocation4], 1
    %20 = vsyncpa %s19, 0
    loop: start=0, step=1, limit=16
    $region2: #{efficientnet_forward.16} parent=1 // loop_pre_header
      _
    $region3: #{efficientnet_forward.16} parent=1 // loop_header
      %s22 = sphi 0, %s26
      %p23 = scmp.ge.s32.totalorder %s22, 16
      %s29 = sphi 0, %s41
      %s30 = sphi 0, %s37
      %s31 = sphi 0, %s29
      %s32 = sphi 0, %s30
      %s33 = sphi 0, %s31
      %s34 = sphi 0, %s32
      %s44 = sphi 0, %s46
      %s47 = sphi 0, %s44
      %s48 = sphi 0, %s47
      %s64 = sphi 0, %s48
      %s70 = sphi 0, %s72
      %s73 = sphi 0, %s70
      %s74 = sphi 0, %s73
      %s90 = sphi 0, %s74
      %s96 = sphi 0, %s98
      %s99 = sphi 0, %s96
      %s100 = sphi 0, %s99
      %s116 = sphi 0, %s100
      %s122 = sphi 0, %s124
      %s125 = sphi 0, %s122
      %s126 = sphi 0, %s125
      %s142 = sphi 0, %s126
      %s150 = sphi 0, %s152
      %s153 = sphi 0, %s150
      %s154 = sphi 0, %s153
      %s170 = sphi 0, %s154
    $region4: #{efficientnet_forward.16} parent=1 // loop_header_branch
      %25 = sbr.rel (%p23) target = $region8
    $region5: #{efficientnet_forward.16} parent=1 // loop_body
      %s27 = ssub.s32 %s22, 1
      %s28 = ssub.s32 %s22, 2
      %s35 = sadd.s32 1, %s30
      %p36 = scmp.ge.s32.totalorder %s35, 7
      %s37 = scalar_select %p36, 0, %s35
      %s38 = sadd.s32 1, %s29
      %s39 = scalar_select %p36, %s38, %s29
      %p40 = scmp.ge.s32.totalorder %s39, 2
      %s41 = scalar_select %p40, 0, %s39
      %s42 = ssub.s32 %s29, %s41
      %p43 = scmp.eq.s32.totalorder %s42, 0
      %s45 = sadd.s32 %s44, 1
      %s46 = scalar_select %p43, %s44, %s45
      %p49 = pneg %p43
      %p50 = scmp.eq.s32.totalorder %s22, 13
      %p51 = por %p49, %p50
      %p52 = scmp.ne.s32.totalorder %s44, %s47
      %p53 = scmp.eq.s32.totalorder %s22, 0
      %p54 = por %p52, %p53
      %p55 = scmp.ne.s32.totalorder %s44, %s47
      %p56 = scmp.eq.s32.totalorder %s27, 13
      %p57 = por %p55, %p56
      %p58 = scmp.ne.s32.totalorder %s47, %s48
      %p59 = scmp.eq.s32.totalorder %s27, 0
      %p60 = por %p58, %p59
      %p61 = scmp.ne.s32.totalorder %s47, %s48
      %p62 = scmp.eq.s32.totalorder %s28, 13
      %p63 = por %p61, %p62
      %p65 = scmp.ne.s32.totalorder %s48, %s64
      %p66 = scmp.eq.s32.totalorder %s28, 0
      %p67 = por %p65, %p66
      %s68 = ssub.s32 %s30, %s37
      %p69 = scmp.eq.s32.totalorder %s68, 0
      %s71 = sadd.s32 %s70, 1
      %s72 = scalar_select %p69, %s70, %s71
      %p75 = pneg %p69
      %p76 = scmp.eq.s32.totalorder %s22, 13
      %p77 = por %p75, %p76
      %p78 = scmp.ne.s32.totalorder %s70, %s73
      %p79 = scmp.eq.s32.totalorder %s22, 0
      %p80 = por %p78, %p79
      %p81 = scmp.ne.s32.totalorder %s70, %s73
      %p82 = scmp.eq.s32.totalorder %s27, 13
      %p83 = por %p81, %p82
      %p84 = scmp.ne.s32.totalorder %s73, %s74
      %p85 = scmp.eq.s32.totalorder %s27, 0
      %p86 = por %p84, %p85
      %p87 = scmp.ne.s32.totalorder %s73, %s74
      %p88 = scmp.eq.s32.totalorder %s28, 13
      %p89 = por %p87, %p88
      %p91 = scmp.ne.s32.totalorder %s74, %s90
      %p92 = scmp.eq.s32.totalorder %s28, 0
      %p93 = por %p91, %p92
      %s94 = ssub.s32 %s30, %s37
      %p95 = scmp.eq.s32.totalorder %s94, 0
      %s97 = sadd.s32 %s96, 1
      %s98 = scalar_select %p95, %s96, %s97
      %p101 = pneg %p95
      %p102 = scmp.eq.s32.totalorder %s22, 13
      %p103 = por %p101, %p102
      %p104 = scmp.ne.s32.totalorder %s96, %s99
      %p105 = scmp.eq.s32.totalorder %s22, 0
      %p106 = por %p104, %p105
      %p107 = scmp.ne.s32.totalorder %s96, %s99
      %p108 = scmp.eq.s32.totalorder %s27, 13
      %p109 = por %p107, %p108
      %p110 = scmp.ne.s32.totalorder %s99, %s100
      %p111 = scmp.eq.s32.totalorder %s27, 0
      %p112 = por %p110, %p111
      %p113 = scmp.ne.s32.totalorder %s99, %s100
      %p114 = scmp.eq.s32.totalorder %s28, 13
      %p115 = por %p113, %p114
      %p117 = scmp.ne.s32.totalorder %s100, %s116
      %p118 = scmp.eq.s32.totalorder %s28, 0
      %p119 = por %p117, %p118
      %s120 = ssub.s32 %s30, %s37
      %p121 = scmp.eq.s32.totalorder %s120, 0
      %s123 = sadd.s32 %s122, 1
      %s124 = scalar_select %p121, %s122, %s123
      %p127 = pneg %p121
      %p128 = scmp.eq.s32.totalorder %s22, 13
      %p129 = por %p127, %p128
      %p130 = scmp.ne.s32.totalorder %s122, %s125
      %p131 = scmp.eq.s32.totalorder %s22, 0
      %p132 = por %p130, %p131
      %p133 = scmp.ne.s32.totalorder %s122, %s125
      %p134 = scmp.eq.s32.totalorder %s27, 13
      %p135 = por %p133, %p134
      %p136 = scmp.ne.s32.totalorder %s125, %s126
      %p137 = scmp.eq.s32.totalorder %s27, 0
      %p138 = por %p136, %p137
      %p139 = scmp.ne.s32.totalorder %s125, %s126
      %p140 = scmp.eq.s32.totalorder %s28, 13
      %p141 = por %p139, %p140
      %p143 = scmp.ne.s32.totalorder %s126, %s142
      %p144 = scmp.eq.s32.totalorder %s28, 0
      %p145 = por %p143, %p144
      %s146 = ssub.s32 %s29, %s41
      %s147 = ssub.s32 %s30, %s37
      %s148 = sor.u32 %s146, %s147
      %p149 = scmp.eq.s32.totalorder %s148, 0
      %s151 = sadd.s32 %s150, 1
      %s152 = scalar_select %p149, %s150, %s151
      %p155 = pneg %p149
      %p156 = scmp.eq.s32.totalorder %s22, 13
      %p157 = por %p155, %p156
      %p158 = scmp.ne.s32.totalorder %s150, %s153
      %p159 = scmp.eq.s32.totalorder %s22, 0
      %p160 = por %p158, %p159
      %p161 = scmp.ne.s32.totalorder %s150, %s153
      %p162 = scmp.eq.s32.totalorder %s27, 13
      %p163 = por %p161, %p162
      %p164 = scmp.ne.s32.totalorder %s153, %s154
      %p165 = scmp.eq.s32.totalorder %s27, 0
      %p166 = por %p164, %p165
      %p167 = scmp.ne.s32.totalorder %s153, %s154
      %p168 = scmp.eq.s32.totalorder %s28, 13
      %p169 = por %p167, %p168
      %p171 = scmp.ne.s32.totalorder %s154, %s170
      %p172 = scmp.eq.s32.totalorder %s28, 0
      %p173 = por %p171, %p172
      %p174 = scmp.le.s32.totalorder 1, %s22
      %p175 = scmp.lt.s32.totalorder %s22, 15
      %p176 = pnand %p174, %p175
      %p177 = pneg %p176
      // Predicated region
      $region9: #{efficientnet_forward.16} parent=5 // pred_check
        _
      $region10: #{efficientnet_forward.16} parent=5 // pred_check_branch
        %179 = sbr.rel (%p176) target = $region12
      $region11: #{efficientnet_forward.16} parent=5 // pred_region
        %s180 = ssub.s32 %s22, 1
      $region12: #{efficientnet_forward.16} parent=5 // pred_fallthru
        _
      %p181 = scmp.lt.s32.totalorder %s22, 14
      // Predicated region
      $region13: #{efficientnet_forward.16} parent=5 // pred_check
        %p182 = pneg %p181
      $region14: #{efficientnet_forward.16} parent=5 // pred_check_branch
        %184 = sbr.rel (%p182) target = $region16
      $region15: #{efficientnet_forward.16} parent=5 // pred_region
        // Predicated region
        $region17: #{efficientnet_forward.16} parent=15 // pred_check
          %p185 = pneg %p54
        $region18: #{efficientnet_forward.16} parent=15 // pred_check_branch
          %187 = sbr.rel (%p185) target = $region20
        $region19: #{efficientnet_forward.16} parent=15 // pred_region
          %s188 = sand.u32 %s44, 1
          %s189 = scalar_lea.sflag [#allocation3], %s188
          %s190 = sand.u32 %s44, 1
          %s191 = smul.addr %s190, 8
          %s192 = scalar_lea.vmem [#allocation2], %s191
          %s194 = ssub.s32 128, 128
          %195 = vsyncadd %s189, %s194
          %s196 = smul.addr %s29, 2
          %s197 = smul.addr %s196, 64
          %s198 = scalar_lea.hbm %s0, %s197
          %s199 = sshll.u32 %s192, 4
          %s200 = int_to_ptr.vmem [resolvable:$true] %s199
          %205 = dma.hbm_to_vmem [thread:$0]  %s198, 128, %s200, %s189, 64, 64, 4
        $region20: #{efficientnet_forward.16} parent=15 // pred_fallthru
          _
        // Predicated region
        $region21: #{efficientnet_forward.16} parent=15 // pred_check
          %p206 = pneg %p80
        $region22: #{efficientnet_forward.16} parent=15 // pred_check_branch
          %208 = sbr.rel (%p206) target = $region24
        $region23: #{efficientnet_forward.16} parent=15 // pred_region
          %s209 = sand.u32 %s22, 1
          %s210 = scalar_lea.sflag [#allocation6], %s209
          %s211 = sand.u32 %s70, 1
          %s212 = smul.addr %s211, 64
          %s213 = scalar_lea.vmem [#allocation5], %s212
          %s214 = smul.u32 2, %s30
          %s216 = ssub.s32 1024, 1024
          %217 = vsyncadd %s210, %s216
          %s218 = smul.addr %s214, 64
          %s219 = scalar_lea.hbm %s1, %s218
          %s220 = sshll.u32 %s213, 4
          %s221 = int_to_ptr.vmem [resolvable:$true] %s220
          %226 = dma.hbm_to_vmem [thread:$0]  %s219, 1024, %s221, %s210, 896, 128, 8
        $region24: #{efficientnet_forward.16} parent=15 // pred_fallthru
          _
        // Predicated region
        $region25: #{efficientnet_forward.16} parent=15 // pred_check
          %p227 = pneg %p106
        $region26: #{efficientnet_forward.16} parent=15 // pred_check_branch
          %229 = sbr.rel (%p227) target = $region28
        $region27: #{efficientnet_forward.16} parent=15 // pred_region
          %s230 = sand.u32 %s22, 1
          %s231 = scalar_lea.sflag [#allocation6], %s230
          %s232 = sand.u32 %s96, 1
          %s233 = smul.addr %s232, 2
          %s234 = scalar_lea.vmem [#allocation7], %s233
          %s235 = smul.u32 2, %s30
          %s237 = ssub.s32 32, 32
          %238 = vsyncadd %s231, %s237
          %s239 = smul.addr %s235, 16
          %s240 = scalar_lea.hbm %s2, %s239
          %s242 = sshll.u32 %s234, 4
          %s243 = int_to_ptr.vmem [resolvable:$true] %s242
          %245 = dma.hbm_to_vmem [thread:$0]  %s240, 32, %s243, %s231
        $region28: #{efficientnet_forward.16} parent=15 // pred_fallthru
          _
        // Predicated region
        $region29: #{efficientnet_forward.16} parent=15 // pred_check
          %p246 = pneg %p132
        $region30: #{efficientnet_forward.16} parent=15 // pred_check_branch
          %248 = sbr.rel (%p246) target = $region32
        $region31: #{efficientnet_forward.16} parent=15 // pred_region
          %s249 = sand.u32 %s122, 1
          %s250 = scalar_lea.sflag [#allocation9], %s249
          %s251 = sand.u32 %s122, 1
          %s252 = smul.addr %s251, 2
          %s253 = scalar_lea.vmem [#allocation8], %s252
          %s254 = smul.u32 2, %s30
          %s256 = ssub.s32 32, 32
          %257 = vsyncadd %s250, %s256
          %s258 = smul.addr %s254, 16
          %s259 = scalar_lea.hbm %s3, %s258
          %s261 = sshll.u32 %s253, 4
          %s262 = int_to_ptr.vmem [resolvable:$true] %s261
          %264 = dma.hbm_to_vmem [thread:$0]  %s259, 32, %s262, %s250
        $region32: #{efficientnet_forward.16} parent=15 // pred_fallthru
          _
      $region16: #{efficientnet_forward.16} parent=5 // pred_fallthru
        _
      %p265 = scmp.le.s32.totalorder 1, %s22
      %p266 = scmp.lt.s32.totalorder %s22, 15
      %p267 = pnand %p265, %p266
      %p268 = pneg %p267
      // Predicated region
      $region33: #{efficientnet_forward.16} parent=5 // pred_check
        _
      $region34: #{efficientnet_forward.16} parent=5 // pred_check_branch
        %270 = sbr.rel (%p267) target = $region36
      $region35: #{efficientnet_forward.16} parent=5 // pred_region
        %s271 = ssub.s32 %s22, 1
        %s272 = sand.u32 %s47, 1
        %s273 = scalar_lea.sflag [#allocation3], %s272
        %s274 = sand.u32 %s47, 1
        %s275 = smul.addr %s274, 8
        %s276 = scalar_lea.vmem [#allocation2], %s275
        // Predicated region
        $region37: #{efficientnet_forward.16} parent=35 // pred_check
          %p277 = pneg %p60
        $region38: #{efficientnet_forward.16} parent=35 // pred_check_branch
          %279 = sbr.rel (%p277) target = $region40
        $region39: #{efficientnet_forward.16} parent=35 // pred_region
          %280 = dma.done %s273, 128
        $region40: #{efficientnet_forward.16} parent=35 // pred_fallthru
          _
        %s281 = sand.u32 %s27, 1
        %s282 = scalar_lea.sflag [#allocation6], %s281
        %s283 = sand.u32 %s73, 1
        %s284 = smul.addr %s283, 64
        %s285 = scalar_lea.vmem [#allocation5], %s284
        // Predicated region
        $region41: #{efficientnet_forward.16} parent=35 // pred_check
          %p286 = pneg %p86
        $region42: #{efficientnet_forward.16} parent=35 // pred_check_branch
          %288 = sbr.rel (%p286) target = $region44
        $region43: #{efficientnet_forward.16} parent=35 // pred_region
          %289 = dma.done %s282, 1024
        $region44: #{efficientnet_forward.16} parent=35 // pred_fallthru
          _
        %s290 = sand.u32 %s27, 1
        %s291 = scalar_lea.sflag [#allocation6], %s290
        %s292 = sand.u32 %s99, 1
        %s293 = smul.addr %s292, 2
        %s294 = scalar_lea.vmem [#allocation7], %s293
        // Predicated region
        $region45: #{efficientnet_forward.16} parent=35 // pred_check
          %p295 = pneg %p112
        $region46: #{efficientnet_forward.16} parent=35 // pred_check_branch
          %297 = sbr.rel (%p295) target = $region48
        $region47: #{efficientnet_forward.16} parent=35 // pred_region
          %298 = dma.done %s291, 32
        $region48: #{efficientnet_forward.16} parent=35 // pred_fallthru
          _
        %s299 = sand.u32 %s125, 1
        %s300 = scalar_lea.sflag [#allocation9], %s299
        %s301 = sand.u32 %s125, 1
        %s302 = smul.addr %s301, 2
        %s303 = scalar_lea.vmem [#allocation8], %s302
        // Predicated region
        $region49: #{efficientnet_forward.16} parent=35 // pred_check
          %p304 = pneg %p138
        $region50: #{efficientnet_forward.16} parent=35 // pred_check_branch
          %306 = sbr.rel (%p304) target = $region52
        $region51: #{efficientnet_forward.16} parent=35 // pred_region
          %307 = dma.done %s300, 32
        $region52: #{efficientnet_forward.16} parent=35 // pred_fallthru
          _
        %s308 = sand.u32 %s47, 1
        %s309 = scalar_lea.sflag [#allocation3], %s308
        %s310 = sand.u32 %s47, 1
        %s311 = smul.addr %s310, 8
        %s312 = scalar_lea.vmem [#allocation2], %s311
        %p313 = pneg %p60
        %p314 = pneg %p57
        %s315 = sand.u32 %s27, 1
        %s316 = scalar_lea.sflag [#allocation6], %s315
        %s317 = sand.u32 %s73, 1
        %s318 = smul.addr %s317, 64
        %s319 = scalar_lea.vmem [#allocation5], %s318
        %p320 = pneg %p86
        %p321 = pneg %p83
        %s322 = sand.u32 %s27, 1
        %s323 = scalar_lea.sflag [#allocation6], %s322
        %s324 = sand.u32 %s99, 1
        %s325 = smul.addr %s324, 2
        %s326 = scalar_lea.vmem [#allocation7], %s325
        %p327 = pneg %p112
        %p328 = pneg %p109
        %s329 = sand.u32 %s125, 1
        %s330 = scalar_lea.sflag [#allocation9], %s329
        %s331 = sand.u32 %s125, 1
        %s332 = smul.addr %s331, 2
        %s333 = scalar_lea.vmem [#allocation8], %s332
        %p334 = pneg %p138
        %p335 = pneg %p135
        %p336 = pneg %p166
        %p337 = pneg %p163
        %s338 = sand.u32 %s153, 1
        %s339 = scalar_lea.sflag [#allocation4], %s338
        %s340 = sand.u32 %s153, 1
        %s341 = smul.addr %s340, 2
        %s342 = scalar_lea.vmem [#allocation10], %s341
        %s343 = smul.u32 2, %s32
        %s344 = smul.u32 2, %s32
        %s345 = smul.u32 2, %s32
        %s346 = smul.u32 2, %s32
        %v348 = vld [vmem:[%s276] sm:$0xf]
        %v349 = vld [vmem:[%s276 + $0x4] sm:$0xf]
        %v350 = vld [vmem:[%s285] sm:$0xff]
        %v351 = vld [vmem:[%s285 + $0x8] sm:$0xff]
        %v352 = vld [vmem:[%s285 + $0x10] sm:$0xff]
        %v353 = vld [vmem:[%s285 + $0x18] sm:$0xff]
        %v354 = vld [vmem:[%s285 + $0x20] sm:$0xff]
        %v355 = vld [vmem:[%s285 + $0x28] sm:$0xff]
        %v356 = vld [vmem:[%s285 + $0x30] sm:$0xff]
        %v357 = vld [vmem:[%s285 + $0x38] sm:$0xff]
        %v360 = vunpack.c.l.b16 %v348
        %v361 = vunpack.c.l.b16 %v349
        %v362 = vpack.c.b16 %v361, %v360
        %v371 = vunpack.c.l.b16 %v350
        %v372 = vunpack.c.h.b16 %v350
        %v373 = vunpack.c.l.b16 %v351
        %v374 = vunpack.c.h.b16 %v351
        %v375 = vunpack.c.l.b16 %v352
        %v376 = vunpack.c.h.b16 %v352
        %v377 = vunpack.c.l.b16 %v353
        %v378 = vunpack.c.h.b16 %v353
        %v379 = vunpack.c.l.b16 %v354
        %v380 = vunpack.c.h.b16 %v354
        %v381 = vunpack.c.l.b16 %v355
        %v382 = vunpack.c.h.b16 %v355
        %v383 = vunpack.c.l.b16 %v356
        %v384 = vunpack.c.h.b16 %v356
        %v385 = vunpack.c.l.b16 %v357
        %v386 = vunpack.c.h.b16 %v357
        %v387 = vpack.c.b16 %v373, %v371
        %v388 = vpack.c.b16 %v374, %v372
        %v389 = vpack.c.b16 %v377, %v375
        %v390 = vpack.c.b16 %v378, %v376
        %v391 = vpack.c.b16 %v381, %v379
        %v392 = vpack.c.b16 %v382, %v380
        %v393 = vpack.c.b16 %v385, %v383
        %v394 = vpack.c.b16 %v386, %v384
        %vm403 = vcmask 523264
        %v405 = vsel %vm403, %v362, 0
        %407 = vmatprep.subr.bf16.mxu0 %v388
        %408 = vmatpush1.bf16.msra.mxu0 %v387
        %409 = vmatprep.subr.bf16.mxu0 %v390
        %410 = vmatpush1.bf16.msra.mxu0 %v389
        %411 = vmatprep.subr.bf16.mxu0 %v392
        %412 = vmatpush1.bf16.msra.mxu0 %v391
        %413 = vmatprep.subr.bf16.mxu0 %v394
        %414 = vmatpush1.bf16.msra.mxu0 %v393
        %415 = vmatprep.subr.bf16.mxu0 0
        %416 = vmatpush1.bf16.msra.mxu0 0
        %417 = vmatprep.subr.bf16.mxu0 0
        %418 = vmatpush1.bf16.msra.mxu0 0
        %419 = vmatprep.subr.bf16.mxu0 0
        %420 = vmatpush1.bf16.msra.mxu0 0
        %421 = vmatprep.subr.bf16.mxu0 0
        %422 = vmatpush1.bf16.msra.mxu0 0
        %423 = vmatprep.subr.bf16.mxu0 0
        %424 = vmatpush1.bf16.msra.mxu0 0
        %425 = vmatprep.subr.bf16.mxu0 0
        %426 = vmatpush1.bf16.msra.mxu0 0
        %427 = vmatprep.subr.bf16.mxu0 0
        %428 = vmatpush1.bf16.msra.mxu0 0
        %429 = vmatprep.subr.bf16.mxu0 0
        %430 = vmatpush1.bf16.msra.mxu0 0
        %431 = vmatprep.subr.bf16.mxu0 0
        %432 = vmatpush1.bf16.msra.mxu0 0
        %433 = vmatprep.subr.bf16.mxu0 0
        %434 = vmatpush1.bf16.msra.mxu0 0
        %435 = vmatprep.subr.bf16.mxu0 0
        %436 = vmatpush1.bf16.msra.mxu0 0
        %437 = vmatprep.subr.bf16.mxu0 0
        %438 = vmatpush1.bf16.msra.mxu0 0
        %439 = vmatprep.mubr.bf16.mxu0 0
        %440 = vmatmul.mubr.bf16.gmra.mrb[0].mxu0 %v405
        %v441 = vpop.f32.mrb[0].mxu0
        %v442 = vadd.f32 0.0, %v441
        %v443 = vpop.f32.mrb[0].mxu0
        %v444 = vadd.f32 0.0, %v443
        %v445 = vpop.f32.mrb[0].mxu0
        %v446 = vadd.f32 0.0, %v445
        %v447 = vpop.f32.mrb[0].mxu0
        %v448 = vadd.f32 0.0, %v447
        %449 = vdwg.mxu0
        %v450 = vld [vmem:[%s294] sm:$0x3]
        %v452 = vlaneseq
        %v453 = vshrl.u32 %v452, 7
        %v454 = vsub.s32 0, %v453
        %v455 = vrot.slane %v450, %v454
        %v456 = vlaneseq
        %v457 = vshrl.u32 %v456, 7
        %v458 = vsub.s32 1, %v457
        %v459 = vrot.slane %v450, %v458
        %v462 = vmul.f32 %v442, %v455
        %v463 = vmul.f32 %v444, %v459
        %v464 = vmul.f32 %v446, %v455
        %v465 = vmul.f32 %v448, %v459
        %v466 = vld [vmem:[%s303] sm:$0x3]
        %v468 = vlaneseq
        %v469 = vshrl.u32 %v468, 7
        %v470 = vsub.s32 0, %v469
        %v471 = vrot.slane %v466, %v470
        %v472 = vlaneseq
        %v473 = vshrl.u32 %v472, 7
        %v474 = vsub.s32 1, %v473
        %v475 = vrot.slane %v466, %v474
        %v478 = vadd.f32 %v462, %v471
        %v479 = vadd.f32 %v463, %v475
        %v480 = vadd.f32 %v464, %v471
        %v481 = vadd.f32 %v465, %v475
        %v482 = vxor.u32 %v478, 2147483648
        %v483 = vxor.u32 %v479, 2147483648
        %v484 = vxor.u32 %v480, 2147483648
        %v485 = vxor.u32 %v481, 2147483648
        %v486 = vmul.f32 %v482, 1.442695
        %v487 = vpow.pop %v486
        %v488 = vmul.f32 %v483, 1.442695
        %v489 = vpow.pop %v488
        %v490 = vmul.f32 %v484, 1.442695
        %v491 = vpow.pop %v490
        %v492 = vmul.f32 %v485, 1.442695
        %v493 = vpow.pop %v492
        %v494 = vadd.f32 %v487, 1.0
        %v495 = vadd.f32 %v489, 1.0
        %v496 = vadd.f32 %v491, 1.0
        %v497 = vadd.f32 %v493, 1.0
        %v498 = vrcp.pop %v494
        %v499 = vmul.f32 1.0, %v498
        %v500 = vrcp.pop %v495
        %v501 = vmul.f32 1.0, %v500
        %v502 = vrcp.pop %v496
        %v503 = vmul.f32 1.0, %v502
        %v504 = vrcp.pop %v497
        %v505 = vmul.f32 1.0, %v504
        %v506 = vmul.f32 %v478, %v499
        %v507 = vmul.f32 %v479, %v501
        %v508 = vmul.f32 %v480, %v503
        %v509 = vmul.f32 %v481, %v505
        %v510 = vadd.f32 %v506, %v508
        %v511 = vrot.slane %v510, 4
        %v512 = vadd.f32 %v510, %v511
        %v513 = vrot.slane %v512, 2
        %v514 = vadd.f32 %v512, %v513
        %v515 = vrot.slane %v514, 1
        %v516 = vadd.f32 %v514, %v515
        %v517 = vadd.f32 %v507, %v509
        %v518 = vrot.slane %v517, 4
        %v519 = vadd.f32 %v517, %v518
        %v520 = vrot.slane %v519, 2
        %v521 = vadd.f32 %v519, %v520
        %v522 = vrot.slane %v521, 1
        %v523 = vadd.f32 %v521, %v522
        %v524 = vrcp.pop 16.0
        %v525 = vmul.f32 %v516, %v524
        %v526 = vmul.f32 %v523, %v524
        %v529 = vcombine.low %v525, %v526
        %v531 = vunpack.c.l.s4 1966171168
        %v532 = vunpack.c.0.s8 %v531
        %v533 = vlaneseq
        %v534 = vshrl.u32 %v533, 7
        %v535 = vsub.s32 %v532, %v534
        %v536 = vrot.slane %v529, %v535
        %v538 = vunpack.c.l.s4 1966171168
        %v539 = vunpack.c.0.s8 %v538
        %v540 = vlaneseq
        %v541 = vshrl.u32 %v540, 7
        %v542 = vsub.s32 %v539, %v541
        %v543 = vrot.slane %v536, %v542
        %v545 = vlaneseq
        %vm546 = vcmp.ge.s32.totalorder %v545, 0
        %vm547 = vcmp.lt.s32.totalorder %v545, 256
        %vm548 = vmand %vm546, %vm547
        %549 = vst.msk [vmem:[%s342] sm:$0x3] %vm548, %v543
        %s550 = sand.u32 %s153, 1
        %s551 = scalar_lea.sflag [#allocation4], %s550
        %s552 = sand.u32 %s153, 1
        %s553 = smul.addr %s552, 2
        %s554 = scalar_lea.vmem [#allocation10], %s553
        // Predicated region
        $region53: #{efficientnet_forward.16} parent=35 // pred_check
          %p555 = pneg %p163
        $region54: #{efficientnet_forward.16} parent=35 // pred_check_branch
          %557 = sbr.rel (%p555) target = $region56
        $region55: #{efficientnet_forward.16} parent=35 // pred_region
          %s558 = smul.u32 2, %s32
          %s560 = ssub.s32 32, 32
          %561 = vsyncadd %s551, %s560
          %s562 = smul.addr %s31, 14
          %s563 = sadd.s32 %s558, %s562
          %s564 = smul.addr %s563, 16
          %s565 = scalar_lea.hbm %s4, %s564
          %s567 = sshll.u32 %s554, 4
          %s568 = int_to_ptr.vmem [resolvable:$true] %s567
          %570 = dma.vmem_to_hbm [thread:$0]  %s568, 32, %s565, %s551
        $region56: #{efficientnet_forward.16} parent=35 // pred_fallthru
          _
      $region36: #{efficientnet_forward.16} parent=5 // pred_fallthru
        _
      %p571 = scmp.le.s32.totalorder 2, %s22
      // Predicated region
      $region57: #{efficientnet_forward.16} parent=5 // pred_check
        %p572 = pneg %p571
      $region58: #{efficientnet_forward.16} parent=5 // pred_check_branch
        %574 = sbr.rel (%p572) target = $region60
      $region59: #{efficientnet_forward.16} parent=5 // pred_region
        %s575 = ssub.s32 %s22, 2
        // Predicated region
        $region61: #{efficientnet_forward.16} parent=59 // pred_check
          %p576 = pneg %p169
        $region62: #{efficientnet_forward.16} parent=59 // pred_check_branch
          %578 = sbr.rel (%p576) target = $region64
        $region63: #{efficientnet_forward.16} parent=59 // pred_region
          %s579 = sand.u32 %s154, 1
          %s580 = scalar_lea.sflag [#allocation4], %s579
          %s581 = sand.u32 %s154, 1
          %s582 = smul.addr %s581, 2
          %s583 = scalar_lea.vmem [#allocation10], %s582
          %584 = dma.done %s580, 32
        $region64: #{efficientnet_forward.16} parent=59 // pred_fallthru
          _
      $region60: #{efficientnet_forward.16} parent=5 // pred_fallthru
        _
    $region6: #{efficientnet_forward.16} parent=1 // loop_footer
      %s26 = sadd.s32 1, %s22
    $region7: #{efficientnet_forward.16} parent=1 // loop_footer_branch
      %21 = sbr.rel target = $region3
    $region8: #{efficientnet_forward.16} parent=1 // loop_exit
      _
    %585 = vsyncpa [#allocation3], 1
    %s586 = scalar_lea.sflag [#allocation3], 1
    %587 = vsyncpa %s586, 1
    %588 = vsyncpa [#allocation6], 1
    %s589 = scalar_lea.sflag [#allocation6], 1
    %590 = vsyncpa %s589, 1
    %591 = vsyncpa [#allocation9], 1
    %s592 = scalar_lea.sflag [#allocation9], 1
    %593 = vsyncpa %s592, 1
    %594 = vsyncpa [#allocation4], 1
    %s595 = scalar_lea.sflag [#allocation4], 1
    %596 = vsyncpa %s595, 1

</llo_original>
